<compile_context>
chip_gen: v6e
topology: v6e:2x2x1
jax: 0.10.0
libtpu: 0.0.40
codegen_flags: <defaults>
</compile_context>

<pallas_src>
import math
import jax
import jax.numpy as jnp
from jax.experimental import pallas as pl
from jax.experimental.pallas import tpu as pltpu

# ---------------- model dims (scaled-down TinyLlama analog) ----------------
B = 2          # batch
S = 7          # valid sequence length (docstring: [B, 7, 768])
SP = 8         # padded sequence length (sublane aligned)
IN = 64        # CNN embedding dim   (stands for 768)
D = 128        # hidden size         (stands for 2048)
H = 4          # attention heads
DH = D // H    # head dim
F = 256        # MLP intermediate (SwiGLU)
L = 2          # decoder layers
V = D          # "vocab" size == hidden size (see TODO above)
EPS = 1e-5
SCALE = 1.0 / math.sqrt(DH)

_VMEM = pl.BlockSpec(memory_space=pltpu.MemorySpace.VMEM)


# ------------------------- in-kernel helpers (f32 math) ----------------------

def _rmsnorm(x, w):
    var = jnp.mean(x * x, axis=-1, keepdims=True)
    return x * jax.lax.rsqrt(var + EPS) * w


def _rope(x, cos, sin):
    # x: [SP, DH]; cos/sin: [SP, DH]
    half = x.shape[-1] // 2
    rot = jnp.concatenate([-x[:, half:], x[:, :half]], axis=-1)
    return x * cos + rot * sin


# ----------------------------- fused forward kernel --------------------------

def _fused_forward_kernel(
    x_ref,            # [B*SP, IN] f32   padded embeddings
    cos_ref, sin_ref,  # [SP, DH]  f32   RoPE tables
    proj_w_ref,       # [IN, D]    bf16
    proj_b_ref,       # [1, D]     f32
    attn_norm_ref,    # [L, 1, D]  f32
    wqkv_ref,         # [L, D, 3D] bf16  (merged q/k/v)
    wo_ref,           # [L, D, D]  bf16
    mlp_norm_ref,     # [L, 1, D]  f32
    wg_ref,           # [L, D, F]  bf16
    wu_ref,           # [L, D, F]  bf16
    wd_ref,           # [L, F, D]  bf16
    final_norm_ref,   # [1, D]     f32
    lm_head_ref,      # [D, V]     bf16
    reg_w_ref,        # [V, 3]     f32
    reg_b_ref,        # [1, 3]     f32
    out_ref,          # [B, 3]     f32
):
    cos = cos_ref[...]
    sin = sin_ref[...]

    # causal mask, built once and shared across layers / heads / batches
    row = jax.lax.broadcasted_iota(jnp.int32, (SP, SP), 0)
    col = jax.lax.broadcasted_iota(jnp.int32, (SP, SP), 1)
    causal = col <= row

    # ---- proj: Linear(IN -> D) ----
    x = x_ref[...]
    h = (jnp.dot(x.astype(jnp.bfloat16), proj_w_ref[...],
                 preferred_element_type=jnp.float32)
         + proj_b_ref[...])                                    # [B*SP, D] f32

    # ---- decoder stack (statically unrolled) ----
    for l in range(L):
        # attention block
        hn = _rmsnorm(h, attn_norm_ref[l])
        qkv = jnp.dot(hn.astype(jnp.bfloat16), wqkv_ref[l],
                      preferred_element_type=jnp.float32)       # [B*SP, 3D]
        q, k, v = qkv[:, :D], qkv[:, D:2 * D], qkv[:, 2 * D:]

        per_batch = []
        for b in range(B):
            r0 = b * SP
            heads = []
            for hh in range(H):
                c0 = hh * DH
                qh = _rope(q[r0:r0 + SP, c0:c0 + DH], cos, sin)
                kh = _rope(k[r0:r0 + SP, c0:c0 + DH], cos, sin)
                vh = v[r0:r0 + SP, c0:c0 + DH]
                s = jnp.dot(qh, kh.T,
                            preferred_element_type=jnp.float32) * SCALE
                s = jnp.where(causal, s, -1e30)                 # f32 mask fill
                m = jnp.max(s, axis=-1, keepdims=True)
                p = jnp.exp(s - m)
                p = p * pl.reciprocal(jnp.sum(p, axis=-1, keepdims=True),
                                      approx=True)
                heads.append(jnp.dot(p, vh,
                                     preferred_element_type=jnp.float32))
            per_batch.append(jnp.concatenate(heads, axis=-1))   # [SP, D]
        attn = jnp.concatenate(per_batch, axis=0)               # [B*SP, D]

        h = h + jnp.dot(attn.astype(jnp.bfloat16), wo_ref[l],
                        preferred_element_type=jnp.float32)

        # SwiGLU MLP block
        hn2 = _rmsnorm(h, mlp_norm_ref[l]).astype(jnp.bfloat16)
        g = jnp.dot(hn2, wg_ref[l], preferred_element_type=jnp.float32)
        u = jnp.dot(hn2, wu_ref[l], preferred_element_type=jnp.float32)
        act = (g * jax.nn.sigmoid(g)) * u                       # SiLU(g) * u
        h = h + jnp.dot(act.astype(jnp.bfloat16), wd_ref[l],
                        preferred_element_type=jnp.float32)

    # ---- final norm + lm_head + reg head, LAST VALID TOKEN only ----
    last = jnp.concatenate(
        [h[b * SP + S - 1: b * SP + S, :] for b in range(B)], axis=0)  # [B, D]
    last = _rmsnorm(last, final_norm_ref[...])
    logits = jnp.dot(last.astype(jnp.bfloat16), lm_head_ref[...],
                     preferred_element_type=jnp.float32)               # [B, V]
    pred = jnp.dot(logits, reg_w_ref[...],
                   preferred_element_type=jnp.float32) + reg_b_ref[...]
    out_ref[...] = pred


# ----------------------------- wrapper / params ------------------------------

def rope_tables(seq_len, dim, base=10000.0):
    inv_freq = 1.0 / (base ** (jnp.arange(0, dim, 2, dtype=jnp.float32) / dim))
    t = jnp.arange(seq_len, dtype=jnp.float32)
    freqs = jnp.outer(t, inv_freq)                  # [SP, dim/2]
    emb = jnp.concatenate([freqs, freqs], axis=-1)  # [SP, dim]
    return jnp.cos(emb), jnp.sin(emb)


def init_params(key):
    def nrm(k, shape, scale=0.02):
        return (scale * jax.random.normal(k, shape)).astype(jnp.float32)

    keys = iter(jax.random.split(key, 32))
    layers = []
    for _ in range(L):
        layers.append(dict(
            wq=nrm(next(keys), (D, D)), wk=nrm(next(keys), (D, D)),
            wv=nrm(next(keys), (D, D)), wo=nrm(next(keys), (D, D)),
            wg=nrm(next(keys), (D, F)), wu=nrm(next(keys), (D, F)),
            wd=nrm(next(keys), (F, D))))

    params = {
        "proj_w": nrm(next(keys), (IN, D)).astype(jnp.bfloat16),
        "proj_b": nrm(next(keys), (D,)).reshape(1, D),
        "attn_norm": jnp.ones((L, 1, D), jnp.float32),
        "wqkv": jnp.stack(
            [jnp.concatenate([lp["wq"], lp["wk"], lp["wv"]], axis=1)
             for lp in layers]).astype(jnp.bfloat16),            # [L, D, 3D]
        "wo": jnp.stack([lp["wo"] for lp in layers]).astype(jnp.bfloat16),
        "mlp_norm": jnp.ones((L, 1, D), jnp.float32),
        "wg": jnp.stack([lp["wg"] for lp in layers]).astype(jnp.bfloat16),
        "wu": jnp.stack([lp["wu"] for lp in layers]).astype(jnp.bfloat16),
        "wd": jnp.stack([lp["wd"] for lp in layers]).astype(jnp.bfloat16),
        "final_norm": jnp.ones((1, D), jnp.float32),
        "lm_head": nrm(next(keys), (D, V)).astype(jnp.bfloat16),
        "reg_w": nrm(next(keys), (V, 3)),
        "reg_b": nrm(next(keys), (3,)).reshape(1, 3),
    }
    return params


def llama_regressor_forward(params, embeddings):
    """embeddings: [B, S, IN] (channel-last; stands for [B, 7, 768])."""
    Bx, Sx, _ = embeddings.shape
    # pad S=7 -> 8; pad column is causally masked and never read back
    x = jnp.pad(embeddings, ((0, 0), (0, SP - Sx), (0, 0))).reshape(Bx * SP, IN)
    cos, sin = rope_tables(SP, DH)

    return pl.pallas_call(
        _fused_forward_kernel,
        out_shape=jax.ShapeDtypeStruct((Bx, 3), jnp.float32),
        in_specs=[_VMEM] * 16,
        out_specs=_VMEM,
    )(x, cos, sin,
      params["proj_w"], params["proj_b"],
      params["attn_norm"], params["wqkv"], params["wo"],
      params["mlp_norm"], params["wg"], params["wu"], params["wd"],
      params["final_norm"], params["lm_head"],
      params["reg_w"], params["reg_b"])


# ---------------------------------- main --------------------------------------

if __name__ == "__main__":
    key = jax.random.PRNGKey(0)
    pkey, xkey = jax.random.split(key)
    params = init_params(pkey)
    embeddings = jax.random.normal(xkey, (B, S, IN), dtype=jnp.float32)

    out = jax.jit(llama_regressor_forward)(params, embeddings)
    out = jax.block_until_ready(out)
    assert out.shape == (B, 3), out.shape
    assert bool(jnp.all(jnp.isfinite(out)))
    print("KERNEL_OK")
</pallas_src>

<mosaic_0001>
module attributes {stable_mosaic.version = 11 : i64} {
  func.func @_fused_forward_kernel(%arg0: memref<16x64xf32, #tpu.memory_space<vmem>>, %arg1: memref<8x32xf32, #tpu.memory_space<vmem>>, %arg2: memref<8x32xf32, #tpu.memory_space<vmem>>, %arg3: memref<64x128xbf16, #tpu.memory_space<vmem>>, %arg4: memref<1x128xf32, #tpu.memory_space<vmem>>, %arg5: memref<2x1x128xf32, #tpu.memory_space<vmem>>, %arg6: memref<2x128x384xbf16, #tpu.memory_space<vmem>>, %arg7: memref<2x128x128xbf16, #tpu.memory_space<vmem>>, %arg8: memref<2x1x128xf32, #tpu.memory_space<vmem>>, %arg9: memref<2x128x256xbf16, #tpu.memory_space<vmem>>, %arg10: memref<2x128x256xbf16, #tpu.memory_space<vmem>>, %arg11: memref<2x256x128xbf16, #tpu.memory_space<vmem>>, %arg12: memref<1x128xf32, #tpu.memory_space<vmem>>, %arg13: memref<128x128xbf16, #tpu.memory_space<vmem>>, %arg14: memref<128x3xf32, #tpu.memory_space<vmem>>, %arg15: memref<1x3xf32, #tpu.memory_space<vmem>>, %arg16: memref<2x3xf32, #tpu.memory_space<vmem>>) attributes {dimension_semantics = [], scalar_prefetch = 0 : i64, scratch_operands = 0 : i64, tpu.core_type = #tpu.core_type<tc>} {
    %c0 = arith.constant 0 : index
    %c0_0 = arith.constant 0 : index
    %0 = vector.load %arg1[%c0, %c0_0] : memref<8x32xf32, #tpu.memory_space<vmem>>, vector<8x32xf32>
    %c0_1 = arith.constant 0 : index
    %c0_2 = arith.constant 0 : index
    %1 = vector.load %arg2[%c0_1, %c0_2] : memref<8x32xf32, #tpu.memory_space<vmem>>, vector<8x32xf32>
    %2 = tpu.iota {dimensions = array<i32: 0>} : vector<8x8xi32>
    %3 = tpu.iota {dimensions = array<i32: 1>} : vector<8x8xi32>
    %4 = arith.cmpi sle, %3, %2 : vector<8x8xi32>
    %c0_3 = arith.constant 0 : index
    %c0_4 = arith.constant 0 : index
    %5 = vector.load %arg0[%c0_3, %c0_4] : memref<16x64xf32, #tpu.memory_space<vmem>>, vector<16x64xf32>
    %6 = arith.truncf %5 : vector<16x64xf32> to vector<16x64xbf16>
    %c0_5 = arith.constant 0 : index
    %c0_6 = arith.constant 0 : index
    %7 = vector.load %arg3[%c0_5, %c0_6] : memref<64x128xbf16, #tpu.memory_space<vmem>>, vector<64x128xbf16>
    %cst = arith.constant dense<0.000000e+00> : vector<16x128xf32>
    %8 = tpu.matmul %6, %7, %cst {dimension_numbers = #tpu.dot_dimension_numbers<[1], [0], [0], [1], [0, 0, 1, 1], [], []>} : vector<16x64xbf16>, vector<64x128xbf16>, vector<16x128xf32> -> vector<16x128xf32>
    %c0_7 = arith.constant 0 : index
    %c0_8 = arith.constant 0 : index
    %9 = vector.load %arg4[%c0_7, %c0_8] : memref<1x128xf32, #tpu.memory_space<vmem>>, vector<1x128xf32>
    %10 = vector.broadcast %9 : vector<1x128xf32> to vector<16x128xf32>
    %11 = arith.addf %8, %10 : vector<16x128xf32>
    %c0_9 = arith.constant 0 : index
    %c0_10 = arith.constant 0 : index
    %c0_11 = arith.constant 0 : index
    %12 = vector.load %arg5[%c0_9, %c0_10, %c0_11] : memref<2x1x128xf32, #tpu.memory_space<vmem>>, vector<1x1x128xf32>
    %13 = vector.shape_cast %12 : vector<1x1x128xf32> to vector<1x128xf32>
    %14 = arith.mulf %11, %11 : vector<16x128xf32>
    %cst_12 = arith.constant dense<0.000000e+00> : vector<16xf32>
    %15 = vector.multi_reduction <add>, %14, %cst_12 [1] : vector<16x128xf32> to vector<16xf32>
    %16 = vector.shape_cast %15 : vector<16xf32> to vector<16x1xf32>
    %cst_13 = arith.constant 1.280000e+02 : f32
    %17 = vector.broadcast %cst_13 : f32 to vector<16x1xf32>
    %18 = arith.divf %16, %17 : vector<16x1xf32>
    %cst_14 = arith.constant 9.99999974E-6 : f32
    %19 = vector.broadcast %cst_14 : f32 to vector<16x1xf32>
    %20 = arith.addf %18, %19 : vector<16x1xf32>
    %21 = math.rsqrt %20 : vector<16x1xf32>
    %22 = vector.broadcast %21 : vector<16x1xf32> to vector<16x128xf32>
    %23 = arith.mulf %11, %22 : vector<16x128xf32>
    %24 = vector.broadcast %13 : vector<1x128xf32> to vector<16x128xf32>
    %25 = arith.mulf %23, %24 : vector<16x128xf32>
    %26 = arith.truncf %25 : vector<16x128xf32> to vector<16x128xbf16>
    %c0_15 = arith.constant 0 : index
    %c0_16 = arith.constant 0 : index
    %c0_17 = arith.constant 0 : index
    %27 = vector.load %arg6[%c0_15, %c0_16, %c0_17] : memref<2x128x384xbf16, #tpu.memory_space<vmem>>, vector<1x128x384xbf16>
    %28 = vector.shape_cast %27 : vector<1x128x384xbf16> to vector<128x384xbf16>
    %cst_18 = arith.constant dense<0.000000e+00> : vector<16x384xf32>
    %29 = tpu.matmul %26, %28, %cst_18 {dimension_numbers = #tpu.dot_dimension_numbers<[1], [0], [0], [1], [0, 0, 1, 1], [], []>} : vector<16x128xbf16>, vector<128x384xbf16>, vector<16x384xf32> -> vector<16x384xf32>
    %30 = vector.extract_strided_slice %29 {offsets = [0, 0], sizes = [16, 128], strides = [1, 1]} : vector<16x384xf32> to vector<16x128xf32>
    %31 = vector.extract_strided_slice %29 {offsets = [0, 128], sizes = [16, 128], strides = [1, 1]} : vector<16x384xf32> to vector<16x128xf32>
    %32 = vector.extract_strided_slice %29 {offsets = [0, 256], sizes = [16, 128], strides = [1, 1]} : vector<16x384xf32> to vector<16x128xf32>
    %33 = vector.extract_strided_slice %30 {offsets = [0, 0], sizes = [8, 32], strides = [1, 1]} : vector<16x128xf32> to vector<8x32xf32>
    %34 = vector.extract_strided_slice %33 {offsets = [0, 16], sizes = [8, 16], strides = [1, 1]} : vector<8x32xf32> to vector<8x16xf32>
    %cst_19 = arith.constant 0.000000e+00 : f32
    %35 = vector.broadcast %cst_19 : f32 to vector<8x16xf32>
    %36 = arith.subf %35, %34 : vector<8x16xf32>
    %37 = vector.extract_strided_slice %33 {offsets = [0, 0], sizes = [8, 16], strides = [1, 1]} : vector<8x32xf32> to vector<8x16xf32>
    %38 = tpu.concatenate %36, %37 in 1 : vector<8x16xf32>, vector<8x16xf32> -> vector<8x32xf32>
    %39 = arith.mulf %33, %0 : vector<8x32xf32>
    %40 = arith.mulf %38, %1 : vector<8x32xf32>
    %41 = arith.addf %39, %40 : vector<8x32xf32>
    %42 = vector.extract_strided_slice %31 {offsets = [0, 0], sizes = [8, 32], strides = [1, 1]} : vector<16x128xf32> to vector<8x32xf32>
    %43 = vector.extract_strided_slice %42 {offsets = [0, 16], sizes = [8, 16], strides = [1, 1]} : vector<8x32xf32> to vector<8x16xf32>
    %cst_20 = arith.constant 0.000000e+00 : f32
    %44 = vector.broadcast %cst_20 : f32 to vector<8x16xf32>
    %45 = arith.subf %44, %43 : vector<8x16xf32>
    %46 = vector.extract_strided_slice %42 {offsets = [0, 0], sizes = [8, 16], strides = [1, 1]} : vector<8x32xf32> to vector<8x16xf32>
    %47 = tpu.concatenate %45, %46 in 1 : vector<8x16xf32>, vector<8x16xf32> -> vector<8x32xf32>
    %48 = arith.mulf %42, %0 : vector<8x32xf32>
    %49 = arith.mulf %47, %1 : vector<8x32xf32>
    %50 = arith.addf %48, %49 : vector<8x32xf32>
    %51 = vector.extract_strided_slice %32 {offsets = [0, 0], sizes = [8, 32], strides = [1, 1]} : vector<16x128xf32> to vector<8x32xf32>
    %52 = tpu.transpose %50, [1, 0] : vector<8x32xf32> -> vector<32x8xf32>
    %cst_21 = arith.constant dense<0.000000e+00> : vector<8x8xf32>
    %53 = tpu.matmul %41, %52, %cst_21 {dimension_numbers = #tpu.dot_dimension_numbers<[1], [0], [0], [1], [0, 0, 1, 1], [], []>} : vector<8x32xf32>, vector<32x8xf32>, vector<8x8xf32> -> vector<8x8xf32>
    %cst_22 = arith.constant 0.176776692 : f32
    %54 = vector.broadcast %cst_22 : f32 to vector<8x8xf32>
    %55 = arith.mulf %53, %54 : vector<8x8xf32>
    %cst_23 = arith.constant -1.000000e+30 : f32
    %56 = vector.broadcast %cst_23 : f32 to vector<8x8xf32>
    %57 = arith.select %4, %55, %56 : vector<8x8xi1>, vector<8x8xf32>
    %cst_24 = arith.constant dense<0xFF800000> : vector<8xf32>
    %58 = vector.multi_reduction <maximumf>, %57, %cst_24 [1] : vector<8x8xf32> to vector<8xf32>
    %59 = vector.shape_cast %58 : vector<8xf32> to vector<8x1xf32>
    %60 = vector.broadcast %59 : vector<8x1xf32> to vector<8x8xf32>
    %61 = arith.subf %57, %60 : vector<8x8xf32>
    %62 = math.exp %61 : vector<8x8xf32>
    %cst_25 = arith.constant dense<0.000000e+00> : vector<8xf32>
    %63 = vector.multi_reduction <add>, %62, %cst_25 [1] : vector<8x8xf32> to vector<8xf32>
    %64 = vector.shape_cast %63 : vector<8xf32> to vector<8x1xf32>
    %65 = tpu.reciprocal %64 {approx = true} : vector<8x1xf32> -> vector<8x1xf32>
    %66 = vector.broadcast %65 : vector<8x1xf32> to vector<8x8xf32>
    %67 = arith.mulf %62, %66 : vector<8x8xf32>
    %cst_26 = arith.constant dense<0.000000e+00> : vector<8x32xf32>
    %68 = tpu.matmul %67, %51, %cst_26 {dimension_numbers = #tpu.dot_dimension_numbers<[1], [0], [0], [1], [0, 0, 1, 1], [], []>} : vector<8x8xf32>, vector<8x32xf32>, vector<8x32xf32> -> vector<8x32xf32>
    %69 = vector.extract_strided_slice %30 {offsets = [0, 32], sizes = [8, 32], strides = [1, 1]} : vector<16x128xf32> to vector<8x32xf32>
    %70 = vector.extract_strided_slice %69 {offsets = [0, 16], sizes = [8, 16], strides = [1, 1]} : vector<8x32xf32> to vector<8x16xf32>
    %cst_27 = arith.constant 0.000000e+00 : f32
    %71 = vector.broadcast %cst_27 : f32 to vector<8x16xf32>
    %72 = arith.subf %71, %70 : vector<8x16xf32>
    %73 = vector.extract_strided_slice %69 {offsets = [0, 0], sizes = [8, 16], strides = [1, 1]} : vector<8x32xf32> to vector<8x16xf32>
    %74 = tpu.concatenate %72, %73 in 1 : vector<8x16xf32>, vector<8x16xf32> -> vector<8x32xf32>
    %75 = arith.mulf %69, %0 : vector<8x32xf32>
    %76 = arith.mulf %74, %1 : vector<8x32xf32>
    %77 = arith.addf %75, %76 : vector<8x32xf32>
    %78 = vector.extract_strided_slice %31 {offsets = [0, 32], sizes = [8, 32], strides = [1, 1]} : vector<16x128xf32> to vector<8x32xf32>
    %79 = vector.extract_strided_slice %78 {offsets = [0, 16], sizes = [8, 16], strides = [1, 1]} : vector<8x32xf32> to vector<8x16xf32>
    %cst_28 = arith.constant 0.000000e+00 : f32
    %80 = vector.broadcast %cst_28 : f32 to vector<8x16xf32>
    %81 = arith.subf %80, %79 : vector<8x16xf32>
    %82 = vector.extract_strided_slice %78 {offsets = [0, 0], sizes = [8, 16], strides = [1, 1]} : vector<8x32xf32> to vector<8x16xf32>
    %83 = tpu.concatenate %81, %82 in 1 : vector<8x16xf32>, vector<8x16xf32> -> vector<8x32xf32>
    %84 = arith.mulf %78, %0 : vector<8x32xf32>
    %85 = arith.mulf %83, %1 : vector<8x32xf32>
    %86 = arith.addf %84, %85 : vector<8x32xf32>
    %87 = vector.extract_strided_slice %32 {offsets = [0, 32], sizes = [8, 32], strides = [1, 1]} : vector<16x128xf32> to vector<8x32xf32>
    %88 = tpu.transpose %86, [1, 0] : vector<8x32xf32> -> vector<32x8xf32>
    %cst_29 = arith.constant dense<0.000000e+00> : vector<8x8xf32>
    %89 = tpu.matmul %77, %88, %cst_29 {dimension_numbers = #tpu.dot_dimension_numbers<[1], [0], [0], [1], [0, 0, 1, 1], [], []>} : vector<8x32xf32>, vector<32x8xf32>, vector<8x8xf32> -> vector<8x8xf32>
    %cst_30 = arith.constant 0.176776692 : f32
    %90 = vector.broadcast %cst_30 : f32 to vector<8x8xf32>
    %91 = arith.mulf %89, %90 : vector<8x8xf32>
    %cst_31 = arith.constant -1.000000e+30 : f32
    %92 = vector.broadcast %cst_31 : f32 to vector<8x8xf32>
    %93 = arith.select %4, %91, %92 : vector<8x8xi1>, vector<8x8xf32>
    %cst_32 = arith.constant dense<0xFF800000> : vector<8xf32>
    %94 = vector.multi_reduction <maximumf>, %93, %cst_32 [1] : vector<8x8xf32> to vector<8xf32>
    %95 = vector.shape_cast %94 : vector<8xf32> to vector<8x1xf32>
    %96 = vector.broadcast %95 : vector<8x1xf32> to vector<8x8xf32>
    %97 = arith.subf %93, %96 : vector<8x8xf32>
    %98 = math.exp %97 : vector<8x8xf32>
    %cst_33 = arith.constant dense<0.000000e+00> : vector<8xf32>
    %99 = vector.multi_reduction <add>, %98, %cst_33 [1] : vector<8x8xf32> to vector<8xf32>
    %100 = vector.shape_cast %99 : vector<8xf32> to vector<8x1xf32>
    %101 = tpu.reciprocal %100 {approx = true} : vector<8x1xf32> -> vector<8x1xf32>
    %102 = vector.broadcast %101 : vector<8x1xf32> to vector<8x8xf32>
    %103 = arith.mulf %98, %102 : vector<8x8xf32>
    %cst_34 = arith.constant dense<0.000000e+00> : vector<8x32xf32>
    %104 = tpu.matmul %103, %87, %cst_34 {dimension_numbers = #tpu.dot_dimension_numbers<[1], [0], [0], [1], [0, 0, 1, 1], [], []>} : vector<8x8xf32>, vector<8x32xf32>, vector<8x32xf32> -> vector<8x32xf32>
    %105 = vector.extract_strided_slice %30 {offsets = [0, 64], sizes = [8, 32], strides = [1, 1]} : vector<16x128xf32> to vector<8x32xf32>
    %106 = vector.extract_strided_slice %105 {offsets = [0, 16], sizes = [8, 16], strides = [1, 1]} : vector<8x32xf32> to vector<8x16xf32>
    %cst_35 = arith.constant 0.000000e+00 : f32
    %107 = vector.broadcast %cst_35 : f32 to vector<8x16xf32>
    %108 = arith.subf %107, %106 : vector<8x16xf32>
    %109 = vector.extract_strided_slice %105 {offsets = [0, 0], sizes = [8, 16], strides = [1, 1]} : vector<8x32xf32> to vector<8x16xf32>
    %110 = tpu.concatenate %108, %109 in 1 : vector<8x16xf32>, vector<8x16xf32> -> vector<8x32xf32>
    %111 = arith.mulf %105, %0 : vector<8x32xf32>
    %112 = arith.mulf %110, %1 : vector<8x32xf32>
    %113 = arith.addf %111, %112 : vector<8x32xf32>
    %114 = vector.extract_strided_slice %31 {offsets = [0, 64], sizes = [8, 32], strides = [1, 1]} : vector<16x128xf32> to vector<8x32xf32>
    %115 = vector.extract_strided_slice %114 {offsets = [0, 16], sizes = [8, 16], strides = [1, 1]} : vector<8x32xf32> to vector<8x16xf32>
    %cst_36 = arith.constant 0.000000e+00 : f32
    %116 = vector.broadcast %cst_36 : f32 to vector<8x16xf32>
    %117 = arith.subf %116, %115 : vector<8x16xf32>
    %118 = vector.extract_strided_slice %114 {offsets = [0, 0], sizes = [8, 16], strides = [1, 1]} : vector<8x32xf32> to vector<8x16xf32>
    %119 = tpu.concatenate %117, %118 in 1 : vector<8x16xf32>, vector<8x16xf32> -> vector<8x32xf32>
    %120 = arith.mulf %114, %0 : vector<8x32xf32>
    %121 = arith.mulf %119, %1 : vector<8x32xf32>
    %122 = arith.addf %120, %121 : vector<8x32xf32>
    %123 = vector.extract_strided_slice %32 {offsets = [0, 64], sizes = [8, 32], strides = [1, 1]} : vector<16x128xf32> to vector<8x32xf32>
    %124 = tpu.transpose %122, [1, 0] : vector<8x32xf32> -> vector<32x8xf32>
    %cst_37 = arith.constant dense<0.000000e+00> : vector<8x8xf32>
    %125 = tpu.matmul %113, %124, %cst_37 {dimension_numbers = #tpu.dot_dimension_numbers<[1], [0], [0], [1], [0, 0, 1, 1], [], []>} : vector<8x32xf32>, vector<32x8xf32>, vector<8x8xf32> -> vector<8x8xf32>
    %cst_38 = arith.constant 0.176776692 : f32
    %126 = vector.broadcast %cst_38 : f32 to vector<8x8xf32>
    %127 = arith.mulf %125, %126 : vector<8x8xf32>
    %cst_39 = arith.constant -1.000000e+30 : f32
    %128 = vector.broadcast %cst_39 : f32 to vector<8x8xf32>
    %129 = arith.select %4, %127, %128 : vector<8x8xi1>, vector<8x8xf32>
    %cst_40 = arith.constant dense<0xFF800000> : vector<8xf32>
    %130 = vector.multi_reduction <maximumf>, %129, %cst_40 [1] : vector<8x8xf32> to vector<8xf32>
    %131 = vector.shape_cast %130 : vector<8xf32> to vector<8x1xf32>
    %132 = vector.broadcast %131 : vector<8x1xf32> to vector<8x8xf32>
    %133 = arith.subf %129, %132 : vector<8x8xf32>
    %134 = math.exp %133 : vector<8x8xf32>
    %cst_41 = arith.constant dense<0.000000e+00> : vector<8xf32>
    %135 = vector.multi_reduction <add>, %134, %cst_41 [1] : vector<8x8xf32> to vector<8xf32>
    %136 = vector.shape_cast %135 : vector<8xf32> to vector<8x1xf32>
    %137 = tpu.reciprocal %136 {approx = true} : vector<8x1xf32> -> vector<8x1xf32>
    %138 = vector.broadcast %137 : vector<8x1xf32> to vector<8x8xf32>
    %139 = arith.mulf %134, %138 : vector<8x8xf32>
    %cst_42 = arith.constant dense<0.000000e+00> : vector<8x32xf32>
    %140 = tpu.matmul %139, %123, %cst_42 {dimension_numbers = #tpu.dot_dimension_numbers<[1], [0], [0], [1], [0, 0, 1, 1], [], []>} : vector<8x8xf32>, vector<8x32xf32>, vector<8x32xf32> -> vector<8x32xf32>
    %141 = vector.extract_strided_slice %30 {offsets = [0, 96], sizes = [8, 32], strides = [1, 1]} : vector<16x128xf32> to vector<8x32xf32>
    %142 = vector.extract_strided_slice %141 {offsets = [0, 16], sizes = [8, 16], strides = [1, 1]} : vector<8x32xf32> to vector<8x16xf32>
    %cst_43 = arith.constant 0.000000e+00 : f32
    %143 = vector.broadcast %cst_43 : f32 to vector<8x16xf32>
    %144 = arith.subf %143, %142 : vector<8x16xf32>
    %145 = vector.extract_strided_slice %141 {offsets = [0, 0], sizes = [8, 16], strides = [1, 1]} : vector<8x32xf32> to vector<8x16xf32>
    %146 = tpu.concatenate %144, %145 in 1 : vector<8x16xf32>, vector<8x16xf32> -> vector<8x32xf32>
    %147 = arith.mulf %141, %0 : vector<8x32xf32>
    %148 = arith.mulf %146, %1 : vector<8x32xf32>
    %149 = arith.addf %147, %148 : vector<8x32xf32>
    %150 = vector.extract_strided_slice %31 {offsets = [0, 96], sizes = [8, 32], strides = [1, 1]} : vector<16x128xf32> to vector<8x32xf32>
    %151 = vector.extract_strided_slice %150 {offsets = [0, 16], sizes = [8, 16], strides = [1, 1]} : vector<8x32xf32> to vector<8x16xf32>
    %cst_44 = arith.constant 0.000000e+00 : f32
    %152 = vector.broadcast %cst_44 : f32 to vector<8x16xf32>
    %153 = arith.subf %152, %151 : vector<8x16xf32>
    %154 = vector.extract_strided_slice %150 {offsets = [0, 0], sizes = [8, 16], strides = [1, 1]} : vector<8x32xf32> to vector<8x16xf32>
    %155 = tpu.concatenate %153, %154 in 1 : vector<8x16xf32>, vector<8x16xf32> -> vector<8x32xf32>
    %156 = arith.mulf %150, %0 : vector<8x32xf32>
    %157 = arith.mulf %155, %1 : vector<8x32xf32>
    %158 = arith.addf %156, %157 : vector<8x32xf32>
    %159 = vector.extract_strided_slice %32 {offsets = [0, 96], sizes = [8, 32], strides = [1, 1]} : vector<16x128xf32> to vector<8x32xf32>
    %160 = tpu.transpose %158, [1, 0] : vector<8x32xf32> -> vector<32x8xf32>
    %cst_45 = arith.constant dense<0.000000e+00> : vector<8x8xf32>
    %161 = tpu.matmul %149, %160, %cst_45 {dimension_numbers = #tpu.dot_dimension_numbers<[1], [0], [0], [1], [0, 0, 1, 1], [], []>} : vector<8x32xf32>, vector<32x8xf32>, vector<8x8xf32> -> vector<8x8xf32>
    %cst_46 = arith.constant 0.176776692 : f32
    %162 = vector.broadcast %cst_46 : f32 to vector<8x8xf32>
    %163 = arith.mulf %161, %162 : vector<8x8xf32>
    %cst_47 = arith.constant -1.000000e+30 : f32
    %164 = vector.broadcast %cst_47 : f32 to vector<8x8xf32>
    %165 = arith.select %4, %163, %164 : vector<8x8xi1>, vector<8x8xf32>
    %cst_48 = arith.constant dense<0xFF800000> : vector<8xf32>
    %166 = vector.multi_reduction <maximumf>, %165, %cst_48 [1] : vector<8x8xf32> to vector<8xf32>
    %167 = vector.shape_cast %166 : vector<8xf32> to vector<8x1xf32>
    %168 = vector.broadcast %167 : vector<8x1xf32> to vector<8x8xf32>
    %169 = arith.subf %165, %168 : vector<8x8xf32>
    %170 = math.exp %169 : vector<8x8xf32>
    %cst_49 = arith.constant dense<0.000000e+00> : vector<8xf32>
    %171 = vector.multi_reduction <add>, %170, %cst_49 [1] : vector<8x8xf32> to vector<8xf32>
    %172 = vector.shape_cast %171 : vector<8xf32> to vector<8x1xf32>
    %173 = tpu.reciprocal %172 {approx = true} : vector<8x1xf32> -> vector<8x1xf32>
    %174 = vector.broadcast %173 : vector<8x1xf32> to vector<8x8xf32>
    %175 = arith.mulf %170, %174 : vector<8x8xf32>
    %cst_50 = arith.constant dense<0.000000e+00> : vector<8x32xf32>
    %176 = tpu.matmul %175, %159, %cst_50 {dimension_numbers = #tpu.dot_dimension_numbers<[1], [0], [0], [1], [0, 0, 1, 1], [], []>} : vector<8x8xf32>, vector<8x32xf32>, vector<8x32xf32> -> vector<8x32xf32>
    %177 = tpu.concatenate %68, %104, %140, %176 in 1 : vector<8x32xf32>, vector<8x32xf32>, vector<8x32xf32>, vector<8x32xf32> -> vector<8x128xf32>
    %178 = vector.extract_strided_slice %30 {offsets = [8, 0], sizes = [8, 32], strides = [1, 1]} : vector<16x128xf32> to vector<8x32xf32>
    %179 = vector.extract_strided_slice %178 {offsets = [0, 16], sizes = [8, 16], strides = [1, 1]} : vector<8x32xf32> to vector<8x16xf32>
    %cst_51 = arith.constant 0.000000e+00 : f32
    %180 = vector.broadcast %cst_51 : f32 to vector<8x16xf32>
    %181 = arith.subf %180, %179 : vector<8x16xf32>
    %182 = vector.extract_strided_slice %178 {offsets = [0, 0], sizes = [8, 16], strides = [1, 1]} : vector<8x32xf32> to vector<8x16xf32>
    %183 = tpu.concatenate %181, %182 in 1 : vector<8x16xf32>, vector<8x16xf32> -> vector<8x32xf32>
    %184 = arith.mulf %178, %0 : vector<8x32xf32>
    %185 = arith.mulf %183, %1 : vector<8x32xf32>
    %186 = arith.addf %184, %185 : vector<8x32xf32>
    %187 = vector.extract_strided_slice %31 {offsets = [8, 0], sizes = [8, 32], strides = [1, 1]} : vector<16x128xf32> to vector<8x32xf32>
    %188 = vector.extract_strided_slice %187 {offsets = [0, 16], sizes = [8, 16], strides = [1, 1]} : vector<8x32xf32> to vector<8x16xf32>
    %cst_52 = arith.constant 0.000000e+00 : f32
    %189 = vector.broadcast %cst_52 : f32 to vector<8x16xf32>
    %190 = arith.subf %189, %188 : vector<8x16xf32>
    %191 = vector.extract_strided_slice %187 {offsets = [0, 0], sizes = [8, 16], strides = [1, 1]} : vector<8x32xf32> to vector<8x16xf32>
    %192 = tpu.concatenate %190, %191 in 1 : vector<8x16xf32>, vector<8x16xf32> -> vector<8x32xf32>
    %193 = arith.mulf %187, %0 : vector<8x32xf32>
    %194 = arith.mulf %192, %1 : vector<8x32xf32>
    %195 = arith.addf %193, %194 : vector<8x32xf32>
    %196 = vector.extract_strided_slice %32 {offsets = [8, 0], sizes = [8, 32], strides = [1, 1]} : vector<16x128xf32> to vector<8x32xf32>
    %197 = tpu.transpose %195, [1, 0] : vector<8x32xf32> -> vector<32x8xf32>
    %cst_53 = arith.constant dense<0.000000e+00> : vector<8x8xf32>
    %198 = tpu.matmul %186, %197, %cst_53 {dimension_numbers = #tpu.dot_dimension_numbers<[1], [0], [0], [1], [0, 0, 1, 1], [], []>} : vector<8x32xf32>, vector<32x8xf32>, vector<8x8xf32> -> vector<8x8xf32>
    %cst_54 = arith.constant 0.176776692 : f32
    %199 = vector.broadcast %cst_54 : f32 to vector<8x8xf32>
    %200 = arith.mulf %198, %199 : vector<8x8xf32>
    %cst_55 = arith.constant -1.000000e+30 : f32
    %201 = vector.broadcast %cst_55 : f32 to vector<8x8xf32>
    %202 = arith.select %4, %200, %201 : vector<8x8xi1>, vector<8x8xf32>
    %cst_56 = arith.constant dense<0xFF800000> : vector<8xf32>
    %203 = vector.multi_reduction <maximumf>, %202, %cst_56 [1] : vector<8x8xf32> to vector<8xf32>
    %204 = vector.shape_cast %203 : vector<8xf32> to vector<8x1xf32>
    %205 = vector.broadcast %204 : vector<8x1xf32> to vector<8x8xf32>
    %206 = arith.subf %202, %205 : vector<8x8xf32>
    %207 = math.exp %206 : vector<8x8xf32>
    %cst_57 = arith.constant dense<0.000000e+00> : vector<8xf32>
    %208 = vector.multi_reduction <add>, %207, %cst_57 [1] : vector<8x8xf32> to vector<8xf32>
    %209 = vector.shape_cast %208 : vector<8xf32> to vector<8x1xf32>
    %210 = tpu.reciprocal %209 {approx = true} : vector<8x1xf32> -> vector<8x1xf32>
    %211 = vector.broadcast %210 : vector<8x1xf32> to vector<8x8xf32>
    %212 = arith.mulf %207, %211 : vector<8x8xf32>
    %cst_58 = arith.constant dense<0.000000e+00> : vector<8x32xf32>
    %213 = tpu.matmul %212, %196, %cst_58 {dimension_numbers = #tpu.dot_dimension_numbers<[1], [0], [0], [1], [0, 0, 1, 1], [], []>} : vector<8x8xf32>, vector<8x32xf32>, vector<8x32xf32> -> vector<8x32xf32>
    %214 = vector.extract_strided_slice %30 {offsets = [8, 32], sizes = [8, 32], strides = [1, 1]} : vector<16x128xf32> to vector<8x32xf32>
    %215 = vector.extract_strided_slice %214 {offsets = [0, 16], sizes = [8, 16], strides = [1, 1]} : vector<8x32xf32> to vector<8x16xf32>
    %cst_59 = arith.constant 0.000000e+00 : f32
    %216 = vector.broadcast %cst_59 : f32 to vector<8x16xf32>
    %217 = arith.subf %216, %215 : vector<8x16xf32>
    %218 = vector.extract_strided_slice %214 {offsets = [0, 0], sizes = [8, 16], strides = [1, 1]} : vector<8x32xf32> to vector<8x16xf32>
    %219 = tpu.concatenate %217, %218 in 1 : vector<8x16xf32>, vector<8x16xf32> -> vector<8x32xf32>
    %220 = arith.mulf %214, %0 : vector<8x32xf32>
    %221 = arith.mulf %219, %1 : vector<8x32xf32>
    %222 = arith.addf %220, %221 : vector<8x32xf32>
    %223 = vector.extract_strided_slice %31 {offsets = [8, 32], sizes = [8, 32], strides = [1, 1]} : vector<16x128xf32> to vector<8x32xf32>
    %224 = vector.extract_strided_slice %223 {offsets = [0, 16], sizes = [8, 16], strides = [1, 1]} : vector<8x32xf32> to vector<8x16xf32>
    %cst_60 = arith.constant 0.000000e+00 : f32
    %225 = vector.broadcast %cst_60 : f32 to vector<8x16xf32>
    %226 = arith.subf %225, %224 : vector<8x16xf32>
    %227 = vector.extract_strided_slice %223 {offsets = [0, 0], sizes = [8, 16], strides = [1, 1]} : vector<8x32xf32> to vector<8x16xf32>
    %228 = tpu.concatenate %226, %227 in 1 : vector<8x16xf32>, vector<8x16xf32> -> vector<8x32xf32>
    %229 = arith.mulf %223, %0 : vector<8x32xf32>
    %230 = arith.mulf %228, %1 : vector<8x32xf32>
    %231 = arith.addf %229, %230 : vector<8x32xf32>
    %232 = vector.extract_strided_slice %32 {offsets = [8, 32], sizes = [8, 32], strides = [1, 1]} : vector<16x128xf32> to vector<8x32xf32>
    %233 = tpu.transpose %231, [1, 0] : vector<8x32xf32> -> vector<32x8xf32>
    %cst_61 = arith.constant dense<0.000000e+00> : vector<8x8xf32>
    %234 = tpu.matmul %222, %233, %cst_61 {dimension_numbers = #tpu.dot_dimension_numbers<[1], [0], [0], [1], [0, 0, 1, 1], [], []>} : vector<8x32xf32>, vector<32x8xf32>, vector<8x8xf32> -> vector<8x8xf32>
    %cst_62 = arith.constant 0.176776692 : f32
    %235 = vector.broadcast %cst_62 : f32 to vector<8x8xf32>
    %236 = arith.mulf %234, %235 : vector<8x8xf32>
    %cst_63 = arith.constant -1.000000e+30 : f32
    %237 = vector.broadcast %cst_63 : f32 to vector<8x8xf32>
    %238 = arith.select %4, %236, %237 : vector<8x8xi1>, vector<8x8xf32>
    %cst_64 = arith.constant dense<0xFF800000> : vector<8xf32>
    %239 = vector.multi_reduction <maximumf>, %238, %cst_64 [1] : vector<8x8xf32> to vector<8xf32>
    %240 = vector.shape_cast %239 : vector<8xf32> to vector<8x1xf32>
    %241 = vector.broadcast %240 : vector<8x1xf32> to vector<8x8xf32>
    %242 = arith.subf %238, %241 : vector<8x8xf32>
    %243 = math.exp %242 : vector<8x8xf32>
    %cst_65 = arith.constant dense<0.000000e+00> : vector<8xf32>
    %244 = vector.multi_reduction <add>, %243, %cst_65 [1] : vector<8x8xf32> to vector<8xf32>
    %245 = vector.shape_cast %244 : vector<8xf32> to vector<8x1xf32>
    %246 = tpu.reciprocal %245 {approx = true} : vector<8x1xf32> -> vector<8x1xf32>
    %247 = vector.broadcast %246 : vector<8x1xf32> to vector<8x8xf32>
    %248 = arith.mulf %243, %247 : vector<8x8xf32>
    %cst_66 = arith.constant dense<0.000000e+00> : vector<8x32xf32>
    %249 = tpu.matmul %248, %232, %cst_66 {dimension_numbers = #tpu.dot_dimension_numbers<[1], [0], [0], [1], [0, 0, 1, 1], [], []>} : vector<8x8xf32>, vector<8x32xf32>, vector<8x32xf32> -> vector<8x32xf32>
    %250 = vector.extract_strided_slice %30 {offsets = [8, 64], sizes = [8, 32], strides = [1, 1]} : vector<16x128xf32> to vector<8x32xf32>
    %251 = vector.extract_strided_slice %250 {offsets = [0, 16], sizes = [8, 16], strides = [1, 1]} : vector<8x32xf32> to vector<8x16xf32>
    %cst_67 = arith.constant 0.000000e+00 : f32
    %252 = vector.broadcast %cst_67 : f32 to vector<8x16xf32>
    %253 = arith.subf %252, %251 : vector<8x16xf32>
    %254 = vector.extract_strided_slice %250 {offsets = [0, 0], sizes = [8, 16], strides = [1, 1]} : vector<8x32xf32> to vector<8x16xf32>
    %255 = tpu.concatenate %253, %254 in 1 : vector<8x16xf32>, vector<8x16xf32> -> vector<8x32xf32>
    %256 = arith.mulf %250, %0 : vector<8x32xf32>
    %257 = arith.mulf %255, %1 : vector<8x32xf32>
    %258 = arith.addf %256, %257 : vector<8x32xf32>
    %259 = vector.extract_strided_slice %31 {offsets = [8, 64], sizes = [8, 32], strides = [1, 1]} : vector<16x128xf32> to vector<8x32xf32>
    %260 = vector.extract_strided_slice %259 {offsets = [0, 16], sizes = [8, 16], strides = [1, 1]} : vector<8x32xf32> to vector<8x16xf32>
    %cst_68 = arith.constant 0.000000e+00 : f32
    %261 = vector.broadcast %cst_68 : f32 to vector<8x16xf32>
    %262 = arith.subf %261, %260 : vector<8x16xf32>
    %263 = vector.extract_strided_slice %259 {offsets = [0, 0], sizes = [8, 16], strides = [1, 1]} : vector<8x32xf32> to vector<8x16xf32>
    %264 = tpu.concatenate %262, %263 in 1 : vector<8x16xf32>, vector<8x16xf32> -> vector<8x32xf32>
    %265 = arith.mulf %259, %0 : vector<8x32xf32>
    %266 = arith.mulf %264, %1 : vector<8x32xf32>
    %267 = arith.addf %265, %266 : vector<8x32xf32>
    %268 = vector.extract_strided_slice %32 {offsets = [8, 64], sizes = [8, 32], strides = [1, 1]} : vector<16x128xf32> to vector<8x32xf32>
    %269 = tpu.transpose %267, [1, 0] : vector<8x32xf32> -> vector<32x8xf32>
    %cst_69 = arith.constant dense<0.000000e+00> : vector<8x8xf32>
    %270 = tpu.matmul %258, %269, %cst_69 {dimension_numbers = #tpu.dot_dimension_numbers<[1], [0], [0], [1], [0, 0, 1, 1], [], []>} : vector<8x32xf32>, vector<32x8xf32>, vector<8x8xf32> -> vector<8x8xf32>
    %cst_70 = arith.constant 0.176776692 : f32
    %271 = vector.broadcast %cst_70 : f32 to vector<8x8xf32>
    %272 = arith.mulf %270, %271 : vector<8x8xf32>
    %cst_71 = arith.constant -1.000000e+30 : f32
    %273 = vector.broadcast %cst_71 : f32 to vector<8x8xf32>
    %274 = arith.select %4, %272, %273 : vector<8x8xi1>, vector<8x8xf32>
    %cst_72 = arith.constant dense<0xFF800000> : vector<8xf32>
    %275 = vector.multi_reduction <maximumf>, %274, %cst_72 [1] : vector<8x8xf32> to vector<8xf32>
    %276 = vector.shape_cast %275 : vector<8xf32> to vector<8x1xf32>
    %277 = vector.broadcast %276 : vector<8x1xf32> to vector<8x8xf32>
    %278 = arith.subf %274, %277 : vector<8x8xf32>
    %279 = math.exp %278 : vector<8x8xf32>
    %cst_73 = arith.constant dense<0.000000e+00> : vector<8xf32>
    %280 = vector.multi_reduction <add>, %279, %cst_73 [1] : vector<8x8xf32> to vector<8xf32>
    %281 = vector.shape_cast %280 : vector<8xf32> to vector<8x1xf32>
    %282 = tpu.reciprocal %281 {approx = true} : vector<8x1xf32> -> vector<8x1xf32>
    %283 = vector.broadcast %282 : vector<8x1xf32> to vector<8x8xf32>
    %284 = arith.mulf %279, %283 : vector<8x8xf32>
    %cst_74 = arith.constant dense<0.000000e+00> : vector<8x32xf32>
    %285 = tpu.matmul %284, %268, %cst_74 {dimension_numbers = #tpu.dot_dimension_numbers<[1], [0], [0], [1], [0, 0, 1, 1], [], []>} : vector<8x8xf32>, vector<8x32xf32>, vector<8x32xf32> -> vector<8x32xf32>
    %286 = vector.extract_strided_slice %30 {offsets = [8, 96], sizes = [8, 32], strides = [1, 1]} : vector<16x128xf32> to vector<8x32xf32>
    %287 = vector.extract_strided_slice %286 {offsets = [0, 16], sizes = [8, 16], strides = [1, 1]} : vector<8x32xf32> to vector<8x16xf32>
    %cst_75 = arith.constant 0.000000e+00 : f32
    %288 = vector.broadcast %cst_75 : f32 to vector<8x16xf32>
    %289 = arith.subf %288, %287 : vector<8x16xf32>
    %290 = vector.extract_strided_slice %286 {offsets = [0, 0], sizes = [8, 16], strides = [1, 1]} : vector<8x32xf32> to vector<8x16xf32>
    %291 = tpu.concatenate %289, %290 in 1 : vector<8x16xf32>, vector<8x16xf32> -> vector<8x32xf32>
    %292 = arith.mulf %286, %0 : vector<8x32xf32>
    %293 = arith.mulf %291, %1 : vector<8x32xf32>
    %294 = arith.addf %292, %293 : vector<8x32xf32>
    %295 = vector.extract_strided_slice %31 {offsets = [8, 96], sizes = [8, 32], strides = [1, 1]} : vector<16x128xf32> to vector<8x32xf32>
    %296 = vector.extract_strided_slice %295 {offsets = [0, 16], sizes = [8, 16], strides = [1, 1]} : vector<8x32xf32> to vector<8x16xf32>
    %cst_76 = arith.constant 0.000000e+00 : f32
    %297 = vector.broadcast %cst_76 : f32 to vector<8x16xf32>
    %298 = arith.subf %297, %296 : vector<8x16xf32>
    %299 = vector.extract_strided_slice %295 {offsets = [0, 0], sizes = [8, 16], strides = [1, 1]} : vector<8x32xf32> to vector<8x16xf32>
    %300 = tpu.concatenate %298, %299 in 1 : vector<8x16xf32>, vector<8x16xf32> -> vector<8x32xf32>
    %301 = arith.mulf %295, %0 : vector<8x32xf32>
    %302 = arith.mulf %300, %1 : vector<8x32xf32>
    %303 = arith.addf %301, %302 : vector<8x32xf32>
    %304 = vector.extract_strided_slice %32 {offsets = [8, 96], sizes = [8, 32], strides = [1, 1]} : vector<16x128xf32> to vector<8x32xf32>
    %305 = tpu.transpose %303, [1, 0] : vector<8x32xf32> -> vector<32x8xf32>
    %cst_77 = arith.constant dense<0.000000e+00> : vector<8x8xf32>
    %306 = tpu.matmul %294, %305, %cst_77 {dimension_numbers = #tpu.dot_dimension_numbers<[1], [0], [0], [1], [0, 0, 1, 1], [], []>} : vector<8x32xf32>, vector<32x8xf32>, vector<8x8xf32> -> vector<8x8xf32>
    %cst_78 = arith.constant 0.176776692 : f32
    %307 = vector.broadcast %cst_78 : f32 to vector<8x8xf32>
    %308 = arith.mulf %306, %307 : vector<8x8xf32>
    %cst_79 = arith.constant -1.000000e+30 : f32
    %309 = vector.broadcast %cst_79 : f32 to vector<8x8xf32>
    %310 = arith.select %4, %308, %309 : vector<8x8xi1>, vector<8x8xf32>
    %cst_80 = arith.constant dense<0xFF800000> : vector<8xf32>
    %311 = vector.multi_reduction <maximumf>, %310, %cst_80 [1] : vector<8x8xf32> to vector<8xf32>
    %312 = vector.shape_cast %311 : vector<8xf32> to vector<8x1xf32>
    %313 = vector.broadcast %312 : vector<8x1xf32> to vector<8x8xf32>
    %314 = arith.subf %310, %313 : vector<8x8xf32>
    %315 = math.exp %314 : vector<8x8xf32>
    %cst_81 = arith.constant dense<0.000000e+00> : vector<8xf32>
    %316 = vector.multi_reduction <add>, %315, %cst_81 [1] : vector<8x8xf32> to vector<8xf32>
    %317 = vector.shape_cast %316 : vector<8xf32> to vector<8x1xf32>
    %318 = tpu.reciprocal %317 {approx = true} : vector<8x1xf32> -> vector<8x1xf32>
    %319 = vector.broadcast %318 : vector<8x1xf32> to vector<8x8xf32>
    %320 = arith.mulf %315, %319 : vector<8x8xf32>
    %cst_82 = arith.constant dense<0.000000e+00> : vector<8x32xf32>
    %321 = tpu.matmul %320, %304, %cst_82 {dimension_numbers = #tpu.dot_dimension_numbers<[1], [0], [0], [1], [0, 0, 1, 1], [], []>} : vector<8x8xf32>, vector<8x32xf32>, vector<8x32xf32> -> vector<8x32xf32>
    %322 = tpu.concatenate %213, %249, %285, %321 in 1 : vector<8x32xf32>, vector<8x32xf32>, vector<8x32xf32>, vector<8x32xf32> -> vector<8x128xf32>
    %323 = tpu.concatenate %177, %322 in 0 : vector<8x128xf32>, vector<8x128xf32> -> vector<16x128xf32>
    %324 = arith.truncf %323 : vector<16x128xf32> to vector<16x128xbf16>
    %c0_83 = arith.constant 0 : index
    %c0_84 = arith.constant 0 : index
    %c0_85 = arith.constant 0 : index
    %325 = vector.load %arg7[%c0_83, %c0_84, %c0_85] : memref<2x128x128xbf16, #tpu.memory_space<vmem>>, vector<1x128x128xbf16>
    %326 = vector.shape_cast %325 : vector<1x128x128xbf16> to vector<128x128xbf16>
    %cst_86 = arith.constant dense<0.000000e+00> : vector<16x128xf32>
    %327 = tpu.matmul %324, %326, %cst_86 {dimension_numbers = #tpu.dot_dimension_numbers<[1], [0], [0], [1], [0, 0, 1, 1], [], []>} : vector<16x128xbf16>, vector<128x128xbf16>, vector<16x128xf32> -> vector<16x128xf32>
    %328 = arith.addf %11, %327 : vector<16x128xf32>
    %c0_87 = arith.constant 0 : index
    %c0_88 = arith.constant 0 : index
    %c0_89 = arith.constant 0 : index
    %329 = vector.load %arg8[%c0_87, %c0_88, %c0_89] : memref<2x1x128xf32, #tpu.memory_space<vmem>>, vector<1x1x128xf32>
    %330 = vector.shape_cast %329 : vector<1x1x128xf32> to vector<1x128xf32>
    %331 = arith.mulf %328, %328 : vector<16x128xf32>
    %cst_90 = arith.constant dense<0.000000e+00> : vector<16xf32>
    %332 = vector.multi_reduction <add>, %331, %cst_90 [1] : vector<16x128xf32> to vector<16xf32>
    %333 = vector.shape_cast %332 : vector<16xf32> to vector<16x1xf32>
    %cst_91 = arith.constant 1.280000e+02 : f32
    %334 = vector.broadcast %cst_91 : f32 to vector<16x1xf32>
    %335 = arith.divf %333, %334 : vector<16x1xf32>
    %cst_92 = arith.constant 9.99999974E-6 : f32
    %336 = vector.broadcast %cst_92 : f32 to vector<16x1xf32>
    %337 = arith.addf %335, %336 : vector<16x1xf32>
    %338 = math.rsqrt %337 : vector<16x1xf32>
    %339 = vector.broadcast %338 : vector<16x1xf32> to vector<16x128xf32>
    %340 = arith.mulf %328, %339 : vector<16x128xf32>
    %341 = vector.broadcast %330 : vector<1x128xf32> to vector<16x128xf32>
    %342 = arith.mulf %340, %341 : vector<16x128xf32>
    %343 = arith.truncf %342 : vector<16x128xf32> to vector<16x128xbf16>
    %c0_93 = arith.constant 0 : index
    %c0_94 = arith.constant 0 : index
    %c0_95 = arith.constant 0 : index
    %344 = vector.load %arg9[%c0_93, %c0_94, %c0_95] : memref<2x128x256xbf16, #tpu.memory_space<vmem>>, vector<1x128x256xbf16>
    %345 = vector.shape_cast %344 : vector<1x128x256xbf16> to vector<128x256xbf16>
    %cst_96 = arith.constant dense<0.000000e+00> : vector<16x256xf32>
    %346 = tpu.matmul %343, %345, %cst_96 {dimension_numbers = #tpu.dot_dimension_numbers<[1], [0], [0], [1], [0, 0, 1, 1], [], []>} : vector<16x128xbf16>, vector<128x256xbf16>, vector<16x256xf32> -> vector<16x256xf32>
    %c0_97 = arith.constant 0 : index
    %c0_98 = arith.constant 0 : index
    %c0_99 = arith.constant 0 : index
    %347 = vector.load %arg10[%c0_97, %c0_98, %c0_99] : memref<2x128x256xbf16, #tpu.memory_space<vmem>>, vector<1x128x256xbf16>
    %348 = vector.shape_cast %347 : vector<1x128x256xbf16> to vector<128x256xbf16>
    %cst_100 = arith.constant dense<0.000000e+00> : vector<16x256xf32>
    %349 = tpu.matmul %343, %348, %cst_100 {dimension_numbers = #tpu.dot_dimension_numbers<[1], [0], [0], [1], [0, 0, 1, 1], [], []>} : vector<16x128xbf16>, vector<128x256xbf16>, vector<16x256xf32> -> vector<16x256xf32>
    %350 = arith.negf %346 : vector<16x256xf32>
    %351 = math.exp %350 : vector<16x256xf32>
    %cst_101 = arith.constant 1.000000e+00 : f32
    %352 = vector.broadcast %cst_101 : f32 to vector<16x256xf32>
    %353 = arith.addf %352, %351 : vector<16x256xf32>
    %354 = arith.divf %352, %353 : vector<16x256xf32>
    %355 = arith.mulf %346, %354 : vector<16x256xf32>
    %356 = arith.mulf %355, %349 : vector<16x256xf32>
    %357 = arith.truncf %356 : vector<16x256xf32> to vector<16x256xbf16>
    %c0_102 = arith.constant 0 : index
    %c0_103 = arith.constant 0 : index
    %c0_104 = arith.constant 0 : index
    %358 = vector.load %arg11[%c0_102, %c0_103, %c0_104] : memref<2x256x128xbf16, #tpu.memory_space<vmem>>, vector<1x256x128xbf16>
    %359 = vector.shape_cast %358 : vector<1x256x128xbf16> to vector<256x128xbf16>
    %cst_105 = arith.constant dense<0.000000e+00> : vector<16x128xf32>
    %360 = tpu.matmul %357, %359, %cst_105 {dimension_numbers = #tpu.dot_dimension_numbers<[1], [0], [0], [1], [0, 0, 1, 1], [], []>} : vector<16x256xbf16>, vector<256x128xbf16>, vector<16x128xf32> -> vector<16x128xf32>
    %361 = arith.addf %328, %360 : vector<16x128xf32>
    %c1 = arith.constant 1 : index
    %c0_106 = arith.constant 0 : index
    %c0_107 = arith.constant 0 : index
    %362 = vector.load %arg5[%c1, %c0_106, %c0_107] : memref<2x1x128xf32, #tpu.memory_space<vmem>>, vector<1x1x128xf32>
    %363 = vector.shape_cast %362 : vector<1x1x128xf32> to vector<1x128xf32>
    %364 = arith.mulf %361, %361 : vector<16x128xf32>
    %cst_108 = arith.constant dense<0.000000e+00> : vector<16xf32>
    %365 = vector.multi_reduction <add>, %364, %cst_108 [1] : vector<16x128xf32> to vector<16xf32>
    %366 = vector.shape_cast %365 : vector<16xf32> to vector<16x1xf32>
    %cst_109 = arith.constant 1.280000e+02 : f32
    %367 = vector.broadcast %cst_109 : f32 to vector<16x1xf32>
    %368 = arith.divf %366, %367 : vector<16x1xf32>
    %cst_110 = arith.constant 9.99999974E-6 : f32
    %369 = vector.broadcast %cst_110 : f32 to vector<16x1xf32>
    %370 = arith.addf %368, %369 : vector<16x1xf32>
    %371 = math.rsqrt %370 : vector<16x1xf32>
    %372 = vector.broadcast %371 : vector<16x1xf32> to vector<16x128xf32>
    %373 = arith.mulf %361, %372 : vector<16x128xf32>
    %374 = vector.broadcast %363 : vector<1x128xf32> to vector<16x128xf32>
    %375 = arith.mulf %373, %374 : vector<16x128xf32>
    %376 = arith.truncf %375 : vector<16x128xf32> to vector<16x128xbf16>
    %c1_111 = arith.constant 1 : index
    %c0_112 = arith.constant 0 : index
    %c0_113 = arith.constant 0 : index
    %377 = vector.load %arg6[%c1_111, %c0_112, %c0_113] : memref<2x128x384xbf16, #tpu.memory_space<vmem>>, vector<1x128x384xbf16>
    %378 = vector.shape_cast %377 : vector<1x128x384xbf16> to vector<128x384xbf16>
    %cst_114 = arith.constant dense<0.000000e+00> : vector<16x384xf32>
    %379 = tpu.matmul %376, %378, %cst_114 {dimension_numbers = #tpu.dot_dimension_numbers<[1], [0], [0], [1], [0, 0, 1, 1], [], []>} : vector<16x128xbf16>, vector<128x384xbf16>, vector<16x384xf32> -> vector<16x384xf32>
    %380 = vector.extract_strided_slice %379 {offsets = [0, 0], sizes = [16, 128], strides = [1, 1]} : vector<16x384xf32> to vector<16x128xf32>
    %381 = vector.extract_strided_slice %379 {offsets = [0, 128], sizes = [16, 128], strides = [1, 1]} : vector<16x384xf32> to vector<16x128xf32>
    %382 = vector.extract_strided_slice %379 {offsets = [0, 256], sizes = [16, 128], strides = [1, 1]} : vector<16x384xf32> to vector<16x128xf32>
    %383 = vector.extract_strided_slice %380 {offsets = [0, 0], sizes = [8, 32], strides = [1, 1]} : vector<16x128xf32> to vector<8x32xf32>
    %384 = vector.extract_strided_slice %383 {offsets = [0, 16], sizes = [8, 16], strides = [1, 1]} : vector<8x32xf32> to vector<8x16xf32>
    %cst_115 = arith.constant 0.000000e+00 : f32
    %385 = vector.broadcast %cst_115 : f32 to vector<8x16xf32>
    %386 = arith.subf %385, %384 : vector<8x16xf32>
    %387 = vector.extract_strided_slice %383 {offsets = [0, 0], sizes = [8, 16], strides = [1, 1]} : vector<8x32xf32> to vector<8x16xf32>
    %388 = tpu.concatenate %386, %387 in 1 : vector<8x16xf32>, vector<8x16xf32> -> vector<8x32xf32>
    %389 = arith.mulf %383, %0 : vector<8x32xf32>
    %390 = arith.mulf %388, %1 : vector<8x32xf32>
    %391 = arith.addf %389, %390 : vector<8x32xf32>
    %392 = vector.extract_strided_slice %381 {offsets = [0, 0], sizes = [8, 32], strides = [1, 1]} : vector<16x128xf32> to vector<8x32xf32>
    %393 = vector.extract_strided_slice %392 {offsets = [0, 16], sizes = [8, 16], strides = [1, 1]} : vector<8x32xf32> to vector<8x16xf32>
    %cst_116 = arith.constant 0.000000e+00 : f32
    %394 = vector.broadcast %cst_116 : f32 to vector<8x16xf32>
    %395 = arith.subf %394, %393 : vector<8x16xf32>
    %396 = vector.extract_strided_slice %392 {offsets = [0, 0], sizes = [8, 16], strides = [1, 1]} : vector<8x32xf32> to vector<8x16xf32>
    %397 = tpu.concatenate %395, %396 in 1 : vector<8x16xf32>, vector<8x16xf32> -> vector<8x32xf32>
    %398 = arith.mulf %392, %0 : vector<8x32xf32>
    %399 = arith.mulf %397, %1 : vector<8x32xf32>
    %400 = arith.addf %398, %399 : vector<8x32xf32>
    %401 = vector.extract_strided_slice %382 {offsets = [0, 0], sizes = [8, 32], strides = [1, 1]} : vector<16x128xf32> to vector<8x32xf32>
    %402 = tpu.transpose %400, [1, 0] : vector<8x32xf32> -> vector<32x8xf32>
    %cst_117 = arith.constant dense<0.000000e+00> : vector<8x8xf32>
    %403 = tpu.matmul %391, %402, %cst_117 {dimension_numbers = #tpu.dot_dimension_numbers<[1], [0], [0], [1], [0, 0, 1, 1], [], []>} : vector<8x32xf32>, vector<32x8xf32>, vector<8x8xf32> -> vector<8x8xf32>
    %cst_118 = arith.constant 0.176776692 : f32
    %404 = vector.broadcast %cst_118 : f32 to vector<8x8xf32>
    %405 = arith.mulf %403, %404 : vector<8x8xf32>
    %cst_119 = arith.constant -1.000000e+30 : f32
    %406 = vector.broadcast %cst_119 : f32 to vector<8x8xf32>
    %407 = arith.select %4, %405, %406 : vector<8x8xi1>, vector<8x8xf32>
    %cst_120 = arith.constant dense<0xFF800000> : vector<8xf32>
    %408 = vector.multi_reduction <maximumf>, %407, %cst_120 [1] : vector<8x8xf32> to vector<8xf32>
    %409 = vector.shape_cast %408 : vector<8xf32> to vector<8x1xf32>
    %410 = vector.broadcast %409 : vector<8x1xf32> to vector<8x8xf32>
    %411 = arith.subf %407, %410 : vector<8x8xf32>
    %412 = math.exp %411 : vector<8x8xf32>
    %cst_121 = arith.constant dense<0.000000e+00> : vector<8xf32>
    %413 = vector.multi_reduction <add>, %412, %cst_121 [1] : vector<8x8xf32> to vector<8xf32>
    %414 = vector.shape_cast %413 : vector<8xf32> to vector<8x1xf32>
    %415 = tpu.reciprocal %414 {approx = true} : vector<8x1xf32> -> vector<8x1xf32>
    %416 = vector.broadcast %415 : vector<8x1xf32> to vector<8x8xf32>
    %417 = arith.mulf %412, %416 : vector<8x8xf32>
    %cst_122 = arith.constant dense<0.000000e+00> : vector<8x32xf32>
    %418 = tpu.matmul %417, %401, %cst_122 {dimension_numbers = #tpu.dot_dimension_numbers<[1], [0], [0], [1], [0, 0, 1, 1], [], []>} : vector<8x8xf32>, vector<8x32xf32>, vector<8x32xf32> -> vector<8x32xf32>
    %419 = vector.extract_strided_slice %380 {offsets = [0, 32], sizes = [8, 32], strides = [1, 1]} : vector<16x128xf32> to vector<8x32xf32>
    %420 = vector.extract_strided_slice %419 {offsets = [0, 16], sizes = [8, 16], strides = [1, 1]} : vector<8x32xf32> to vector<8x16xf32>
    %cst_123 = arith.constant 0.000000e+00 : f32
    %421 = vector.broadcast %cst_123 : f32 to vector<8x16xf32>
    %422 = arith.subf %421, %420 : vector<8x16xf32>
    %423 = vector.extract_strided_slice %419 {offsets = [0, 0], sizes = [8, 16], strides = [1, 1]} : vector<8x32xf32> to vector<8x16xf32>
    %424 = tpu.concatenate %422, %423 in 1 : vector<8x16xf32>, vector<8x16xf32> -> vector<8x32xf32>
    %425 = arith.mulf %419, %0 : vector<8x32xf32>
    %426 = arith.mulf %424, %1 : vector<8x32xf32>
    %427 = arith.addf %425, %426 : vector<8x32xf32>
    %428 = vector.extract_strided_slice %381 {offsets = [0, 32], sizes = [8, 32], strides = [1, 1]} : vector<16x128xf32> to vector<8x32xf32>
    %429 = vector.extract_strided_slice %428 {offsets = [0, 16], sizes = [8, 16], strides = [1, 1]} : vector<8x32xf32> to vector<8x16xf32>
    %cst_124 = arith.constant 0.000000e+00 : f32
    %430 = vector.broadcast %cst_124 : f32 to vector<8x16xf32>
    %431 = arith.subf %430, %429 : vector<8x16xf32>
    %432 = vector.extract_strided_slice %428 {offsets = [0, 0], sizes = [8, 16], strides = [1, 1]} : vector<8x32xf32> to vector<8x16xf32>
    %433 = tpu.concatenate %431, %432 in 1 : vector<8x16xf32>, vector<8x16xf32> -> vector<8x32xf32>
    %434 = arith.mulf %428, %0 : vector<8x32xf32>
    %435 = arith.mulf %433, %1 : vector<8x32xf32>
    %436 = arith.addf %434, %435 : vector<8x32xf32>
    %437 = vector.extract_strided_slice %382 {offsets = [0, 32], sizes = [8, 32], strides = [1, 1]} : vector<16x128xf32> to vector<8x32xf32>
    %438 = tpu.transpose %436, [1, 0] : vector<8x32xf32> -> vector<32x8xf32>
    %cst_125 = arith.constant dense<0.000000e+00> : vector<8x8xf32>
    %439 = tpu.matmul %427, %438, %cst_125 {dimension_numbers = #tpu.dot_dimension_numbers<[1], [0], [0], [1], [0, 0, 1, 1], [], []>} : vector<8x32xf32>, vector<32x8xf32>, vector<8x8xf32> -> vector<8x8xf32>
    %cst_126 = arith.constant 0.176776692 : f32
    %440 = vector.broadcast %cst_126 : f32 to vector<8x8xf32>
    %441 = arith.mulf %439, %440 : vector<8x8xf32>
    %cst_127 = arith.constant -1.000000e+30 : f32
    %442 = vector.broadcast %cst_127 : f32 to vector<8x8xf32>
    %443 = arith.select %4, %441, %442 : vector<8x8xi1>, vector<8x8xf32>
    %cst_128 = arith.constant dense<0xFF800000> : vector<8xf32>
    %444 = vector.multi_reduction <maximumf>, %443, %cst_128 [1] : vector<8x8xf32> to vector<8xf32>
    %445 = vector.shape_cast %444 : vector<8xf32> to vector<8x1xf32>
    %446 = vector.broadcast %445 : vector<8x1xf32> to vector<8x8xf32>
    %447 = arith.subf %443, %446 : vector<8x8xf32>
    %448 = math.exp %447 : vector<8x8xf32>
    %cst_129 = arith.constant dense<0.000000e+00> : vector<8xf32>
    %449 = vector.multi_reduction <add>, %448, %cst_129 [1] : vector<8x8xf32> to vector<8xf32>
    %450 = vector.shape_cast %449 : vector<8xf32> to vector<8x1xf32>
    %451 = tpu.reciprocal %450 {approx = true} : vector<8x1xf32> -> vector<8x1xf32>
    %452 = vector.broadcast %451 : vector<8x1xf32> to vector<8x8xf32>
    %453 = arith.mulf %448, %452 : vector<8x8xf32>
    %cst_130 = arith.constant dense<0.000000e+00> : vector<8x32xf32>
    %454 = tpu.matmul %453, %437, %cst_130 {dimension_numbers = #tpu.dot_dimension_numbers<[1], [0], [0], [1], [0, 0, 1, 1], [], []>} : vector<8x8xf32>, vector<8x32xf32>, vector<8x32xf32> -> vector<8x32xf32>
    %455 = vector.extract_strided_slice %380 {offsets = [0, 64], sizes = [8, 32], strides = [1, 1]} : vector<16x128xf32> to vector<8x32xf32>
    %456 = vector.extract_strided_slice %455 {offsets = [0, 16], sizes = [8, 16], strides = [1, 1]} : vector<8x32xf32> to vector<8x16xf32>
    %cst_131 = arith.constant 0.000000e+00 : f32
    %457 = vector.broadcast %cst_131 : f32 to vector<8x16xf32>
    %458 = arith.subf %457, %456 : vector<8x16xf32>
    %459 = vector.extract_strided_slice %455 {offsets = [0, 0], sizes = [8, 16], strides = [1, 1]} : vector<8x32xf32> to vector<8x16xf32>
    %460 = tpu.concatenate %458, %459 in 1 : vector<8x16xf32>, vector<8x16xf32> -> vector<8x32xf32>
    %461 = arith.mulf %455, %0 : vector<8x32xf32>
    %462 = arith.mulf %460, %1 : vector<8x32xf32>
    %463 = arith.addf %461, %462 : vector<8x32xf32>
    %464 = vector.extract_strided_slice %381 {offsets = [0, 64], sizes = [8, 32], strides = [1, 1]} : vector<16x128xf32> to vector<8x32xf32>
    %465 = vector.extract_strided_slice %464 {offsets = [0, 16], sizes = [8, 16], strides = [1, 1]} : vector<8x32xf32> to vector<8x16xf32>
    %cst_132 = arith.constant 0.000000e+00 : f32
    %466 = vector.broadcast %cst_132 : f32 to vector<8x16xf32>
    %467 = arith.subf %466, %465 : vector<8x16xf32>
    %468 = vector.extract_strided_slice %464 {offsets = [0, 0], sizes = [8, 16], strides = [1, 1]} : vector<8x32xf32> to vector<8x16xf32>
    %469 = tpu.concatenate %467, %468 in 1 : vector<8x16xf32>, vector<8x16xf32> -> vector<8x32xf32>
    %470 = arith.mulf %464, %0 : vector<8x32xf32>
    %471 = arith.mulf %469, %1 : vector<8x32xf32>
    %472 = arith.addf %470, %471 : vector<8x32xf32>
    %473 = vector.extract_strided_slice %382 {offsets = [0, 64], sizes = [8, 32], strides = [1, 1]} : vector<16x128xf32> to vector<8x32xf32>
    %474 = tpu.transpose %472, [1, 0] : vector<8x32xf32> -> vector<32x8xf32>
    %cst_133 = arith.constant dense<0.000000e+00> : vector<8x8xf32>
    %475 = tpu.matmul %463, %474, %cst_133 {dimension_numbers = #tpu.dot_dimension_numbers<[1], [0], [0], [1], [0, 0, 1, 1], [], []>} : vector<8x32xf32>, vector<32x8xf32>, vector<8x8xf32> -> vector<8x8xf32>
    %cst_134 = arith.constant 0.176776692 : f32
    %476 = vector.broadcast %cst_134 : f32 to vector<8x8xf32>
    %477 = arith.mulf %475, %476 : vector<8x8xf32>
    %cst_135 = arith.constant -1.000000e+30 : f32
    %478 = vector.broadcast %cst_135 : f32 to vector<8x8xf32>
    %479 = arith.select %4, %477, %478 : vector<8x8xi1>, vector<8x8xf32>
    %cst_136 = arith.constant dense<0xFF800000> : vector<8xf32>
    %480 = vector.multi_reduction <maximumf>, %479, %cst_136 [1] : vector<8x8xf32> to vector<8xf32>
    %481 = vector.shape_cast %480 : vector<8xf32> to vector<8x1xf32>
    %482 = vector.broadcast %481 : vector<8x1xf32> to vector<8x8xf32>
    %483 = arith.subf %479, %482 : vector<8x8xf32>
    %484 = math.exp %483 : vector<8x8xf32>
    %cst_137 = arith.constant dense<0.000000e+00> : vector<8xf32>
    %485 = vector.multi_reduction <add>, %484, %cst_137 [1] : vector<8x8xf32> to vector<8xf32>
    %486 = vector.shape_cast %485 : vector<8xf32> to vector<8x1xf32>
    %487 = tpu.reciprocal %486 {approx = true} : vector<8x1xf32> -> vector<8x1xf32>
    %488 = vector.broadcast %487 : vector<8x1xf32> to vector<8x8xf32>
    %489 = arith.mulf %484, %488 : vector<8x8xf32>
    %cst_138 = arith.constant dense<0.000000e+00> : vector<8x32xf32>
    %490 = tpu.matmul %489, %473, %cst_138 {dimension_numbers = #tpu.dot_dimension_numbers<[1], [0], [0], [1], [0, 0, 1, 1], [], []>} : vector<8x8xf32>, vector<8x32xf32>, vector<8x32xf32> -> vector<8x32xf32>
    %491 = vector.extract_strided_slice %380 {offsets = [0, 96], sizes = [8, 32], strides = [1, 1]} : vector<16x128xf32> to vector<8x32xf32>
    %492 = vector.extract_strided_slice %491 {offsets = [0, 16], sizes = [8, 16], strides = [1, 1]} : vector<8x32xf32> to vector<8x16xf32>
    %cst_139 = arith.constant 0.000000e+00 : f32
    %493 = vector.broadcast %cst_139 : f32 to vector<8x16xf32>
    %494 = arith.subf %493, %492 : vector<8x16xf32>
    %495 = vector.extract_strided_slice %491 {offsets = [0, 0], sizes = [8, 16], strides = [1, 1]} : vector<8x32xf32> to vector<8x16xf32>
    %496 = tpu.concatenate %494, %495 in 1 : vector<8x16xf32>, vector<8x16xf32> -> vector<8x32xf32>
    %497 = arith.mulf %491, %0 : vector<8x32xf32>
    %498 = arith.mulf %496, %1 : vector<8x32xf32>
    %499 = arith.addf %497, %498 : vector<8x32xf32>
    %500 = vector.extract_strided_slice %381 {offsets = [0, 96], sizes = [8, 32], strides = [1, 1]} : vector<16x128xf32> to vector<8x32xf32>
    %501 = vector.extract_strided_slice %500 {offsets = [0, 16], sizes = [8, 16], strides = [1, 1]} : vector<8x32xf32> to vector<8x16xf32>
    %cst_140 = arith.constant 0.000000e+00 : f32
    %502 = vector.broadcast %cst_140 : f32 to vector<8x16xf32>
    %503 = arith.subf %502, %501 : vector<8x16xf32>
    %504 = vector.extract_strided_slice %500 {offsets = [0, 0], sizes = [8, 16], strides = [1, 1]} : vector<8x32xf32> to vector<8x16xf32>
    %505 = tpu.concatenate %503, %504 in 1 : vector<8x16xf32>, vector<8x16xf32> -> vector<8x32xf32>
    %506 = arith.mulf %500, %0 : vector<8x32xf32>
    %507 = arith.mulf %505, %1 : vector<8x32xf32>
    %508 = arith.addf %506, %507 : vector<8x32xf32>
    %509 = vector.extract_strided_slice %382 {offsets = [0, 96], sizes = [8, 32], strides = [1, 1]} : vector<16x128xf32> to vector<8x32xf32>
    %510 = tpu.transpose %508, [1, 0] : vector<8x32xf32> -> vector<32x8xf32>
    %cst_141 = arith.constant dense<0.000000e+00> : vector<8x8xf32>
    %511 = tpu.matmul %499, %510, %cst_141 {dimension_numbers = #tpu.dot_dimension_numbers<[1], [0], [0], [1], [0, 0, 1, 1], [], []>} : vector<8x32xf32>, vector<32x8xf32>, vector<8x8xf32> -> vector<8x8xf32>
    %cst_142 = arith.constant 0.176776692 : f32
    %512 = vector.broadcast %cst_142 : f32 to vector<8x8xf32>
    %513 = arith.mulf %511, %512 : vector<8x8xf32>
    %cst_143 = arith.constant -1.000000e+30 : f32
    %514 = vector.broadcast %cst_143 : f32 to vector<8x8xf32>
    %515 = arith.select %4, %513, %514 : vector<8x8xi1>, vector<8x8xf32>
    %cst_144 = arith.constant dense<0xFF800000> : vector<8xf32>
    %516 = vector.multi_reduction <maximumf>, %515, %cst_144 [1] : vector<8x8xf32> to vector<8xf32>
    %517 = vector.shape_cast %516 : vector<8xf32> to vector<8x1xf32>
    %518 = vector.broadcast %517 : vector<8x1xf32> to vector<8x8xf32>
    %519 = arith.subf %515, %518 : vector<8x8xf32>
    %520 = math.exp %519 : vector<8x8xf32>
    %cst_145 = arith.constant dense<0.000000e+00> : vector<8xf32>
    %521 = vector.multi_reduction <add>, %520, %cst_145 [1] : vector<8x8xf32> to vector<8xf32>
    %522 = vector.shape_cast %521 : vector<8xf32> to vector<8x1xf32>
    %523 = tpu.reciprocal %522 {approx = true} : vector<8x1xf32> -> vector<8x1xf32>
    %524 = vector.broadcast %523 : vector<8x1xf32> to vector<8x8xf32>
    %525 = arith.mulf %520, %524 : vector<8x8xf32>
    %cst_146 = arith.constant dense<0.000000e+00> : vector<8x32xf32>
    %526 = tpu.matmul %525, %509, %cst_146 {dimension_numbers = #tpu.dot_dimension_numbers<[1], [0], [0], [1], [0, 0, 1, 1], [], []>} : vector<8x8xf32>, vector<8x32xf32>, vector<8x32xf32> -> vector<8x32xf32>
    %527 = tpu.concatenate %418, %454, %490, %526 in 1 : vector<8x32xf32>, vector<8x32xf32>, vector<8x32xf32>, vector<8x32xf32> -> vector<8x128xf32>
    %528 = vector.extract_strided_slice %380 {offsets = [8, 0], sizes = [8, 32], strides = [1, 1]} : vector<16x128xf32> to vector<8x32xf32>
    %529 = vector.extract_strided_slice %528 {offsets = [0, 16], sizes = [8, 16], strides = [1, 1]} : vector<8x32xf32> to vector<8x16xf32>
    %cst_147 = arith.constant 0.000000e+00 : f32
    %530 = vector.broadcast %cst_147 : f32 to vector<8x16xf32>
    %531 = arith.subf %530, %529 : vector<8x16xf32>
    %532 = vector.extract_strided_slice %528 {offsets = [0, 0], sizes = [8, 16], strides = [1, 1]} : vector<8x32xf32> to vector<8x16xf32>
    %533 = tpu.concatenate %531, %532 in 1 : vector<8x16xf32>, vector<8x16xf32> -> vector<8x32xf32>
    %534 = arith.mulf %528, %0 : vector<8x32xf32>
    %535 = arith.mulf %533, %1 : vector<8x32xf32>
    %536 = arith.addf %534, %535 : vector<8x32xf32>
    %537 = vector.extract_strided_slice %381 {offsets = [8, 0], sizes = [8, 32], strides = [1, 1]} : vector<16x128xf32> to vector<8x32xf32>
    %538 = vector.extract_strided_slice %537 {offsets = [0, 16], sizes = [8, 16], strides = [1, 1]} : vector<8x32xf32> to vector<8x16xf32>
    %cst_148 = arith.constant 0.000000e+00 : f32
    %539 = vector.broadcast %cst_148 : f32 to vector<8x16xf32>
    %540 = arith.subf %539, %538 : vector<8x16xf32>
    %541 = vector.extract_strided_slice %537 {offsets = [0, 0], sizes = [8, 16], strides = [1, 1]} : vector<8x32xf32> to vector<8x16xf32>
    %542 = tpu.concatenate %540, %541 in 1 : vector<8x16xf32>, vector<8x16xf32> -> vector<8x32xf32>
    %543 = arith.mulf %537, %0 : vector<8x32xf32>
    %544 = arith.mulf %542, %1 : vector<8x32xf32>
    %545 = arith.addf %543, %544 : vector<8x32xf32>
    %546 = vector.extract_strided_slice %382 {offsets = [8, 0], sizes = [8, 32], strides = [1, 1]} : vector<16x128xf32> to vector<8x32xf32>
    %547 = tpu.transpose %545, [1, 0] : vector<8x32xf32> -> vector<32x8xf32>
    %cst_149 = arith.constant dense<0.000000e+00> : vector<8x8xf32>
    %548 = tpu.matmul %536, %547, %cst_149 {dimension_numbers = #tpu.dot_dimension_numbers<[1], [0], [0], [1], [0, 0, 1, 1], [], []>} : vector<8x32xf32>, vector<32x8xf32>, vector<8x8xf32> -> vector<8x8xf32>
    %cst_150 = arith.constant 0.176776692 : f32
    %549 = vector.broadcast %cst_150 : f32 to vector<8x8xf32>
    %550 = arith.mulf %548, %549 : vector<8x8xf32>
    %cst_151 = arith.constant -1.000000e+30 : f32
    %551 = vector.broadcast %cst_151 : f32 to vector<8x8xf32>
    %552 = arith.select %4, %550, %551 : vector<8x8xi1>, vector<8x8xf32>
    %cst_152 = arith.constant dense<0xFF800000> : vector<8xf32>
    %553 = vector.multi_reduction <maximumf>, %552, %cst_152 [1] : vector<8x8xf32> to vector<8xf32>
    %554 = vector.shape_cast %553 : vector<8xf32> to vector<8x1xf32>
    %555 = vector.broadcast %554 : vector<8x1xf32> to vector<8x8xf32>
    %556 = arith.subf %552, %555 : vector<8x8xf32>
    %557 = math.exp %556 : vector<8x8xf32>
    %cst_153 = arith.constant dense<0.000000e+00> : vector<8xf32>
    %558 = vector.multi_reduction <add>, %557, %cst_153 [1] : vector<8x8xf32> to vector<8xf32>
    %559 = vector.shape_cast %558 : vector<8xf32> to vector<8x1xf32>
    %560 = tpu.reciprocal %559 {approx = true} : vector<8x1xf32> -> vector<8x1xf32>
    %561 = vector.broadcast %560 : vector<8x1xf32> to vector<8x8xf32>
    %562 = arith.mulf %557, %561 : vector<8x8xf32>
    %cst_154 = arith.constant dense<0.000000e+00> : vector<8x32xf32>
    %563 = tpu.matmul %562, %546, %cst_154 {dimension_numbers = #tpu.dot_dimension_numbers<[1], [0], [0], [1], [0, 0, 1, 1], [], []>} : vector<8x8xf32>, vector<8x32xf32>, vector<8x32xf32> -> vector<8x32xf32>
    %564 = vector.extract_strided_slice %380 {offsets = [8, 32], sizes = [8, 32], strides = [1, 1]} : vector<16x128xf32> to vector<8x32xf32>
    %565 = vector.extract_strided_slice %564 {offsets = [0, 16], sizes = [8, 16], strides = [1, 1]} : vector<8x32xf32> to vector<8x16xf32>
    %cst_155 = arith.constant 0.000000e+00 : f32
    %566 = vector.broadcast %cst_155 : f32 to vector<8x16xf32>
    %567 = arith.subf %566, %565 : vector<8x16xf32>
    %568 = vector.extract_strided_slice %564 {offsets = [0, 0], sizes = [8, 16], strides = [1, 1]} : vector<8x32xf32> to vector<8x16xf32>
    %569 = tpu.concatenate %567, %568 in 1 : vector<8x16xf32>, vector<8x16xf32> -> vector<8x32xf32>
    %570 = arith.mulf %564, %0 : vector<8x32xf32>
    %571 = arith.mulf %569, %1 : vector<8x32xf32>
    %572 = arith.addf %570, %571 : vector<8x32xf32>
    %573 = vector.extract_strided_slice %381 {offsets = [8, 32], sizes = [8, 32], strides = [1, 1]} : vector<16x128xf32> to vector<8x32xf32>
    %574 = vector.extract_strided_slice %573 {offsets = [0, 16], sizes = [8, 16], strides = [1, 1]} : vector<8x32xf32> to vector<8x16xf32>
    %cst_156 = arith.constant 0.000000e+00 : f32
    %575 = vector.broadcast %cst_156 : f32 to vector<8x16xf32>
    %576 = arith.subf %575, %574 : vector<8x16xf32>
    %577 = vector.extract_strided_slice %573 {offsets = [0, 0], sizes = [8, 16], strides = [1, 1]} : vector<8x32xf32> to vector<8x16xf32>
    %578 = tpu.concatenate %576, %577 in 1 : vector<8x16xf32>, vector<8x16xf32> -> vector<8x32xf32>
    %579 = arith.mulf %573, %0 : vector<8x32xf32>
    %580 = arith.mulf %578, %1 : vector<8x32xf32>
    %581 = arith.addf %579, %580 : vector<8x32xf32>
    %582 = vector.extract_strided_slice %382 {offsets = [8, 32], sizes = [8, 32], strides = [1, 1]} : vector<16x128xf32> to vector<8x32xf32>
    %583 = tpu.transpose %581, [1, 0] : vector<8x32xf32> -> vector<32x8xf32>
    %cst_157 = arith.constant dense<0.000000e+00> : vector<8x8xf32>
    %584 = tpu.matmul %572, %583, %cst_157 {dimension_numbers = #tpu.dot_dimension_numbers<[1], [0], [0], [1], [0, 0, 1, 1], [], []>} : vector<8x32xf32>, vector<32x8xf32>, vector<8x8xf32> -> vector<8x8xf32>
    %cst_158 = arith.constant 0.176776692 : f32
    %585 = vector.broadcast %cst_158 : f32 to vector<8x8xf32>
    %586 = arith.mulf %584, %585 : vector<8x8xf32>
    %cst_159 = arith.constant -1.000000e+30 : f32
    %587 = vector.broadcast %cst_159 : f32 to vector<8x8xf32>
    %588 = arith.select %4, %586, %587 : vector<8x8xi1>, vector<8x8xf32>
    %cst_160 = arith.constant dense<0xFF800000> : vector<8xf32>
    %589 = vector.multi_reduction <maximumf>, %588, %cst_160 [1] : vector<8x8xf32> to vector<8xf32>
    %590 = vector.shape_cast %589 : vector<8xf32> to vector<8x1xf32>
    %591 = vector.broadcast %590 : vector<8x1xf32> to vector<8x8xf32>
    %592 = arith.subf %588, %591 : vector<8x8xf32>
    %593 = math.exp %592 : vector<8x8xf32>
    %cst_161 = arith.constant dense<0.000000e+00> : vector<8xf32>
    %594 = vector.multi_reduction <add>, %593, %cst_161 [1] : vector<8x8xf32> to vector<8xf32>
    %595 = vector.shape_cast %594 : vector<8xf32> to vector<8x1xf32>
    %596 = tpu.reciprocal %595 {approx = true} : vector<8x1xf32> -> vector<8x1xf32>
    %597 = vector.broadcast %596 : vector<8x1xf32> to vector<8x8xf32>
    %598 = arith.mulf %593, %597 : vector<8x8xf32>
    %cst_162 = arith.constant dense<0.000000e+00> : vector<8x32xf32>
    %599 = tpu.matmul %598, %582, %cst_162 {dimension_numbers = #tpu.dot_dimension_numbers<[1], [0], [0], [1], [0, 0, 1, 1], [], []>} : vector<8x8xf32>, vector<8x32xf32>, vector<8x32xf32> -> vector<8x32xf32>
    %600 = vector.extract_strided_slice %380 {offsets = [8, 64], sizes = [8, 32], strides = [1, 1]} : vector<16x128xf32> to vector<8x32xf32>
    %601 = vector.extract_strided_slice %600 {offsets = [0, 16], sizes = [8, 16], strides = [1, 1]} : vector<8x32xf32> to vector<8x16xf32>
    %cst_163 = arith.constant 0.000000e+00 : f32
    %602 = vector.broadcast %cst_163 : f32 to vector<8x16xf32>
    %603 = arith.subf %602, %601 : vector<8x16xf32>
    %604 = vector.extract_strided_slice %600 {offsets = [0, 0], sizes = [8, 16], strides = [1, 1]} : vector<8x32xf32> to vector<8x16xf32>
    %605 = tpu.concatenate %603, %604 in 1 : vector<8x16xf32>, vector<8x16xf32> -> vector<8x32xf32>
    %606 = arith.mulf %600, %0 : vector<8x32xf32>
    %607 = arith.mulf %605, %1 : vector<8x32xf32>
    %608 = arith.addf %606, %607 : vector<8x32xf32>
    %609 = vector.extract_strided_slice %381 {offsets = [8, 64], sizes = [8, 32], strides = [1, 1]} : vector<16x128xf32> to vector<8x32xf32>
    %610 = vector.extract_strided_slice %609 {offsets = [0, 16], sizes = [8, 16], strides = [1, 1]} : vector<8x32xf32> to vector<8x16xf32>
    %cst_164 = arith.constant 0.000000e+00 : f32
    %611 = vector.broadcast %cst_164 : f32 to vector<8x16xf32>
    %612 = arith.subf %611, %610 : vector<8x16xf32>
    %613 = vector.extract_strided_slice %609 {offsets = [0, 0], sizes = [8, 16], strides = [1, 1]} : vector<8x32xf32> to vector<8x16xf32>
    %614 = tpu.concatenate %612, %613 in 1 : vector<8x16xf32>, vector<8x16xf32> -> vector<8x32xf32>
    %615 = arith.mulf %609, %0 : vector<8x32xf32>
    %616 = arith.mulf %614, %1 : vector<8x32xf32>
    %617 = arith.addf %615, %616 : vector<8x32xf32>
    %618 = vector.extract_strided_slice %382 {offsets = [8, 64], sizes = [8, 32], strides = [1, 1]} : vector<16x128xf32> to vector<8x32xf32>
    %619 = tpu.transpose %617, [1, 0] : vector<8x32xf32> -> vector<32x8xf32>
    %cst_165 = arith.constant dense<0.000000e+00> : vector<8x8xf32>
    %620 = tpu.matmul %608, %619, %cst_165 {dimension_numbers = #tpu.dot_dimension_numbers<[1], [0], [0], [1], [0, 0, 1, 1], [], []>} : vector<8x32xf32>, vector<32x8xf32>, vector<8x8xf32> -> vector<8x8xf32>
    %cst_166 = arith.constant 0.176776692 : f32
    %621 = vector.broadcast %cst_166 : f32 to vector<8x8xf32>
    %622 = arith.mulf %620, %621 : vector<8x8xf32>
    %cst_167 = arith.constant -1.000000e+30 : f32
    %623 = vector.broadcast %cst_167 : f32 to vector<8x8xf32>
    %624 = arith.select %4, %622, %623 : vector<8x8xi1>, vector<8x8xf32>
    %cst_168 = arith.constant dense<0xFF800000> : vector<8xf32>
    %625 = vector.multi_reduction <maximumf>, %624, %cst_168 [1] : vector<8x8xf32> to vector<8xf32>
    %626 = vector.shape_cast %625 : vector<8xf32> to vector<8x1xf32>
    %627 = vector.broadcast %626 : vector<8x1xf32> to vector<8x8xf32>
    %628 = arith.subf %624, %627 : vector<8x8xf32>
    %629 = math.exp %628 : vector<8x8xf32>
    %cst_169 = arith.constant dense<0.000000e+00> : vector<8xf32>
    %630 = vector.multi_reduction <add>, %629, %cst_169 [1] : vector<8x8xf32> to vector<8xf32>
    %631 = vector.shape_cast %630 : vector<8xf32> to vector<8x1xf32>
    %632 = tpu.reciprocal %631 {approx = true} : vector<8x1xf32> -> vector<8x1xf32>
    %633 = vector.broadcast %632 : vector<8x1xf32> to vector<8x8xf32>
    %634 = arith.mulf %629, %633 : vector<8x8xf32>
    %cst_170 = arith.constant dense<0.000000e+00> : vector<8x32xf32>
    %635 = tpu.matmul %634, %618, %cst_170 {dimension_numbers = #tpu.dot_dimension_numbers<[1], [0], [0], [1], [0, 0, 1, 1], [], []>} : vector<8x8xf32>, vector<8x32xf32>, vector<8x32xf32> -> vector<8x32xf32>
    %636 = vector.extract_strided_slice %380 {offsets = [8, 96], sizes = [8, 32], strides = [1, 1]} : vector<16x128xf32> to vector<8x32xf32>
    %637 = vector.extract_strided_slice %636 {offsets = [0, 16], sizes = [8, 16], strides = [1, 1]} : vector<8x32xf32> to vector<8x16xf32>
    %cst_171 = arith.constant 0.000000e+00 : f32
    %638 = vector.broadcast %cst_171 : f32 to vector<8x16xf32>
    %639 = arith.subf %638, %637 : vector<8x16xf32>
    %640 = vector.extract_strided_slice %636 {offsets = [0, 0], sizes = [8, 16], strides = [1, 1]} : vector<8x32xf32> to vector<8x16xf32>
    %641 = tpu.concatenate %639, %640 in 1 : vector<8x16xf32>, vector<8x16xf32> -> vector<8x32xf32>
    %642 = arith.mulf %636, %0 : vector<8x32xf32>
    %643 = arith.mulf %641, %1 : vector<8x32xf32>
    %644 = arith.addf %642, %643 : vector<8x32xf32>
    %645 = vector.extract_strided_slice %381 {offsets = [8, 96], sizes = [8, 32], strides = [1, 1]} : vector<16x128xf32> to vector<8x32xf32>
    %646 = vector.extract_strided_slice %645 {offsets = [0, 16], sizes = [8, 16], strides = [1, 1]} : vector<8x32xf32> to vector<8x16xf32>
    %cst_172 = arith.constant 0.000000e+00 : f32
    %647 = vector.broadcast %cst_172 : f32 to vector<8x16xf32>
    %648 = arith.subf %647, %646 : vector<8x16xf32>
    %649 = vector.extract_strided_slice %645 {offsets = [0, 0], sizes = [8, 16], strides = [1, 1]} : vector<8x32xf32> to vector<8x16xf32>
    %650 = tpu.concatenate %648, %649 in 1 : vector<8x16xf32>, vector<8x16xf32> -> vector<8x32xf32>
    %651 = arith.mulf %645, %0 : vector<8x32xf32>
    %652 = arith.mulf %650, %1 : vector<8x32xf32>
    %653 = arith.addf %651, %652 : vector<8x32xf32>
    %654 = vector.extract_strided_slice %382 {offsets = [8, 96], sizes = [8, 32], strides = [1, 1]} : vector<16x128xf32> to vector<8x32xf32>
    %655 = tpu.transpose %653, [1, 0] : vector<8x32xf32> -> vector<32x8xf32>
    %cst_173 = arith.constant dense<0.000000e+00> : vector<8x8xf32>
    %656 = tpu.matmul %644, %655, %cst_173 {dimension_numbers = #tpu.dot_dimension_numbers<[1], [0], [0], [1], [0, 0, 1, 1], [], []>} : vector<8x32xf32>, vector<32x8xf32>, vector<8x8xf32> -> vector<8x8xf32>
    %cst_174 = arith.constant 0.176776692 : f32
    %657 = vector.broadcast %cst_174 : f32 to vector<8x8xf32>
    %658 = arith.mulf %656, %657 : vector<8x8xf32>
    %cst_175 = arith.constant -1.000000e+30 : f32
    %659 = vector.broadcast %cst_175 : f32 to vector<8x8xf32>
    %660 = arith.select %4, %658, %659 : vector<8x8xi1>, vector<8x8xf32>
    %cst_176 = arith.constant dense<0xFF800000> : vector<8xf32>
    %661 = vector.multi_reduction <maximumf>, %660, %cst_176 [1] : vector<8x8xf32> to vector<8xf32>
    %662 = vector.shape_cast %661 : vector<8xf32> to vector<8x1xf32>
    %663 = vector.broadcast %662 : vector<8x1xf32> to vector<8x8xf32>
    %664 = arith.subf %660, %663 : vector<8x8xf32>
    %665 = math.exp %664 : vector<8x8xf32>
    %cst_177 = arith.constant dense<0.000000e+00> : vector<8xf32>
    %666 = vector.multi_reduction <add>, %665, %cst_177 [1] : vector<8x8xf32> to vector<8xf32>
    %667 = vector.shape_cast %666 : vector<8xf32> to vector<8x1xf32>
    %668 = tpu.reciprocal %667 {approx = true} : vector<8x1xf32> -> vector<8x1xf32>
    %669 = vector.broadcast %668 : vector<8x1xf32> to vector<8x8xf32>
    %670 = arith.mulf %665, %669 : vector<8x8xf32>
    %cst_178 = arith.constant dense<0.000000e+00> : vector<8x32xf32>
    %671 = tpu.matmul %670, %654, %cst_178 {dimension_numbers = #tpu.dot_dimension_numbers<[1], [0], [0], [1], [0, 0, 1, 1], [], []>} : vector<8x8xf32>, vector<8x32xf32>, vector<8x32xf32> -> vector<8x32xf32>
    %672 = tpu.concatenate %563, %599, %635, %671 in 1 : vector<8x32xf32>, vector<8x32xf32>, vector<8x32xf32>, vector<8x32xf32> -> vector<8x128xf32>
    %673 = tpu.concatenate %527, %672 in 0 : vector<8x128xf32>, vector<8x128xf32> -> vector<16x128xf32>
    %674 = arith.truncf %673 : vector<16x128xf32> to vector<16x128xbf16>
    %c1_179 = arith.constant 1 : index
    %c0_180 = arith.constant 0 : index
    %c0_181 = arith.constant 0 : index
    %675 = vector.load %arg7[%c1_179, %c0_180, %c0_181] : memref<2x128x128xbf16, #tpu.memory_space<vmem>>, vector<1x128x128xbf16>
    %676 = vector.shape_cast %675 : vector<1x128x128xbf16> to vector<128x128xbf16>
    %cst_182 = arith.constant dense<0.000000e+00> : vector<16x128xf32>
    %677 = tpu.matmul %674, %676, %cst_182 {dimension_numbers = #tpu.dot_dimension_numbers<[1], [0], [0], [1], [0, 0, 1, 1], [], []>} : vector<16x128xbf16>, vector<128x128xbf16>, vector<16x128xf32> -> vector<16x128xf32>
    %678 = arith.addf %361, %677 : vector<16x128xf32>
    %c1_183 = arith.constant 1 : index
    %c0_184 = arith.constant 0 : index
    %c0_185 = arith.constant 0 : index
    %679 = vector.load %arg8[%c1_183, %c0_184, %c0_185] : memref<2x1x128xf32, #tpu.memory_space<vmem>>, vector<1x1x128xf32>
    %680 = vector.shape_cast %679 : vector<1x1x128xf32> to vector<1x128xf32>
    %681 = arith.mulf %678, %678 : vector<16x128xf32>
    %cst_186 = arith.constant dense<0.000000e+00> : vector<16xf32>
    %682 = vector.multi_reduction <add>, %681, %cst_186 [1] : vector<16x128xf32> to vector<16xf32>
    %683 = vector.shape_cast %682 : vector<16xf32> to vector<16x1xf32>
    %cst_187 = arith.constant 1.280000e+02 : f32
    %684 = vector.broadcast %cst_187 : f32 to vector<16x1xf32>
    %685 = arith.divf %683, %684 : vector<16x1xf32>
    %cst_188 = arith.constant 9.99999974E-6 : f32
    %686 = vector.broadcast %cst_188 : f32 to vector<16x1xf32>
    %687 = arith.addf %685, %686 : vector<16x1xf32>
    %688 = math.rsqrt %687 : vector<16x1xf32>
    %689 = vector.broadcast %688 : vector<16x1xf32> to vector<16x128xf32>
    %690 = arith.mulf %678, %689 : vector<16x128xf32>
    %691 = vector.broadcast %680 : vector<1x128xf32> to vector<16x128xf32>
    %692 = arith.mulf %690, %691 : vector<16x128xf32>
    %693 = arith.truncf %692 : vector<16x128xf32> to vector<16x128xbf16>
    %c1_189 = arith.constant 1 : index
    %c0_190 = arith.constant 0 : index
    %c0_191 = arith.constant 0 : index
    %694 = vector.load %arg9[%c1_189, %c0_190, %c0_191] : memref<2x128x256xbf16, #tpu.memory_space<vmem>>, vector<1x128x256xbf16>
    %695 = vector.shape_cast %694 : vector<1x128x256xbf16> to vector<128x256xbf16>
    %cst_192 = arith.constant dense<0.000000e+00> : vector<16x256xf32>
    %696 = tpu.matmul %693, %695, %cst_192 {dimension_numbers = #tpu.dot_dimension_numbers<[1], [0], [0], [1], [0, 0, 1, 1], [], []>} : vector<16x128xbf16>, vector<128x256xbf16>, vector<16x256xf32> -> vector<16x256xf32>
    %c1_193 = arith.constant 1 : index
    %c0_194 = arith.constant 0 : index
    %c0_195 = arith.constant 0 : index
    %697 = vector.load %arg10[%c1_193, %c0_194, %c0_195] : memref<2x128x256xbf16, #tpu.memory_space<vmem>>, vector<1x128x256xbf16>
    %698 = vector.shape_cast %697 : vector<1x128x256xbf16> to vector<128x256xbf16>
    %cst_196 = arith.constant dense<0.000000e+00> : vector<16x256xf32>
    %699 = tpu.matmul %693, %698, %cst_196 {dimension_numbers = #tpu.dot_dimension_numbers<[1], [0], [0], [1], [0, 0, 1, 1], [], []>} : vector<16x128xbf16>, vector<128x256xbf16>, vector<16x256xf32> -> vector<16x256xf32>
    %700 = arith.negf %696 : vector<16x256xf32>
    %701 = math.exp %700 : vector<16x256xf32>
    %cst_197 = arith.constant 1.000000e+00 : f32
    %702 = vector.broadcast %cst_197 : f32 to vector<16x256xf32>
    %703 = arith.addf %702, %701 : vector<16x256xf32>
    %704 = arith.divf %702, %703 : vector<16x256xf32>
    %705 = arith.mulf %696, %704 : vector<16x256xf32>
    %706 = arith.mulf %705, %699 : vector<16x256xf32>
    %707 = arith.truncf %706 : vector<16x256xf32> to vector<16x256xbf16>
    %c1_198 = arith.constant 1 : index
    %c0_199 = arith.constant 0 : index
    %c0_200 = arith.constant 0 : index
    %708 = vector.load %arg11[%c1_198, %c0_199, %c0_200] : memref<2x256x128xbf16, #tpu.memory_space<vmem>>, vector<1x256x128xbf16>
    %709 = vector.shape_cast %708 : vector<1x256x128xbf16> to vector<256x128xbf16>
    %cst_201 = arith.constant dense<0.000000e+00> : vector<16x128xf32>
    %710 = tpu.matmul %707, %709, %cst_201 {dimension_numbers = #tpu.dot_dimension_numbers<[1], [0], [0], [1], [0, 0, 1, 1], [], []>} : vector<16x256xbf16>, vector<256x128xbf16>, vector<16x128xf32> -> vector<16x128xf32>
    %711 = arith.addf %678, %710 : vector<16x128xf32>
    %712 = vector.extract_strided_slice %711 {offsets = [6, 0], sizes = [1, 128], strides = [1, 1]} : vector<16x128xf32> to vector<1x128xf32>
    %713 = vector.extract_strided_slice %711 {offsets = [14, 0], sizes = [1, 128], strides = [1, 1]} : vector<16x128xf32> to vector<1x128xf32>
    %714 = tpu.concatenate %712, %713 in 0 : vector<1x128xf32>, vector<1x128xf32> -> vector<2x128xf32>
    %c0_202 = arith.constant 0 : index
    %c0_203 = arith.constant 0 : index
    %715 = vector.load %arg12[%c0_202, %c0_203] : memref<1x128xf32, #tpu.memory_space<vmem>>, vector<1x128xf32>
    %716 = arith.mulf %714, %714 : vector<2x128xf32>
    %cst_204 = arith.constant dense<0.000000e+00> : vector<2xf32>
    %717 = vector.multi_reduction <add>, %716, %cst_204 [1] : vector<2x128xf32> to vector<2xf32>
    %718 = vector.shape_cast %717 : vector<2xf32> to vector<2x1xf32>
    %cst_205 = arith.constant 1.280000e+02 : f32
    %719 = vector.broadcast %cst_205 : f32 to vector<2x1xf32>
    %720 = arith.divf %718, %719 : vector<2x1xf32>
    %cst_206 = arith.constant 9.99999974E-6 : f32
    %721 = vector.broadcast %cst_206 : f32 to vector<2x1xf32>
    %722 = arith.addf %720, %721 : vector<2x1xf32>
    %723 = math.rsqrt %722 : vector<2x1xf32>
    %724 = vector.broadcast %723 : vector<2x1xf32> to vector<2x128xf32>
    %725 = arith.mulf %714, %724 : vector<2x128xf32>
    %726 = vector.broadcast %715 : vector<1x128xf32> to vector<2x128xf32>
    %727 = arith.mulf %725, %726 : vector<2x128xf32>
    %728 = arith.truncf %727 : vector<2x128xf32> to vector<2x128xbf16>
    %c0_207 = arith.constant 0 : index
    %c0_208 = arith.constant 0 : index
    %729 = vector.load %arg13[%c0_207, %c0_208] : memref<128x128xbf16, #tpu.memory_space<vmem>>, vector<128x128xbf16>
    %cst_209 = arith.constant dense<0.000000e+00> : vector<2x128xf32>
    %730 = tpu.matmul %728, %729, %cst_209 {dimension_numbers = #tpu.dot_dimension_numbers<[1], [0], [0], [1], [0, 0, 1, 1], [], []>} : vector<2x128xbf16>, vector<128x128xbf16>, vector<2x128xf32> -> vector<2x128xf32>
    %c0_210 = arith.constant 0 : index
    %c0_211 = arith.constant 0 : index
    %731 = vector.load %arg14[%c0_210, %c0_211] : memref<128x3xf32, #tpu.memory_space<vmem>>, vector<128x3xf32>
    %cst_212 = arith.constant dense<0.000000e+00> : vector<2x3xf32>
    %732 = tpu.matmul %730, %731, %cst_212 {dimension_numbers = #tpu.dot_dimension_numbers<[1], [0], [0], [1], [0, 0, 1, 1], [], []>} : vector<2x128xf32>, vector<128x3xf32>, vector<2x3xf32> -> vector<2x3xf32>
    %c0_213 = arith.constant 0 : index
    %c0_214 = arith.constant 0 : index
    %733 = vector.load %arg15[%c0_213, %c0_214] : memref<1x3xf32, #tpu.memory_space<vmem>>, vector<1x3xf32>
    %734 = vector.broadcast %733 : vector<1x3xf32> to vector<2x3xf32>
    %735 = arith.addf %732, %734 : vector<2x3xf32>
    %c0_215 = arith.constant 0 : index
    %c0_216 = arith.constant 0 : index
    %736 = vector.load %arg16[%c0_215, %c0_216] : memref<2x3xf32, #tpu.memory_space<vmem>>, vector<2x3xf32>
    tpu.vector_store %arg16[%c0_215, %c0_216], %735 {strides = array<i32>} : memref<2x3xf32, #tpu.memory_space<vmem>>, vector<2x3xf32>,
    return
  }
}

</mosaic_0001>

<llo_original>
// kernel: llama_regressor_forward.1
$region0: #{llama_regressor_forward.1}
  #allocation0 [shape = 'u32[]', space=smem, size = 0x4, offset = 0x4, fixed_abs, tag = 'smem constant byte address 0x4 - core index']
  #allocation1 [shape = 'u32[144,128]{1,0:T(1,128)}', space=vmem, size = 0x12000, scoped, tag = 'internal scratch']
  %s0 = inlined_call_operand.vmem [shape: f32[16,64], index: 0, kind: input, shape index: {}]
  %s1 = inlined_call_operand.vmem [shape: f32[8,32], index: 1, kind: input, shape index: {}]
  %s2 = inlined_call_operand.vmem [shape: f32[8,32], index: 2, kind: input, shape index: {}]
  %s3 = inlined_call_operand.vmem [shape: bf16[64,128], index: 3, kind: input, shape index: {}]
  %s4 = inlined_call_operand.vmem [shape: f32[1,128], index: 4, kind: input, shape index: {}]
  %s5 = inlined_call_operand.vmem [shape: f32[2,1,128], index: 5, kind: input, shape index: {}]
  %s6 = inlined_call_operand.hbm [shape: bf16[2,128,384], index: 6, kind: input, shape index: {}]
  %s7 = inlined_call_operand.vmem [shape: bf16[2,128,128], index: 7, kind: input, shape index: {}]
  %s8 = inlined_call_operand.vmem [shape: f32[2,1,128], index: 8, kind: input, shape index: {}]
  %s9 = inlined_call_operand.hbm [shape: bf16[2,128,256], index: 9, kind: input, shape index: {}]
  %s10 = inlined_call_operand.hbm [shape: bf16[2,128,256], index: 10, kind: input, shape index: {}]
  %s11 = inlined_call_operand.hbm [shape: bf16[2,256,128], index: 11, kind: input, shape index: {}]
  %s12 = inlined_call_operand.vmem [shape: f32[1,128], index: 12, kind: input, shape index: {}]
  %s13 = inlined_call_operand.vmem [shape: bf16[128,128], index: 13, kind: input, shape index: {}]
  %s14 = inlined_call_operand.vmem [shape: f32[128,3], index: 14, kind: input, shape index: {}]
  %s15 = inlined_call_operand.vmem [shape: f32[1,3], index: 15, kind: input, shape index: {}]
  %s16 = inlined_call_operand.hbm [shape: f32[2,3], index: 16, kind: output, shape index: {}]
  %s17 = sld [smem:[#allocation0]]
  $region90: #{llama_regressor_forward.1} parent=0
    _
  %s19 = ssub.s32 1, %s17
  %s20 = scalar_select 0, %s19, %s17
  $region1: #{llama_regressor_forward.1} parent=0
    #allocation2 [shape = 'u8[196608]{0}', space=vmem, size = 0x30000, scoped, tag = 'input window, operand 6, single buffered']
    #allocation3 [shape = 's32[1]{0}', space=sflag, size = 0x4, scoped, tag = 'scoped memory for llama_regressor_forward.1']
    #allocation4 [shape = 's32[1]{0}', space=sflag, size = 0x4, scoped, tag = 'scoped memory for llama_regressor_forward.1']
    #allocation5 [shape = 'u8[131072]{0}', space=vmem, size = 0x20000, scoped, tag = 'input window, operand 9, single buffered']
    #allocation6 [shape = 's32[1]{0}', space=sflag, size = 0x4, scoped, tag = 'scoped memory for llama_regressor_forward.1']
    #allocation7 [shape = 'u8[131072]{0}', space=vmem, size = 0x20000, scoped, tag = 'input window, operand 10, single buffered']
    #allocation8 [shape = 'u8[131072]{0}', space=vmem, size = 0x20000, scoped, tag = 'input window, operand 11, single buffered']
    #allocation9 [shape = 's32[1]{0}', space=sflag, size = 0x4, scoped, tag = 'scoped memory for llama_regressor_forward.1']
    #allocation10 [shape = 'u8[1024]{0}', space=vmem, size = 0x400, scoped, tag = 'output window, operand 0, single buffered']
    %21 = vsyncpa [#allocation3], 0
    %22 = vsyncpa [#allocation6], 0
    %23 = vsyncpa [#allocation9], 0
    %24 = vsyncpa [#allocation4], 0
    // Predicated region
    $region2: #{llama_regressor_forward.1} parent=1 // pred_check
      _
    $region3: #{llama_regressor_forward.1} parent=1 // pred_check_branch
      %26 = sbr.rel (0) target = $region5
    $region4: #{llama_regressor_forward.1} parent=1 // pred_region
      _
    $region5: #{llama_regressor_forward.1} parent=1 // pred_fallthru
      _
    // Predicated region
    $region6: #{llama_regressor_forward.1} parent=1 // pred_check
      _
    $region7: #{llama_regressor_forward.1} parent=1 // pred_check_branch
      %28 = sbr.rel (0) target = $region9
    $region8: #{llama_regressor_forward.1} parent=1 // pred_region
      _
    $region9: #{llama_regressor_forward.1} parent=1 // pred_fallthru
      _
    // Predicated region
    $region10: #{llama_regressor_forward.1} parent=1 // pred_check
      _
    $region11: #{llama_regressor_forward.1} parent=1 // pred_check_branch
      %30 = sbr.rel (0) target = $region13
    $region12: #{llama_regressor_forward.1} parent=1 // pred_region
      _
    $region13: #{llama_regressor_forward.1} parent=1 // pred_fallthru
      _
    // Predicated region
    $region14: #{llama_regressor_forward.1} parent=1 // pred_check
      _
    $region15: #{llama_regressor_forward.1} parent=1 // pred_check_branch
      %32 = sbr.rel (0) target = $region17
    $region16: #{llama_regressor_forward.1} parent=1 // pred_region
      _
    $region17: #{llama_regressor_forward.1} parent=1 // pred_fallthru
      _
    // Predicated region
    $region18: #{llama_regressor_forward.1} parent=1 // pred_check
      _
    $region19: #{llama_regressor_forward.1} parent=1 // pred_check_branch
      %34 = sbr.rel (0) target = $region21
    $region20: #{llama_regressor_forward.1} parent=1 // pred_region
      _
    $region21: #{llama_regressor_forward.1} parent=1 // pred_fallthru
      _
    // Predicated region
    $region22: #{llama_regressor_forward.1} parent=1 // pred_check
      _
    $region23: #{llama_regressor_forward.1} parent=1 // pred_check_branch
      %36 = sbr.rel (0) target = $region25
    $region24: #{llama_regressor_forward.1} parent=1 // pred_region
      _
    $region25: #{llama_regressor_forward.1} parent=1 // pred_fallthru
      _
    // Predicated region
    $region26: #{llama_regressor_forward.1} parent=1 // pred_check
      _
    $region27: #{llama_regressor_forward.1} parent=1 // pred_check_branch
      %38 = sbr.rel (0) target = $region29
    $region28: #{llama_regressor_forward.1} parent=1 // pred_region
      %s40 = ssub.s32 6144, 6144
      %41 = vsyncadd [#allocation3], %s40
      %s42 = sshll.u32 [#allocation2], 4
      %s43 = int_to_ptr.vmem [resolvable:$true] %s42
      %48 = dma.hbm_to_vmem [thread:$0]  %s6, 6144, %s43, [#allocation3], 192, 192, 12
    $region29: #{llama_regressor_forward.1} parent=1 // pred_fallthru
      _
    // Predicated region
    $region30: #{llama_regressor_forward.1} parent=1 // pred_check
      _
    $region31: #{llama_regressor_forward.1} parent=1 // pred_check_branch
      %50 = sbr.rel (0) target = $region33
    $region32: #{llama_regressor_forward.1} parent=1 // pred_region
      _
    $region33: #{llama_regressor_forward.1} parent=1 // pred_fallthru
      _
    // Predicated region
    $region34: #{llama_regressor_forward.1} parent=1 // pred_check
      _
    $region35: #{llama_regressor_forward.1} parent=1 // pred_check_branch
      %52 = sbr.rel (0) target = $region37
    $region36: #{llama_regressor_forward.1} parent=1 // pred_region
      _
    $region37: #{llama_regressor_forward.1} parent=1 // pred_fallthru
      _
    // Predicated region
    $region38: #{llama_regressor_forward.1} parent=1 // pred_check
      _
    $region39: #{llama_regressor_forward.1} parent=1 // pred_check_branch
      %54 = sbr.rel (0) target = $region41
    $region40: #{llama_regressor_forward.1} parent=1 // pred_region
      %s56 = ssub.s32 4096, 4096
      %57 = vsyncadd [#allocation6], %s56
      %s58 = sshll.u32 [#allocation5], 4
      %s59 = int_to_ptr.vmem [resolvable:$true] %s58
      %64 = dma.hbm_to_vmem [thread:$0]  %s9, 4096, %s59, [#allocation6], 128, 128, 8
    $region41: #{llama_regressor_forward.1} parent=1 // pred_fallthru
      _
    // Predicated region
    $region42: #{llama_regressor_forward.1} parent=1 // pred_check
      _
    $region43: #{llama_regressor_forward.1} parent=1 // pred_check_branch
      %66 = sbr.rel (0) target = $region45
    $region44: #{llama_regressor_forward.1} parent=1 // pred_region
      %s68 = ssub.s32 4096, 4096
      %69 = vsyncadd [#allocation6], %s68
      %s70 = sshll.u32 [#allocation7], 4
      %s71 = int_to_ptr.vmem [resolvable:$true] %s70
      %76 = dma.hbm_to_vmem [thread:$0]  %s10, 4096, %s71, [#allocation6], 128, 128, 8
    $region45: #{llama_regressor_forward.1} parent=1 // pred_fallthru
      _
    // Predicated region
    $region46: #{llama_regressor_forward.1} parent=1 // pred_check
      _
    $region47: #{llama_regressor_forward.1} parent=1 // pred_check_branch
      %78 = sbr.rel (0) target = $region49
    $region48: #{llama_regressor_forward.1} parent=1 // pred_region
      %s80 = ssub.s32 4096, 4096
      %81 = vsyncadd [#allocation9], %s80
      %s82 = sshll.u32 [#allocation8], 4
      %s83 = int_to_ptr.vmem [resolvable:$true] %s82
      %88 = dma.hbm_to_vmem [thread:$0]  %s11, 4096, %s83, [#allocation9], 64, 64, 4
    $region49: #{llama_regressor_forward.1} parent=1 // pred_fallthru
      _
    // Predicated region
    $region50: #{llama_regressor_forward.1} parent=1 // pred_check
      _
    $region51: #{llama_regressor_forward.1} parent=1 // pred_check_branch
      %90 = sbr.rel (0) target = $region53
    $region52: #{llama_regressor_forward.1} parent=1 // pred_region
      _
    $region53: #{llama_regressor_forward.1} parent=1 // pred_fallthru
      _
    // Predicated region
    $region54: #{llama_regressor_forward.1} parent=1 // pred_check
      _
    $region55: #{llama_regressor_forward.1} parent=1 // pred_check_branch
      %92 = sbr.rel (0) target = $region57
    $region56: #{llama_regressor_forward.1} parent=1 // pred_region
      _
    $region57: #{llama_regressor_forward.1} parent=1 // pred_fallthru
      _
    // Predicated region
    $region58: #{llama_regressor_forward.1} parent=1 // pred_check
      _
    $region59: #{llama_regressor_forward.1} parent=1 // pred_check_branch
      %94 = sbr.rel (0) target = $region61
    $region60: #{llama_regressor_forward.1} parent=1 // pred_region
      _
    $region61: #{llama_regressor_forward.1} parent=1 // pred_fallthru
      _
    // Predicated region
    $region62: #{llama_regressor_forward.1} parent=1 // pred_check
      _
    $region63: #{llama_regressor_forward.1} parent=1 // pred_check_branch
      %96 = sbr.rel (0) target = $region65
    $region64: #{llama_regressor_forward.1} parent=1 // pred_region
      _
    $region65: #{llama_regressor_forward.1} parent=1 // pred_fallthru
      _
    // Predicated region
    $region66: #{llama_regressor_forward.1} parent=1 // pred_check
      _
    $region67: #{llama_regressor_forward.1} parent=1 // pred_check_branch
      %98 = sbr.rel (0) target = $region69
    $region68: #{llama_regressor_forward.1} parent=1 // pred_region
      %99 = dma.done [#allocation3], 6144
    $region69: #{llama_regressor_forward.1} parent=1 // pred_fallthru
      _
    // Predicated region
    $region70: #{llama_regressor_forward.1} parent=1 // pred_check
      _
    $region71: #{llama_regressor_forward.1} parent=1 // pred_check_branch
      %101 = sbr.rel (0) target = $region73
    $region72: #{llama_regressor_forward.1} parent=1 // pred_region
      %102 = dma.done [#allocation6], 4096
    $region73: #{llama_regressor_forward.1} parent=1 // pred_fallthru
      _
    // Predicated region
    $region74: #{llama_regressor_forward.1} parent=1 // pred_check
      _
    $region75: #{llama_regressor_forward.1} parent=1 // pred_check_branch
      %104 = sbr.rel (0) target = $region77
    $region76: #{llama_regressor_forward.1} parent=1 // pred_region
      %105 = dma.done [#allocation6], 4096
    $region77: #{llama_regressor_forward.1} parent=1 // pred_fallthru
      _
    // Predicated region
    $region78: #{llama_regressor_forward.1} parent=1 // pred_check
      _
    $region79: #{llama_regressor_forward.1} parent=1 // pred_check_branch
      %107 = sbr.rel (0) target = $region81
    $region80: #{llama_regressor_forward.1} parent=1 // pred_region
      %108 = dma.done [#allocation9], 4096
    $region81: #{llama_regressor_forward.1} parent=1 // pred_fallthru
      _
    %v110 = vld [vmem:[%s1] sm:$0xff]
    %v111 = vld [vmem:[%s2] sm:$0xff]
    %v112 = vlaneseq
    %v113 = vshrl.u32 %v112, 7
    %v114 = vlaneseq
    %v115 = vand.u32 %v114, 127
    %vm116 = vcmp.le.s32.totalorder %v115, %v113
    %v117 = vld [vmem:[%s0] sm:$0xff]
    %v118 = vld [vmem:[%s0 + $0x8] sm:$0xff]
    %v119 = vpack.c.bf16 %v118, %v117
    %v120 = vld [vmem:[%s3] sm:$0xf]
    %v121 = vld [vmem:[%s3 + $0x4] sm:$0xf]
    %v122 = vld [vmem:[%s3 + $0x8] sm:$0xf]
    %v123 = vld [vmem:[%s3 + $0xc] sm:$0xf]
    %v124 = vld [vmem:[%s3 + $0x10] sm:$0xf]
    %v125 = vld [vmem:[%s3 + $0x14] sm:$0xf]
    %v126 = vld [vmem:[%s3 + $0x18] sm:$0xf]
    %v127 = vld [vmem:[%s3 + $0x1c] sm:$0xf]
    %v128 = vld [vmem:[%s4] sm:$0x1]
    %v130 = vlaneseq
    %v131 = vshrl.u32 %v130, 7
    %v132 = vsub.s32 0, %v131
    %v133 = vrot.slane %v128, %v132
    %v143 = vunpack.c.l.b16 %v120
    %v144 = vunpack.c.l.b16 %v121
    %v145 = vunpack.c.l.b16 %v122
    %v146 = vunpack.c.l.b16 %v123
    %v147 = vunpack.c.l.b16 %v124
    %v148 = vunpack.c.l.b16 %v125
    %v149 = vunpack.c.l.b16 %v126
    %v150 = vunpack.c.l.b16 %v127
    %v151 = vpack.c.b16 %v144, %v143
    %v152 = vpack.c.b16 %v146, %v145
    %v153 = vpack.c.b16 %v148, %v147
    %v154 = vpack.c.b16 %v150, %v149
    %vm159 = vcmask 523264
    %v161 = vsel %vm159, %v119, 0
    %163 = vmatprep.subr.bf16.mxu0 0
    %164 = vmatpush1.bf16.msra.mxu0 0
    %165 = vmatprep.subr.bf16.mxu0 0
    %166 = vmatpush1.bf16.msra.mxu0 0
    %167 = vmatprep.subr.bf16.mxu0 0
    %168 = vmatpush1.bf16.msra.mxu0 0
    %169 = vmatprep.subr.bf16.mxu0 0
    %170 = vmatpush1.bf16.msra.mxu0 0
    %171 = vmatprep.subr.bf16.mxu0 0
    %172 = vmatpush1.bf16.msra.mxu0 %v154
    %173 = vmatprep.subr.bf16.mxu0 0
    %174 = vmatpush1.bf16.msra.mxu0 %v153
    %175 = vmatprep.subr.bf16.mxu0 0
    %176 = vmatpush1.bf16.msra.mxu0 %v152
    %177 = vmatprep.subr.bf16.mxu0 0
    %178 = vmatpush1.bf16.msra.mxu0 %v151
    %179 = vmatprep.subr.bf16.mxu0 0
    %180 = vmatpush2.bf16.msra.mxu0 0
    %181 = vmatprep.subr.bf16.mxu0 0
    %182 = vmatpush2.bf16.msra.mxu0 0
    %183 = vmatprep.subr.bf16.mxu0 0
    %184 = vmatpush2.bf16.msra.mxu0 0
    %185 = vmatprep.subr.bf16.mxu0 0
    %186 = vmatpush2.bf16.msra.mxu0 0
    %187 = vmatprep.subr.bf16.mxu0 0
    %188 = vmatpush2.bf16.msra.mxu0 0
    %189 = vmatprep.subr.bf16.mxu0 0
    %190 = vmatpush2.bf16.msra.mxu0 0
    %191 = vmatprep.subr.bf16.mxu0 0
    %192 = vmatpush2.bf16.msra.mxu0 0
    %193 = vmatprep.subr.bf16.mxu0 0
    %194 = vmatpush2.bf16.msra.mxu0 0
    %195 = vmatprep.mubr.bf16.mxu0 0
    %196 = vmatmul.mubr.bf16.gmra.mxu0 %v161
    %v197 = vpop.f32.mrf.mxu0
    %v198 = vadd.f32 %v133, %v197
    %v199 = vpop.f32.mrf.mxu0
    %v200 = vpop.f32.mrf.mxu0
    %v201 = vadd.f32 %v133, %v200
    %v202 = vpop.f32.mrf.mxu0
    %203 = vdwg.mxu0
    %v204 = vld [vmem:[%s5] sm:$0x1]
    %v205 = vmul.f32 %v198, %v198
    %v206 = vmul.f32 %v201, %v201
    %207 = vadd.xlane.f32.xlu0 %v205
    %v208 = vpop.xlane.xlu0 %207
    %209 = vadd.xlane.f32.xlu0 %v206
    %v210 = vpop.xlane.xlu0 %209
    %v211 = vrcp.pop 128.0
    %v212 = vmul.f32 %v208, %v211
    %v213 = vmul.f32 %v210, %v211
    %v214 = vadd.f32 %v212, 1e-05
    %v215 = vadd.f32 %v213, 1e-05
    %v216 = vrsqrt.pop %v214
    %v217 = vrsqrt.pop %v215
    %v218 = vmul.f32 %v198, %v216
    %v219 = vmul.f32 %v201, %v217
    %v221 = vlaneseq
    %v222 = vshrl.u32 %v221, 7
    %v223 = vsub.s32 0, %v222
    %v224 = vrot.slane %v204, %v223
    %v226 = vmul.f32 %v218, %v224
    %v227 = vmul.f32 %v219, %v224
    %v228 = vpack.c.bf16 %v227, %v226
    %v229 = vld [vmem:[#allocation2] sm:$0xff]
    %v230 = vld [vmem:[#allocation2 + $0x8] sm:$0xf]
    %v231 = vld [vmem:[#allocation2 + $0xc] sm:$0xff]
    %v232 = vld [vmem:[#allocation2 + $0x14] sm:$0xf]
    %v233 = vld [vmem:[#allocation2 + $0x18] sm:$0xff]
    %v234 = vld [vmem:[#allocation2 + $0x20] sm:$0xf]
    %v235 = vld [vmem:[#allocation2 + $0x24] sm:$0xff]
    %v236 = vld [vmem:[#allocation2 + $0x2c] sm:$0xf]
    %v237 = vld [vmem:[#allocation2 + $0x30] sm:$0xff]
    %v238 = vld [vmem:[#allocation2 + $0x38] sm:$0xf]
    %v239 = vld [vmem:[#allocation2 + $0x3c] sm:$0xff]
    %v240 = vld [vmem:[#allocation2 + $0x44] sm:$0xf]
    %v241 = vld [vmem:[#allocation2 + $0x48] sm:$0xff]
    %v242 = vld [vmem:[#allocation2 + $0x50] sm:$0xf]
    %v243 = vld [vmem:[#allocation2 + $0x54] sm:$0xff]
    %v244 = vld [vmem:[#allocation2 + $0x5c] sm:$0xf]
    %v245 = vld [vmem:[#allocation2 + $0x60] sm:$0xff]
    %v246 = vld [vmem:[#allocation2 + $0x68] sm:$0xf]
    %v247 = vld [vmem:[#allocation2 + $0x6c] sm:$0xff]
    %v248 = vld [vmem:[#allocation2 + $0x74] sm:$0xf]
    %v249 = vld [vmem:[#allocation2 + $0x78] sm:$0xff]
    %v250 = vld [vmem:[#allocation2 + $0x80] sm:$0xf]
    %v251 = vld [vmem:[#allocation2 + $0x84] sm:$0xff]
    %v252 = vld [vmem:[#allocation2 + $0x8c] sm:$0xf]
    %v253 = vld [vmem:[#allocation2 + $0x90] sm:$0xff]
    %v254 = vld [vmem:[#allocation2 + $0x98] sm:$0xf]
    %v255 = vld [vmem:[#allocation2 + $0x9c] sm:$0xff]
    %v256 = vld [vmem:[#allocation2 + $0xa4] sm:$0xf]
    %v257 = vld [vmem:[#allocation2 + $0xa8] sm:$0xff]
    %v258 = vld [vmem:[#allocation2 + $0xb0] sm:$0xf]
    %v259 = vld [vmem:[#allocation2 + $0xb4] sm:$0xff]
    %v260 = vld [vmem:[#allocation2 + $0xbc] sm:$0xf]
    %v293 = vunpack.c.l.b16 %v229
    %v294 = vunpack.c.h.b16 %v229
    %v295 = vunpack.c.l.b16 %v230
    %v296 = vunpack.c.l.b16 %v231
    %v297 = vunpack.c.h.b16 %v231
    %v298 = vunpack.c.l.b16 %v232
    %v299 = vunpack.c.l.b16 %v233
    %v300 = vunpack.c.h.b16 %v233
    %v301 = vunpack.c.l.b16 %v234
    %v302 = vunpack.c.l.b16 %v235
    %v303 = vunpack.c.h.b16 %v235
    %v304 = vunpack.c.l.b16 %v236
    %v305 = vunpack.c.l.b16 %v237
    %v306 = vunpack.c.h.b16 %v237
    %v307 = vunpack.c.l.b16 %v238
    %v308 = vunpack.c.l.b16 %v239
    %v309 = vunpack.c.h.b16 %v239
    %v310 = vunpack.c.l.b16 %v240
    %v311 = vunpack.c.l.b16 %v241
    %v312 = vunpack.c.h.b16 %v241
    %v313 = vunpack.c.l.b16 %v242
    %v314 = vunpack.c.l.b16 %v243
    %v315 = vunpack.c.h.b16 %v243
    %v316 = vunpack.c.l.b16 %v244
    %v317 = vunpack.c.l.b16 %v245
    %v318 = vunpack.c.h.b16 %v245
    %v319 = vunpack.c.l.b16 %v246
    %v320 = vunpack.c.l.b16 %v247
    %v321 = vunpack.c.h.b16 %v247
    %v322 = vunpack.c.l.b16 %v248
    %v323 = vunpack.c.l.b16 %v249
    %v324 = vunpack.c.h.b16 %v249
    %v325 = vunpack.c.l.b16 %v250
    %v326 = vunpack.c.l.b16 %v251
    %v327 = vunpack.c.h.b16 %v251
    %v328 = vunpack.c.l.b16 %v252
    %v329 = vunpack.c.l.b16 %v253
    %v330 = vunpack.c.h.b16 %v253
    %v331 = vunpack.c.l.b16 %v254
    %v332 = vunpack.c.l.b16 %v255
    %v333 = vunpack.c.h.b16 %v255
    %v334 = vunpack.c.l.b16 %v256
    %v335 = vunpack.c.l.b16 %v257
    %v336 = vunpack.c.h.b16 %v257
    %v337 = vunpack.c.l.b16 %v258
    %v338 = vunpack.c.l.b16 %v259
    %v339 = vunpack.c.h.b16 %v259
    %v340 = vunpack.c.l.b16 %v260
    %v341 = vpack.c.b16 %v296, %v293
    %v342 = vpack.c.b16 %v297, %v294
    %v343 = vpack.c.b16 %v298, %v295
    %v344 = vpack.c.b16 %v302, %v299
    %v345 = vpack.c.b16 %v303, %v300
    %v346 = vpack.c.b16 %v304, %v301
    %v347 = vpack.c.b16 %v308, %v305
    %v348 = vpack.c.b16 %v309, %v306
    %v349 = vpack.c.b16 %v310, %v307
    %v350 = vpack.c.b16 %v314, %v311
    %v351 = vpack.c.b16 %v315, %v312
    %v352 = vpack.c.b16 %v316, %v313
    %v353 = vpack.c.b16 %v320, %v317
    %v354 = vpack.c.b16 %v321, %v318
    %v355 = vpack.c.b16 %v322, %v319
    %v356 = vpack.c.b16 %v326, %v323
    %v357 = vpack.c.b16 %v327, %v324
    %v358 = vpack.c.b16 %v328, %v325
    %v359 = vpack.c.b16 %v332, %v329
    %v360 = vpack.c.b16 %v333, %v330
    %v361 = vpack.c.b16 %v334, %v331
    %v362 = vpack.c.b16 %v338, %v335
    %v363 = vpack.c.b16 %v339, %v336
    %v364 = vpack.c.b16 %v340, %v337
    %389 = vmatprep.subr.bf16.mxu0 %v363
    %390 = vmatpush1.bf16.msra.mxu0 %v362
    %391 = vmatprep.subr.bf16.mxu0 %v360
    %392 = vmatpush1.bf16.msra.mxu0 %v359
    %393 = vmatprep.subr.bf16.mxu0 %v357
    %394 = vmatpush1.bf16.msra.mxu0 %v356
    %395 = vmatprep.subr.bf16.mxu0 %v354
    %396 = vmatpush1.bf16.msra.mxu0 %v353
    %397 = vmatprep.subr.bf16.mxu0 %v351
    %398 = vmatpush1.bf16.msra.mxu0 %v350
    %399 = vmatprep.subr.bf16.mxu0 %v348
    %400 = vmatpush1.bf16.msra.mxu0 %v347
    %401 = vmatprep.subr.bf16.mxu0 %v345
    %402 = vmatpush1.bf16.msra.mxu0 %v344
    %403 = vmatprep.subr.bf16.mxu0 %v342
    %404 = vmatpush1.bf16.msra.mxu0 %v341
    %405 = vmatprep.subr.bf16.mxu0 0
    %406 = vmatpush2.bf16.msra.mxu0 0
    %407 = vmatprep.subr.bf16.mxu0 0
    %408 = vmatpush2.bf16.msra.mxu0 0
    %409 = vmatprep.subr.bf16.mxu0 0
    %410 = vmatpush2.bf16.msra.mxu0 0
    %411 = vmatprep.subr.bf16.mxu0 0
    %412 = vmatpush2.bf16.msra.mxu0 0
    %413 = vmatprep.subr.bf16.mxu0 0
    %414 = vmatpush2.bf16.msra.mxu0 0
    %415 = vmatprep.subr.bf16.mxu0 0
    %416 = vmatpush2.bf16.msra.mxu0 0
    %417 = vmatprep.subr.bf16.mxu0 0
    %418 = vmatpush2.bf16.msra.mxu0 0
    %419 = vmatprep.subr.bf16.mxu0 0
    %420 = vmatpush2.bf16.msra.mxu0 0
    %421 = vmatprep.mubr.bf16.mxu0 0
    %422 = vmatmul.mubr.bf16.gmra.mxu0 %v228
    %v423 = vpop.f32.mrf.mxu0
    %v424 = vadd.f32 0.0, %v423
    %v425 = vpop.f32.mrf.mxu0
    %v426 = vadd.f32 0.0, %v425
    %v427 = vpop.f32.mrf.mxu0
    %v428 = vadd.f32 0.0, %v427
    %v429 = vpop.f32.mrf.mxu0
    %v430 = vadd.f32 0.0, %v429
    %431 = vdwg.mxu0
    %432 = vmatprep.subr.bf16.mxu0 0
    %433 = vmatpush1.bf16.msra.mxu0 %v364
    %434 = vmatprep.subr.bf16.mxu0 0
    %435 = vmatpush1.bf16.msra.mxu0 %v361
    %436 = vmatprep.subr.bf16.mxu0 0
    %437 = vmatpush1.bf16.msra.mxu0 %v358
    %438 = vmatprep.subr.bf16.mxu0 0
    %439 = vmatpush1.bf16.msra.mxu0 %v355
    %440 = vmatprep.subr.bf16.mxu0 0
    %441 = vmatpush1.bf16.msra.mxu0 %v352
    %442 = vmatprep.subr.bf16.mxu0 0
    %443 = vmatpush1.bf16.msra.mxu0 %v349
    %444 = vmatprep.subr.bf16.mxu0 0
    %445 = vmatpush1.bf16.msra.mxu0 %v346
    %446 = vmatprep.subr.bf16.mxu0 0
    %447 = vmatpush1.bf16.msra.mxu0 %v343
    %448 = vmatprep.subr.bf16.mxu0 0
    %449 = vmatpush2.bf16.msra.mxu0 0
    %450 = vmatprep.subr.bf16.mxu0 0
    %451 = vmatpush2.bf16.msra.mxu0 0
    %452 = vmatprep.subr.bf16.mxu0 0
    %453 = vmatpush2.bf16.msra.mxu0 0
    %454 = vmatprep.subr.bf16.mxu0 0
    %455 = vmatpush2.bf16.msra.mxu0 0
    %456 = vmatprep.subr.bf16.mxu0 0
    %457 = vmatpush2.bf16.msra.mxu0 0
    %458 = vmatprep.subr.bf16.mxu0 0
    %459 = vmatpush2.bf16.msra.mxu0 0
    %460 = vmatprep.subr.bf16.mxu0 0
    %461 = vmatpush2.bf16.msra.mxu0 0
    %462 = vmatprep.subr.bf16.mxu0 0
    %463 = vmatpush2.bf16.msra.mxu0 0
    %464 = vmatprep.mubr.bf16.mxu0 0
    %465 = vmatmul.mubr.bf16.gmra.mxu0 %v228
    %v466 = vpop.f32.mrf.mxu0
    %v467 = vadd.f32 0.0, %v466
    %v468 = vpop.f32.mrf.mxu0
    %v469 = vpop.f32.mrf.mxu0
    %v470 = vadd.f32 0.0, %v469
    %v471 = vpop.f32.mrf.mxu0
    %472 = vdwg.mxu0
    %v473 = vsub.f32 0.0, %v424
    %475 = vrot.lane.b32.xlu0 %v473, 112
    %v476 = vpop.permute.xlu0 %475
    %479 = vrot.lane.b32.xlu0 %v424, 16
    %v480 = vpop.permute.xlu0 %479
    %vm482 = vcmask 130048
    %v483 = vsel %vm482, %v476, %v480
    %v484 = vmul.f32 %v424, %v110
    %v485 = vmul.f32 %v483, %v111
    %v486 = vadd.f32 %v484, %v485
    %v487 = vsub.f32 0.0, %v426
    %489 = vrot.lane.b32.xlu0 %v487, 112
    %v490 = vpop.permute.xlu0 %489
    %493 = vrot.lane.b32.xlu0 %v426, 16
    %v494 = vpop.permute.xlu0 %493
    %v496 = vsel %vm482, %v490, %v494
    %v497 = vmul.f32 %v426, %v110
    %v498 = vmul.f32 %v496, %v111
    %v499 = vadd.f32 %v497, %v498
    %vm500 = vcmask 261120
    %v502 = vsel %vm500, %v486, 0
    %v505 = vsel %vm500, %v499, 0
    %507 = vmatprep.subr.mxu0 0.0
    %508 = vmatpush1.xpose.msra.mxu0 0.0
    %509 = vmatprep.subr.mxu0 0.0
    %510 = vmatpush1.xpose.msra.mxu0 0.0
    %511 = vmatprep.subr.mxu0 0.0
    %512 = vmatpush1.xpose.msra.mxu0 0.0
    %513 = vmatprep.subr.mxu0 0.0
    %514 = vmatpush1.xpose.msra.mxu0 0.0
    %515 = vmatprep.subr.mxu0 0.0
    %516 = vmatpush1.xpose.msra.mxu0 0.0
    %517 = vmatprep.subr.mxu0 0.0
    %518 = vmatpush1.xpose.msra.mxu0 0.0
    %519 = vmatprep.subr.mxu0 0.0
    %520 = vmatpush1.xpose.msra.mxu0 0.0
    %521 = vmatprep.subr.mxu0 0.0
    %522 = vmatpush1.xpose.msra.mxu0 0.0
    %523 = vmatprep.subr.mxu0 0.0
    %524 = vmatpush1.xpose.msra.mxu0 0.0
    %525 = vmatprep.subr.mxu0 0.0
    %526 = vmatpush1.xpose.msra.mxu0 0.0
    %527 = vmatprep.subr.mxu0 0.0
    %528 = vmatpush1.xpose.msra.mxu0 0.0
    %529 = vmatprep.subr.mxu0 0.0
    %530 = vmatpush1.xpose.msra.mxu0 0.0
    %531 = vmatprep.subr.mxu0 0.0
    %532 = vmatpush1.xpose.msra.mxu0 0.0
    %533 = vmatprep.subr.mxu0 0.0
    %534 = vmatpush1.xpose.msra.mxu0 0.0
    %535 = vmatprep.subr.mxu0 0.0
    %536 = vmatpush1.xpose.msra.mxu0 0.0
    %537 = vmatprep.subr.mxu0 0.0
    %538 = vmatpush1.xpose.msra.mxu0 %v505
    %539 = vmatprep.subr.mxu0 0.0
    %540 = vmatpush2.xpose.msra.mxu0 0.0
    %541 = vmatprep.subr.mxu0 0.0
    %542 = vmatpush2.xpose.msra.mxu0 0.0
    %543 = vmatprep.subr.mxu0 0.0
    %544 = vmatpush2.xpose.msra.mxu0 0.0
    %545 = vmatprep.subr.mxu0 0.0
    %546 = vmatpush2.xpose.msra.mxu0 0.0
    %547 = vmatprep.subr.mxu0 0.0
    %548 = vmatpush2.xpose.msra.mxu0 0.0
    %549 = vmatprep.subr.mxu0 0.0
    %550 = vmatpush2.xpose.msra.mxu0 0.0
    %551 = vmatprep.subr.mxu0 0.0
    %552 = vmatpush2.xpose.msra.mxu0 0.0
    %553 = vmatprep.subr.mxu0 0.0
    %554 = vmatpush2.xpose.msra.mxu0 0.0
    %555 = vmatprep.subr.mxu0 0.0
    %556 = vmatpush2.xpose.msra.mxu0 0.0
    %557 = vmatprep.subr.mxu0 0.0
    %558 = vmatpush2.xpose.msra.mxu0 0.0
    %559 = vmatprep.subr.mxu0 0.0
    %560 = vmatpush2.xpose.msra.mxu0 0.0
    %561 = vmatprep.subr.mxu0 0.0
    %562 = vmatpush2.xpose.msra.mxu0 0.0
    %563 = vmatprep.subr.mxu0 0.0
    %564 = vmatpush2.xpose.msra.mxu0 0.0
    %565 = vmatprep.subr.mxu0 0.0
    %566 = vmatpush2.xpose.msra.mxu0 0.0
    %567 = vmatprep.subr.mxu0 0.0
    %568 = vmatpush2.xpose.msra.mxu0 0.0
    %569 = vmatprep.subr.mxu0 0.0
    %570 = vmatpush2.xpose.msra.mxu0 0.0
    %571 = vmatprep.mubr.f32.mxu0 0.0
    %572 = vmatmul.mubr.f32.gmra.mxu0 %v502
    %v573 = vpop.f32.mrf.mxu0
    %v574 = vadd.f32 0.0, %v573
    %v575 = vpop.f32.mrf.mxu0
    %576 = vdwg.mxu0
    %v577 = vmul.f32 %v574, 0.17677669
    %v578 = vsel %vm116, %v577, -1e+30
    %vm579 = vcmask 64512
    %v580 = vsel %vm579, %v578, -inf
    %581 = vmax.xlane.f32.xlu0 %v580
    %v582 = vpop.xlane.xlu0 %581
    %v583 = vsub.f32 %v578, %v582
    %v584 = vmul.f32 %v583, 1.442695
    %v585 = vpow.pop %v584
    %v586 = vsel %vm579, %v585, 0.0
    %587 = vadd.xlane.f32.xlu0 %v586
    %v588 = vpop.xlane.xlu0 %587
    %v589 = vrcp.pop %v588
    %v590 = vmul.f32 %v585, %v589
    %v592 = vsel %vm579, %v590, 0
    %594 = vmatprep.subr.mxu0 0.0
    %595 = vmatpush1.msra.mxu0 0.0
    %596 = vmatprep.subr.mxu0 0.0
    %597 = vmatpush1.msra.mxu0 0.0
    %598 = vmatprep.subr.mxu0 0.0
    %599 = vmatpush1.msra.mxu0 0.0
    %600 = vmatprep.subr.mxu0 0.0
    %601 = vmatpush1.msra.mxu0 0.0
    %602 = vmatprep.subr.mxu0 0.0
    %603 = vmatpush1.msra.mxu0 0.0
    %604 = vmatprep.subr.mxu0 0.0
    %605 = vmatpush1.msra.mxu0 0.0
    %606 = vmatprep.subr.mxu0 0.0
    %607 = vmatpush1.msra.mxu0 0.0
    %608 = vmatprep.subr.mxu0 0.0
    %609 = vmatpush1.msra.mxu0 0.0
    %610 = vmatprep.subr.mxu0 0.0
    %611 = vmatpush1.msra.mxu0 0.0
    %612 = vmatprep.subr.mxu0 0.0
    %613 = vmatpush1.msra.mxu0 0.0
    %614 = vmatprep.subr.mxu0 0.0
    %615 = vmatpush1.msra.mxu0 0.0
    %616 = vmatprep.subr.mxu0 0.0
    %617 = vmatpush1.msra.mxu0 0.0
    %618 = vmatprep.subr.mxu0 0.0
    %619 = vmatpush1.msra.mxu0 0.0
    %620 = vmatprep.subr.mxu0 0.0
    %621 = vmatpush1.msra.mxu0 0.0
    %622 = vmatprep.subr.mxu0 0.0
    %623 = vmatpush1.msra.mxu0 0.0
    %624 = vmatprep.subr.mxu0 0.0
    %625 = vmatpush1.msra.mxu0 %v467
    %626 = vmatprep.subr.mxu0 0.0
    %627 = vmatpush2.msra.mxu0 0.0
    %628 = vmatprep.subr.mxu0 0.0
    %629 = vmatpush2.msra.mxu0 0.0
    %630 = vmatprep.subr.mxu0 0.0
    %631 = vmatpush2.msra.mxu0 0.0
    %632 = vmatprep.subr.mxu0 0.0
    %633 = vmatpush2.msra.mxu0 0.0
    %634 = vmatprep.subr.mxu0 0.0
    %635 = vmatpush2.msra.mxu0 0.0
    %636 = vmatprep.subr.mxu0 0.0
    %637 = vmatpush2.msra.mxu0 0.0
    %638 = vmatprep.subr.mxu0 0.0
    %639 = vmatpush2.msra.mxu0 0.0
    %640 = vmatprep.subr.mxu0 0.0
    %641 = vmatpush2.msra.mxu0 0.0
    %642 = vmatprep.subr.mxu0 0.0
    %643 = vmatpush2.msra.mxu0 0.0
    %644 = vmatprep.subr.mxu0 0.0
    %645 = vmatpush2.msra.mxu0 0.0
    %646 = vmatprep.subr.mxu0 0.0
    %647 = vmatpush2.msra.mxu0 0.0
    %648 = vmatprep.subr.mxu0 0.0
    %649 = vmatpush2.msra.mxu0 0.0
    %650 = vmatprep.subr.mxu0 0.0
    %651 = vmatpush2.msra.mxu0 0.0
    %652 = vmatprep.subr.mxu0 0.0
    %653 = vmatpush2.msra.mxu0 0.0
    %654 = vmatprep.subr.mxu0 0.0
    %655 = vmatpush2.msra.mxu0 0.0
    %656 = vmatprep.subr.mxu0 0.0
    %657 = vmatpush2.msra.mxu0 0.0
    %658 = vmatprep.mubr.f32.mxu0 0.0
    %659 = vmatmul.mubr.f32.gmra.mxu0 %v592
    %v660 = vpop.f32.mrf.mxu0
    %v661 = vadd.f32 0.0, %v660
    %v662 = vpop.f32.mrf.mxu0
    %663 = vdwg.mxu0
    %664 = vrot.lane.b32.xlu0 %v473, 80
    %v665 = vpop.permute.xlu0 %664
    %667 = vrot.lane.b32.xlu0 %v424, 112
    %v668 = vpop.permute.xlu0 %667
    %v670 = vsel %vm482, %v665, %v668
    %672 = vrot.lane.b32.xlu0 %v110, 32
    %v673 = vpop.permute.xlu0 %672
    %v675 = vmul.f32 %v424, %v673
    %v676 = vmul.f32 %v670, %v111
    %678 = vrot.lane.b32.xlu0 %v676, 32
    %v679 = vpop.permute.xlu0 %678
    %v681 = vadd.f32 %v675, %v679
    %682 = vrot.lane.b32.xlu0 %v487, 80
    %v683 = vpop.permute.xlu0 %682
    %685 = vrot.lane.b32.xlu0 %v426, 112
    %v686 = vpop.permute.xlu0 %685
    %v688 = vsel %vm482, %v683, %v686
    %v689 = vmul.f32 %v426, %v673
    %v690 = vmul.f32 %v688, %v111
    %692 = vrot.lane.b32.xlu0 %v690, 32
    %v693 = vpop.permute.xlu0 %692
    %v695 = vadd.f32 %v689, %v693
    %697 = vrot.lane.b32.xlu0 %v681, 96
    %v698 = vpop.permute.xlu0 %697
    %700 = vrot.lane.b32.xlu0 %v695, 96
    %v701 = vpop.permute.xlu0 %700
    %v702 = vsel %vm500, %v698, 0
    %v704 = vsel %vm500, %v701, 0
    %706 = vmatprep.subr.mxu0 0.0
    %707 = vmatpush1.xpose.msra.mxu0 0.0
    %708 = vmatprep.subr.mxu0 0.0
    %709 = vmatpush1.xpose.msra.mxu0 0.0
    %710 = vmatprep.subr.mxu0 0.0
    %711 = vmatpush1.xpose.msra.mxu0 0.0
    %712 = vmatprep.subr.mxu0 0.0
    %713 = vmatpush1.xpose.msra.mxu0 0.0
    %714 = vmatprep.subr.mxu0 0.0
    %715 = vmatpush1.xpose.msra.mxu0 0.0
    %716 = vmatprep.subr.mxu0 0.0
    %717 = vmatpush1.xpose.msra.mxu0 0.0
    %718 = vmatprep.subr.mxu0 0.0
    %719 = vmatpush1.xpose.msra.mxu0 0.0
    %720 = vmatprep.subr.mxu0 0.0
    %721 = vmatpush1.xpose.msra.mxu0 0.0
    %722 = vmatprep.subr.mxu0 0.0
    %723 = vmatpush1.xpose.msra.mxu0 0.0
    %724 = vmatprep.subr.mxu0 0.0
    %725 = vmatpush1.xpose.msra.mxu0 0.0
    %726 = vmatprep.subr.mxu0 0.0
    %727 = vmatpush1.xpose.msra.mxu0 0.0
    %728 = vmatprep.subr.mxu0 0.0
    %729 = vmatpush1.xpose.msra.mxu0 0.0
    %730 = vmatprep.subr.mxu0 0.0
    %731 = vmatpush1.xpose.msra.mxu0 0.0
    %732 = vmatprep.subr.mxu0 0.0
    %733 = vmatpush1.xpose.msra.mxu0 0.0
    %734 = vmatprep.subr.mxu0 0.0
    %735 = vmatpush1.xpose.msra.mxu0 0.0
    %736 = vmatprep.subr.mxu0 0.0
    %737 = vmatpush1.xpose.msra.mxu0 %v704
    %738 = vmatprep.subr.mxu0 0.0
    %739 = vmatpush2.xpose.msra.mxu0 0.0
    %740 = vmatprep.subr.mxu0 0.0
    %741 = vmatpush2.xpose.msra.mxu0 0.0
    %742 = vmatprep.subr.mxu0 0.0
    %743 = vmatpush2.xpose.msra.mxu0 0.0
    %744 = vmatprep.subr.mxu0 0.0
    %745 = vmatpush2.xpose.msra.mxu0 0.0
    %746 = vmatprep.subr.mxu0 0.0
    %747 = vmatpush2.xpose.msra.mxu0 0.0
    %748 = vmatprep.subr.mxu0 0.0
    %749 = vmatpush2.xpose.msra.mxu0 0.0
    %750 = vmatprep.subr.mxu0 0.0
    %751 = vmatpush2.xpose.msra.mxu0 0.0
    %752 = vmatprep.subr.mxu0 0.0
    %753 = vmatpush2.xpose.msra.mxu0 0.0
    %754 = vmatprep.subr.mxu0 0.0
    %755 = vmatpush2.xpose.msra.mxu0 0.0
    %756 = vmatprep.subr.mxu0 0.0
    %757 = vmatpush2.xpose.msra.mxu0 0.0
    %758 = vmatprep.subr.mxu0 0.0
    %759 = vmatpush2.xpose.msra.mxu0 0.0
    %760 = vmatprep.subr.mxu0 0.0
    %761 = vmatpush2.xpose.msra.mxu0 0.0
    %762 = vmatprep.subr.mxu0 0.0
    %763 = vmatpush2.xpose.msra.mxu0 0.0
    %764 = vmatprep.subr.mxu0 0.0
    %765 = vmatpush2.xpose.msra.mxu0 0.0
    %766 = vmatprep.subr.mxu0 0.0
    %767 = vmatpush2.xpose.msra.mxu0 0.0
    %768 = vmatprep.subr.mxu0 0.0
    %769 = vmatpush2.xpose.msra.mxu0 0.0
    %770 = vmatprep.mubr.f32.mxu0 0.0
    %771 = vmatmul.mubr.f32.gmra.mxu0 %v702
    %v772 = vpop.f32.mrf.mxu0
    %v773 = vadd.f32 0.0, %v772
    %v774 = vpop.f32.mrf.mxu0
    %775 = vdwg.mxu0
    %v776 = vmul.f32 %v773, 0.17677669
    %v777 = vsel %vm116, %v776, -1e+30
    %v778 = vsel %vm579, %v777, -inf
    %779 = vmax.xlane.f32.xlu0 %v778
    %v780 = vpop.xlane.xlu0 %779
    %v781 = vsub.f32 %v777, %v780
    %v782 = vmul.f32 %v781, 1.442695
    %v783 = vpow.pop %v782
    %v784 = vsel %vm579, %v783, 0.0
    %785 = vadd.xlane.f32.xlu0 %v784
    %v786 = vpop.xlane.xlu0 %785
    %v787 = vrcp.pop %v786
    %v788 = vmul.f32 %v783, %v787
    %790 = vrot.lane.b32.xlu0 %v467, 96
    %v791 = vpop.permute.xlu0 %790
    %v794 = vsel %vm579, %v788, 0
    %796 = vmatprep.subr.mxu0 0.0
    %797 = vmatpush1.msra.mxu0 0.0
    %798 = vmatprep.subr.mxu0 0.0
    %799 = vmatpush1.msra.mxu0 0.0
    %800 = vmatprep.subr.mxu0 0.0
    %801 = vmatpush1.msra.mxu0 0.0
    %802 = vmatprep.subr.mxu0 0.0
    %803 = vmatpush1.msra.mxu0 0.0
    %804 = vmatprep.subr.mxu0 0.0
    %805 = vmatpush1.msra.mxu0 0.0
    %806 = vmatprep.subr.mxu0 0.0
    %807 = vmatpush1.msra.mxu0 0.0
    %808 = vmatprep.subr.mxu0 0.0
    %809 = vmatpush1.msra.mxu0 0.0
    %810 = vmatprep.subr.mxu0 0.0
    %811 = vmatpush1.msra.mxu0 0.0
    %812 = vmatprep.subr.mxu0 0.0
    %813 = vmatpush1.msra.mxu0 0.0
    %814 = vmatprep.subr.mxu0 0.0
    %815 = vmatpush1.msra.mxu0 0.0
    %816 = vmatprep.subr.mxu0 0.0
    %817 = vmatpush1.msra.mxu0 0.0
    %818 = vmatprep.subr.mxu0 0.0
    %819 = vmatpush1.msra.mxu0 0.0
    %820 = vmatprep.subr.mxu0 0.0
    %821 = vmatpush1.msra.mxu0 0.0
    %822 = vmatprep.subr.mxu0 0.0
    %823 = vmatpush1.msra.mxu0 0.0
    %824 = vmatprep.subr.mxu0 0.0
    %825 = vmatpush1.msra.mxu0 0.0
    %826 = vmatprep.subr.mxu0 0.0
    %827 = vmatpush1.msra.mxu0 %v791
    %828 = vmatprep.subr.mxu0 0.0
    %829 = vmatpush2.msra.mxu0 0.0
    %830 = vmatprep.subr.mxu0 0.0
    %831 = vmatpush2.msra.mxu0 0.0
    %832 = vmatprep.subr.mxu0 0.0
    %833 = vmatpush2.msra.mxu0 0.0
    %834 = vmatprep.subr.mxu0 0.0
    %835 = vmatpush2.msra.mxu0 0.0
    %836 = vmatprep.subr.mxu0 0.0
    %837 = vmatpush2.msra.mxu0 0.0
    %838 = vmatprep.subr.mxu0 0.0
    %839 = vmatpush2.msra.mxu0 0.0
    %840 = vmatprep.subr.mxu0 0.0
    %841 = vmatpush2.msra.mxu0 0.0
    %842 = vmatprep.subr.mxu0 0.0
    %843 = vmatpush2.msra.mxu0 0.0
    %844 = vmatprep.subr.mxu0 0.0
    %845 = vmatpush2.msra.mxu0 0.0
    %846 = vmatprep.subr.mxu0 0.0
    %847 = vmatpush2.msra.mxu0 0.0
    %848 = vmatprep.subr.mxu0 0.0
    %849 = vmatpush2.msra.mxu0 0.0
    %850 = vmatprep.subr.mxu0 0.0
    %851 = vmatpush2.msra.mxu0 0.0
    %852 = vmatprep.subr.mxu0 0.0
    %853 = vmatpush2.msra.mxu0 0.0
    %854 = vmatprep.subr.mxu0 0.0
    %855 = vmatpush2.msra.mxu0 0.0
    %856 = vmatprep.subr.mxu0 0.0
    %857 = vmatpush2.msra.mxu0 0.0
    %858 = vmatprep.subr.mxu0 0.0
    %859 = vmatpush2.msra.mxu0 0.0
    %860 = vmatprep.mubr.f32.mxu0 0.0
    %861 = vmatmul.mubr.f32.gmra.mxu0 %v794
    %v862 = vpop.f32.mrf.mxu0
    %v863 = vadd.f32 0.0, %v862
    %v864 = vpop.f32.mrf.mxu0
    %865 = vdwg.mxu0
    %866 = vrot.lane.b32.xlu0 %v473, 48
    %v867 = vpop.permute.xlu0 %866
    %869 = vrot.lane.b32.xlu0 %v424, 80
    %v870 = vpop.permute.xlu0 %869
    %v872 = vsel %vm482, %v867, %v870
    %873 = vrot.lane.b32.xlu0 %v110, 64
    %v874 = vpop.permute.xlu0 %873
    %v876 = vmul.f32 %v424, %v874
    %v877 = vmul.f32 %v872, %v111
    %879 = vrot.lane.b32.xlu0 %v877, 64
    %v880 = vpop.permute.xlu0 %879
    %v882 = vadd.f32 %v876, %v880
    %883 = vrot.lane.b32.xlu0 %v487, 48
    %v884 = vpop.permute.xlu0 %883
    %886 = vrot.lane.b32.xlu0 %v426, 80
    %v887 = vpop.permute.xlu0 %886
    %v889 = vsel %vm482, %v884, %v887
    %v890 = vmul.f32 %v426, %v874
    %v891 = vmul.f32 %v889, %v111
    %893 = vrot.lane.b32.xlu0 %v891, 64
    %v894 = vpop.permute.xlu0 %893
    %v896 = vadd.f32 %v890, %v894
    %898 = vrot.lane.b32.xlu0 %v882, 64
    %v899 = vpop.permute.xlu0 %898
    %901 = vrot.lane.b32.xlu0 %v896, 64
    %v902 = vpop.permute.xlu0 %901
    %v903 = vsel %vm500, %v899, 0
    %v905 = vsel %vm500, %v902, 0
    %907 = vmatprep.subr.mxu0 0.0
    %908 = vmatpush1.xpose.msra.mxu0 0.0
    %909 = vmatprep.subr.mxu0 0.0
    %910 = vmatpush1.xpose.msra.mxu0 0.0
    %911 = vmatprep.subr.mxu0 0.0
    %912 = vmatpush1.xpose.msra.mxu0 0.0
    %913 = vmatprep.subr.mxu0 0.0
    %914 = vmatpush1.xpose.msra.mxu0 0.0
    %915 = vmatprep.subr.mxu0 0.0
    %916 = vmatpush1.xpose.msra.mxu0 0.0
    %917 = vmatprep.subr.mxu0 0.0
    %918 = vmatpush1.xpose.msra.mxu0 0.0
    %919 = vmatprep.subr.mxu0 0.0
    %920 = vmatpush1.xpose.msra.mxu0 0.0
    %921 = vmatprep.subr.mxu0 0.0
    %922 = vmatpush1.xpose.msra.mxu0 0.0
    %923 = vmatprep.subr.mxu0 0.0
    %924 = vmatpush1.xpose.msra.mxu0 0.0
    %925 = vmatprep.subr.mxu0 0.0
    %926 = vmatpush1.xpose.msra.mxu0 0.0
    %927 = vmatprep.subr.mxu0 0.0
    %928 = vmatpush1.xpose.msra.mxu0 0.0
    %929 = vmatprep.subr.mxu0 0.0
    %930 = vmatpush1.xpose.msra.mxu0 0.0
    %931 = vmatprep.subr.mxu0 0.0
    %932 = vmatpush1.xpose.msra.mxu0 0.0
    %933 = vmatprep.subr.mxu0 0.0
    %934 = vmatpush1.xpose.msra.mxu0 0.0
    %935 = vmatprep.subr.mxu0 0.0
    %936 = vmatpush1.xpose.msra.mxu0 0.0
    %937 = vmatprep.subr.mxu0 0.0
    %938 = vmatpush1.xpose.msra.mxu0 %v905
    %939 = vmatprep.subr.mxu0 0.0
    %940 = vmatpush2.xpose.msra.mxu0 0.0
    %941 = vmatprep.subr.mxu0 0.0
    %942 = vmatpush2.xpose.msra.mxu0 0.0
    %943 = vmatprep.subr.mxu0 0.0
    %944 = vmatpush2.xpose.msra.mxu0 0.0
    %945 = vmatprep.subr.mxu0 0.0
    %946 = vmatpush2.xpose.msra.mxu0 0.0
    %947 = vmatprep.subr.mxu0 0.0
    %948 = vmatpush2.xpose.msra.mxu0 0.0
    %949 = vmatprep.subr.mxu0 0.0
    %950 = vmatpush2.xpose.msra.mxu0 0.0
    %951 = vmatprep.subr.mxu0 0.0
    %952 = vmatpush2.xpose.msra.mxu0 0.0
    %953 = vmatprep.subr.mxu0 0.0
    %954 = vmatpush2.xpose.msra.mxu0 0.0
    %955 = vmatprep.subr.mxu0 0.0
    %956 = vmatpush2.xpose.msra.mxu0 0.0
    %957 = vmatprep.subr.mxu0 0.0
    %958 = vmatpush2.xpose.msra.mxu0 0.0
    %959 = vmatprep.subr.mxu0 0.0
    %960 = vmatpush2.xpose.msra.mxu0 0.0
    %961 = vmatprep.subr.mxu0 0.0
    %962 = vmatpush2.xpose.msra.mxu0 0.0
    %963 = vmatprep.subr.mxu0 0.0
    %964 = vmatpush2.xpose.msra.mxu0 0.0
    %965 = vmatprep.subr.mxu0 0.0
    %966 = vmatpush2.xpose.msra.mxu0 0.0
    %967 = vmatprep.subr.mxu0 0.0
    %968 = vmatpush2.xpose.msra.mxu0 0.0
    %969 = vmatprep.subr.mxu0 0.0
    %970 = vmatpush2.xpose.msra.mxu0 0.0
    %971 = vmatprep.mubr.f32.mxu0 0.0
    %972 = vmatmul.mubr.f32.gmra.mxu0 %v903
    %v973 = vpop.f32.mrf.mxu0
    %v974 = vadd.f32 0.0, %v973
    %v975 = vpop.f32.mrf.mxu0
    %976 = vdwg.mxu0
    %v977 = vmul.f32 %v974, 0.17677669
    %v978 = vsel %vm116, %v977, -1e+30
    %v979 = vsel %vm579, %v978, -inf
    %980 = vmax.xlane.f32.xlu0 %v979
    %v981 = vpop.xlane.xlu0 %980
    %v982 = vsub.f32 %v978, %v981
    %v983 = vmul.f32 %v982, 1.442695
    %v984 = vpow.pop %v983
    %v985 = vsel %vm579, %v984, 0.0
    %986 = vadd.xlane.f32.xlu0 %v985
    %v987 = vpop.xlane.xlu0 %986
    %v988 = vrcp.pop %v987
    %v989 = vmul.f32 %v984, %v988
    %990 = vrot.lane.b32.xlu0 %v467, 64
    %v991 = vpop.permute.xlu0 %990
    %v994 = vsel %vm579, %v989, 0
    %996 = vmatprep.subr.mxu0 0.0
    %997 = vmatpush1.msra.mxu0 0.0
    %998 = vmatprep.subr.mxu0 0.0
    %999 = vmatpush1.msra.mxu0 0.0
    %1000 = vmatprep.subr.mxu0 0.0
    %1001 = vmatpush1.msra.mxu0 0.0
    %1002 = vmatprep.subr.mxu0 0.0
    %1003 = vmatpush1.msra.mxu0 0.0
    %1004 = vmatprep.subr.mxu0 0.0
    %1005 = vmatpush1.msra.mxu0 0.0
    %1006 = vmatprep.subr.mxu0 0.0
    %1007 = vmatpush1.msra.mxu0 0.0
    %1008 = vmatprep.subr.mxu0 0.0
    %1009 = vmatpush1.msra.mxu0 0.0
    %1010 = vmatprep.subr.mxu0 0.0
    %1011 = vmatpush1.msra.mxu0 0.0
    %1012 = vmatprep.subr.mxu0 0.0
    %1013 = vmatpush1.msra.mxu0 0.0
    %1014 = vmatprep.subr.mxu0 0.0
    %1015 = vmatpush1.msra.mxu0 0.0
    %1016 = vmatprep.subr.mxu0 0.0
    %1017 = vmatpush1.msra.mxu0 0.0
    %1018 = vmatprep.subr.mxu0 0.0
    %1019 = vmatpush1.msra.mxu0 0.0
    %1020 = vmatprep.subr.mxu0 0.0
    %1021 = vmatpush1.msra.mxu0 0.0
    %1022 = vmatprep.subr.mxu0 0.0
    %1023 = vmatpush1.msra.mxu0 0.0
    %1024 = vmatprep.subr.mxu0 0.0
    %1025 = vmatpush1.msra.mxu0 0.0
    %1026 = vmatprep.subr.mxu0 0.0
    %1027 = vmatpush1.msra.mxu0 %v991
    %1028 = vmatprep.subr.mxu0 0.0
    %1029 = vmatpush2.msra.mxu0 0.0
    %1030 = vmatprep.subr.mxu0 0.0
    %1031 = vmatpush2.msra.mxu0 0.0
    %1032 = vmatprep.subr.mxu0 0.0
    %1033 = vmatpush2.msra.mxu0 0.0
    %1034 = vmatprep.subr.mxu0 0.0
    %1035 = vmatpush2.msra.mxu0 0.0
    %1036 = vmatprep.subr.mxu0 0.0
    %1037 = vmatpush2.msra.mxu0 0.0
    %1038 = vmatprep.subr.mxu0 0.0
    %1039 = vmatpush2.msra.mxu0 0.0
    %1040 = vmatprep.subr.mxu0 0.0
    %1041 = vmatpush2.msra.mxu0 0.0
    %1042 = vmatprep.subr.mxu0 0.0
    %1043 = vmatpush2.msra.mxu0 0.0
    %1044 = vmatprep.subr.mxu0 0.0
    %1045 = vmatpush2.msra.mxu0 0.0
    %1046 = vmatprep.subr.mxu0 0.0
    %1047 = vmatpush2.msra.mxu0 0.0
    %1048 = vmatprep.subr.mxu0 0.0
    %1049 = vmatpush2.msra.mxu0 0.0
    %1050 = vmatprep.subr.mxu0 0.0
    %1051 = vmatpush2.msra.mxu0 0.0
    %1052 = vmatprep.subr.mxu0 0.0
    %1053 = vmatpush2.msra.mxu0 0.0
    %1054 = vmatprep.subr.mxu0 0.0
    %1055 = vmatpush2.msra.mxu0 0.0
    %1056 = vmatprep.subr.mxu0 0.0
    %1057 = vmatpush2.msra.mxu0 0.0
    %1058 = vmatprep.subr.mxu0 0.0
    %1059 = vmatpush2.msra.mxu0 0.0
    %1060 = vmatprep.mubr.f32.mxu0 0.0
    %1061 = vmatmul.mubr.f32.gmra.mxu0 %v994
    %v1062 = vpop.f32.mrf.mxu0
    %v1063 = vadd.f32 0.0, %v1062
    %v1064 = vpop.f32.mrf.mxu0
    %1065 = vdwg.mxu0
    %1066 = vrot.lane.b32.xlu0 %v473, 16
    %v1067 = vpop.permute.xlu0 %1066
    %1069 = vrot.lane.b32.xlu0 %v424, 48
    %v1070 = vpop.permute.xlu0 %1069
    %v1072 = vsel %vm482, %v1067, %v1070
    %1073 = vrot.lane.b32.xlu0 %v110, 96
    %v1074 = vpop.permute.xlu0 %1073
    %v1076 = vmul.f32 %v424, %v1074
    %v1077 = vmul.f32 %v1072, %v111
    %1079 = vrot.lane.b32.xlu0 %v1077, 96
    %v1080 = vpop.permute.xlu0 %1079
    %v1082 = vadd.f32 %v1076, %v1080
    %1083 = vrot.lane.b32.xlu0 %v487, 16
    %v1084 = vpop.permute.xlu0 %1083
    %1086 = vrot.lane.b32.xlu0 %v426, 48
    %v1087 = vpop.permute.xlu0 %1086
    %v1089 = vsel %vm482, %v1084, %v1087
    %v1090 = vmul.f32 %v426, %v1074
    %v1091 = vmul.f32 %v1089, %v111
    %1093 = vrot.lane.b32.xlu0 %v1091, 96
    %v1094 = vpop.permute.xlu0 %1093
    %v1096 = vadd.f32 %v1090, %v1094
    %1098 = vrot.lane.b32.xlu0 %v1082, 32
    %v1099 = vpop.permute.xlu0 %1098
    %1101 = vrot.lane.b32.xlu0 %v1096, 32
    %v1102 = vpop.permute.xlu0 %1101
    %v1103 = vsel %vm500, %v1099, 0
    %v1105 = vsel %vm500, %v1102, 0
    %1107 = vmatprep.subr.mxu0 0.0
    %1108 = vmatpush1.xpose.msra.mxu0 0.0
    %1109 = vmatprep.subr.mxu0 0.0
    %1110 = vmatpush1.xpose.msra.mxu0 0.0
    %1111 = vmatprep.subr.mxu0 0.0
    %1112 = vmatpush1.xpose.msra.mxu0 0.0
    %1113 = vmatprep.subr.mxu0 0.0
    %1114 = vmatpush1.xpose.msra.mxu0 0.0
    %1115 = vmatprep.subr.mxu0 0.0
    %1116 = vmatpush1.xpose.msra.mxu0 0.0
    %1117 = vmatprep.subr.mxu0 0.0
    %1118 = vmatpush1.xpose.msra.mxu0 0.0
    %1119 = vmatprep.subr.mxu0 0.0
    %1120 = vmatpush1.xpose.msra.mxu0 0.0
    %1121 = vmatprep.subr.mxu0 0.0
    %1122 = vmatpush1.xpose.msra.mxu0 0.0
    %1123 = vmatprep.subr.mxu0 0.0
    %1124 = vmatpush1.xpose.msra.mxu0 0.0
    %1125 = vmatprep.subr.mxu0 0.0
    %1126 = vmatpush1.xpose.msra.mxu0 0.0
    %1127 = vmatprep.subr.mxu0 0.0
    %1128 = vmatpush1.xpose.msra.mxu0 0.0
    %1129 = vmatprep.subr.mxu0 0.0
    %1130 = vmatpush1.xpose.msra.mxu0 0.0
    %1131 = vmatprep.subr.mxu0 0.0
    %1132 = vmatpush1.xpose.msra.mxu0 0.0
    %1133 = vmatprep.subr.mxu0 0.0
    %1134 = vmatpush1.xpose.msra.mxu0 0.0
    %1135 = vmatprep.subr.mxu0 0.0
    %1136 = vmatpush1.xpose.msra.mxu0 0.0
    %1137 = vmatprep.subr.mxu0 0.0
    %1138 = vmatpush1.xpose.msra.mxu0 %v1105
    %1139 = vmatprep.subr.mxu0 0.0
    %1140 = vmatpush2.xpose.msra.mxu0 0.0
    %1141 = vmatprep.subr.mxu0 0.0
    %1142 = vmatpush2.xpose.msra.mxu0 0.0
    %1143 = vmatprep.subr.mxu0 0.0
    %1144 = vmatpush2.xpose.msra.mxu0 0.0
    %1145 = vmatprep.subr.mxu0 0.0
    %1146 = vmatpush2.xpose.msra.mxu0 0.0
    %1147 = vmatprep.subr.mxu0 0.0
    %1148 = vmatpush2.xpose.msra.mxu0 0.0
    %1149 = vmatprep.subr.mxu0 0.0
    %1150 = vmatpush2.xpose.msra.mxu0 0.0
    %1151 = vmatprep.subr.mxu0 0.0
    %1152 = vmatpush2.xpose.msra.mxu0 0.0
    %1153 = vmatprep.subr.mxu0 0.0
    %1154 = vmatpush2.xpose.msra.mxu0 0.0
    %1155 = vmatprep.subr.mxu0 0.0
    %1156 = vmatpush2.xpose.msra.mxu0 0.0
    %1157 = vmatprep.subr.mxu0 0.0
    %1158 = vmatpush2.xpose.msra.mxu0 0.0
    %1159 = vmatprep.subr.mxu0 0.0
    %1160 = vmatpush2.xpose.msra.mxu0 0.0
    %1161 = vmatprep.subr.mxu0 0.0
    %1162 = vmatpush2.xpose.msra.mxu0 0.0
    %1163 = vmatprep.subr.mxu0 0.0
    %1164 = vmatpush2.xpose.msra.mxu0 0.0
    %1165 = vmatprep.subr.mxu0 0.0
    %1166 = vmatpush2.xpose.msra.mxu0 0.0
    %1167 = vmatprep.subr.mxu0 0.0
    %1168 = vmatpush2.xpose.msra.mxu0 0.0
    %1169 = vmatprep.subr.mxu0 0.0
    %1170 = vmatpush2.xpose.msra.mxu0 0.0
    %1171 = vmatprep.mubr.f32.mxu0 0.0
    %1172 = vmatmul.mubr.f32.gmra.mxu0 %v1103
    %v1173 = vpop.f32.mrf.mxu0
    %v1174 = vadd.f32 0.0, %v1173
    %v1175 = vpop.f32.mrf.mxu0
    %1176 = vdwg.mxu0
    %v1177 = vmul.f32 %v1174, 0.17677669
    %v1178 = vsel %vm116, %v1177, -1e+30
    %v1179 = vsel %vm579, %v1178, -inf
    %1180 = vmax.xlane.f32.xlu0 %v1179
    %v1181 = vpop.xlane.xlu0 %1180
    %v1182 = vsub.f32 %v1178, %v1181
    %v1183 = vmul.f32 %v1182, 1.442695
    %v1184 = vpow.pop %v1183
    %v1185 = vsel %vm579, %v1184, 0.0
    %1186 = vadd.xlane.f32.xlu0 %v1185
    %v1187 = vpop.xlane.xlu0 %1186
    %v1188 = vrcp.pop %v1187
    %v1189 = vmul.f32 %v1184, %v1188
    %1190 = vrot.lane.b32.xlu0 %v467, 32
    %v1191 = vpop.permute.xlu0 %1190
    %v1194 = vsel %vm579, %v1189, 0
    %1196 = vmatprep.subr.mxu0 0.0
    %1197 = vmatpush1.msra.mxu0 0.0
    %1198 = vmatprep.subr.mxu0 0.0
    %1199 = vmatpush1.msra.mxu0 0.0
    %1200 = vmatprep.subr.mxu0 0.0
    %1201 = vmatpush1.msra.mxu0 0.0
    %1202 = vmatprep.subr.mxu0 0.0
    %1203 = vmatpush1.msra.mxu0 0.0
    %1204 = vmatprep.subr.mxu0 0.0
    %1205 = vmatpush1.msra.mxu0 0.0
    %1206 = vmatprep.subr.mxu0 0.0
    %1207 = vmatpush1.msra.mxu0 0.0
    %1208 = vmatprep.subr.mxu0 0.0
    %1209 = vmatpush1.msra.mxu0 0.0
    %1210 = vmatprep.subr.mxu0 0.0
    %1211 = vmatpush1.msra.mxu0 0.0
    %1212 = vmatprep.subr.mxu0 0.0
    %1213 = vmatpush1.msra.mxu0 0.0
    %1214 = vmatprep.subr.mxu0 0.0
    %1215 = vmatpush1.msra.mxu0 0.0
    %1216 = vmatprep.subr.mxu0 0.0
    %1217 = vmatpush1.msra.mxu0 0.0
    %1218 = vmatprep.subr.mxu0 0.0
    %1219 = vmatpush1.msra.mxu0 0.0
    %1220 = vmatprep.subr.mxu0 0.0
    %1221 = vmatpush1.msra.mxu0 0.0
    %1222 = vmatprep.subr.mxu0 0.0
    %1223 = vmatpush1.msra.mxu0 0.0
    %1224 = vmatprep.subr.mxu0 0.0
    %1225 = vmatpush1.msra.mxu0 0.0
    %1226 = vmatprep.subr.mxu0 0.0
    %1227 = vmatpush1.msra.mxu0 %v1191
    %1228 = vmatprep.subr.mxu0 0.0
    %1229 = vmatpush2.msra.mxu0 0.0
    %1230 = vmatprep.subr.mxu0 0.0
    %1231 = vmatpush2.msra.mxu0 0.0
    %1232 = vmatprep.subr.mxu0 0.0
    %1233 = vmatpush2.msra.mxu0 0.0
    %1234 = vmatprep.subr.mxu0 0.0
    %1235 = vmatpush2.msra.mxu0 0.0
    %1236 = vmatprep.subr.mxu0 0.0
    %1237 = vmatpush2.msra.mxu0 0.0
    %1238 = vmatprep.subr.mxu0 0.0
    %1239 = vmatpush2.msra.mxu0 0.0
    %1240 = vmatprep.subr.mxu0 0.0
    %1241 = vmatpush2.msra.mxu0 0.0
    %1242 = vmatprep.subr.mxu0 0.0
    %1243 = vmatpush2.msra.mxu0 0.0
    %1244 = vmatprep.subr.mxu0 0.0
    %1245 = vmatpush2.msra.mxu0 0.0
    %1246 = vmatprep.subr.mxu0 0.0
    %1247 = vmatpush2.msra.mxu0 0.0
    %1248 = vmatprep.subr.mxu0 0.0
    %1249 = vmatpush2.msra.mxu0 0.0
    %1250 = vmatprep.subr.mxu0 0.0
    %1251 = vmatpush2.msra.mxu0 0.0
    %1252 = vmatprep.subr.mxu0 0.0
    %1253 = vmatpush2.msra.mxu0 0.0
    %1254 = vmatprep.subr.mxu0 0.0
    %1255 = vmatpush2.msra.mxu0 0.0
    %1256 = vmatprep.subr.mxu0 0.0
    %1257 = vmatpush2.msra.mxu0 0.0
    %1258 = vmatprep.subr.mxu0 0.0
    %1259 = vmatpush2.msra.mxu0 0.0
    %1260 = vmatprep.mubr.f32.mxu0 0.0
    %1261 = vmatmul.mubr.f32.gmra.mxu0 %v1194
    %v1262 = vpop.f32.mrf.mxu0
    %v1263 = vadd.f32 0.0, %v1262
    %v1264 = vpop.f32.mrf.mxu0
    %1265 = vdwg.mxu0
    %1267 = vrot.lane.b32.xlu0 %v863, 32
    %v1268 = vpop.permute.xlu0 %1267
    %1271 = vrot.lane.b32.xlu0 %v1063, 64
    %v1272 = vpop.permute.xlu0 %1271
    %1275 = vrot.lane.b32.xlu0 %v1263, 96
    %v1276 = vpop.permute.xlu0 %1275
    %v1278 = vsel %vm500, %v661, %v1268
    %v1279 = vsel %vm159, %v1278, %v1272
    %vm1280 = vcmask 785408
    %v1281 = vsel %vm1280, %v1279, %v1276
    %v1282 = vsub.f32 0.0, %v428
    %1284 = vrot.lane.b32.xlu0 %v1282, 112
    %v1285 = vpop.permute.xlu0 %1284
    %1288 = vrot.lane.b32.xlu0 %v428, 16
    %v1289 = vpop.permute.xlu0 %1288
    %v1291 = vsel %vm482, %v1285, %v1289
    %v1292 = vmul.f32 %v428, %v110
    %v1293 = vmul.f32 %v1291, %v111
    %v1294 = vadd.f32 %v1292, %v1293
    %v1295 = vsub.f32 0.0, %v430
    %1297 = vrot.lane.b32.xlu0 %v1295, 112
    %v1298 = vpop.permute.xlu0 %1297
    %1301 = vrot.lane.b32.xlu0 %v430, 16
    %v1302 = vpop.permute.xlu0 %1301
    %v1304 = vsel %vm482, %v1298, %v1302
    %v1305 = vmul.f32 %v430, %v110
    %v1306 = vmul.f32 %v1304, %v111
    %v1307 = vadd.f32 %v1305, %v1306
    %v1309 = vsel %vm500, %v1294, 0
    %v1312 = vsel %vm500, %v1307, 0
    %1314 = vmatprep.subr.mxu0 0.0
    %1315 = vmatpush1.xpose.msra.mxu0 0.0
    %1316 = vmatprep.subr.mxu0 0.0
    %1317 = vmatpush1.xpose.msra.mxu0 0.0
    %1318 = vmatprep.subr.mxu0 0.0
    %1319 = vmatpush1.xpose.msra.mxu0 0.0
    %1320 = vmatprep.subr.mxu0 0.0
    %1321 = vmatpush1.xpose.msra.mxu0 0.0
    %1322 = vmatprep.subr.mxu0 0.0
    %1323 = vmatpush1.xpose.msra.mxu0 0.0
    %1324 = vmatprep.subr.mxu0 0.0
    %1325 = vmatpush1.xpose.msra.mxu0 0.0
    %1326 = vmatprep.subr.mxu0 0.0
    %1327 = vmatpush1.xpose.msra.mxu0 0.0
    %1328 = vmatprep.subr.mxu0 0.0
    %1329 = vmatpush1.xpose.msra.mxu0 0.0
    %1330 = vmatprep.subr.mxu0 0.0
    %1331 = vmatpush1.xpose.msra.mxu0 0.0
    %1332 = vmatprep.subr.mxu0 0.0
    %1333 = vmatpush1.xpose.msra.mxu0 0.0
    %1334 = vmatprep.subr.mxu0 0.0
    %1335 = vmatpush1.xpose.msra.mxu0 0.0
    %1336 = vmatprep.subr.mxu0 0.0
    %1337 = vmatpush1.xpose.msra.mxu0 0.0
    %1338 = vmatprep.subr.mxu0 0.0
    %1339 = vmatpush1.xpose.msra.mxu0 0.0
    %1340 = vmatprep.subr.mxu0 0.0
    %1341 = vmatpush1.xpose.msra.mxu0 0.0
    %1342 = vmatprep.subr.mxu0 0.0
    %1343 = vmatpush1.xpose.msra.mxu0 0.0
    %1344 = vmatprep.subr.mxu0 0.0
    %1345 = vmatpush1.xpose.msra.mxu0 %v1312
    %1346 = vmatprep.subr.mxu0 0.0
    %1347 = vmatpush2.xpose.msra.mxu0 0.0
    %1348 = vmatprep.subr.mxu0 0.0
    %1349 = vmatpush2.xpose.msra.mxu0 0.0
    %1350 = vmatprep.subr.mxu0 0.0
    %1351 = vmatpush2.xpose.msra.mxu0 0.0
    %1352 = vmatprep.subr.mxu0 0.0
    %1353 = vmatpush2.xpose.msra.mxu0 0.0
    %1354 = vmatprep.subr.mxu0 0.0
    %1355 = vmatpush2.xpose.msra.mxu0 0.0
    %1356 = vmatprep.subr.mxu0 0.0
    %1357 = vmatpush2.xpose.msra.mxu0 0.0
    %1358 = vmatprep.subr.mxu0 0.0
    %1359 = vmatpush2.xpose.msra.mxu0 0.0
    %1360 = vmatprep.subr.mxu0 0.0
    %1361 = vmatpush2.xpose.msra.mxu0 0.0
    %1362 = vmatprep.subr.mxu0 0.0
    %1363 = vmatpush2.xpose.msra.mxu0 0.0
    %1364 = vmatprep.subr.mxu0 0.0
    %1365 = vmatpush2.xpose.msra.mxu0 0.0
    %1366 = vmatprep.subr.mxu0 0.0
    %1367 = vmatpush2.xpose.msra.mxu0 0.0
    %1368 = vmatprep.subr.mxu0 0.0
    %1369 = vmatpush2.xpose.msra.mxu0 0.0
    %1370 = vmatprep.subr.mxu0 0.0
    %1371 = vmatpush2.xpose.msra.mxu0 0.0
    %1372 = vmatprep.subr.mxu0 0.0
    %1373 = vmatpush2.xpose.msra.mxu0 0.0
    %1374 = vmatprep.subr.mxu0 0.0
    %1375 = vmatpush2.xpose.msra.mxu0 0.0
    %1376 = vmatprep.subr.mxu0 0.0
    %1377 = vmatpush2.xpose.msra.mxu0 0.0
    %1378 = vmatprep.mubr.f32.mxu0 0.0
    %1379 = vmatmul.mubr.f32.gmra.mxu0 %v1309
    %v1380 = vpop.f32.mrf.mxu0
    %v1381 = vadd.f32 0.0, %v1380
    %v1382 = vpop.f32.mrf.mxu0
    %1383 = vdwg.mxu0
    %v1384 = vmul.f32 %v1381, 0.17677669
    %v1385 = vsel %vm116, %v1384, -1e+30
    %v1386 = vsel %vm579, %v1385, -inf
    %1387 = vmax.xlane.f32.xlu0 %v1386
    %v1388 = vpop.xlane.xlu0 %1387
    %v1389 = vsub.f32 %v1385, %v1388
    %v1390 = vmul.f32 %v1389, 1.442695
    %v1391 = vpow.pop %v1390
    %v1392 = vsel %vm579, %v1391, 0.0
    %1393 = vadd.xlane.f32.xlu0 %v1392
    %v1394 = vpop.xlane.xlu0 %1393
    %v1395 = vrcp.pop %v1394
    %v1396 = vmul.f32 %v1391, %v1395
    %v1398 = vsel %vm579, %v1396, 0
    %1400 = vmatprep.subr.mxu0 0.0
    %1401 = vmatpush1.msra.mxu0 0.0
    %1402 = vmatprep.subr.mxu0 0.0
    %1403 = vmatpush1.msra.mxu0 0.0
    %1404 = vmatprep.subr.mxu0 0.0
    %1405 = vmatpush1.msra.mxu0 0.0
    %1406 = vmatprep.subr.mxu0 0.0
    %1407 = vmatpush1.msra.mxu0 0.0
    %1408 = vmatprep.subr.mxu0 0.0
    %1409 = vmatpush1.msra.mxu0 0.0
    %1410 = vmatprep.subr.mxu0 0.0
    %1411 = vmatpush1.msra.mxu0 0.0
    %1412 = vmatprep.subr.mxu0 0.0
    %1413 = vmatpush1.msra.mxu0 0.0
    %1414 = vmatprep.subr.mxu0 0.0
    %1415 = vmatpush1.msra.mxu0 0.0
    %1416 = vmatprep.subr.mxu0 0.0
    %1417 = vmatpush1.msra.mxu0 0.0
    %1418 = vmatprep.subr.mxu0 0.0
    %1419 = vmatpush1.msra.mxu0 0.0
    %1420 = vmatprep.subr.mxu0 0.0
    %1421 = vmatpush1.msra.mxu0 0.0
    %1422 = vmatprep.subr.mxu0 0.0
    %1423 = vmatpush1.msra.mxu0 0.0
    %1424 = vmatprep.subr.mxu0 0.0
    %1425 = vmatpush1.msra.mxu0 0.0
    %1426 = vmatprep.subr.mxu0 0.0
    %1427 = vmatpush1.msra.mxu0 0.0
    %1428 = vmatprep.subr.mxu0 0.0
    %1429 = vmatpush1.msra.mxu0 0.0
    %1430 = vmatprep.subr.mxu0 0.0
    %1431 = vmatpush1.msra.mxu0 %v470
    %1432 = vmatprep.subr.mxu0 0.0
    %1433 = vmatpush2.msra.mxu0 0.0
    %1434 = vmatprep.subr.mxu0 0.0
    %1435 = vmatpush2.msra.mxu0 0.0
    %1436 = vmatprep.subr.mxu0 0.0
    %1437 = vmatpush2.msra.mxu0 0.0
    %1438 = vmatprep.subr.mxu0 0.0
    %1439 = vmatpush2.msra.mxu0 0.0
    %1440 = vmatprep.subr.mxu0 0.0
    %1441 = vmatpush2.msra.mxu0 0.0
    %1442 = vmatprep.subr.mxu0 0.0
    %1443 = vmatpush2.msra.mxu0 0.0
    %1444 = vmatprep.subr.mxu0 0.0
    %1445 = vmatpush2.msra.mxu0 0.0
    %1446 = vmatprep.subr.mxu0 0.0
    %1447 = vmatpush2.msra.mxu0 0.0
    %1448 = vmatprep.subr.mxu0 0.0
    %1449 = vmatpush2.msra.mxu0 0.0
    %1450 = vmatprep.subr.mxu0 0.0
    %1451 = vmatpush2.msra.mxu0 0.0
    %1452 = vmatprep.subr.mxu0 0.0
    %1453 = vmatpush2.msra.mxu0 0.0
    %1454 = vmatprep.subr.mxu0 0.0
    %1455 = vmatpush2.msra.mxu0 0.0
    %1456 = vmatprep.subr.mxu0 0.0
    %1457 = vmatpush2.msra.mxu0 0.0
    %1458 = vmatprep.subr.mxu0 0.0
    %1459 = vmatpush2.msra.mxu0 0.0
    %1460 = vmatprep.subr.mxu0 0.0
    %1461 = vmatpush2.msra.mxu0 0.0
    %1462 = vmatprep.subr.mxu0 0.0
    %1463 = vmatpush2.msra.mxu0 0.0
    %1464 = vmatprep.mubr.f32.mxu0 0.0
    %1465 = vmatmul.mubr.f32.gmra.mxu0 %v1398
    %v1466 = vpop.f32.mrf.mxu0
    %v1467 = vadd.f32 0.0, %v1466
    %v1468 = vpop.f32.mrf.mxu0
    %1469 = vdwg.mxu0
    %1470 = vrot.lane.b32.xlu0 %v1282, 80
    %v1471 = vpop.permute.xlu0 %1470
    %1473 = vrot.lane.b32.xlu0 %v428, 112
    %v1474 = vpop.permute.xlu0 %1473
    %v1476 = vsel %vm482, %v1471, %v1474
    %v1477 = vmul.f32 %v428, %v673
    %v1478 = vmul.f32 %v1476, %v111
    %1480 = vrot.lane.b32.xlu0 %v1478, 32
    %v1481 = vpop.permute.xlu0 %1480
    %v1483 = vadd.f32 %v1477, %v1481
    %1484 = vrot.lane.b32.xlu0 %v1295, 80
    %v1485 = vpop.permute.xlu0 %1484
    %1487 = vrot.lane.b32.xlu0 %v430, 112
    %v1488 = vpop.permute.xlu0 %1487
    %v1490 = vsel %vm482, %v1485, %v1488
    %v1491 = vmul.f32 %v430, %v673
    %v1492 = vmul.f32 %v1490, %v111
    %1494 = vrot.lane.b32.xlu0 %v1492, 32
    %v1495 = vpop.permute.xlu0 %1494
    %v1497 = vadd.f32 %v1491, %v1495
    %1499 = vrot.lane.b32.xlu0 %v1483, 96
    %v1500 = vpop.permute.xlu0 %1499
    %1502 = vrot.lane.b32.xlu0 %v1497, 96
    %v1503 = vpop.permute.xlu0 %1502
    %v1504 = vsel %vm500, %v1500, 0
    %v1506 = vsel %vm500, %v1503, 0
    %1508 = vmatprep.subr.mxu0 0.0
    %1509 = vmatpush1.xpose.msra.mxu0 0.0
    %1510 = vmatprep.subr.mxu0 0.0
    %1511 = vmatpush1.xpose.msra.mxu0 0.0
    %1512 = vmatprep.subr.mxu0 0.0
    %1513 = vmatpush1.xpose.msra.mxu0 0.0
    %1514 = vmatprep.subr.mxu0 0.0
    %1515 = vmatpush1.xpose.msra.mxu0 0.0
    %1516 = vmatprep.subr.mxu0 0.0
    %1517 = vmatpush1.xpose.msra.mxu0 0.0
    %1518 = vmatprep.subr.mxu0 0.0
    %1519 = vmatpush1.xpose.msra.mxu0 0.0
    %1520 = vmatprep.subr.mxu0 0.0
    %1521 = vmatpush1.xpose.msra.mxu0 0.0
    %1522 = vmatprep.subr.mxu0 0.0
    %1523 = vmatpush1.xpose.msra.mxu0 0.0
    %1524 = vmatprep.subr.mxu0 0.0
    %1525 = vmatpush1.xpose.msra.mxu0 0.0
    %1526 = vmatprep.subr.mxu0 0.0
    %1527 = vmatpush1.xpose.msra.mxu0 0.0
    %1528 = vmatprep.subr.mxu0 0.0
    %1529 = vmatpush1.xpose.msra.mxu0 0.0
    %1530 = vmatprep.subr.mxu0 0.0
    %1531 = vmatpush1.xpose.msra.mxu0 0.0
    %1532 = vmatprep.subr.mxu0 0.0
    %1533 = vmatpush1.xpose.msra.mxu0 0.0
    %1534 = vmatprep.subr.mxu0 0.0
    %1535 = vmatpush1.xpose.msra.mxu0 0.0
    %1536 = vmatprep.subr.mxu0 0.0
    %1537 = vmatpush1.xpose.msra.mxu0 0.0
    %1538 = vmatprep.subr.mxu0 0.0
    %1539 = vmatpush1.xpose.msra.mxu0 %v1506
    %1540 = vmatprep.subr.mxu0 0.0
    %1541 = vmatpush2.xpose.msra.mxu0 0.0
    %1542 = vmatprep.subr.mxu0 0.0
    %1543 = vmatpush2.xpose.msra.mxu0 0.0
    %1544 = vmatprep.subr.mxu0 0.0
    %1545 = vmatpush2.xpose.msra.mxu0 0.0
    %1546 = vmatprep.subr.mxu0 0.0
    %1547 = vmatpush2.xpose.msra.mxu0 0.0
    %1548 = vmatprep.subr.mxu0 0.0
    %1549 = vmatpush2.xpose.msra.mxu0 0.0
    %1550 = vmatprep.subr.mxu0 0.0
    %1551 = vmatpush2.xpose.msra.mxu0 0.0
    %1552 = vmatprep.subr.mxu0 0.0
    %1553 = vmatpush2.xpose.msra.mxu0 0.0
    %1554 = vmatprep.subr.mxu0 0.0
    %1555 = vmatpush2.xpose.msra.mxu0 0.0
    %1556 = vmatprep.subr.mxu0 0.0
    %1557 = vmatpush2.xpose.msra.mxu0 0.0
    %1558 = vmatprep.subr.mxu0 0.0
    %1559 = vmatpush2.xpose.msra.mxu0 0.0
    %1560 = vmatprep.subr.mxu0 0.0
    %1561 = vmatpush2.xpose.msra.mxu0 0.0
    %1562 = vmatprep.subr.mxu0 0.0
    %1563 = vmatpush2.xpose.msra.mxu0 0.0
    %1564 = vmatprep.subr.mxu0 0.0
    %1565 = vmatpush2.xpose.msra.mxu0 0.0
    %1566 = vmatprep.subr.mxu0 0.0
    %1567 = vmatpush2.xpose.msra.mxu0 0.0
    %1568 = vmatprep.subr.mxu0 0.0
    %1569 = vmatpush2.xpose.msra.mxu0 0.0
    %1570 = vmatprep.subr.mxu0 0.0
    %1571 = vmatpush2.xpose.msra.mxu0 0.0
    %1572 = vmatprep.mubr.f32.mxu0 0.0
    %1573 = vmatmul.mubr.f32.gmra.mxu0 %v1504
    %v1574 = vpop.f32.mrf.mxu0
    %v1575 = vadd.f32 0.0, %v1574
    %v1576 = vpop.f32.mrf.mxu0
    %1577 = vdwg.mxu0
    %v1578 = vmul.f32 %v1575, 0.17677669
    %v1579 = vsel %vm116, %v1578, -1e+30
    %v1580 = vsel %vm579, %v1579, -inf
    %1581 = vmax.xlane.f32.xlu0 %v1580
    %v1582 = vpop.xlane.xlu0 %1581
    %v1583 = vsub.f32 %v1579, %v1582
    %v1584 = vmul.f32 %v1583, 1.442695
    %v1585 = vpow.pop %v1584
    %v1586 = vsel %vm579, %v1585, 0.0
    %1587 = vadd.xlane.f32.xlu0 %v1586
    %v1588 = vpop.xlane.xlu0 %1587
    %v1589 = vrcp.pop %v1588
    %v1590 = vmul.f32 %v1585, %v1589
    %1592 = vrot.lane.b32.xlu0 %v470, 96
    %v1593 = vpop.permute.xlu0 %1592
    %v1596 = vsel %vm579, %v1590, 0
    %1598 = vmatprep.subr.mxu0 0.0
    %1599 = vmatpush1.msra.mxu0 0.0
    %1600 = vmatprep.subr.mxu0 0.0
    %1601 = vmatpush1.msra.mxu0 0.0
    %1602 = vmatprep.subr.mxu0 0.0
    %1603 = vmatpush1.msra.mxu0 0.0
    %1604 = vmatprep.subr.mxu0 0.0
    %1605 = vmatpush1.msra.mxu0 0.0
    %1606 = vmatprep.subr.mxu0 0.0
    %1607 = vmatpush1.msra.mxu0 0.0
    %1608 = vmatprep.subr.mxu0 0.0
    %1609 = vmatpush1.msra.mxu0 0.0
    %1610 = vmatprep.subr.mxu0 0.0
    %1611 = vmatpush1.msra.mxu0 0.0
    %1612 = vmatprep.subr.mxu0 0.0
    %1613 = vmatpush1.msra.mxu0 0.0
    %1614 = vmatprep.subr.mxu0 0.0
    %1615 = vmatpush1.msra.mxu0 0.0
    %1616 = vmatprep.subr.mxu0 0.0
    %1617 = vmatpush1.msra.mxu0 0.0
    %1618 = vmatprep.subr.mxu0 0.0
    %1619 = vmatpush1.msra.mxu0 0.0
    %1620 = vmatprep.subr.mxu0 0.0
    %1621 = vmatpush1.msra.mxu0 0.0
    %1622 = vmatprep.subr.mxu0 0.0
    %1623 = vmatpush1.msra.mxu0 0.0
    %1624 = vmatprep.subr.mxu0 0.0
    %1625 = vmatpush1.msra.mxu0 0.0
    %1626 = vmatprep.subr.mxu0 0.0
    %1627 = vmatpush1.msra.mxu0 0.0
    %1628 = vmatprep.subr.mxu0 0.0
    %1629 = vmatpush1.msra.mxu0 %v1593
    %1630 = vmatprep.subr.mxu0 0.0
    %1631 = vmatpush2.msra.mxu0 0.0
    %1632 = vmatprep.subr.mxu0 0.0
    %1633 = vmatpush2.msra.mxu0 0.0
    %1634 = vmatprep.subr.mxu0 0.0
    %1635 = vmatpush2.msra.mxu0 0.0
    %1636 = vmatprep.subr.mxu0 0.0
    %1637 = vmatpush2.msra.mxu0 0.0
    %1638 = vmatprep.subr.mxu0 0.0
    %1639 = vmatpush2.msra.mxu0 0.0
    %1640 = vmatprep.subr.mxu0 0.0
    %1641 = vmatpush2.msra.mxu0 0.0
    %1642 = vmatprep.subr.mxu0 0.0
    %1643 = vmatpush2.msra.mxu0 0.0
    %1644 = vmatprep.subr.mxu0 0.0
    %1645 = vmatpush2.msra.mxu0 0.0
    %1646 = vmatprep.subr.mxu0 0.0
    %1647 = vmatpush2.msra.mxu0 0.0
    %1648 = vmatprep.subr.mxu0 0.0
    %1649 = vmatpush2.msra.mxu0 0.0
    %1650 = vmatprep.subr.mxu0 0.0
    %1651 = vmatpush2.msra.mxu0 0.0
    %1652 = vmatprep.subr.mxu0 0.0
    %1653 = vmatpush2.msra.mxu0 0.0
    %1654 = vmatprep.subr.mxu0 0.0
    %1655 = vmatpush2.msra.mxu0 0.0
    %1656 = vmatprep.subr.mxu0 0.0
    %1657 = vmatpush2.msra.mxu0 0.0
    %1658 = vmatprep.subr.mxu0 0.0
    %1659 = vmatpush2.msra.mxu0 0.0
    %1660 = vmatprep.subr.mxu0 0.0
    %1661 = vmatpush2.msra.mxu0 0.0
    %1662 = vmatprep.mubr.f32.mxu0 0.0
    %1663 = vmatmul.mubr.f32.gmra.mxu0 %v1596
    %v1664 = vpop.f32.mrf.mxu0
    %v1665 = vadd.f32 0.0, %v1664
    %v1666 = vpop.f32.mrf.mxu0
    %1667 = vdwg.mxu0
    %1668 = vrot.lane.b32.xlu0 %v1282, 48
    %v1669 = vpop.permute.xlu0 %1668
    %1671 = vrot.lane.b32.xlu0 %v428, 80
    %v1672 = vpop.permute.xlu0 %1671
    %v1674 = vsel %vm482, %v1669, %v1672
    %v1675 = vmul.f32 %v428, %v874
    %v1676 = vmul.f32 %v1674, %v111
    %1678 = vrot.lane.b32.xlu0 %v1676, 64
    %v1679 = vpop.permute.xlu0 %1678
    %v1681 = vadd.f32 %v1675, %v1679
    %1682 = vrot.lane.b32.xlu0 %v1295, 48
    %v1683 = vpop.permute.xlu0 %1682
    %1685 = vrot.lane.b32.xlu0 %v430, 80
    %v1686 = vpop.permute.xlu0 %1685
    %v1688 = vsel %vm482, %v1683, %v1686
    %v1689 = vmul.f32 %v430, %v874
    %v1690 = vmul.f32 %v1688, %v111
    %1692 = vrot.lane.b32.xlu0 %v1690, 64
    %v1693 = vpop.permute.xlu0 %1692
    %v1695 = vadd.f32 %v1689, %v1693
    %1697 = vrot.lane.b32.xlu0 %v1681, 64
    %v1698 = vpop.permute.xlu0 %1697
    %1700 = vrot.lane.b32.xlu0 %v1695, 64
    %v1701 = vpop.permute.xlu0 %1700
    %v1702 = vsel %vm500, %v1698, 0
    %v1704 = vsel %vm500, %v1701, 0
    %1706 = vmatprep.subr.mxu0 0.0
    %1707 = vmatpush1.xpose.msra.mxu0 0.0
    %1708 = vmatprep.subr.mxu0 0.0
    %1709 = vmatpush1.xpose.msra.mxu0 0.0
    %1710 = vmatprep.subr.mxu0 0.0
    %1711 = vmatpush1.xpose.msra.mxu0 0.0
    %1712 = vmatprep.subr.mxu0 0.0
    %1713 = vmatpush1.xpose.msra.mxu0 0.0
    %1714 = vmatprep.subr.mxu0 0.0
    %1715 = vmatpush1.xpose.msra.mxu0 0.0
    %1716 = vmatprep.subr.mxu0 0.0
    %1717 = vmatpush1.xpose.msra.mxu0 0.0
    %1718 = vmatprep.subr.mxu0 0.0
    %1719 = vmatpush1.xpose.msra.mxu0 0.0
    %1720 = vmatprep.subr.mxu0 0.0
    %1721 = vmatpush1.xpose.msra.mxu0 0.0
    %1722 = vmatprep.subr.mxu0 0.0
    %1723 = vmatpush1.xpose.msra.mxu0 0.0
    %1724 = vmatprep.subr.mxu0 0.0
    %1725 = vmatpush1.xpose.msra.mxu0 0.0
    %1726 = vmatprep.subr.mxu0 0.0
    %1727 = vmatpush1.xpose.msra.mxu0 0.0
    %1728 = vmatprep.subr.mxu0 0.0
    %1729 = vmatpush1.xpose.msra.mxu0 0.0
    %1730 = vmatprep.subr.mxu0 0.0
    %1731 = vmatpush1.xpose.msra.mxu0 0.0
    %1732 = vmatprep.subr.mxu0 0.0
    %1733 = vmatpush1.xpose.msra.mxu0 0.0
    %1734 = vmatprep.subr.mxu0 0.0
    %1735 = vmatpush1.xpose.msra.mxu0 0.0
    %1736 = vmatprep.subr.mxu0 0.0
    %1737 = vmatpush1.xpose.msra.mxu0 %v1704
    %1738 = vmatprep.subr.mxu0 0.0
    %1739 = vmatpush2.xpose.msra.mxu0 0.0
    %1740 = vmatprep.subr.mxu0 0.0
    %1741 = vmatpush2.xpose.msra.mxu0 0.0
    %1742 = vmatprep.subr.mxu0 0.0
    %1743 = vmatpush2.xpose.msra.mxu0 0.0
    %1744 = vmatprep.subr.mxu0 0.0
    %1745 = vmatpush2.xpose.msra.mxu0 0.0
    %1746 = vmatprep.subr.mxu0 0.0
    %1747 = vmatpush2.xpose.msra.mxu0 0.0
    %1748 = vmatprep.subr.mxu0 0.0
    %1749 = vmatpush2.xpose.msra.mxu0 0.0
    %1750 = vmatprep.subr.mxu0 0.0
    %1751 = vmatpush2.xpose.msra.mxu0 0.0
    %1752 = vmatprep.subr.mxu0 0.0
    %1753 = vmatpush2.xpose.msra.mxu0 0.0
    %1754 = vmatprep.subr.mxu0 0.0
    %1755 = vmatpush2.xpose.msra.mxu0 0.0
    %1756 = vmatprep.subr.mxu0 0.0
    %1757 = vmatpush2.xpose.msra.mxu0 0.0
    %1758 = vmatprep.subr.mxu0 0.0
    %1759 = vmatpush2.xpose.msra.mxu0 0.0
    %1760 = vmatprep.subr.mxu0 0.0
    %1761 = vmatpush2.xpose.msra.mxu0 0.0
    %1762 = vmatprep.subr.mxu0 0.0
    %1763 = vmatpush2.xpose.msra.mxu0 0.0
    %1764 = vmatprep.subr.mxu0 0.0
    %1765 = vmatpush2.xpose.msra.mxu0 0.0
    %1766 = vmatprep.subr.mxu0 0.0
    %1767 = vmatpush2.xpose.msra.mxu0 0.0
    %1768 = vmatprep.subr.mxu0 0.0
    %1769 = vmatpush2.xpose.msra.mxu0 0.0
    %1770 = vmatprep.mubr.f32.mxu0 0.0
    %1771 = vmatmul.mubr.f32.gmra.mxu0 %v1702
    %v1772 = vpop.f32.mrf.mxu0
    %v1773 = vadd.f32 0.0, %v1772
    %v1774 = vpop.f32.mrf.mxu0
    %1775 = vdwg.mxu0
    %v1776 = vmul.f32 %v1773, 0.17677669
    %v1777 = vsel %vm116, %v1776, -1e+30
    %v1778 = vsel %vm579, %v1777, -inf
    %1779 = vmax.xlane.f32.xlu0 %v1778
    %v1780 = vpop.xlane.xlu0 %1779
    %v1781 = vsub.f32 %v1777, %v1780
    %v1782 = vmul.f32 %v1781, 1.442695
    %v1783 = vpow.pop %v1782
    %v1784 = vsel %vm579, %v1783, 0.0
    %1785 = vadd.xlane.f32.xlu0 %v1784
    %v1786 = vpop.xlane.xlu0 %1785
    %v1787 = vrcp.pop %v1786
    %v1788 = vmul.f32 %v1783, %v1787
    %1789 = vrot.lane.b32.xlu0 %v470, 64
    %v1790 = vpop.permute.xlu0 %1789
    %v1793 = vsel %vm579, %v1788, 0
    %1795 = vmatprep.subr.mxu0 0.0
    %1796 = vmatpush1.msra.mxu0 0.0
    %1797 = vmatprep.subr.mxu0 0.0
    %1798 = vmatpush1.msra.mxu0 0.0
    %1799 = vmatprep.subr.mxu0 0.0
    %1800 = vmatpush1.msra.mxu0 0.0
    %1801 = vmatprep.subr.mxu0 0.0
    %1802 = vmatpush1.msra.mxu0 0.0
    %1803 = vmatprep.subr.mxu0 0.0
    %1804 = vmatpush1.msra.mxu0 0.0
    %1805 = vmatprep.subr.mxu0 0.0
    %1806 = vmatpush1.msra.mxu0 0.0
    %1807 = vmatprep.subr.mxu0 0.0
    %1808 = vmatpush1.msra.mxu0 0.0
    %1809 = vmatprep.subr.mxu0 0.0
    %1810 = vmatpush1.msra.mxu0 0.0
    %1811 = vmatprep.subr.mxu0 0.0
    %1812 = vmatpush1.msra.mxu0 0.0
    %1813 = vmatprep.subr.mxu0 0.0
    %1814 = vmatpush1.msra.mxu0 0.0
    %1815 = vmatprep.subr.mxu0 0.0
    %1816 = vmatpush1.msra.mxu0 0.0
    %1817 = vmatprep.subr.mxu0 0.0
    %1818 = vmatpush1.msra.mxu0 0.0
    %1819 = vmatprep.subr.mxu0 0.0
    %1820 = vmatpush1.msra.mxu0 0.0
    %1821 = vmatprep.subr.mxu0 0.0
    %1822 = vmatpush1.msra.mxu0 0.0
    %1823 = vmatprep.subr.mxu0 0.0
    %1824 = vmatpush1.msra.mxu0 0.0
    %1825 = vmatprep.subr.mxu0 0.0
    %1826 = vmatpush1.msra.mxu0 %v1790
    %1827 = vmatprep.subr.mxu0 0.0
    %1828 = vmatpush2.msra.mxu0 0.0
    %1829 = vmatprep.subr.mxu0 0.0
    %1830 = vmatpush2.msra.mxu0 0.0
    %1831 = vmatprep.subr.mxu0 0.0
    %1832 = vmatpush2.msra.mxu0 0.0
    %1833 = vmatprep.subr.mxu0 0.0
    %1834 = vmatpush2.msra.mxu0 0.0
    %1835 = vmatprep.subr.mxu0 0.0
    %1836 = vmatpush2.msra.mxu0 0.0
    %1837 = vmatprep.subr.mxu0 0.0
    %1838 = vmatpush2.msra.mxu0 0.0
    %1839 = vmatprep.subr.mxu0 0.0
    %1840 = vmatpush2.msra.mxu0 0.0
    %1841 = vmatprep.subr.mxu0 0.0
    %1842 = vmatpush2.msra.mxu0 0.0
    %1843 = vmatprep.subr.mxu0 0.0
    %1844 = vmatpush2.msra.mxu0 0.0
    %1845 = vmatprep.subr.mxu0 0.0
    %1846 = vmatpush2.msra.mxu0 0.0
    %1847 = vmatprep.subr.mxu0 0.0
    %1848 = vmatpush2.msra.mxu0 0.0
    %1849 = vmatprep.subr.mxu0 0.0
    %1850 = vmatpush2.msra.mxu0 0.0
    %1851 = vmatprep.subr.mxu0 0.0
    %1852 = vmatpush2.msra.mxu0 0.0
    %1853 = vmatprep.subr.mxu0 0.0
    %1854 = vmatpush2.msra.mxu0 0.0
    %1855 = vmatprep.subr.mxu0 0.0
    %1856 = vmatpush2.msra.mxu0 0.0
    %1857 = vmatprep.subr.mxu0 0.0
    %1858 = vmatpush2.msra.mxu0 0.0
    %1859 = vmatprep.mubr.f32.mxu0 0.0
    %1860 = vmatmul.mubr.f32.gmra.mxu0 %v1793
    %v1861 = vpop.f32.mrf.mxu0
    %v1862 = vadd.f32 0.0, %v1861
    %v1863 = vpop.f32.mrf.mxu0
    %1864 = vdwg.mxu0
    %1865 = vrot.lane.b32.xlu0 %v1282, 16
    %v1866 = vpop.permute.xlu0 %1865
    %1868 = vrot.lane.b32.xlu0 %v428, 48
    %v1869 = vpop.permute.xlu0 %1868
    %v1871 = vsel %vm482, %v1866, %v1869
    %v1872 = vmul.f32 %v428, %v1074
    %v1873 = vmul.f32 %v1871, %v111
    %1875 = vrot.lane.b32.xlu0 %v1873, 96
    %v1876 = vpop.permute.xlu0 %1875
    %v1878 = vadd.f32 %v1872, %v1876
    %1879 = vrot.lane.b32.xlu0 %v1295, 16
    %v1880 = vpop.permute.xlu0 %1879
    %1882 = vrot.lane.b32.xlu0 %v430, 48
    %v1883 = vpop.permute.xlu0 %1882
    %v1885 = vsel %vm482, %v1880, %v1883
    %v1886 = vmul.f32 %v430, %v1074
    %v1887 = vmul.f32 %v1885, %v111
    %1889 = vrot.lane.b32.xlu0 %v1887, 96
    %v1890 = vpop.permute.xlu0 %1889
    %v1892 = vadd.f32 %v1886, %v1890
    %1894 = vrot.lane.b32.xlu0 %v1878, 32
    %v1895 = vpop.permute.xlu0 %1894
    %1897 = vrot.lane.b32.xlu0 %v1892, 32
    %v1898 = vpop.permute.xlu0 %1897
    %v1899 = vsel %vm500, %v1895, 0
    %v1901 = vsel %vm500, %v1898, 0
    %1903 = vmatprep.subr.mxu0 0.0
    %1904 = vmatpush1.xpose.msra.mxu0 0.0
    %1905 = vmatprep.subr.mxu0 0.0
    %1906 = vmatpush1.xpose.msra.mxu0 0.0
    %1907 = vmatprep.subr.mxu0 0.0
    %1908 = vmatpush1.xpose.msra.mxu0 0.0
    %1909 = vmatprep.subr.mxu0 0.0
    %1910 = vmatpush1.xpose.msra.mxu0 0.0
    %1911 = vmatprep.subr.mxu0 0.0
    %1912 = vmatpush1.xpose.msra.mxu0 0.0
    %1913 = vmatprep.subr.mxu0 0.0
    %1914 = vmatpush1.xpose.msra.mxu0 0.0
    %1915 = vmatprep.subr.mxu0 0.0
    %1916 = vmatpush1.xpose.msra.mxu0 0.0
    %1917 = vmatprep.subr.mxu0 0.0
    %1918 = vmatpush1.xpose.msra.mxu0 0.0
    %1919 = vmatprep.subr.mxu0 0.0
    %1920 = vmatpush1.xpose.msra.mxu0 0.0
    %1921 = vmatprep.subr.mxu0 0.0
    %1922 = vmatpush1.xpose.msra.mxu0 0.0
    %1923 = vmatprep.subr.mxu0 0.0
    %1924 = vmatpush1.xpose.msra.mxu0 0.0
    %1925 = vmatprep.subr.mxu0 0.0
    %1926 = vmatpush1.xpose.msra.mxu0 0.0
    %1927 = vmatprep.subr.mxu0 0.0
    %1928 = vmatpush1.xpose.msra.mxu0 0.0
    %1929 = vmatprep.subr.mxu0 0.0
    %1930 = vmatpush1.xpose.msra.mxu0 0.0
    %1931 = vmatprep.subr.mxu0 0.0
    %1932 = vmatpush1.xpose.msra.mxu0 0.0
    %1933 = vmatprep.subr.mxu0 0.0
    %1934 = vmatpush1.xpose.msra.mxu0 %v1901
    %1935 = vmatprep.subr.mxu0 0.0
    %1936 = vmatpush2.xpose.msra.mxu0 0.0
    %1937 = vmatprep.subr.mxu0 0.0
    %1938 = vmatpush2.xpose.msra.mxu0 0.0
    %1939 = vmatprep.subr.mxu0 0.0
    %1940 = vmatpush2.xpose.msra.mxu0 0.0
    %1941 = vmatprep.subr.mxu0 0.0
    %1942 = vmatpush2.xpose.msra.mxu0 0.0
    %1943 = vmatprep.subr.mxu0 0.0
    %1944 = vmatpush2.xpose.msra.mxu0 0.0
    %1945 = vmatprep.subr.mxu0 0.0
    %1946 = vmatpush2.xpose.msra.mxu0 0.0
    %1947 = vmatprep.subr.mxu0 0.0
    %1948 = vmatpush2.xpose.msra.mxu0 0.0
    %1949 = vmatprep.subr.mxu0 0.0
    %1950 = vmatpush2.xpose.msra.mxu0 0.0
    %1951 = vmatprep.subr.mxu0 0.0
    %1952 = vmatpush2.xpose.msra.mxu0 0.0
    %1953 = vmatprep.subr.mxu0 0.0
    %1954 = vmatpush2.xpose.msra.mxu0 0.0
    %1955 = vmatprep.subr.mxu0 0.0
    %1956 = vmatpush2.xpose.msra.mxu0 0.0
    %1957 = vmatprep.subr.mxu0 0.0
    %1958 = vmatpush2.xpose.msra.mxu0 0.0
    %1959 = vmatprep.subr.mxu0 0.0
    %1960 = vmatpush2.xpose.msra.mxu0 0.0
    %1961 = vmatprep.subr.mxu0 0.0
    %1962 = vmatpush2.xpose.msra.mxu0 0.0
    %1963 = vmatprep.subr.mxu0 0.0
    %1964 = vmatpush2.xpose.msra.mxu0 0.0
    %1965 = vmatprep.subr.mxu0 0.0
    %1966 = vmatpush2.xpose.msra.mxu0 0.0
    %1967 = vmatprep.mubr.f32.mxu0 0.0
    %1968 = vmatmul.mubr.f32.gmra.mxu0 %v1899
    %v1969 = vpop.f32.mrf.mxu0
    %v1970 = vadd.f32 0.0, %v1969
    %v1971 = vpop.f32.mrf.mxu0
    %1972 = vdwg.mxu0
    %v1973 = vmul.f32 %v1970, 0.17677669
    %v1974 = vsel %vm116, %v1973, -1e+30
    %v1975 = vsel %vm579, %v1974, -inf
    %1976 = vmax.xlane.f32.xlu0 %v1975
    %v1977 = vpop.xlane.xlu0 %1976
    %v1978 = vsub.f32 %v1974, %v1977
    %v1979 = vmul.f32 %v1978, 1.442695
    %v1980 = vpow.pop %v1979
    %v1981 = vsel %vm579, %v1980, 0.0
    %1982 = vadd.xlane.f32.xlu0 %v1981
    %v1983 = vpop.xlane.xlu0 %1982
    %v1984 = vrcp.pop %v1983
    %v1985 = vmul.f32 %v1980, %v1984
    %1986 = vrot.lane.b32.xlu0 %v470, 32
    %v1987 = vpop.permute.xlu0 %1986
    %v1990 = vsel %vm579, %v1985, 0
    %1992 = vmatprep.subr.mxu0 0.0
    %1993 = vmatpush1.msra.mxu0 0.0
    %1994 = vmatprep.subr.mxu0 0.0
    %1995 = vmatpush1.msra.mxu0 0.0
    %1996 = vmatprep.subr.mxu0 0.0
    %1997 = vmatpush1.msra.mxu0 0.0
    %1998 = vmatprep.subr.mxu0 0.0
    %1999 = vmatpush1.msra.mxu0 0.0
    %2000 = vmatprep.subr.mxu0 0.0
    %2001 = vmatpush1.msra.mxu0 0.0
    %2002 = vmatprep.subr.mxu0 0.0
    %2003 = vmatpush1.msra.mxu0 0.0
    %2004 = vmatprep.subr.mxu0 0.0
    %2005 = vmatpush1.msra.mxu0 0.0
    %2006 = vmatprep.subr.mxu0 0.0
    %2007 = vmatpush1.msra.mxu0 0.0
    %2008 = vmatprep.subr.mxu0 0.0
    %2009 = vmatpush1.msra.mxu0 0.0
    %2010 = vmatprep.subr.mxu0 0.0
    %2011 = vmatpush1.msra.mxu0 0.0
    %2012 = vmatprep.subr.mxu0 0.0
    %2013 = vmatpush1.msra.mxu0 0.0
    %2014 = vmatprep.subr.mxu0 0.0
    %2015 = vmatpush1.msra.mxu0 0.0
    %2016 = vmatprep.subr.mxu0 0.0
    %2017 = vmatpush1.msra.mxu0 0.0
    %2018 = vmatprep.subr.mxu0 0.0
    %2019 = vmatpush1.msra.mxu0 0.0
    %2020 = vmatprep.subr.mxu0 0.0
    %2021 = vmatpush1.msra.mxu0 0.0
    %2022 = vmatprep.subr.mxu0 0.0
    %2023 = vmatpush1.msra.mxu0 %v1987
    %2024 = vmatprep.subr.mxu0 0.0
    %2025 = vmatpush2.msra.mxu0 0.0
    %2026 = vmatprep.subr.mxu0 0.0
    %2027 = vmatpush2.msra.mxu0 0.0
    %2028 = vmatprep.subr.mxu0 0.0
    %2029 = vmatpush2.msra.mxu0 0.0
    %2030 = vmatprep.subr.mxu0 0.0
    %2031 = vmatpush2.msra.mxu0 0.0
    %2032 = vmatprep.subr.mxu0 0.0
    %2033 = vmatpush2.msra.mxu0 0.0
    %2034 = vmatprep.subr.mxu0 0.0
    %2035 = vmatpush2.msra.mxu0 0.0
    %2036 = vmatprep.subr.mxu0 0.0
    %2037 = vmatpush2.msra.mxu0 0.0
    %2038 = vmatprep.subr.mxu0 0.0
    %2039 = vmatpush2.msra.mxu0 0.0
    %2040 = vmatprep.subr.mxu0 0.0
    %2041 = vmatpush2.msra.mxu0 0.0
    %2042 = vmatprep.subr.mxu0 0.0
    %2043 = vmatpush2.msra.mxu0 0.0
    %2044 = vmatprep.subr.mxu0 0.0
    %2045 = vmatpush2.msra.mxu0 0.0
    %2046 = vmatprep.subr.mxu0 0.0
    %2047 = vmatpush2.msra.mxu0 0.0
    %2048 = vmatprep.subr.mxu0 0.0
    %2049 = vmatpush2.msra.mxu0 0.0
    %2050 = vmatprep.subr.mxu0 0.0
    %2051 = vmatpush2.msra.mxu0 0.0
    %2052 = vmatprep.subr.mxu0 0.0
    %2053 = vmatpush2.msra.mxu0 0.0
    %2054 = vmatprep.subr.mxu0 0.0
    %2055 = vmatpush2.msra.mxu0 0.0
    %2056 = vmatprep.mubr.f32.mxu0 0.0
    %2057 = vmatmul.mubr.f32.gmra.mxu0 %v1990
    %v2058 = vpop.f32.mrf.mxu0
    %v2059 = vadd.f32 0.0, %v2058
    %v2060 = vpop.f32.mrf.mxu0
    %2061 = vdwg.mxu0
    %2063 = vrot.lane.b32.xlu0 %v1665, 32
    %v2064 = vpop.permute.xlu0 %2063
    %2067 = vrot.lane.b32.xlu0 %v1862, 64
    %v2068 = vpop.permute.xlu0 %2067
    %2071 = vrot.lane.b32.xlu0 %v2059, 96
    %v2072 = vpop.permute.xlu0 %2071
    %v2074 = vsel %vm500, %v1467, %v2064
    %v2075 = vsel %vm159, %v2074, %v2068
    %v2076 = vsel %vm1280, %v2075, %v2072
    %v2077 = vpack.c.bf16 %v2076, %v1281
    %v2078 = vld [vmem:[%s7] sm:$0xf]
    %v2079 = vld [vmem:[%s7 + $0x4] sm:$0xf]
    %v2080 = vld [vmem:[%s7 + $0x8] sm:$0xf]
    %v2081 = vld [vmem:[%s7 + $0xc] sm:$0xf]
    %v2082 = vld [vmem:[%s7 + $0x10] sm:$0xf]
    %v2083 = vld [vmem:[%s7 + $0x14] sm:$0xf]
    %v2084 = vld [vmem:[%s7 + $0x18] sm:$0xf]
    %v2085 = vld [vmem:[%s7 + $0x1c] sm:$0xf]
    %v2086 = vld [vmem:[%s7 + $0x20] sm:$0xf]
    %v2087 = vld [vmem:[%s7 + $0x24] sm:$0xf]
    %v2088 = vld [vmem:[%s7 + $0x28] sm:$0xf]
    %v2089 = vld [vmem:[%s7 + $0x2c] sm:$0xf]
    %v2090 = vld [vmem:[%s7 + $0x30] sm:$0xf]
    %v2091 = vld [vmem:[%s7 + $0x34] sm:$0xf]
    %v2092 = vld [vmem:[%s7 + $0x38] sm:$0xf]
    %v2093 = vld [vmem:[%s7 + $0x3c] sm:$0xf]
    %v2110 = vunpack.c.l.b16 %v2078
    %v2111 = vunpack.c.l.b16 %v2079
    %v2112 = vunpack.c.l.b16 %v2080
    %v2113 = vunpack.c.l.b16 %v2081
    %v2114 = vunpack.c.l.b16 %v2082
    %v2115 = vunpack.c.l.b16 %v2083
    %v2116 = vunpack.c.l.b16 %v2084
    %v2117 = vunpack.c.l.b16 %v2085
    %v2118 = vunpack.c.l.b16 %v2086
    %v2119 = vunpack.c.l.b16 %v2087
    %v2120 = vunpack.c.l.b16 %v2088
    %v2121 = vunpack.c.l.b16 %v2089
    %v2122 = vunpack.c.l.b16 %v2090
    %v2123 = vunpack.c.l.b16 %v2091
    %v2124 = vunpack.c.l.b16 %v2092
    %v2125 = vunpack.c.l.b16 %v2093
    %v2126 = vpack.c.b16 %v2111, %v2110
    %v2127 = vpack.c.b16 %v2113, %v2112
    %v2128 = vpack.c.b16 %v2115, %v2114
    %v2129 = vpack.c.b16 %v2117, %v2116
    %v2130 = vpack.c.b16 %v2119, %v2118
    %v2131 = vpack.c.b16 %v2121, %v2120
    %v2132 = vpack.c.b16 %v2123, %v2122
    %v2133 = vpack.c.b16 %v2125, %v2124
    %2142 = vmatprep.subr.bf16.mxu0 0
    %2143 = vmatpush1.bf16.msra.mxu0 %v2133
    %2144 = vmatprep.subr.bf16.mxu0 0
    %2145 = vmatpush1.bf16.msra.mxu0 %v2132
    %2146 = vmatprep.subr.bf16.mxu0 0
    %2147 = vmatpush1.bf16.msra.mxu0 %v2131
    %2148 = vmatprep.subr.bf16.mxu0 0
    %2149 = vmatpush1.bf16.msra.mxu0 %v2130
    %2150 = vmatprep.subr.bf16.mxu0 0
    %2151 = vmatpush1.bf16.msra.mxu0 %v2129
    %2152 = vmatprep.subr.bf16.mxu0 0
    %2153 = vmatpush1.bf16.msra.mxu0 %v2128
    %2154 = vmatprep.subr.bf16.mxu0 0
    %2155 = vmatpush1.bf16.msra.mxu0 %v2127
    %2156 = vmatprep.subr.bf16.mxu0 0
    %2157 = vmatpush1.bf16.msra.mxu0 %v2126
    %2158 = vmatprep.subr.bf16.mxu0 0
    %2159 = vmatpush2.bf16.msra.mxu0 0
    %2160 = vmatprep.subr.bf16.mxu0 0
    %2161 = vmatpush2.bf16.msra.mxu0 0
    %2162 = vmatprep.subr.bf16.mxu0 0
    %2163 = vmatpush2.bf16.msra.mxu0 0
    %2164 = vmatprep.subr.bf16.mxu0 0
    %2165 = vmatpush2.bf16.msra.mxu0 0
    %2166 = vmatprep.subr.bf16.mxu0 0
    %2167 = vmatpush2.bf16.msra.mxu0 0
    %2168 = vmatprep.subr.bf16.mxu0 0
    %2169 = vmatpush2.bf16.msra.mxu0 0
    %2170 = vmatprep.subr.bf16.mxu0 0
    %2171 = vmatpush2.bf16.msra.mxu0 0
    %2172 = vmatprep.subr.bf16.mxu0 0
    %2173 = vmatpush2.bf16.msra.mxu0 0
    %2174 = vmatprep.mubr.bf16.mxu0 0
    %2175 = vmatmul.mubr.bf16.gmra.mxu0 %v2077
    %v2176 = vpop.f32.mrf.mxu0
    %v2177 = vadd.f32 0.0, %v2176
    %v2178 = vpop.f32.mrf.mxu0
    %v2179 = vpop.f32.mrf.mxu0
    %v2180 = vadd.f32 0.0, %v2179
    %v2181 = vpop.f32.mrf.mxu0
    %2182 = vdwg.mxu0
    %v2183 = vadd.f32 %v198, %v2177
    %v2184 = vadd.f32 %v201, %v2180
    %v2185 = vld [vmem:[%s8] sm:$0x1]
    %v2186 = vmul.f32 %v2183, %v2183
    %v2187 = vmul.f32 %v2184, %v2184
    %2188 = vadd.xlane.f32.xlu0 %v2186
    %v2189 = vpop.xlane.xlu0 %2188
    %2190 = vadd.xlane.f32.xlu0 %v2187
    %v2191 = vpop.xlane.xlu0 %2190
    %v2192 = vmul.f32 %v2189, %v211
    %v2193 = vmul.f32 %v2191, %v211
    %v2194 = vadd.f32 %v2192, 1e-05
    %v2195 = vadd.f32 %v2193, 1e-05
    %v2196 = vrsqrt.pop %v2194
    %v2197 = vrsqrt.pop %v2195
    %v2198 = vmul.f32 %v2183, %v2196
    %v2199 = vmul.f32 %v2184, %v2197
    %v2201 = vlaneseq
    %v2202 = vshrl.u32 %v2201, 7
    %v2203 = vsub.s32 0, %v2202
    %v2204 = vrot.slane %v2185, %v2203
    %v2206 = vmul.f32 %v2198, %v2204
    %v2207 = vmul.f32 %v2199, %v2204
    %v2208 = vpack.c.bf16 %v2207, %v2206
    %v2209 = vld [vmem:[#allocation5] sm:$0xff]
    %v2210 = vld [vmem:[#allocation5 + $0x8] sm:$0xff]
    %v2211 = vld [vmem:[#allocation5 + $0x10] sm:$0xff]
    %v2212 = vld [vmem:[#allocation5 + $0x18] sm:$0xff]
    %v2213 = vld [vmem:[#allocation5 + $0x20] sm:$0xff]
    %v2214 = vld [vmem:[#allocation5 + $0x28] sm:$0xff]
    %v2215 = vld [vmem:[#allocation5 + $0x30] sm:$0xff]
    %v2216 = vld [vmem:[#allocation5 + $0x38] sm:$0xff]
    %v2217 = vld [vmem:[#allocation5 + $0x40] sm:$0xff]
    %v2218 = vld [vmem:[#allocation5 + $0x48] sm:$0xff]
    %v2219 = vld [vmem:[#allocation5 + $0x50] sm:$0xff]
    %v2220 = vld [vmem:[#allocation5 + $0x58] sm:$0xff]
    %v2221 = vld [vmem:[#allocation5 + $0x60] sm:$0xff]
    %v2222 = vld [vmem:[#allocation5 + $0x68] sm:$0xff]
    %v2223 = vld [vmem:[#allocation5 + $0x70] sm:$0xff]
    %v2224 = vld [vmem:[#allocation5 + $0x78] sm:$0xff]
    %v2241 = vunpack.c.l.b16 %v2209
    %v2242 = vunpack.c.h.b16 %v2209
    %v2243 = vunpack.c.l.b16 %v2210
    %v2244 = vunpack.c.h.b16 %v2210
    %v2245 = vunpack.c.l.b16 %v2211
    %v2246 = vunpack.c.h.b16 %v2211
    %v2247 = vunpack.c.l.b16 %v2212
    %v2248 = vunpack.c.h.b16 %v2212
    %v2249 = vunpack.c.l.b16 %v2213
    %v2250 = vunpack.c.h.b16 %v2213
    %v2251 = vunpack.c.l.b16 %v2214
    %v2252 = vunpack.c.h.b16 %v2214
    %v2253 = vunpack.c.l.b16 %v2215
    %v2254 = vunpack.c.h.b16 %v2215
    %v2255 = vunpack.c.l.b16 %v2216
    %v2256 = vunpack.c.h.b16 %v2216
    %v2257 = vunpack.c.l.b16 %v2217
    %v2258 = vunpack.c.h.b16 %v2217
    %v2259 = vunpack.c.l.b16 %v2218
    %v2260 = vunpack.c.h.b16 %v2218
    %v2261 = vunpack.c.l.b16 %v2219
    %v2262 = vunpack.c.h.b16 %v2219
    %v2263 = vunpack.c.l.b16 %v2220
    %v2264 = vunpack.c.h.b16 %v2220
    %v2265 = vunpack.c.l.b16 %v2221
    %v2266 = vunpack.c.h.b16 %v2221
    %v2267 = vunpack.c.l.b16 %v2222
    %v2268 = vunpack.c.h.b16 %v2222
    %v2269 = vunpack.c.l.b16 %v2223
    %v2270 = vunpack.c.h.b16 %v2223
    %v2271 = vunpack.c.l.b16 %v2224
    %v2272 = vunpack.c.h.b16 %v2224
    %v2273 = vpack.c.b16 %v2243, %v2241
    %v2274 = vpack.c.b16 %v2244, %v2242
    %v2275 = vpack.c.b16 %v2247, %v2245
    %v2276 = vpack.c.b16 %v2248, %v2246
    %v2277 = vpack.c.b16 %v2251, %v2249
    %v2278 = vpack.c.b16 %v2252, %v2250
    %v2279 = vpack.c.b16 %v2255, %v2253
    %v2280 = vpack.c.b16 %v2256, %v2254
    %v2281 = vpack.c.b16 %v2259, %v2257
    %v2282 = vpack.c.b16 %v2260, %v2258
    %v2283 = vpack.c.b16 %v2263, %v2261
    %v2284 = vpack.c.b16 %v2264, %v2262
    %v2285 = vpack.c.b16 %v2267, %v2265
    %v2286 = vpack.c.b16 %v2268, %v2266
    %v2287 = vpack.c.b16 %v2271, %v2269
    %v2288 = vpack.c.b16 %v2272, %v2270
    %2305 = vmatprep.subr.bf16.mxu0 %v2288
    %2306 = vmatpush1.bf16.msra.mxu0 %v2287
    %2307 = vmatprep.subr.bf16.mxu0 %v2286
    %2308 = vmatpush1.bf16.msra.mxu0 %v2285
    %2309 = vmatprep.subr.bf16.mxu0 %v2284
    %2310 = vmatpush1.bf16.msra.mxu0 %v2283
    %2311 = vmatprep.subr.bf16.mxu0 %v2282
    %2312 = vmatpush1.bf16.msra.mxu0 %v2281
    %2313 = vmatprep.subr.bf16.mxu0 %v2280
    %2314 = vmatpush1.bf16.msra.mxu0 %v2279
    %2315 = vmatprep.subr.bf16.mxu0 %v2278
    %2316 = vmatpush1.bf16.msra.mxu0 %v2277
    %2317 = vmatprep.subr.bf16.mxu0 %v2276
    %2318 = vmatpush1.bf16.msra.mxu0 %v2275
    %2319 = vmatprep.subr.bf16.mxu0 %v2274
    %2320 = vmatpush1.bf16.msra.mxu0 %v2273
    %2321 = vmatprep.subr.bf16.mxu0 0
    %2322 = vmatpush2.bf16.msra.mxu0 0
    %2323 = vmatprep.subr.bf16.mxu0 0
    %2324 = vmatpush2.bf16.msra.mxu0 0
    %2325 = vmatprep.subr.bf16.mxu0 0
    %2326 = vmatpush2.bf16.msra.mxu0 0
    %2327 = vmatprep.subr.bf16.mxu0 0
    %2328 = vmatpush2.bf16.msra.mxu0 0
    %2329 = vmatprep.subr.bf16.mxu0 0
    %2330 = vmatpush2.bf16.msra.mxu0 0
    %2331 = vmatprep.subr.bf16.mxu0 0
    %2332 = vmatpush2.bf16.msra.mxu0 0
    %2333 = vmatprep.subr.bf16.mxu0 0
    %2334 = vmatpush2.bf16.msra.mxu0 0
    %2335 = vmatprep.subr.bf16.mxu0 0
    %2336 = vmatpush2.bf16.msra.mxu0 0
    %2337 = vmatprep.mubr.bf16.mxu0 0
    %2338 = vmatmul.mubr.bf16.gmra.mxu0 %v2208
    %v2339 = vpop.f32.mrf.mxu0
    %v2340 = vadd.f32 0.0, %v2339
    %v2341 = vpop.f32.mrf.mxu0
    %v2342 = vadd.f32 0.0, %v2341
    %v2343 = vpop.f32.mrf.mxu0
    %v2344 = vadd.f32 0.0, %v2343
    %v2345 = vpop.f32.mrf.mxu0
    %v2346 = vadd.f32 0.0, %v2345
    %2347 = vdwg.mxu0
    %v2348 = vld [vmem:[#allocation7] sm:$0xff]
    %v2349 = vld [vmem:[#allocation7 + $0x8] sm:$0xff]
    %v2350 = vld [vmem:[#allocation7 + $0x10] sm:$0xff]
    %v2351 = vld [vmem:[#allocation7 + $0x18] sm:$0xff]
    %v2352 = vld [vmem:[#allocation7 + $0x20] sm:$0xff]
    %v2353 = vld [vmem:[#allocation7 + $0x28] sm:$0xff]
    %v2354 = vld [vmem:[#allocation7 + $0x30] sm:$0xff]
    %v2355 = vld [vmem:[#allocation7 + $0x38] sm:$0xff]
    %v2356 = vld [vmem:[#allocation7 + $0x40] sm:$0xff]
    %v2357 = vld [vmem:[#allocation7 + $0x48] sm:$0xff]
    %v2358 = vld [vmem:[#allocation7 + $0x50] sm:$0xff]
    %v2359 = vld [vmem:[#allocation7 + $0x58] sm:$0xff]
    %v2360 = vld [vmem:[#allocation7 + $0x60] sm:$0xff]
    %v2361 = vld [vmem:[#allocation7 + $0x68] sm:$0xff]
    %v2362 = vld [vmem:[#allocation7 + $0x70] sm:$0xff]
    %v2363 = vld [vmem:[#allocation7 + $0x78] sm:$0xff]
    %v2380 = vunpack.c.l.b16 %v2348
    %v2381 = vunpack.c.h.b16 %v2348
    %v2382 = vunpack.c.l.b16 %v2349
    %v2383 = vunpack.c.h.b16 %v2349
    %v2384 = vunpack.c.l.b16 %v2350
    %v2385 = vunpack.c.h.b16 %v2350
    %v2386 = vunpack.c.l.b16 %v2351
    %v2387 = vunpack.c.h.b16 %v2351
    %v2388 = vunpack.c.l.b16 %v2352
    %v2389 = vunpack.c.h.b16 %v2352
    %v2390 = vunpack.c.l.b16 %v2353
    %v2391 = vunpack.c.h.b16 %v2353
    %v2392 = vunpack.c.l.b16 %v2354
    %v2393 = vunpack.c.h.b16 %v2354
    %v2394 = vunpack.c.l.b16 %v2355
    %v2395 = vunpack.c.h.b16 %v2355
    %v2396 = vunpack.c.l.b16 %v2356
    %v2397 = vunpack.c.h.b16 %v2356
    %v2398 = vunpack.c.l.b16 %v2357
    %v2399 = vunpack.c.h.b16 %v2357
    %v2400 = vunpack.c.l.b16 %v2358
    %v2401 = vunpack.c.h.b16 %v2358
    %v2402 = vunpack.c.l.b16 %v2359
    %v2403 = vunpack.c.h.b16 %v2359
    %v2404 = vunpack.c.l.b16 %v2360
    %v2405 = vunpack.c.h.b16 %v2360
    %v2406 = vunpack.c.l.b16 %v2361
    %v2407 = vunpack.c.h.b16 %v2361
    %v2408 = vunpack.c.l.b16 %v2362
    %v2409 = vunpack.c.h.b16 %v2362
    %v2410 = vunpack.c.l.b16 %v2363
    %v2411 = vunpack.c.h.b16 %v2363
    %v2412 = vpack.c.b16 %v2382, %v2380
    %v2413 = vpack.c.b16 %v2383, %v2381
    %v2414 = vpack.c.b16 %v2386, %v2384
    %v2415 = vpack.c.b16 %v2387, %v2385
    %v2416 = vpack.c.b16 %v2390, %v2388
    %v2417 = vpack.c.b16 %v2391, %v2389
    %v2418 = vpack.c.b16 %v2394, %v2392
    %v2419 = vpack.c.b16 %v2395, %v2393
    %v2420 = vpack.c.b16 %v2398, %v2396
    %v2421 = vpack.c.b16 %v2399, %v2397
    %v2422 = vpack.c.b16 %v2402, %v2400
    %v2423 = vpack.c.b16 %v2403, %v2401
    %v2424 = vpack.c.b16 %v2406, %v2404
    %v2425 = vpack.c.b16 %v2407, %v2405
    %v2426 = vpack.c.b16 %v2410, %v2408
    %v2427 = vpack.c.b16 %v2411, %v2409
    %2444 = vmatprep.subr.bf16.mxu0 %v2427
    %2445 = vmatpush1.bf16.msra.mxu0 %v2426
    %2446 = vmatprep.subr.bf16.mxu0 %v2425
    %2447 = vmatpush1.bf16.msra.mxu0 %v2424
    %2448 = vmatprep.subr.bf16.mxu0 %v2423
    %2449 = vmatpush1.bf16.msra.mxu0 %v2422
    %2450 = vmatprep.subr.bf16.mxu0 %v2421
    %2451 = vmatpush1.bf16.msra.mxu0 %v2420
    %2452 = vmatprep.subr.bf16.mxu0 %v2419
    %2453 = vmatpush1.bf16.msra.mxu0 %v2418
    %2454 = vmatprep.subr.bf16.mxu0 %v2417
    %2455 = vmatpush1.bf16.msra.mxu0 %v2416
    %2456 = vmatprep.subr.bf16.mxu0 %v2415
    %2457 = vmatpush1.bf16.msra.mxu0 %v2414
    %2458 = vmatprep.subr.bf16.mxu0 %v2413
    %2459 = vmatpush1.bf16.msra.mxu0 %v2412
    %2460 = vmatprep.subr.bf16.mxu0 0
    %2461 = vmatpush2.bf16.msra.mxu0 0
    %2462 = vmatprep.subr.bf16.mxu0 0
    %2463 = vmatpush2.bf16.msra.mxu0 0
    %2464 = vmatprep.subr.bf16.mxu0 0
    %2465 = vmatpush2.bf16.msra.mxu0 0
    %2466 = vmatprep.subr.bf16.mxu0 0
    %2467 = vmatpush2.bf16.msra.mxu0 0
    %2468 = vmatprep.subr.bf16.mxu0 0
    %2469 = vmatpush2.bf16.msra.mxu0 0
    %2470 = vmatprep.subr.bf16.mxu0 0
    %2471 = vmatpush2.bf16.msra.mxu0 0
    %2472 = vmatprep.subr.bf16.mxu0 0
    %2473 = vmatpush2.bf16.msra.mxu0 0
    %2474 = vmatprep.subr.bf16.mxu0 0
    %2475 = vmatpush2.bf16.msra.mxu0 0
    %2476 = vmatprep.mubr.bf16.mxu0 0
    %2477 = vmatmul.mubr.bf16.gmra.mxu0 %v2208
    %v2478 = vpop.f32.mrf.mxu0
    %v2479 = vadd.f32 0.0, %v2478
    %v2480 = vpop.f32.mrf.mxu0
    %v2481 = vadd.f32 0.0, %v2480
    %v2482 = vpop.f32.mrf.mxu0
    %v2483 = vadd.f32 0.0, %v2482
    %v2484 = vpop.f32.mrf.mxu0
    %v2485 = vadd.f32 0.0, %v2484
    %2486 = vdwg.mxu0
    %v2487 = vxor.u32 %v2340, 2147483648
    %v2488 = vxor.u32 %v2342, 2147483648
    %v2489 = vxor.u32 %v2344, 2147483648
    %v2490 = vxor.u32 %v2346, 2147483648
    %v2491 = vmul.f32 %v2487, 1.442695
    %v2492 = vpow.pop %v2491
    %v2493 = vmul.f32 %v2488, 1.442695
    %v2494 = vpow.pop %v2493
    %v2495 = vmul.f32 %v2489, 1.442695
    %v2496 = vpow.pop %v2495
    %v2497 = vmul.f32 %v2490, 1.442695
    %v2498 = vpow.pop %v2497
    %v2499 = vadd.f32 %v2492, 1.0
    %v2500 = vadd.f32 %v2494, 1.0
    %v2501 = vadd.f32 %v2496, 1.0
    %v2502 = vadd.f32 %v2498, 1.0
    %v2503 = vrcp.pop %v2499
    %v2504 = vmul.f32 1.0, %v2503
    %v2505 = vrcp.pop %v2500
    %v2506 = vmul.f32 1.0, %v2505
    %v2507 = vrcp.pop %v2501
    %v2508 = vmul.f32 1.0, %v2507
    %v2509 = vrcp.pop %v2502
    %v2510 = vmul.f32 1.0, %v2509
    %v2511 = vmul.f32 %v2340, %v2504
    %v2512 = vmul.f32 %v2342, %v2506
    %v2513 = vmul.f32 %v2344, %v2508
    %v2514 = vmul.f32 %v2346, %v2510
    %v2515 = vmul.f32 %v2511, %v2479
    %v2516 = vmul.f32 %v2512, %v2481
    %v2517 = vmul.f32 %v2513, %v2483
    %v2518 = vmul.f32 %v2514, %v2485
    %v2519 = vpack.c.bf16 %v2517, %v2515
    %v2520 = vpack.c.bf16 %v2518, %v2516
    %v2521 = vld [vmem:[#allocation8] sm:$0xf]
    %v2522 = vld [vmem:[#allocation8 + $0x4] sm:$0xf]
    %v2523 = vld [vmem:[#allocation8 + $0x8] sm:$0xf]
    %v2524 = vld [vmem:[#allocation8 + $0xc] sm:$0xf]
    %v2525 = vld [vmem:[#allocation8 + $0x10] sm:$0xf]
    %v2526 = vld [vmem:[#allocation8 + $0x14] sm:$0xf]
    %v2527 = vld [vmem:[#allocation8 + $0x18] sm:$0xf]
    %v2528 = vld [vmem:[#allocation8 + $0x1c] sm:$0xf]
    %v2529 = vld [vmem:[#allocation8 + $0x20] sm:$0xf]
    %v2530 = vld [vmem:[#allocation8 + $0x24] sm:$0xf]
    %v2531 = vld [vmem:[#allocation8 + $0x28] sm:$0xf]
    %v2532 = vld [vmem:[#allocation8 + $0x2c] sm:$0xf]
    %v2533 = vld [vmem:[#allocation8 + $0x30] sm:$0xf]
    %v2534 = vld [vmem:[#allocation8 + $0x34] sm:$0xf]
    %v2535 = vld [vmem:[#allocation8 + $0x38] sm:$0xf]
    %v2536 = vld [vmem:[#allocation8 + $0x3c] sm:$0xf]
    %v2537 = vld [vmem:[#allocation8 + $0x40] sm:$0xf]
    %v2538 = vld [vmem:[#allocation8 + $0x44] sm:$0xf]
    %v2539 = vld [vmem:[#allocation8 + $0x48] sm:$0xf]
    %v2540 = vld [vmem:[#allocation8 + $0x4c] sm:$0xf]
    %v2541 = vld [vmem:[#allocation8 + $0x50] sm:$0xf]
    %v2542 = vld [vmem:[#allocation8 + $0x54] sm:$0xf]
    %v2543 = vld [vmem:[#allocation8 + $0x58] sm:$0xf]
    %v2544 = vld [vmem:[#allocation8 + $0x5c] sm:$0xf]
    %v2545 = vld [vmem:[#allocation8 + $0x60] sm:$0xf]
    %v2546 = vld [vmem:[#allocation8 + $0x64] sm:$0xf]
    %v2547 = vld [vmem:[#allocation8 + $0x68] sm:$0xf]
    %v2548 = vld [vmem:[#allocation8 + $0x6c] sm:$0xf]
    %v2549 = vld [vmem:[#allocation8 + $0x70] sm:$0xf]
    %v2550 = vld [vmem:[#allocation8 + $0x74] sm:$0xf]
    %v2551 = vld [vmem:[#allocation8 + $0x78] sm:$0xf]
    %v2552 = vld [vmem:[#allocation8 + $0x7c] sm:$0xf]
    %v2585 = vunpack.c.l.b16 %v2521
    %v2586 = vunpack.c.l.b16 %v2522
    %v2587 = vunpack.c.l.b16 %v2523
    %v2588 = vunpack.c.l.b16 %v2524
    %v2589 = vunpack.c.l.b16 %v2525
    %v2590 = vunpack.c.l.b16 %v2526
    %v2591 = vunpack.c.l.b16 %v2527
    %v2592 = vunpack.c.l.b16 %v2528
    %v2593 = vunpack.c.l.b16 %v2529
    %v2594 = vunpack.c.l.b16 %v2530
    %v2595 = vunpack.c.l.b16 %v2531
    %v2596 = vunpack.c.l.b16 %v2532
    %v2597 = vunpack.c.l.b16 %v2533
    %v2598 = vunpack.c.l.b16 %v2534
    %v2599 = vunpack.c.l.b16 %v2535
    %v2600 = vunpack.c.l.b16 %v2536
    %v2601 = vunpack.c.l.b16 %v2537
    %v2602 = vunpack.c.l.b16 %v2538
    %v2603 = vunpack.c.l.b16 %v2539
    %v2604 = vunpack.c.l.b16 %v2540
    %v2605 = vunpack.c.l.b16 %v2541
    %v2606 = vunpack.c.l.b16 %v2542
    %v2607 = vunpack.c.l.b16 %v2543
    %v2608 = vunpack.c.l.b16 %v2544
    %v2609 = vunpack.c.l.b16 %v2545
    %v2610 = vunpack.c.l.b16 %v2546
    %v2611 = vunpack.c.l.b16 %v2547
    %v2612 = vunpack.c.l.b16 %v2548
    %v2613 = vunpack.c.l.b16 %v2549
    %v2614 = vunpack.c.l.b16 %v2550
    %v2615 = vunpack.c.l.b16 %v2551
    %v2616 = vunpack.c.l.b16 %v2552
    %v2617 = vpack.c.b16 %v2586, %v2585
    %v2618 = vpack.c.b16 %v2588, %v2587
    %v2619 = vpack.c.b16 %v2590, %v2589
    %v2620 = vpack.c.b16 %v2592, %v2591
    %v2621 = vpack.c.b16 %v2594, %v2593
    %v2622 = vpack.c.b16 %v2596, %v2595
    %v2623 = vpack.c.b16 %v2598, %v2597
    %v2624 = vpack.c.b16 %v2600, %v2599
    %v2625 = vpack.c.b16 %v2602, %v2601
    %v2626 = vpack.c.b16 %v2604, %v2603
    %v2627 = vpack.c.b16 %v2606, %v2605
    %v2628 = vpack.c.b16 %v2608, %v2607
    %v2629 = vpack.c.b16 %v2610, %v2609
    %v2630 = vpack.c.b16 %v2612, %v2611
    %v2631 = vpack.c.b16 %v2614, %v2613
    %v2632 = vpack.c.b16 %v2616, %v2615
    %2649 = vmatprep.subr.bf16.mxu0 0
    %2650 = vmatpush1.bf16.msra.mxu0 %v2624
    %2651 = vmatprep.subr.bf16.mxu0 0
    %2652 = vmatpush1.bf16.msra.mxu0 %v2623
    %2653 = vmatprep.subr.bf16.mxu0 0
    %2654 = vmatpush1.bf16.msra.mxu0 %v2622
    %2655 = vmatprep.subr.bf16.mxu0 0
    %2656 = vmatpush1.bf16.msra.mxu0 %v2621
    %2657 = vmatprep.subr.bf16.mxu0 0
    %2658 = vmatpush1.bf16.msra.mxu0 %v2620
    %2659 = vmatprep.subr.bf16.mxu0 0
    %2660 = vmatpush1.bf16.msra.mxu0 %v2619
    %2661 = vmatprep.subr.bf16.mxu0 0
    %2662 = vmatpush1.bf16.msra.mxu0 %v2618
    %2663 = vmatprep.subr.bf16.mxu0 0
    %2664 = vmatpush1.bf16.msra.mxu0 %v2617
    %2665 = vmatprep.subr.bf16.mxu0 0
    %2666 = vmatpush2.bf16.msra.mxu0 %v2632
    %2667 = vmatprep.subr.bf16.mxu0 0
    %2668 = vmatpush2.bf16.msra.mxu0 %v2631
    %2669 = vmatprep.subr.bf16.mxu0 0
    %2670 = vmatpush2.bf16.msra.mxu0 %v2630
    %2671 = vmatprep.subr.bf16.mxu0 0
    %2672 = vmatpush2.bf16.msra.mxu0 %v2629
    %2673 = vmatprep.subr.bf16.mxu0 0
    %2674 = vmatpush2.bf16.msra.mxu0 %v2628
    %2675 = vmatprep.subr.bf16.mxu0 0
    %2676 = vmatpush2.bf16.msra.mxu0 %v2627
    %2677 = vmatprep.subr.bf16.mxu0 0
    %2678 = vmatpush2.bf16.msra.mxu0 %v2626
    %2679 = vmatprep.subr.bf16.mxu0 0
    %2680 = vmatpush2.bf16.msra.mxu0 %v2625
    %2681 = vmatprep.mubr.bf16.mxu0 %v2520
    %2682 = vmatmul.mubr.bf16.gmra.mxu0 %v2519
    %v2683 = vpop.f32.mrf.mxu0
    %v2684 = vadd.f32 0.0, %v2683
    %v2685 = vpop.f32.mrf.mxu0
    %v2686 = vpop.f32.mrf.mxu0
    %v2687 = vadd.f32 0.0, %v2686
    %v2688 = vpop.f32.mrf.mxu0
    %2689 = vdwg.mxu0
    %v2690 = vadd.f32 %v2183, %v2684
    %v2691 = vadd.f32 %v2184, %v2687
    %s2692 = scalar_lea.vmem %s5, 1
    %v2693 = vld [vmem:[%s2692] sm:$0x1]
    %v2694 = vmul.f32 %v2690, %v2690
    %v2695 = vmul.f32 %v2691, %v2691
    %2696 = vadd.xlane.f32.xlu0 %v2694
    %v2697 = vpop.xlane.xlu0 %2696
    %2698 = vadd.xlane.f32.xlu0 %v2695
    %v2699 = vpop.xlane.xlu0 %2698
    %v2700 = vmul.f32 %v2697, %v211
    %v2701 = vmul.f32 %v2699, %v211
    %v2702 = vadd.f32 %v2700, 1e-05
    %v2703 = vadd.f32 %v2701, 1e-05
    %v2704 = vrsqrt.pop %v2702
    %v2705 = vrsqrt.pop %v2703
    %v2706 = vmul.f32 %v2690, %v2704
    %v2707 = vmul.f32 %v2691, %v2705
    %v2709 = vlaneseq
    %v2710 = vshrl.u32 %v2709, 7
    %v2711 = vsub.s32 0, %v2710
    %v2712 = vrot.slane %v2693, %v2711
    %v2714 = vmul.f32 %v2706, %v2712
    %v2715 = vmul.f32 %v2707, %v2712
    %v2716 = vpack.c.bf16 %v2715, %v2714
    %s2717 = scalar_lea.vmem [#allocation2], 192
    %v2718 = vld [vmem:[%s2717] sm:$0xff]
    %v2719 = vld [vmem:[%s2717 + $0x8] sm:$0xf]
    %v2720 = vld [vmem:[%s2717 + $0xc] sm:$0xff]
    %v2721 = vld [vmem:[%s2717 + $0x14] sm:$0xf]
    %v2722 = vld [vmem:[%s2717 + $0x18] sm:$0xff]
    %v2723 = vld [vmem:[%s2717 + $0x20] sm:$0xf]
    %v2724 = vld [vmem:[%s2717 + $0x24] sm:$0xff]
    %v2725 = vld [vmem:[%s2717 + $0x2c] sm:$0xf]
    %v2726 = vld [vmem:[%s2717 + $0x30] sm:$0xff]
    %v2727 = vld [vmem:[%s2717 + $0x38] sm:$0xf]
    %v2728 = vld [vmem:[%s2717 + $0x3c] sm:$0xff]
    %v2729 = vld [vmem:[%s2717 + $0x44] sm:$0xf]
    %v2730 = vld [vmem:[%s2717 + $0x48] sm:$0xff]
    %v2731 = vld [vmem:[%s2717 + $0x50] sm:$0xf]
    %v2732 = vld [vmem:[%s2717 + $0x54] sm:$0xff]
    %v2733 = vld [vmem:[%s2717 + $0x5c] sm:$0xf]
    %v2734 = vld [vmem:[%s2717 + $0x60] sm:$0xff]
    %v2735 = vld [vmem:[%s2717 + $0x68] sm:$0xf]
    %v2736 = vld [vmem:[%s2717 + $0x6c] sm:$0xff]
    %v2737 = vld [vmem:[%s2717 + $0x74] sm:$0xf]
    %v2738 = vld [vmem:[%s2717 + $0x78] sm:$0xff]
    %v2739 = vld [vmem:[%s2717 + $0x80] sm:$0xf]
    %v2740 = vld [vmem:[%s2717 + $0x84] sm:$0xff]
    %v2741 = vld [vmem:[%s2717 + $0x8c] sm:$0xf]
    %v2742 = vld [vmem:[%s2717 + $0x90] sm:$0xff]
    %v2743 = vld [vmem:[%s2717 + $0x98] sm:$0xf]
    %v2744 = vld [vmem:[%s2717 + $0x9c] sm:$0xff]
    %v2745 = vld [vmem:[%s2717 + $0xa4] sm:$0xf]
    %v2746 = vld [vmem:[%s2717 + $0xa8] sm:$0xff]
    %v2747 = vld [vmem:[%s2717 + $0xb0] sm:$0xf]
    %v2748 = vld [vmem:[%s2717 + $0xb4] sm:$0xff]
    %v2749 = vld [vmem:[%s2717 + $0xbc] sm:$0xf]
    %v2782 = vunpack.c.l.b16 %v2718
    %v2783 = vunpack.c.h.b16 %v2718
    %v2784 = vunpack.c.l.b16 %v2719
    %v2785 = vunpack.c.l.b16 %v2720
    %v2786 = vunpack.c.h.b16 %v2720
    %v2787 = vunpack.c.l.b16 %v2721
    %v2788 = vunpack.c.l.b16 %v2722
    %v2789 = vunpack.c.h.b16 %v2722
    %v2790 = vunpack.c.l.b16 %v2723
    %v2791 = vunpack.c.l.b16 %v2724
    %v2792 = vunpack.c.h.b16 %v2724
    %v2793 = vunpack.c.l.b16 %v2725
    %v2794 = vunpack.c.l.b16 %v2726
    %v2795 = vunpack.c.h.b16 %v2726
    %v2796 = vunpack.c.l.b16 %v2727
    %v2797 = vunpack.c.l.b16 %v2728
    %v2798 = vunpack.c.h.b16 %v2728
    %v2799 = vunpack.c.l.b16 %v2729
    %v2800 = vunpack.c.l.b16 %v2730
    %v2801 = vunpack.c.h.b16 %v2730
    %v2802 = vunpack.c.l.b16 %v2731
    %v2803 = vunpack.c.l.b16 %v2732
    %v2804 = vunpack.c.h.b16 %v2732
    %v2805 = vunpack.c.l.b16 %v2733
    %v2806 = vunpack.c.l.b16 %v2734
    %v2807 = vunpack.c.h.b16 %v2734
    %v2808 = vunpack.c.l.b16 %v2735
    %v2809 = vunpack.c.l.b16 %v2736
    %v2810 = vunpack.c.h.b16 %v2736
    %v2811 = vunpack.c.l.b16 %v2737
    %v2812 = vunpack.c.l.b16 %v2738
    %v2813 = vunpack.c.h.b16 %v2738
    %v2814 = vunpack.c.l.b16 %v2739
    %v2815 = vunpack.c.l.b16 %v2740
    %v2816 = vunpack.c.h.b16 %v2740
    %v2817 = vunpack.c.l.b16 %v2741
    %v2818 = vunpack.c.l.b16 %v2742
    %v2819 = vunpack.c.h.b16 %v2742
    %v2820 = vunpack.c.l.b16 %v2743
    %v2821 = vunpack.c.l.b16 %v2744
    %v2822 = vunpack.c.h.b16 %v2744
    %v2823 = vunpack.c.l.b16 %v2745
    %v2824 = vunpack.c.l.b16 %v2746
    %v2825 = vunpack.c.h.b16 %v2746
    %v2826 = vunpack.c.l.b16 %v2747
    %v2827 = vunpack.c.l.b16 %v2748
    %v2828 = vunpack.c.h.b16 %v2748
    %v2829 = vunpack.c.l.b16 %v2749
    %v2830 = vpack.c.b16 %v2785, %v2782
    %v2831 = vpack.c.b16 %v2786, %v2783
    %v2832 = vpack.c.b16 %v2787, %v2784
    %v2833 = vpack.c.b16 %v2791, %v2788
    %v2834 = vpack.c.b16 %v2792, %v2789
    %v2835 = vpack.c.b16 %v2793, %v2790
    %v2836 = vpack.c.b16 %v2797, %v2794
    %v2837 = vpack.c.b16 %v2798, %v2795
    %v2838 = vpack.c.b16 %v2799, %v2796
    %v2839 = vpack.c.b16 %v2803, %v2800
    %v2840 = vpack.c.b16 %v2804, %v2801
    %v2841 = vpack.c.b16 %v2805, %v2802
    %v2842 = vpack.c.b16 %v2809, %v2806
    %v2843 = vpack.c.b16 %v2810, %v2807
    %v2844 = vpack.c.b16 %v2811, %v2808
    %v2845 = vpack.c.b16 %v2815, %v2812
    %v2846 = vpack.c.b16 %v2816, %v2813
    %v2847 = vpack.c.b16 %v2817, %v2814
    %v2848 = vpack.c.b16 %v2821, %v2818
    %v2849 = vpack.c.b16 %v2822, %v2819
    %v2850 = vpack.c.b16 %v2823, %v2820
    %v2851 = vpack.c.b16 %v2827, %v2824
    %v2852 = vpack.c.b16 %v2828, %v2825
    %v2853 = vpack.c.b16 %v2829, %v2826
    %2878 = vmatprep.subr.bf16.mxu0 %v2852
    %2879 = vmatpush1.bf16.msra.mxu0 %v2851
    %2880 = vmatprep.subr.bf16.mxu0 %v2849
    %2881 = vmatpush1.bf16.msra.mxu0 %v2848
    %2882 = vmatprep.subr.bf16.mxu0 %v2846
    %2883 = vmatpush1.bf16.msra.mxu0 %v2845
    %2884 = vmatprep.subr.bf16.mxu0 %v2843
    %2885 = vmatpush1.bf16.msra.mxu0 %v2842
    %2886 = vmatprep.subr.bf16.mxu0 %v2840
    %2887 = vmatpush1.bf16.msra.mxu0 %v2839
    %2888 = vmatprep.subr.bf16.mxu0 %v2837
    %2889 = vmatpush1.bf16.msra.mxu0 %v2836
    %2890 = vmatprep.subr.bf16.mxu0 %v2834
    %2891 = vmatpush1.bf16.msra.mxu0 %v2833
    %2892 = vmatprep.subr.bf16.mxu0 %v2831
    %2893 = vmatpush1.bf16.msra.mxu0 %v2830
    %2894 = vmatprep.subr.bf16.mxu0 0
    %2895 = vmatpush2.bf16.msra.mxu0 0
    %2896 = vmatprep.subr.bf16.mxu0 0
    %2897 = vmatpush2.bf16.msra.mxu0 0
    %2898 = vmatprep.subr.bf16.mxu0 0
    %2899 = vmatpush2.bf16.msra.mxu0 0
    %2900 = vmatprep.subr.bf16.mxu0 0
    %2901 = vmatpush2.bf16.msra.mxu0 0
    %2902 = vmatprep.subr.bf16.mxu0 0
    %2903 = vmatpush2.bf16.msra.mxu0 0
    %2904 = vmatprep.subr.bf16.mxu0 0
    %2905 = vmatpush2.bf16.msra.mxu0 0
    %2906 = vmatprep.subr.bf16.mxu0 0
    %2907 = vmatpush2.bf16.msra.mxu0 0
    %2908 = vmatprep.subr.bf16.mxu0 0
    %2909 = vmatpush2.bf16.msra.mxu0 0
    %2910 = vmatprep.mubr.bf16.mxu0 0
    %2911 = vmatmul.mubr.bf16.gmra.mxu0 %v2716
    %v2912 = vpop.f32.mrf.mxu0
    %v2913 = vadd.f32 0.0, %v2912
    %v2914 = vpop.f32.mrf.mxu0
    %v2915 = vadd.f32 0.0, %v2914
    %v2916 = vpop.f32.mrf.mxu0
    %v2917 = vadd.f32 0.0, %v2916
    %v2918 = vpop.f32.mrf.mxu0
    %v2919 = vadd.f32 0.0, %v2918
    %2920 = vdwg.mxu0
    %2921 = vmatprep.subr.bf16.mxu0 0
    %2922 = vmatpush1.bf16.msra.mxu0 %v2853
    %2923 = vmatprep.subr.bf16.mxu0 0
    %2924 = vmatpush1.bf16.msra.mxu0 %v2850
    %2925 = vmatprep.subr.bf16.mxu0 0
    %2926 = vmatpush1.bf16.msra.mxu0 %v2847
    %2927 = vmatprep.subr.bf16.mxu0 0
    %2928 = vmatpush1.bf16.msra.mxu0 %v2844
    %2929 = vmatprep.subr.bf16.mxu0 0
    %2930 = vmatpush1.bf16.msra.mxu0 %v2841
    %2931 = vmatprep.subr.bf16.mxu0 0
    %2932 = vmatpush1.bf16.msra.mxu0 %v2838
    %2933 = vmatprep.subr.bf16.mxu0 0
    %2934 = vmatpush1.bf16.msra.mxu0 %v2835
    %2935 = vmatprep.subr.bf16.mxu0 0
    %2936 = vmatpush1.bf16.msra.mxu0 %v2832
    %2937 = vmatprep.subr.bf16.mxu0 0
    %2938 = vmatpush2.bf16.msra.mxu0 0
    %2939 = vmatprep.subr.bf16.mxu0 0
    %2940 = vmatpush2.bf16.msra.mxu0 0
    %2941 = vmatprep.subr.bf16.mxu0 0
    %2942 = vmatpush2.bf16.msra.mxu0 0
    %2943 = vmatprep.subr.bf16.mxu0 0
    %2944 = vmatpush2.bf16.msra.mxu0 0
    %2945 = vmatprep.subr.bf16.mxu0 0
    %2946 = vmatpush2.bf16.msra.mxu0 0
    %2947 = vmatprep.subr.bf16.mxu0 0
    %2948 = vmatpush2.bf16.msra.mxu0 0
    %2949 = vmatprep.subr.bf16.mxu0 0
    %2950 = vmatpush2.bf16.msra.mxu0 0
    %2951 = vmatprep.subr.bf16.mxu0 0
    %2952 = vmatpush2.bf16.msra.mxu0 0
    %2953 = vmatprep.mubr.bf16.mxu0 0
    %2954 = vmatmul.mubr.bf16.gmra.mxu0 %v2716
    %v2955 = vpop.f32.mrf.mxu0
    %v2956 = vadd.f32 0.0, %v2955
    %v2957 = vpop.f32.mrf.mxu0
    %v2958 = vpop.f32.mrf.mxu0
    %v2959 = vadd.f32 0.0, %v2958
    %v2960 = vpop.f32.mrf.mxu0
    %2961 = vdwg.mxu0
    %v2962 = vsub.f32 0.0, %v2913
    %2964 = vrot.lane.b32.xlu0 %v2962, 112
    %v2965 = vpop.permute.xlu0 %2964
    %2968 = vrot.lane.b32.xlu0 %v2913, 16
    %v2969 = vpop.permute.xlu0 %2968
    %v2971 = vsel %vm482, %v2965, %v2969
    %v2972 = vmul.f32 %v2913, %v110
    %v2973 = vmul.f32 %v2971, %v111
    %v2974 = vadd.f32 %v2972, %v2973
    %v2975 = vsub.f32 0.0, %v2915
    %2977 = vrot.lane.b32.xlu0 %v2975, 112
    %v2978 = vpop.permute.xlu0 %2977
    %2981 = vrot.lane.b32.xlu0 %v2915, 16
    %v2982 = vpop.permute.xlu0 %2981
    %v2984 = vsel %vm482, %v2978, %v2982
    %v2985 = vmul.f32 %v2915, %v110
    %v2986 = vmul.f32 %v2984, %v111
    %v2987 = vadd.f32 %v2985, %v2986
    %v2989 = vsel %vm500, %v2974, 0
    %v2992 = vsel %vm500, %v2987, 0
    %2994 = vmatprep.subr.mxu0 0.0
    %2995 = vmatpush1.xpose.msra.mxu0 0.0
    %2996 = vmatprep.subr.mxu0 0.0
    %2997 = vmatpush1.xpose.msra.mxu0 0.0
    %2998 = vmatprep.subr.mxu0 0.0
    %2999 = vmatpush1.xpose.msra.mxu0 0.0
    %3000 = vmatprep.subr.mxu0 0.0
    %3001 = vmatpush1.xpose.msra.mxu0 0.0
    %3002 = vmatprep.subr.mxu0 0.0
    %3003 = vmatpush1.xpose.msra.mxu0 0.0
    %3004 = vmatprep.subr.mxu0 0.0
    %3005 = vmatpush1.xpose.msra.mxu0 0.0
    %3006 = vmatprep.subr.mxu0 0.0
    %3007 = vmatpush1.xpose.msra.mxu0 0.0
    %3008 = vmatprep.subr.mxu0 0.0
    %3009 = vmatpush1.xpose.msra.mxu0 0.0
    %3010 = vmatprep.subr.mxu0 0.0
    %3011 = vmatpush1.xpose.msra.mxu0 0.0
    %3012 = vmatprep.subr.mxu0 0.0
    %3013 = vmatpush1.xpose.msra.mxu0 0.0
    %3014 = vmatprep.subr.mxu0 0.0
    %3015 = vmatpush1.xpose.msra.mxu0 0.0
    %3016 = vmatprep.subr.mxu0 0.0
    %3017 = vmatpush1.xpose.msra.mxu0 0.0
    %3018 = vmatprep.subr.mxu0 0.0
    %3019 = vmatpush1.xpose.msra.mxu0 0.0
    %3020 = vmatprep.subr.mxu0 0.0
    %3021 = vmatpush1.xpose.msra.mxu0 0.0
    %3022 = vmatprep.subr.mxu0 0.0
    %3023 = vmatpush1.xpose.msra.mxu0 0.0
    %3024 = vmatprep.subr.mxu0 0.0
    %3025 = vmatpush1.xpose.msra.mxu0 %v2992
    %3026 = vmatprep.subr.mxu0 0.0
    %3027 = vmatpush2.xpose.msra.mxu0 0.0
    %3028 = vmatprep.subr.mxu0 0.0
    %3029 = vmatpush2.xpose.msra.mxu0 0.0
    %3030 = vmatprep.subr.mxu0 0.0
    %3031 = vmatpush2.xpose.msra.mxu0 0.0
    %3032 = vmatprep.subr.mxu0 0.0
    %3033 = vmatpush2.xpose.msra.mxu0 0.0
    %3034 = vmatprep.subr.mxu0 0.0
    %3035 = vmatpush2.xpose.msra.mxu0 0.0
    %3036 = vmatprep.subr.mxu0 0.0
    %3037 = vmatpush2.xpose.msra.mxu0 0.0
    %3038 = vmatprep.subr.mxu0 0.0
    %3039 = vmatpush2.xpose.msra.mxu0 0.0
    %3040 = vmatprep.subr.mxu0 0.0
    %3041 = vmatpush2.xpose.msra.mxu0 0.0
    %3042 = vmatprep.subr.mxu0 0.0
    %3043 = vmatpush2.xpose.msra.mxu0 0.0
    %3044 = vmatprep.subr.mxu0 0.0
    %3045 = vmatpush2.xpose.msra.mxu0 0.0
    %3046 = vmatprep.subr.mxu0 0.0
    %3047 = vmatpush2.xpose.msra.mxu0 0.0
    %3048 = vmatprep.subr.mxu0 0.0
    %3049 = vmatpush2.xpose.msra.mxu0 0.0
    %3050 = vmatprep.subr.mxu0 0.0
    %3051 = vmatpush2.xpose.msra.mxu0 0.0
    %3052 = vmatprep.subr.mxu0 0.0
    %3053 = vmatpush2.xpose.msra.mxu0 0.0
    %3054 = vmatprep.subr.mxu0 0.0
    %3055 = vmatpush2.xpose.msra.mxu0 0.0
    %3056 = vmatprep.subr.mxu0 0.0
    %3057 = vmatpush2.xpose.msra.mxu0 0.0
    %3058 = vmatprep.mubr.f32.mxu0 0.0
    %3059 = vmatmul.mubr.f32.gmra.mxu0 %v2989
    %v3060 = vpop.f32.mrf.mxu0
    %v3061 = vadd.f32 0.0, %v3060
    %v3062 = vpop.f32.mrf.mxu0
    %3063 = vdwg.mxu0
    %v3064 = vmul.f32 %v3061, 0.17677669
    %v3065 = vsel %vm116, %v3064, -1e+30
    %v3066 = vsel %vm579, %v3065, -inf
    %3067 = vmax.xlane.f32.xlu0 %v3066
    %v3068 = vpop.xlane.xlu0 %3067
    %v3069 = vsub.f32 %v3065, %v3068
    %v3070 = vmul.f32 %v3069, 1.442695
    %v3071 = vpow.pop %v3070
    %v3072 = vsel %vm579, %v3071, 0.0
    %3073 = vadd.xlane.f32.xlu0 %v3072
    %v3074 = vpop.xlane.xlu0 %3073
    %v3075 = vrcp.pop %v3074
    %v3076 = vmul.f32 %v3071, %v3075
    %v3078 = vsel %vm579, %v3076, 0
    %3080 = vmatprep.subr.mxu0 0.0
    %3081 = vmatpush1.msra.mxu0 0.0
    %3082 = vmatprep.subr.mxu0 0.0
    %3083 = vmatpush1.msra.mxu0 0.0
    %3084 = vmatprep.subr.mxu0 0.0
    %3085 = vmatpush1.msra.mxu0 0.0
    %3086 = vmatprep.subr.mxu0 0.0
    %3087 = vmatpush1.msra.mxu0 0.0
    %3088 = vmatprep.subr.mxu0 0.0
    %3089 = vmatpush1.msra.mxu0 0.0
    %3090 = vmatprep.subr.mxu0 0.0
    %3091 = vmatpush1.msra.mxu0 0.0
    %3092 = vmatprep.subr.mxu0 0.0
    %3093 = vmatpush1.msra.mxu0 0.0
    %3094 = vmatprep.subr.mxu0 0.0
    %3095 = vmatpush1.msra.mxu0 0.0
    %3096 = vmatprep.subr.mxu0 0.0
    %3097 = vmatpush1.msra.mxu0 0.0
    %3098 = vmatprep.subr.mxu0 0.0
    %3099 = vmatpush1.msra.mxu0 0.0
    %3100 = vmatprep.subr.mxu0 0.0
    %3101 = vmatpush1.msra.mxu0 0.0
    %3102 = vmatprep.subr.mxu0 0.0
    %3103 = vmatpush1.msra.mxu0 0.0
    %3104 = vmatprep.subr.mxu0 0.0
    %3105 = vmatpush1.msra.mxu0 0.0
    %3106 = vmatprep.subr.mxu0 0.0
    %3107 = vmatpush1.msra.mxu0 0.0
    %3108 = vmatprep.subr.mxu0 0.0
    %3109 = vmatpush1.msra.mxu0 0.0
    %3110 = vmatprep.subr.mxu0 0.0
    %3111 = vmatpush1.msra.mxu0 %v2956
    %3112 = vmatprep.subr.mxu0 0.0
    %3113 = vmatpush2.msra.mxu0 0.0
    %3114 = vmatprep.subr.mxu0 0.0
    %3115 = vmatpush2.msra.mxu0 0.0
    %3116 = vmatprep.subr.mxu0 0.0
    %3117 = vmatpush2.msra.mxu0 0.0
    %3118 = vmatprep.subr.mxu0 0.0
    %3119 = vmatpush2.msra.mxu0 0.0
    %3120 = vmatprep.subr.mxu0 0.0
    %3121 = vmatpush2.msra.mxu0 0.0
    %3122 = vmatprep.subr.mxu0 0.0
    %3123 = vmatpush2.msra.mxu0 0.0
    %3124 = vmatprep.subr.mxu0 0.0
    %3125 = vmatpush2.msra.mxu0 0.0
    %3126 = vmatprep.subr.mxu0 0.0
    %3127 = vmatpush2.msra.mxu0 0.0
    %3128 = vmatprep.subr.mxu0 0.0
    %3129 = vmatpush2.msra.mxu0 0.0
    %3130 = vmatprep.subr.mxu0 0.0
    %3131 = vmatpush2.msra.mxu0 0.0
    %3132 = vmatprep.subr.mxu0 0.0
    %3133 = vmatpush2.msra.mxu0 0.0
    %3134 = vmatprep.subr.mxu0 0.0
    %3135 = vmatpush2.msra.mxu0 0.0
    %3136 = vmatprep.subr.mxu0 0.0
    %3137 = vmatpush2.msra.mxu0 0.0
    %3138 = vmatprep.subr.mxu0 0.0
    %3139 = vmatpush2.msra.mxu0 0.0
    %3140 = vmatprep.subr.mxu0 0.0
    %3141 = vmatpush2.msra.mxu0 0.0
    %3142 = vmatprep.subr.mxu0 0.0
    %3143 = vmatpush2.msra.mxu0 0.0
    %3144 = vmatprep.mubr.f32.mxu0 0.0
    %3145 = vmatmul.mubr.f32.gmra.mxu0 %v3078
    %v3146 = vpop.f32.mrf.mxu0
    %v3147 = vadd.f32 0.0, %v3146
    %v3148 = vpop.f32.mrf.mxu0
    %3149 = vdwg.mxu0
    %3150 = vrot.lane.b32.xlu0 %v2962, 80
    %v3151 = vpop.permute.xlu0 %3150
    %3153 = vrot.lane.b32.xlu0 %v2913, 112
    %v3154 = vpop.permute.xlu0 %3153
    %v3156 = vsel %vm482, %v3151, %v3154
    %v3157 = vmul.f32 %v2913, %v673
    %v3158 = vmul.f32 %v3156, %v111
    %3160 = vrot.lane.b32.xlu0 %v3158, 32
    %v3161 = vpop.permute.xlu0 %3160
    %v3163 = vadd.f32 %v3157, %v3161
    %3164 = vrot.lane.b32.xlu0 %v2975, 80
    %v3165 = vpop.permute.xlu0 %3164
    %3167 = vrot.lane.b32.xlu0 %v2915, 112
    %v3168 = vpop.permute.xlu0 %3167
    %v3170 = vsel %vm482, %v3165, %v3168
    %v3171 = vmul.f32 %v2915, %v673
    %v3172 = vmul.f32 %v3170, %v111
    %3174 = vrot.lane.b32.xlu0 %v3172, 32
    %v3175 = vpop.permute.xlu0 %3174
    %v3177 = vadd.f32 %v3171, %v3175
    %3179 = vrot.lane.b32.xlu0 %v3163, 96
    %v3180 = vpop.permute.xlu0 %3179
    %3182 = vrot.lane.b32.xlu0 %v3177, 96
    %v3183 = vpop.permute.xlu0 %3182
    %v3184 = vsel %vm500, %v3180, 0
    %v3186 = vsel %vm500, %v3183, 0
    %3188 = vmatprep.subr.mxu0 0.0
    %3189 = vmatpush1.xpose.msra.mxu0 0.0
    %3190 = vmatprep.subr.mxu0 0.0
    %3191 = vmatpush1.xpose.msra.mxu0 0.0
    %3192 = vmatprep.subr.mxu0 0.0
    %3193 = vmatpush1.xpose.msra.mxu0 0.0
    %3194 = vmatprep.subr.mxu0 0.0
    %3195 = vmatpush1.xpose.msra.mxu0 0.0
    %3196 = vmatprep.subr.mxu0 0.0
    %3197 = vmatpush1.xpose.msra.mxu0 0.0
    %3198 = vmatprep.subr.mxu0 0.0
    %3199 = vmatpush1.xpose.msra.mxu0 0.0
    %3200 = vmatprep.subr.mxu0 0.0
    %3201 = vmatpush1.xpose.msra.mxu0 0.0
    %3202 = vmatprep.subr.mxu0 0.0
    %3203 = vmatpush1.xpose.msra.mxu0 0.0
    %3204 = vmatprep.subr.mxu0 0.0
    %3205 = vmatpush1.xpose.msra.mxu0 0.0
    %3206 = vmatprep.subr.mxu0 0.0
    %3207 = vmatpush1.xpose.msra.mxu0 0.0
    %3208 = vmatprep.subr.mxu0 0.0
    %3209 = vmatpush1.xpose.msra.mxu0 0.0
    %3210 = vmatprep.subr.mxu0 0.0
    %3211 = vmatpush1.xpose.msra.mxu0 0.0
    %3212 = vmatprep.subr.mxu0 0.0
    %3213 = vmatpush1.xpose.msra.mxu0 0.0
    %3214 = vmatprep.subr.mxu0 0.0
    %3215 = vmatpush1.xpose.msra.mxu0 0.0
    %3216 = vmatprep.subr.mxu0 0.0
    %3217 = vmatpush1.xpose.msra.mxu0 0.0
    %3218 = vmatprep.subr.mxu0 0.0
    %3219 = vmatpush1.xpose.msra.mxu0 %v3186
    %3220 = vmatprep.subr.mxu0 0.0
    %3221 = vmatpush2.xpose.msra.mxu0 0.0
    %3222 = vmatprep.subr.mxu0 0.0
    %3223 = vmatpush2.xpose.msra.mxu0 0.0
    %3224 = vmatprep.subr.mxu0 0.0
    %3225 = vmatpush2.xpose.msra.mxu0 0.0
    %3226 = vmatprep.subr.mxu0 0.0
    %3227 = vmatpush2.xpose.msra.mxu0 0.0
    %3228 = vmatprep.subr.mxu0 0.0
    %3229 = vmatpush2.xpose.msra.mxu0 0.0
    %3230 = vmatprep.subr.mxu0 0.0
    %3231 = vmatpush2.xpose.msra.mxu0 0.0
    %3232 = vmatprep.subr.mxu0 0.0
    %3233 = vmatpush2.xpose.msra.mxu0 0.0
    %3234 = vmatprep.subr.mxu0 0.0
    %3235 = vmatpush2.xpose.msra.mxu0 0.0
    %3236 = vmatprep.subr.mxu0 0.0
    %3237 = vmatpush2.xpose.msra.mxu0 0.0
    %3238 = vmatprep.subr.mxu0 0.0
    %3239 = vmatpush2.xpose.msra.mxu0 0.0
    %3240 = vmatprep.subr.mxu0 0.0
    %3241 = vmatpush2.xpose.msra.mxu0 0.0
    %3242 = vmatprep.subr.mxu0 0.0
    %3243 = vmatpush2.xpose.msra.mxu0 0.0
    %3244 = vmatprep.subr.mxu0 0.0
    %3245 = vmatpush2.xpose.msra.mxu0 0.0
    %3246 = vmatprep.subr.mxu0 0.0
    %3247 = vmatpush2.xpose.msra.mxu0 0.0
    %3248 = vmatprep.subr.mxu0 0.0
    %3249 = vmatpush2.xpose.msra.mxu0 0.0
    %3250 = vmatprep.subr.mxu0 0.0
    %3251 = vmatpush2.xpose.msra.mxu0 0.0
    %3252 = vmatprep.mubr.f32.mxu0 0.0
    %3253 = vmatmul.mubr.f32.gmra.mxu0 %v3184
    %v3254 = vpop.f32.mrf.mxu0
    %v3255 = vadd.f32 0.0, %v3254
    %v3256 = vpop.f32.mrf.mxu0
    %3257 = vdwg.mxu0
    %v3258 = vmul.f32 %v3255, 0.17677669
    %v3259 = vsel %vm116, %v3258, -1e+30
    %v3260 = vsel %vm579, %v3259, -inf
    %3261 = vmax.xlane.f32.xlu0 %v3260
    %v3262 = vpop.xlane.xlu0 %3261
    %v3263 = vsub.f32 %v3259, %v3262
    %v3264 = vmul.f32 %v3263, 1.442695
    %v3265 = vpow.pop %v3264
    %v3266 = vsel %vm579, %v3265, 0.0
    %3267 = vadd.xlane.f32.xlu0 %v3266
    %v3268 = vpop.xlane.xlu0 %3267
    %v3269 = vrcp.pop %v3268
    %v3270 = vmul.f32 %v3265, %v3269
    %3272 = vrot.lane.b32.xlu0 %v2956, 96
    %v3273 = vpop.permute.xlu0 %3272
    %v3276 = vsel %vm579, %v3270, 0
    %3278 = vmatprep.subr.mxu0 0.0
    %3279 = vmatpush1.msra.mxu0 0.0
    %3280 = vmatprep.subr.mxu0 0.0
    %3281 = vmatpush1.msra.mxu0 0.0
    %3282 = vmatprep.subr.mxu0 0.0
    %3283 = vmatpush1.msra.mxu0 0.0
    %3284 = vmatprep.subr.mxu0 0.0
    %3285 = vmatpush1.msra.mxu0 0.0
    %3286 = vmatprep.subr.mxu0 0.0
    %3287 = vmatpush1.msra.mxu0 0.0
    %3288 = vmatprep.subr.mxu0 0.0
    %3289 = vmatpush1.msra.mxu0 0.0
    %3290 = vmatprep.subr.mxu0 0.0
    %3291 = vmatpush1.msra.mxu0 0.0
    %3292 = vmatprep.subr.mxu0 0.0
    %3293 = vmatpush1.msra.mxu0 0.0
    %3294 = vmatprep.subr.mxu0 0.0
    %3295 = vmatpush1.msra.mxu0 0.0
    %3296 = vmatprep.subr.mxu0 0.0
    %3297 = vmatpush1.msra.mxu0 0.0
    %3298 = vmatprep.subr.mxu0 0.0
    %3299 = vmatpush1.msra.mxu0 0.0
    %3300 = vmatprep.subr.mxu0 0.0
    %3301 = vmatpush1.msra.mxu0 0.0
    %3302 = vmatprep.subr.mxu0 0.0
    %3303 = vmatpush1.msra.mxu0 0.0
    %3304 = vmatprep.subr.mxu0 0.0
    %3305 = vmatpush1.msra.mxu0 0.0
    %3306 = vmatprep.subr.mxu0 0.0
    %3307 = vmatpush1.msra.mxu0 0.0
    %3308 = vmatprep.subr.mxu0 0.0
    %3309 = vmatpush1.msra.mxu0 %v3273
    %3310 = vmatprep.subr.mxu0 0.0
    %3311 = vmatpush2.msra.mxu0 0.0
    %3312 = vmatprep.subr.mxu0 0.0
    %3313 = vmatpush2.msra.mxu0 0.0
    %3314 = vmatprep.subr.mxu0 0.0
    %3315 = vmatpush2.msra.mxu0 0.0
    %3316 = vmatprep.subr.mxu0 0.0
    %3317 = vmatpush2.msra.mxu0 0.0
    %3318 = vmatprep.subr.mxu0 0.0
    %3319 = vmatpush2.msra.mxu0 0.0
    %3320 = vmatprep.subr.mxu0 0.0
    %3321 = vmatpush2.msra.mxu0 0.0
    %3322 = vmatprep.subr.mxu0 0.0
    %3323 = vmatpush2.msra.mxu0 0.0
    %3324 = vmatprep.subr.mxu0 0.0
    %3325 = vmatpush2.msra.mxu0 0.0
    %3326 = vmatprep.subr.mxu0 0.0
    %3327 = vmatpush2.msra.mxu0 0.0
    %3328 = vmatprep.subr.mxu0 0.0
    %3329 = vmatpush2.msra.mxu0 0.0
    %3330 = vmatprep.subr.mxu0 0.0
    %3331 = vmatpush2.msra.mxu0 0.0
    %3332 = vmatprep.subr.mxu0 0.0
    %3333 = vmatpush2.msra.mxu0 0.0
    %3334 = vmatprep.subr.mxu0 0.0
    %3335 = vmatpush2.msra.mxu0 0.0
    %3336 = vmatprep.subr.mxu0 0.0
    %3337 = vmatpush2.msra.mxu0 0.0
    %3338 = vmatprep.subr.mxu0 0.0
    %3339 = vmatpush2.msra.mxu0 0.0
    %3340 = vmatprep.subr.mxu0 0.0
    %3341 = vmatpush2.msra.mxu0 0.0
    %3342 = vmatprep.mubr.f32.mxu0 0.0
    %3343 = vmatmul.mubr.f32.gmra.mxu0 %v3276
    %v3344 = vpop.f32.mrf.mxu0
    %v3345 = vadd.f32 0.0, %v3344
    %v3346 = vpop.f32.mrf.mxu0
    %3347 = vdwg.mxu0
    %3348 = vrot.lane.b32.xlu0 %v2962, 48
    %v3349 = vpop.permute.xlu0 %3348
    %3351 = vrot.lane.b32.xlu0 %v2913, 80
    %v3352 = vpop.permute.xlu0 %3351
    %v3354 = vsel %vm482, %v3349, %v3352
    %v3355 = vmul.f32 %v2913, %v874
    %v3356 = vmul.f32 %v3354, %v111
    %3358 = vrot.lane.b32.xlu0 %v3356, 64
    %v3359 = vpop.permute.xlu0 %3358
    %v3361 = vadd.f32 %v3355, %v3359
    %3362 = vrot.lane.b32.xlu0 %v2975, 48
    %v3363 = vpop.permute.xlu0 %3362
    %3365 = vrot.lane.b32.xlu0 %v2915, 80
    %v3366 = vpop.permute.xlu0 %3365
    %v3368 = vsel %vm482, %v3363, %v3366
    %v3369 = vmul.f32 %v2915, %v874
    %v3370 = vmul.f32 %v3368, %v111
    %3372 = vrot.lane.b32.xlu0 %v3370, 64
    %v3373 = vpop.permute.xlu0 %3372
    %v3375 = vadd.f32 %v3369, %v3373
    %3377 = vrot.lane.b32.xlu0 %v3361, 64
    %v3378 = vpop.permute.xlu0 %3377
    %3380 = vrot.lane.b32.xlu0 %v3375, 64
    %v3381 = vpop.permute.xlu0 %3380
    %v3382 = vsel %vm500, %v3378, 0
    %v3384 = vsel %vm500, %v3381, 0
    %3386 = vmatprep.subr.mxu0 0.0
    %3387 = vmatpush1.xpose.msra.mxu0 0.0
    %3388 = vmatprep.subr.mxu0 0.0
    %3389 = vmatpush1.xpose.msra.mxu0 0.0
    %3390 = vmatprep.subr.mxu0 0.0
    %3391 = vmatpush1.xpose.msra.mxu0 0.0
    %3392 = vmatprep.subr.mxu0 0.0
    %3393 = vmatpush1.xpose.msra.mxu0 0.0
    %3394 = vmatprep.subr.mxu0 0.0
    %3395 = vmatpush1.xpose.msra.mxu0 0.0
    %3396 = vmatprep.subr.mxu0 0.0
    %3397 = vmatpush1.xpose.msra.mxu0 0.0
    %3398 = vmatprep.subr.mxu0 0.0
    %3399 = vmatpush1.xpose.msra.mxu0 0.0
    %3400 = vmatprep.subr.mxu0 0.0
    %3401 = vmatpush1.xpose.msra.mxu0 0.0
    %3402 = vmatprep.subr.mxu0 0.0
    %3403 = vmatpush1.xpose.msra.mxu0 0.0
    %3404 = vmatprep.subr.mxu0 0.0
    %3405 = vmatpush1.xpose.msra.mxu0 0.0
    %3406 = vmatprep.subr.mxu0 0.0
    %3407 = vmatpush1.xpose.msra.mxu0 0.0
    %3408 = vmatprep.subr.mxu0 0.0
    %3409 = vmatpush1.xpose.msra.mxu0 0.0
    %3410 = vmatprep.subr.mxu0 0.0
    %3411 = vmatpush1.xpose.msra.mxu0 0.0
    %3412 = vmatprep.subr.mxu0 0.0
    %3413 = vmatpush1.xpose.msra.mxu0 0.0
    %3414 = vmatprep.subr.mxu0 0.0
    %3415 = vmatpush1.xpose.msra.mxu0 0.0
    %3416 = vmatprep.subr.mxu0 0.0
    %3417 = vmatpush1.xpose.msra.mxu0 %v3384
    %3418 = vmatprep.subr.mxu0 0.0
    %3419 = vmatpush2.xpose.msra.mxu0 0.0
    %3420 = vmatprep.subr.mxu0 0.0
    %3421 = vmatpush2.xpose.msra.mxu0 0.0
    %3422 = vmatprep.subr.mxu0 0.0
    %3423 = vmatpush2.xpose.msra.mxu0 0.0
    %3424 = vmatprep.subr.mxu0 0.0
    %3425 = vmatpush2.xpose.msra.mxu0 0.0
    %3426 = vmatprep.subr.mxu0 0.0
    %3427 = vmatpush2.xpose.msra.mxu0 0.0
    %3428 = vmatprep.subr.mxu0 0.0
    %3429 = vmatpush2.xpose.msra.mxu0 0.0
    %3430 = vmatprep.subr.mxu0 0.0
    %3431 = vmatpush2.xpose.msra.mxu0 0.0
    %3432 = vmatprep.subr.mxu0 0.0
    %3433 = vmatpush2.xpose.msra.mxu0 0.0
    %3434 = vmatprep.subr.mxu0 0.0
    %3435 = vmatpush2.xpose.msra.mxu0 0.0
    %3436 = vmatprep.subr.mxu0 0.0
    %3437 = vmatpush2.xpose.msra.mxu0 0.0
    %3438 = vmatprep.subr.mxu0 0.0
    %3439 = vmatpush2.xpose.msra.mxu0 0.0
    %3440 = vmatprep.subr.mxu0 0.0
    %3441 = vmatpush2.xpose.msra.mxu0 0.0
    %3442 = vmatprep.subr.mxu0 0.0
    %3443 = vmatpush2.xpose.msra.mxu0 0.0
    %3444 = vmatprep.subr.mxu0 0.0
    %3445 = vmatpush2.xpose.msra.mxu0 0.0
    %3446 = vmatprep.subr.mxu0 0.0
    %3447 = vmatpush2.xpose.msra.mxu0 0.0
    %3448 = vmatprep.subr.mxu0 0.0
    %3449 = vmatpush2.xpose.msra.mxu0 0.0
    %3450 = vmatprep.mubr.f32.mxu0 0.0
    %3451 = vmatmul.mubr.f32.gmra.mxu0 %v3382
    %v3452 = vpop.f32.mrf.mxu0
    %v3453 = vadd.f32 0.0, %v3452
    %v3454 = vpop.f32.mrf.mxu0
    %3455 = vdwg.mxu0
    %v3456 = vmul.f32 %v3453, 0.17677669
    %v3457 = vsel %vm116, %v3456, -1e+30
    %v3458 = vsel %vm579, %v3457, -inf
    %3459 = vmax.xlane.f32.xlu0 %v3458
    %v3460 = vpop.xlane.xlu0 %3459
    %v3461 = vsub.f32 %v3457, %v3460
    %v3462 = vmul.f32 %v3461, 1.442695
    %v3463 = vpow.pop %v3462
    %v3464 = vsel %vm579, %v3463, 0.0
    %3465 = vadd.xlane.f32.xlu0 %v3464
    %v3466 = vpop.xlane.xlu0 %3465
    %v3467 = vrcp.pop %v3466
    %v3468 = vmul.f32 %v3463, %v3467
    %3469 = vrot.lane.b32.xlu0 %v2956, 64
    %v3470 = vpop.permute.xlu0 %3469
    %v3473 = vsel %vm579, %v3468, 0
    %3475 = vmatprep.subr.mxu0 0.0
    %3476 = vmatpush1.msra.mxu0 0.0
    %3477 = vmatprep.subr.mxu0 0.0
    %3478 = vmatpush1.msra.mxu0 0.0
    %3479 = vmatprep.subr.mxu0 0.0
    %3480 = vmatpush1.msra.mxu0 0.0
    %3481 = vmatprep.subr.mxu0 0.0
    %3482 = vmatpush1.msra.mxu0 0.0
    %3483 = vmatprep.subr.mxu0 0.0
    %3484 = vmatpush1.msra.mxu0 0.0
    %3485 = vmatprep.subr.mxu0 0.0
    %3486 = vmatpush1.msra.mxu0 0.0
    %3487 = vmatprep.subr.mxu0 0.0
    %3488 = vmatpush1.msra.mxu0 0.0
    %3489 = vmatprep.subr.mxu0 0.0
    %3490 = vmatpush1.msra.mxu0 0.0
    %3491 = vmatprep.subr.mxu0 0.0
    %3492 = vmatpush1.msra.mxu0 0.0
    %3493 = vmatprep.subr.mxu0 0.0
    %3494 = vmatpush1.msra.mxu0 0.0
    %3495 = vmatprep.subr.mxu0 0.0
    %3496 = vmatpush1.msra.mxu0 0.0
    %3497 = vmatprep.subr.mxu0 0.0
    %3498 = vmatpush1.msra.mxu0 0.0
    %3499 = vmatprep.subr.mxu0 0.0
    %3500 = vmatpush1.msra.mxu0 0.0
    %3501 = vmatprep.subr.mxu0 0.0
    %3502 = vmatpush1.msra.mxu0 0.0
    %3503 = vmatprep.subr.mxu0 0.0
    %3504 = vmatpush1.msra.mxu0 0.0
    %3505 = vmatprep.subr.mxu0 0.0
    %3506 = vmatpush1.msra.mxu0 %v3470
    %3507 = vmatprep.subr.mxu0 0.0
    %3508 = vmatpush2.msra.mxu0 0.0
    %3509 = vmatprep.subr.mxu0 0.0
    %3510 = vmatpush2.msra.mxu0 0.0
    %3511 = vmatprep.subr.mxu0 0.0
    %3512 = vmatpush2.msra.mxu0 0.0
    %3513 = vmatprep.subr.mxu0 0.0
    %3514 = vmatpush2.msra.mxu0 0.0
    %3515 = vmatprep.subr.mxu0 0.0
    %3516 = vmatpush2.msra.mxu0 0.0
    %3517 = vmatprep.subr.mxu0 0.0
    %3518 = vmatpush2.msra.mxu0 0.0
    %3519 = vmatprep.subr.mxu0 0.0
    %3520 = vmatpush2.msra.mxu0 0.0
    %3521 = vmatprep.subr.mxu0 0.0
    %3522 = vmatpush2.msra.mxu0 0.0
    %3523 = vmatprep.subr.mxu0 0.0
    %3524 = vmatpush2.msra.mxu0 0.0
    %3525 = vmatprep.subr.mxu0 0.0
    %3526 = vmatpush2.msra.mxu0 0.0
    %3527 = vmatprep.subr.mxu0 0.0
    %3528 = vmatpush2.msra.mxu0 0.0
    %3529 = vmatprep.subr.mxu0 0.0
    %3530 = vmatpush2.msra.mxu0 0.0
    %3531 = vmatprep.subr.mxu0 0.0
    %3532 = vmatpush2.msra.mxu0 0.0
    %3533 = vmatprep.subr.mxu0 0.0
    %3534 = vmatpush2.msra.mxu0 0.0
    %3535 = vmatprep.subr.mxu0 0.0
    %3536 = vmatpush2.msra.mxu0 0.0
    %3537 = vmatprep.subr.mxu0 0.0
    %3538 = vmatpush2.msra.mxu0 0.0
    %3539 = vmatprep.mubr.f32.mxu0 0.0
    %3540 = vmatmul.mubr.f32.gmra.mxu0 %v3473
    %v3541 = vpop.f32.mrf.mxu0
    %v3542 = vadd.f32 0.0, %v3541
    %v3543 = vpop.f32.mrf.mxu0
    %3544 = vdwg.mxu0
    %3545 = vrot.lane.b32.xlu0 %v2962, 16
    %v3546 = vpop.permute.xlu0 %3545
    %3548 = vrot.lane.b32.xlu0 %v2913, 48
    %v3549 = vpop.permute.xlu0 %3548
    %v3551 = vsel %vm482, %v3546, %v3549
    %v3552 = vmul.f32 %v2913, %v1074
    %v3553 = vmul.f32 %v3551, %v111
    %3555 = vrot.lane.b32.xlu0 %v3553, 96
    %v3556 = vpop.permute.xlu0 %3555
    %v3558 = vadd.f32 %v3552, %v3556
    %3559 = vrot.lane.b32.xlu0 %v2975, 16
    %v3560 = vpop.permute.xlu0 %3559
    %3562 = vrot.lane.b32.xlu0 %v2915, 48
    %v3563 = vpop.permute.xlu0 %3562
    %v3565 = vsel %vm482, %v3560, %v3563
    %v3566 = vmul.f32 %v2915, %v1074
    %v3567 = vmul.f32 %v3565, %v111
    %3569 = vrot.lane.b32.xlu0 %v3567, 96
    %v3570 = vpop.permute.xlu0 %3569
    %v3572 = vadd.f32 %v3566, %v3570
    %3574 = vrot.lane.b32.xlu0 %v3558, 32
    %v3575 = vpop.permute.xlu0 %3574
    %3577 = vrot.lane.b32.xlu0 %v3572, 32
    %v3578 = vpop.permute.xlu0 %3577
    %v3579 = vsel %vm500, %v3575, 0
    %v3581 = vsel %vm500, %v3578, 0
    %3583 = vmatprep.subr.mxu0 0.0
    %3584 = vmatpush1.xpose.msra.mxu0 0.0
    %3585 = vmatprep.subr.mxu0 0.0
    %3586 = vmatpush1.xpose.msra.mxu0 0.0
    %3587 = vmatprep.subr.mxu0 0.0
    %3588 = vmatpush1.xpose.msra.mxu0 0.0
    %3589 = vmatprep.subr.mxu0 0.0
    %3590 = vmatpush1.xpose.msra.mxu0 0.0
    %3591 = vmatprep.subr.mxu0 0.0
    %3592 = vmatpush1.xpose.msra.mxu0 0.0
    %3593 = vmatprep.subr.mxu0 0.0
    %3594 = vmatpush1.xpose.msra.mxu0 0.0
    %3595 = vmatprep.subr.mxu0 0.0
    %3596 = vmatpush1.xpose.msra.mxu0 0.0
    %3597 = vmatprep.subr.mxu0 0.0
    %3598 = vmatpush1.xpose.msra.mxu0 0.0
    %3599 = vmatprep.subr.mxu0 0.0
    %3600 = vmatpush1.xpose.msra.mxu0 0.0
    %3601 = vmatprep.subr.mxu0 0.0
    %3602 = vmatpush1.xpose.msra.mxu0 0.0
    %3603 = vmatprep.subr.mxu0 0.0
    %3604 = vmatpush1.xpose.msra.mxu0 0.0
    %3605 = vmatprep.subr.mxu0 0.0
    %3606 = vmatpush1.xpose.msra.mxu0 0.0
    %3607 = vmatprep.subr.mxu0 0.0
    %3608 = vmatpush1.xpose.msra.mxu0 0.0
    %3609 = vmatprep.subr.mxu0 0.0
    %3610 = vmatpush1.xpose.msra.mxu0 0.0
    %3611 = vmatprep.subr.mxu0 0.0
    %3612 = vmatpush1.xpose.msra.mxu0 0.0
    %3613 = vmatprep.subr.mxu0 0.0
    %3614 = vmatpush1.xpose.msra.mxu0 %v3581
    %3615 = vmatprep.subr.mxu0 0.0
    %3616 = vmatpush2.xpose.msra.mxu0 0.0
    %3617 = vmatprep.subr.mxu0 0.0
    %3618 = vmatpush2.xpose.msra.mxu0 0.0
    %3619 = vmatprep.subr.mxu0 0.0
    %3620 = vmatpush2.xpose.msra.mxu0 0.0
    %3621 = vmatprep.subr.mxu0 0.0
    %3622 = vmatpush2.xpose.msra.mxu0 0.0
    %3623 = vmatprep.subr.mxu0 0.0
    %3624 = vmatpush2.xpose.msra.mxu0 0.0
    %3625 = vmatprep.subr.mxu0 0.0
    %3626 = vmatpush2.xpose.msra.mxu0 0.0
    %3627 = vmatprep.subr.mxu0 0.0
    %3628 = vmatpush2.xpose.msra.mxu0 0.0
    %3629 = vmatprep.subr.mxu0 0.0
    %3630 = vmatpush2.xpose.msra.mxu0 0.0
    %3631 = vmatprep.subr.mxu0 0.0
    %3632 = vmatpush2.xpose.msra.mxu0 0.0
    %3633 = vmatprep.subr.mxu0 0.0
    %3634 = vmatpush2.xpose.msra.mxu0 0.0
    %3635 = vmatprep.subr.mxu0 0.0
    %3636 = vmatpush2.xpose.msra.mxu0 0.0
    %3637 = vmatprep.subr.mxu0 0.0
    %3638 = vmatpush2.xpose.msra.mxu0 0.0
    %3639 = vmatprep.subr.mxu0 0.0
    %3640 = vmatpush2.xpose.msra.mxu0 0.0
    %3641 = vmatprep.subr.mxu0 0.0
    %3642 = vmatpush2.xpose.msra.mxu0 0.0
    %3643 = vmatprep.subr.mxu0 0.0
    %3644 = vmatpush2.xpose.msra.mxu0 0.0
    %3645 = vmatprep.subr.mxu0 0.0
    %3646 = vmatpush2.xpose.msra.mxu0 0.0
    %3647 = vmatprep.mubr.f32.mxu0 0.0
    %3648 = vmatmul.mubr.f32.gmra.mxu0 %v3579
    %v3649 = vpop.f32.mrf.mxu0
    %v3650 = vadd.f32 0.0, %v3649
    %v3651 = vpop.f32.mrf.mxu0
    %3652 = vdwg.mxu0
    %v3653 = vmul.f32 %v3650, 0.17677669
    %v3654 = vsel %vm116, %v3653, -1e+30
    %v3655 = vsel %vm579, %v3654, -inf
    %3656 = vmax.xlane.f32.xlu0 %v3655
    %v3657 = vpop.xlane.xlu0 %3656
    %v3658 = vsub.f32 %v3654, %v3657
    %v3659 = vmul.f32 %v3658, 1.442695
    %v3660 = vpow.pop %v3659
    %v3661 = vsel %vm579, %v3660, 0.0
    %3662 = vadd.xlane.f32.xlu0 %v3661
    %v3663 = vpop.xlane.xlu0 %3662
    %v3664 = vrcp.pop %v3663
    %v3665 = vmul.f32 %v3660, %v3664
    %3666 = vrot.lane.b32.xlu0 %v2956, 32
    %v3667 = vpop.permute.xlu0 %3666
    %v3670 = vsel %vm579, %v3665, 0
    %3672 = vmatprep.subr.mxu0 0.0
    %3673 = vmatpush1.msra.mxu0 0.0
    %3674 = vmatprep.subr.mxu0 0.0
    %3675 = vmatpush1.msra.mxu0 0.0
    %3676 = vmatprep.subr.mxu0 0.0
    %3677 = vmatpush1.msra.mxu0 0.0
    %3678 = vmatprep.subr.mxu0 0.0
    %3679 = vmatpush1.msra.mxu0 0.0
    %3680 = vmatprep.subr.mxu0 0.0
    %3681 = vmatpush1.msra.mxu0 0.0
    %3682 = vmatprep.subr.mxu0 0.0
    %3683 = vmatpush1.msra.mxu0 0.0
    %3684 = vmatprep.subr.mxu0 0.0
    %3685 = vmatpush1.msra.mxu0 0.0
    %3686 = vmatprep.subr.mxu0 0.0
    %3687 = vmatpush1.msra.mxu0 0.0
    %3688 = vmatprep.subr.mxu0 0.0
    %3689 = vmatpush1.msra.mxu0 0.0
    %3690 = vmatprep.subr.mxu0 0.0
    %3691 = vmatpush1.msra.mxu0 0.0
    %3692 = vmatprep.subr.mxu0 0.0
    %3693 = vmatpush1.msra.mxu0 0.0
    %3694 = vmatprep.subr.mxu0 0.0
    %3695 = vmatpush1.msra.mxu0 0.0
    %3696 = vmatprep.subr.mxu0 0.0
    %3697 = vmatpush1.msra.mxu0 0.0
    %3698 = vmatprep.subr.mxu0 0.0
    %3699 = vmatpush1.msra.mxu0 0.0
    %3700 = vmatprep.subr.mxu0 0.0
    %3701 = vmatpush1.msra.mxu0 0.0
    %3702 = vmatprep.subr.mxu0 0.0
    %3703 = vmatpush1.msra.mxu0 %v3667
    %3704 = vmatprep.subr.mxu0 0.0
    %3705 = vmatpush2.msra.mxu0 0.0
    %3706 = vmatprep.subr.mxu0 0.0
    %3707 = vmatpush2.msra.mxu0 0.0
    %3708 = vmatprep.subr.mxu0 0.0
    %3709 = vmatpush2.msra.mxu0 0.0
    %3710 = vmatprep.subr.mxu0 0.0
    %3711 = vmatpush2.msra.mxu0 0.0
    %3712 = vmatprep.subr.mxu0 0.0
    %3713 = vmatpush2.msra.mxu0 0.0
    %3714 = vmatprep.subr.mxu0 0.0
    %3715 = vmatpush2.msra.mxu0 0.0
    %3716 = vmatprep.subr.mxu0 0.0
    %3717 = vmatpush2.msra.mxu0 0.0
    %3718 = vmatprep.subr.mxu0 0.0
    %3719 = vmatpush2.msra.mxu0 0.0
    %3720 = vmatprep.subr.mxu0 0.0
    %3721 = vmatpush2.msra.mxu0 0.0
    %3722 = vmatprep.subr.mxu0 0.0
    %3723 = vmatpush2.msra.mxu0 0.0
    %3724 = vmatprep.subr.mxu0 0.0
    %3725 = vmatpush2.msra.mxu0 0.0
    %3726 = vmatprep.subr.mxu0 0.0
    %3727 = vmatpush2.msra.mxu0 0.0
    %3728 = vmatprep.subr.mxu0 0.0
    %3729 = vmatpush2.msra.mxu0 0.0
    %3730 = vmatprep.subr.mxu0 0.0
    %3731 = vmatpush2.msra.mxu0 0.0
    %3732 = vmatprep.subr.mxu0 0.0
    %3733 = vmatpush2.msra.mxu0 0.0
    %3734 = vmatprep.subr.mxu0 0.0
    %3735 = vmatpush2.msra.mxu0 0.0
    %3736 = vmatprep.mubr.f32.mxu0 0.0
    %3737 = vmatmul.mubr.f32.gmra.mxu0 %v3670
    %v3738 = vpop.f32.mrf.mxu0
    %v3739 = vadd.f32 0.0, %v3738
    %v3740 = vpop.f32.mrf.mxu0
    %3741 = vdwg.mxu0
    %3743 = vrot.lane.b32.xlu0 %v3345, 32
    %v3744 = vpop.permute.xlu0 %3743
    %3747 = vrot.lane.b32.xlu0 %v3542, 64
    %v3748 = vpop.permute.xlu0 %3747
    %3751 = vrot.lane.b32.xlu0 %v3739, 96
    %v3752 = vpop.permute.xlu0 %3751
    %v3754 = vsel %vm500, %v3147, %v3744
    %v3755 = vsel %vm159, %v3754, %v3748
    %v3756 = vsel %vm1280, %v3755, %v3752
    %v3757 = vsub.f32 0.0, %v2917
    %3759 = vrot.lane.b32.xlu0 %v3757, 112
    %v3760 = vpop.permute.xlu0 %3759
    %3763 = vrot.lane.b32.xlu0 %v2917, 16
    %v3764 = vpop.permute.xlu0 %3763
    %v3766 = vsel %vm482, %v3760, %v3764
    %v3767 = vmul.f32 %v2917, %v110
    %v3768 = vmul.f32 %v3766, %v111
    %v3769 = vadd.f32 %v3767, %v3768
    %v3770 = vsub.f32 0.0, %v2919
    %3772 = vrot.lane.b32.xlu0 %v3770, 112
    %v3773 = vpop.permute.xlu0 %3772
    %3776 = vrot.lane.b32.xlu0 %v2919, 16
    %v3777 = vpop.permute.xlu0 %3776
    %v3779 = vsel %vm482, %v3773, %v3777
    %v3780 = vmul.f32 %v2919, %v110
    %v3781 = vmul.f32 %v3779, %v111
    %v3782 = vadd.f32 %v3780, %v3781
    %v3784 = vsel %vm500, %v3769, 0
    %v3787 = vsel %vm500, %v3782, 0
    %3789 = vmatprep.subr.mxu0 0.0
    %3790 = vmatpush1.xpose.msra.mxu0 0.0
    %3791 = vmatprep.subr.mxu0 0.0
    %3792 = vmatpush1.xpose.msra.mxu0 0.0
    %3793 = vmatprep.subr.mxu0 0.0
    %3794 = vmatpush1.xpose.msra.mxu0 0.0
    %3795 = vmatprep.subr.mxu0 0.0
    %3796 = vmatpush1.xpose.msra.mxu0 0.0
    %3797 = vmatprep.subr.mxu0 0.0
    %3798 = vmatpush1.xpose.msra.mxu0 0.0
    %3799 = vmatprep.subr.mxu0 0.0
    %3800 = vmatpush1.xpose.msra.mxu0 0.0
    %3801 = vmatprep.subr.mxu0 0.0
    %3802 = vmatpush1.xpose.msra.mxu0 0.0
    %3803 = vmatprep.subr.mxu0 0.0
    %3804 = vmatpush1.xpose.msra.mxu0 0.0
    %3805 = vmatprep.subr.mxu0 0.0
    %3806 = vmatpush1.xpose.msra.mxu0 0.0
    %3807 = vmatprep.subr.mxu0 0.0
    %3808 = vmatpush1.xpose.msra.mxu0 0.0
    %3809 = vmatprep.subr.mxu0 0.0
    %3810 = vmatpush1.xpose.msra.mxu0 0.0
    %3811 = vmatprep.subr.mxu0 0.0
    %3812 = vmatpush1.xpose.msra.mxu0 0.0
    %3813 = vmatprep.subr.mxu0 0.0
    %3814 = vmatpush1.xpose.msra.mxu0 0.0
    %3815 = vmatprep.subr.mxu0 0.0
    %3816 = vmatpush1.xpose.msra.mxu0 0.0
    %3817 = vmatprep.subr.mxu0 0.0
    %3818 = vmatpush1.xpose.msra.mxu0 0.0
    %3819 = vmatprep.subr.mxu0 0.0
    %3820 = vmatpush1.xpose.msra.mxu0 %v3787
    %3821 = vmatprep.subr.mxu0 0.0
    %3822 = vmatpush2.xpose.msra.mxu0 0.0
    %3823 = vmatprep.subr.mxu0 0.0
    %3824 = vmatpush2.xpose.msra.mxu0 0.0
    %3825 = vmatprep.subr.mxu0 0.0
    %3826 = vmatpush2.xpose.msra.mxu0 0.0
    %3827 = vmatprep.subr.mxu0 0.0
    %3828 = vmatpush2.xpose.msra.mxu0 0.0
    %3829 = vmatprep.subr.mxu0 0.0
    %3830 = vmatpush2.xpose.msra.mxu0 0.0
    %3831 = vmatprep.subr.mxu0 0.0
    %3832 = vmatpush2.xpose.msra.mxu0 0.0
    %3833 = vmatprep.subr.mxu0 0.0
    %3834 = vmatpush2.xpose.msra.mxu0 0.0
    %3835 = vmatprep.subr.mxu0 0.0
    %3836 = vmatpush2.xpose.msra.mxu0 0.0
    %3837 = vmatprep.subr.mxu0 0.0
    %3838 = vmatpush2.xpose.msra.mxu0 0.0
    %3839 = vmatprep.subr.mxu0 0.0
    %3840 = vmatpush2.xpose.msra.mxu0 0.0
    %3841 = vmatprep.subr.mxu0 0.0
    %3842 = vmatpush2.xpose.msra.mxu0 0.0
    %3843 = vmatprep.subr.mxu0 0.0
    %3844 = vmatpush2.xpose.msra.mxu0 0.0
    %3845 = vmatprep.subr.mxu0 0.0
    %3846 = vmatpush2.xpose.msra.mxu0 0.0
    %3847 = vmatprep.subr.mxu0 0.0
    %3848 = vmatpush2.xpose.msra.mxu0 0.0
    %3849 = vmatprep.subr.mxu0 0.0
    %3850 = vmatpush2.xpose.msra.mxu0 0.0
    %3851 = vmatprep.subr.mxu0 0.0
    %3852 = vmatpush2.xpose.msra.mxu0 0.0
    %3853 = vmatprep.mubr.f32.mxu0 0.0
    %3854 = vmatmul.mubr.f32.gmra.mxu0 %v3784
    %v3855 = vpop.f32.mrf.mxu0
    %v3856 = vadd.f32 0.0, %v3855
    %v3857 = vpop.f32.mrf.mxu0
    %3858 = vdwg.mxu0
    %v3859 = vmul.f32 %v3856, 0.17677669
    %v3860 = vsel %vm116, %v3859, -1e+30
    %v3861 = vsel %vm579, %v3860, -inf
    %3862 = vmax.xlane.f32.xlu0 %v3861
    %v3863 = vpop.xlane.xlu0 %3862
    %v3864 = vsub.f32 %v3860, %v3863
    %v3865 = vmul.f32 %v3864, 1.442695
    %v3866 = vpow.pop %v3865
    %v3867 = vsel %vm579, %v3866, 0.0
    %3868 = vadd.xlane.f32.xlu0 %v3867
    %v3869 = vpop.xlane.xlu0 %3868
    %v3870 = vrcp.pop %v3869
    %v3871 = vmul.f32 %v3866, %v3870
    %v3873 = vsel %vm579, %v3871, 0
    %3875 = vmatprep.subr.mxu0 0.0
    %3876 = vmatpush1.msra.mxu0 0.0
    %3877 = vmatprep.subr.mxu0 0.0
    %3878 = vmatpush1.msra.mxu0 0.0
    %3879 = vmatprep.subr.mxu0 0.0
    %3880 = vmatpush1.msra.mxu0 0.0
    %3881 = vmatprep.subr.mxu0 0.0
    %3882 = vmatpush1.msra.mxu0 0.0
    %3883 = vmatprep.subr.mxu0 0.0
    %3884 = vmatpush1.msra.mxu0 0.0
    %3885 = vmatprep.subr.mxu0 0.0
    %3886 = vmatpush1.msra.mxu0 0.0
    %3887 = vmatprep.subr.mxu0 0.0
    %3888 = vmatpush1.msra.mxu0 0.0
    %3889 = vmatprep.subr.mxu0 0.0
    %3890 = vmatpush1.msra.mxu0 0.0
    %3891 = vmatprep.subr.mxu0 0.0
    %3892 = vmatpush1.msra.mxu0 0.0
    %3893 = vmatprep.subr.mxu0 0.0
    %3894 = vmatpush1.msra.mxu0 0.0
    %3895 = vmatprep.subr.mxu0 0.0
    %3896 = vmatpush1.msra.mxu0 0.0
    %3897 = vmatprep.subr.mxu0 0.0
    %3898 = vmatpush1.msra.mxu0 0.0
    %3899 = vmatprep.subr.mxu0 0.0
    %3900 = vmatpush1.msra.mxu0 0.0
    %3901 = vmatprep.subr.mxu0 0.0
    %3902 = vmatpush1.msra.mxu0 0.0
    %3903 = vmatprep.subr.mxu0 0.0
    %3904 = vmatpush1.msra.mxu0 0.0
    %3905 = vmatprep.subr.mxu0 0.0
    %3906 = vmatpush1.msra.mxu0 %v2959
    %3907 = vmatprep.subr.mxu0 0.0
    %3908 = vmatpush2.msra.mxu0 0.0
    %3909 = vmatprep.subr.mxu0 0.0
    %3910 = vmatpush2.msra.mxu0 0.0
    %3911 = vmatprep.subr.mxu0 0.0
    %3912 = vmatpush2.msra.mxu0 0.0
    %3913 = vmatprep.subr.mxu0 0.0
    %3914 = vmatpush2.msra.mxu0 0.0
    %3915 = vmatprep.subr.mxu0 0.0
    %3916 = vmatpush2.msra.mxu0 0.0
    %3917 = vmatprep.subr.mxu0 0.0
    %3918 = vmatpush2.msra.mxu0 0.0
    %3919 = vmatprep.subr.mxu0 0.0
    %3920 = vmatpush2.msra.mxu0 0.0
    %3921 = vmatprep.subr.mxu0 0.0
    %3922 = vmatpush2.msra.mxu0 0.0
    %3923 = vmatprep.subr.mxu0 0.0
    %3924 = vmatpush2.msra.mxu0 0.0
    %3925 = vmatprep.subr.mxu0 0.0
    %3926 = vmatpush2.msra.mxu0 0.0
    %3927 = vmatprep.subr.mxu0 0.0
    %3928 = vmatpush2.msra.mxu0 0.0
    %3929 = vmatprep.subr.mxu0 0.0
    %3930 = vmatpush2.msra.mxu0 0.0
    %3931 = vmatprep.subr.mxu0 0.0
    %3932 = vmatpush2.msra.mxu0 0.0
    %3933 = vmatprep.subr.mxu0 0.0
    %3934 = vmatpush2.msra.mxu0 0.0
    %3935 = vmatprep.subr.mxu0 0.0
    %3936 = vmatpush2.msra.mxu0 0.0
    %3937 = vmatprep.subr.mxu0 0.0
    %3938 = vmatpush2.msra.mxu0 0.0
    %3939 = vmatprep.mubr.f32.mxu0 0.0
    %3940 = vmatmul.mubr.f32.gmra.mxu0 %v3873
    %v3941 = vpop.f32.mrf.mxu0
    %v3942 = vadd.f32 0.0, %v3941
    %v3943 = vpop.f32.mrf.mxu0
    %3944 = vdwg.mxu0
    %3945 = vrot.lane.b32.xlu0 %v3757, 80
    %v3946 = vpop.permute.xlu0 %3945
    %3948 = vrot.lane.b32.xlu0 %v2917, 112
    %v3949 = vpop.permute.xlu0 %3948
    %v3951 = vsel %vm482, %v3946, %v3949
    %v3952 = vmul.f32 %v2917, %v673
    %v3953 = vmul.f32 %v3951, %v111
    %3955 = vrot.lane.b32.xlu0 %v3953, 32
    %v3956 = vpop.permute.xlu0 %3955
    %v3958 = vadd.f32 %v3952, %v3956
    %3959 = vrot.lane.b32.xlu0 %v3770, 80
    %v3960 = vpop.permute.xlu0 %3959
    %3962 = vrot.lane.b32.xlu0 %v2919, 112
    %v3963 = vpop.permute.xlu0 %3962
    %v3965 = vsel %vm482, %v3960, %v3963
    %v3966 = vmul.f32 %v2919, %v673
    %v3967 = vmul.f32 %v3965, %v111
    %3969 = vrot.lane.b32.xlu0 %v3967, 32
    %v3970 = vpop.permute.xlu0 %3969
    %v3972 = vadd.f32 %v3966, %v3970
    %3974 = vrot.lane.b32.xlu0 %v3958, 96
    %v3975 = vpop.permute.xlu0 %3974
    %3977 = vrot.lane.b32.xlu0 %v3972, 96
    %v3978 = vpop.permute.xlu0 %3977
    %v3979 = vsel %vm500, %v3975, 0
    %v3981 = vsel %vm500, %v3978, 0
    %3983 = vmatprep.subr.mxu0 0.0
    %3984 = vmatpush1.xpose.msra.mxu0 0.0
    %3985 = vmatprep.subr.mxu0 0.0
    %3986 = vmatpush1.xpose.msra.mxu0 0.0
    %3987 = vmatprep.subr.mxu0 0.0
    %3988 = vmatpush1.xpose.msra.mxu0 0.0
    %3989 = vmatprep.subr.mxu0 0.0
    %3990 = vmatpush1.xpose.msra.mxu0 0.0
    %3991 = vmatprep.subr.mxu0 0.0
    %3992 = vmatpush1.xpose.msra.mxu0 0.0
    %3993 = vmatprep.subr.mxu0 0.0
    %3994 = vmatpush1.xpose.msra.mxu0 0.0
    %3995 = vmatprep.subr.mxu0 0.0
    %3996 = vmatpush1.xpose.msra.mxu0 0.0
    %3997 = vmatprep.subr.mxu0 0.0
    %3998 = vmatpush1.xpose.msra.mxu0 0.0
    %3999 = vmatprep.subr.mxu0 0.0
    %4000 = vmatpush1.xpose.msra.mxu0 0.0
    %4001 = vmatprep.subr.mxu0 0.0
    %4002 = vmatpush1.xpose.msra.mxu0 0.0
    %4003 = vmatprep.subr.mxu0 0.0
    %4004 = vmatpush1.xpose.msra.mxu0 0.0
    %4005 = vmatprep.subr.mxu0 0.0
    %4006 = vmatpush1.xpose.msra.mxu0 0.0
    %4007 = vmatprep.subr.mxu0 0.0
    %4008 = vmatpush1.xpose.msra.mxu0 0.0
    %4009 = vmatprep.subr.mxu0 0.0
    %4010 = vmatpush1.xpose.msra.mxu0 0.0
    %4011 = vmatprep.subr.mxu0 0.0
    %4012 = vmatpush1.xpose.msra.mxu0 0.0
    %4013 = vmatprep.subr.mxu0 0.0
    %4014 = vmatpush1.xpose.msra.mxu0 %v3981
    %4015 = vmatprep.subr.mxu0 0.0
    %4016 = vmatpush2.xpose.msra.mxu0 0.0
    %4017 = vmatprep.subr.mxu0 0.0
    %4018 = vmatpush2.xpose.msra.mxu0 0.0
    %4019 = vmatprep.subr.mxu0 0.0
    %4020 = vmatpush2.xpose.msra.mxu0 0.0
    %4021 = vmatprep.subr.mxu0 0.0
    %4022 = vmatpush2.xpose.msra.mxu0 0.0
    %4023 = vmatprep.subr.mxu0 0.0
    %4024 = vmatpush2.xpose.msra.mxu0 0.0
    %4025 = vmatprep.subr.mxu0 0.0
    %4026 = vmatpush2.xpose.msra.mxu0 0.0
    %4027 = vmatprep.subr.mxu0 0.0
    %4028 = vmatpush2.xpose.msra.mxu0 0.0
    %4029 = vmatprep.subr.mxu0 0.0
    %4030 = vmatpush2.xpose.msra.mxu0 0.0
    %4031 = vmatprep.subr.mxu0 0.0
    %4032 = vmatpush2.xpose.msra.mxu0 0.0
    %4033 = vmatprep.subr.mxu0 0.0
    %4034 = vmatpush2.xpose.msra.mxu0 0.0
    %4035 = vmatprep.subr.mxu0 0.0
    %4036 = vmatpush2.xpose.msra.mxu0 0.0
    %4037 = vmatprep.subr.mxu0 0.0
    %4038 = vmatpush2.xpose.msra.mxu0 0.0
    %4039 = vmatprep.subr.mxu0 0.0
    %4040 = vmatpush2.xpose.msra.mxu0 0.0
    %4041 = vmatprep.subr.mxu0 0.0
    %4042 = vmatpush2.xpose.msra.mxu0 0.0
    %4043 = vmatprep.subr.mxu0 0.0
    %4044 = vmatpush2.xpose.msra.mxu0 0.0
    %4045 = vmatprep.subr.mxu0 0.0
    %4046 = vmatpush2.xpose.msra.mxu0 0.0
    %4047 = vmatprep.mubr.f32.mxu0 0.0
    %4048 = vmatmul.mubr.f32.gmra.mxu0 %v3979
    %v4049 = vpop.f32.mrf.mxu0
    %v4050 = vadd.f32 0.0, %v4049
    %v4051 = vpop.f32.mrf.mxu0
    %4052 = vdwg.mxu0
    %v4053 = vmul.f32 %v4050, 0.17677669
    %v4054 = vsel %vm116, %v4053, -1e+30
    %v4055 = vsel %vm579, %v4054, -inf
    %4056 = vmax.xlane.f32.xlu0 %v4055
    %v4057 = vpop.xlane.xlu0 %4056
    %v4058 = vsub.f32 %v4054, %v4057
    %v4059 = vmul.f32 %v4058, 1.442695
    %v4060 = vpow.pop %v4059
    %v4061 = vsel %vm579, %v4060, 0.0
    %4062 = vadd.xlane.f32.xlu0 %v4061
    %v4063 = vpop.xlane.xlu0 %4062
    %v4064 = vrcp.pop %v4063
    %v4065 = vmul.f32 %v4060, %v4064
    %4067 = vrot.lane.b32.xlu0 %v2959, 96
    %v4068 = vpop.permute.xlu0 %4067
    %v4071 = vsel %vm579, %v4065, 0
    %4073 = vmatprep.subr.mxu0 0.0
    %4074 = vmatpush1.msra.mxu0 0.0
    %4075 = vmatprep.subr.mxu0 0.0
    %4076 = vmatpush1.msra.mxu0 0.0
    %4077 = vmatprep.subr.mxu0 0.0
    %4078 = vmatpush1.msra.mxu0 0.0
    %4079 = vmatprep.subr.mxu0 0.0
    %4080 = vmatpush1.msra.mxu0 0.0
    %4081 = vmatprep.subr.mxu0 0.0
    %4082 = vmatpush1.msra.mxu0 0.0
    %4083 = vmatprep.subr.mxu0 0.0
    %4084 = vmatpush1.msra.mxu0 0.0
    %4085 = vmatprep.subr.mxu0 0.0
    %4086 = vmatpush1.msra.mxu0 0.0
    %4087 = vmatprep.subr.mxu0 0.0
    %4088 = vmatpush1.msra.mxu0 0.0
    %4089 = vmatprep.subr.mxu0 0.0
    %4090 = vmatpush1.msra.mxu0 0.0
    %4091 = vmatprep.subr.mxu0 0.0
    %4092 = vmatpush1.msra.mxu0 0.0
    %4093 = vmatprep.subr.mxu0 0.0
    %4094 = vmatpush1.msra.mxu0 0.0
    %4095 = vmatprep.subr.mxu0 0.0
    %4096 = vmatpush1.msra.mxu0 0.0
    %4097 = vmatprep.subr.mxu0 0.0
    %4098 = vmatpush1.msra.mxu0 0.0
    %4099 = vmatprep.subr.mxu0 0.0
    %4100 = vmatpush1.msra.mxu0 0.0
    %4101 = vmatprep.subr.mxu0 0.0
    %4102 = vmatpush1.msra.mxu0 0.0
    %4103 = vmatprep.subr.mxu0 0.0
    %4104 = vmatpush1.msra.mxu0 %v4068
    %4105 = vmatprep.subr.mxu0 0.0
    %4106 = vmatpush2.msra.mxu0 0.0
    %4107 = vmatprep.subr.mxu0 0.0
    %4108 = vmatpush2.msra.mxu0 0.0
    %4109 = vmatprep.subr.mxu0 0.0
    %4110 = vmatpush2.msra.mxu0 0.0
    %4111 = vmatprep.subr.mxu0 0.0
    %4112 = vmatpush2.msra.mxu0 0.0
    %4113 = vmatprep.subr.mxu0 0.0
    %4114 = vmatpush2.msra.mxu0 0.0
    %4115 = vmatprep.subr.mxu0 0.0
    %4116 = vmatpush2.msra.mxu0 0.0
    %4117 = vmatprep.subr.mxu0 0.0
    %4118 = vmatpush2.msra.mxu0 0.0
    %4119 = vmatprep.subr.mxu0 0.0
    %4120 = vmatpush2.msra.mxu0 0.0
    %4121 = vmatprep.subr.mxu0 0.0
    %4122 = vmatpush2.msra.mxu0 0.0
    %4123 = vmatprep.subr.mxu0 0.0
    %4124 = vmatpush2.msra.mxu0 0.0
    %4125 = vmatprep.subr.mxu0 0.0
    %4126 = vmatpush2.msra.mxu0 0.0
    %4127 = vmatprep.subr.mxu0 0.0
    %4128 = vmatpush2.msra.mxu0 0.0
    %4129 = vmatprep.subr.mxu0 0.0
    %4130 = vmatpush2.msra.mxu0 0.0
    %4131 = vmatprep.subr.mxu0 0.0
    %4132 = vmatpush2.msra.mxu0 0.0
    %4133 = vmatprep.subr.mxu0 0.0
    %4134 = vmatpush2.msra.mxu0 0.0
    %4135 = vmatprep.subr.mxu0 0.0
    %4136 = vmatpush2.msra.mxu0 0.0
    %4137 = vmatprep.mubr.f32.mxu0 0.0
    %4138 = vmatmul.mubr.f32.gmra.mxu0 %v4071
    %v4139 = vpop.f32.mrf.mxu0
    %v4140 = vadd.f32 0.0, %v4139
    %v4141 = vpop.f32.mrf.mxu0
    %4142 = vdwg.mxu0
    %4143 = vrot.lane.b32.xlu0 %v3757, 48
    %v4144 = vpop.permute.xlu0 %4143
    %4146 = vrot.lane.b32.xlu0 %v2917, 80
    %v4147 = vpop.permute.xlu0 %4146
    %v4149 = vsel %vm482, %v4144, %v4147
    %v4150 = vmul.f32 %v2917, %v874
    %v4151 = vmul.f32 %v4149, %v111
    %4153 = vrot.lane.b32.xlu0 %v4151, 64
    %v4154 = vpop.permute.xlu0 %4153
    %v4156 = vadd.f32 %v4150, %v4154
    %4157 = vrot.lane.b32.xlu0 %v3770, 48
    %v4158 = vpop.permute.xlu0 %4157
    %4160 = vrot.lane.b32.xlu0 %v2919, 80
    %v4161 = vpop.permute.xlu0 %4160
    %v4163 = vsel %vm482, %v4158, %v4161
    %v4164 = vmul.f32 %v2919, %v874
    %v4165 = vmul.f32 %v4163, %v111
    %4167 = vrot.lane.b32.xlu0 %v4165, 64
    %v4168 = vpop.permute.xlu0 %4167
    %v4170 = vadd.f32 %v4164, %v4168
    %4172 = vrot.lane.b32.xlu0 %v4156, 64
    %v4173 = vpop.permute.xlu0 %4172
    %4175 = vrot.lane.b32.xlu0 %v4170, 64
    %v4176 = vpop.permute.xlu0 %4175
    %v4177 = vsel %vm500, %v4173, 0
    %v4179 = vsel %vm500, %v4176, 0
    %4181 = vmatprep.subr.mxu0 0.0
    %4182 = vmatpush1.xpose.msra.mxu0 0.0
    %4183 = vmatprep.subr.mxu0 0.0
    %4184 = vmatpush1.xpose.msra.mxu0 0.0
    %4185 = vmatprep.subr.mxu0 0.0
    %4186 = vmatpush1.xpose.msra.mxu0 0.0
    %4187 = vmatprep.subr.mxu0 0.0
    %4188 = vmatpush1.xpose.msra.mxu0 0.0
    %4189 = vmatprep.subr.mxu0 0.0
    %4190 = vmatpush1.xpose.msra.mxu0 0.0
    %4191 = vmatprep.subr.mxu0 0.0
    %4192 = vmatpush1.xpose.msra.mxu0 0.0
    %4193 = vmatprep.subr.mxu0 0.0
    %4194 = vmatpush1.xpose.msra.mxu0 0.0
    %4195 = vmatprep.subr.mxu0 0.0
    %4196 = vmatpush1.xpose.msra.mxu0 0.0
    %4197 = vmatprep.subr.mxu0 0.0
    %4198 = vmatpush1.xpose.msra.mxu0 0.0
    %4199 = vmatprep.subr.mxu0 0.0
    %4200 = vmatpush1.xpose.msra.mxu0 0.0
    %4201 = vmatprep.subr.mxu0 0.0
    %4202 = vmatpush1.xpose.msra.mxu0 0.0
    %4203 = vmatprep.subr.mxu0 0.0
    %4204 = vmatpush1.xpose.msra.mxu0 0.0
    %4205 = vmatprep.subr.mxu0 0.0
    %4206 = vmatpush1.xpose.msra.mxu0 0.0
    %4207 = vmatprep.subr.mxu0 0.0
    %4208 = vmatpush1.xpose.msra.mxu0 0.0
    %4209 = vmatprep.subr.mxu0 0.0
    %4210 = vmatpush1.xpose.msra.mxu0 0.0
    %4211 = vmatprep.subr.mxu0 0.0
    %4212 = vmatpush1.xpose.msra.mxu0 %v4179
    %4213 = vmatprep.subr.mxu0 0.0
    %4214 = vmatpush2.xpose.msra.mxu0 0.0
    %4215 = vmatprep.subr.mxu0 0.0
    %4216 = vmatpush2.xpose.msra.mxu0 0.0
    %4217 = vmatprep.subr.mxu0 0.0
    %4218 = vmatpush2.xpose.msra.mxu0 0.0
    %4219 = vmatprep.subr.mxu0 0.0
    %4220 = vmatpush2.xpose.msra.mxu0 0.0
    %4221 = vmatprep.subr.mxu0 0.0
    %4222 = vmatpush2.xpose.msra.mxu0 0.0
    %4223 = vmatprep.subr.mxu0 0.0
    %4224 = vmatpush2.xpose.msra.mxu0 0.0
    %4225 = vmatprep.subr.mxu0 0.0
    %4226 = vmatpush2.xpose.msra.mxu0 0.0
    %4227 = vmatprep.subr.mxu0 0.0
    %4228 = vmatpush2.xpose.msra.mxu0 0.0
    %4229 = vmatprep.subr.mxu0 0.0
    %4230 = vmatpush2.xpose.msra.mxu0 0.0
    %4231 = vmatprep.subr.mxu0 0.0
    %4232 = vmatpush2.xpose.msra.mxu0 0.0
    %4233 = vmatprep.subr.mxu0 0.0
    %4234 = vmatpush2.xpose.msra.mxu0 0.0
    %4235 = vmatprep.subr.mxu0 0.0
    %4236 = vmatpush2.xpose.msra.mxu0 0.0
    %4237 = vmatprep.subr.mxu0 0.0
    %4238 = vmatpush2.xpose.msra.mxu0 0.0
    %4239 = vmatprep.subr.mxu0 0.0
    %4240 = vmatpush2.xpose.msra.mxu0 0.0
    %4241 = vmatprep.subr.mxu0 0.0
    %4242 = vmatpush2.xpose.msra.mxu0 0.0
    %4243 = vmatprep.subr.mxu0 0.0
    %4244 = vmatpush2.xpose.msra.mxu0 0.0
    %4245 = vmatprep.mubr.f32.mxu0 0.0
    %4246 = vmatmul.mubr.f32.gmra.mxu0 %v4177
    %v4247 = vpop.f32.mrf.mxu0
    %v4248 = vadd.f32 0.0, %v4247
    %v4249 = vpop.f32.mrf.mxu0
    %4250 = vdwg.mxu0
    %v4251 = vmul.f32 %v4248, 0.17677669
    %v4252 = vsel %vm116, %v4251, -1e+30
    %v4253 = vsel %vm579, %v4252, -inf
    %4254 = vmax.xlane.f32.xlu0 %v4253
    %v4255 = vpop.xlane.xlu0 %4254
    %v4256 = vsub.f32 %v4252, %v4255
    %v4257 = vmul.f32 %v4256, 1.442695
    %v4258 = vpow.pop %v4257
    %v4259 = vsel %vm579, %v4258, 0.0
    %4260 = vadd.xlane.f32.xlu0 %v4259
    %v4261 = vpop.xlane.xlu0 %4260
    %v4262 = vrcp.pop %v4261
    %v4263 = vmul.f32 %v4258, %v4262
    %4264 = vrot.lane.b32.xlu0 %v2959, 64
    %v4265 = vpop.permute.xlu0 %4264
    %v4268 = vsel %vm579, %v4263, 0
    %4270 = vmatprep.subr.mxu0 0.0
    %4271 = vmatpush1.msra.mxu0 0.0
    %4272 = vmatprep.subr.mxu0 0.0
    %4273 = vmatpush1.msra.mxu0 0.0
    %4274 = vmatprep.subr.mxu0 0.0
    %4275 = vmatpush1.msra.mxu0 0.0
    %4276 = vmatprep.subr.mxu0 0.0
    %4277 = vmatpush1.msra.mxu0 0.0
    %4278 = vmatprep.subr.mxu0 0.0
    %4279 = vmatpush1.msra.mxu0 0.0
    %4280 = vmatprep.subr.mxu0 0.0
    %4281 = vmatpush1.msra.mxu0 0.0
    %4282 = vmatprep.subr.mxu0 0.0
    %4283 = vmatpush1.msra.mxu0 0.0
    %4284 = vmatprep.subr.mxu0 0.0
    %4285 = vmatpush1.msra.mxu0 0.0
    %4286 = vmatprep.subr.mxu0 0.0
    %4287 = vmatpush1.msra.mxu0 0.0
    %4288 = vmatprep.subr.mxu0 0.0
    %4289 = vmatpush1.msra.mxu0 0.0
    %4290 = vmatprep.subr.mxu0 0.0
    %4291 = vmatpush1.msra.mxu0 0.0
    %4292 = vmatprep.subr.mxu0 0.0
    %4293 = vmatpush1.msra.mxu0 0.0
    %4294 = vmatprep.subr.mxu0 0.0
    %4295 = vmatpush1.msra.mxu0 0.0
    %4296 = vmatprep.subr.mxu0 0.0
    %4297 = vmatpush1.msra.mxu0 0.0
    %4298 = vmatprep.subr.mxu0 0.0
    %4299 = vmatpush1.msra.mxu0 0.0
    %4300 = vmatprep.subr.mxu0 0.0
    %4301 = vmatpush1.msra.mxu0 %v4265
    %4302 = vmatprep.subr.mxu0 0.0
    %4303 = vmatpush2.msra.mxu0 0.0
    %4304 = vmatprep.subr.mxu0 0.0
    %4305 = vmatpush2.msra.mxu0 0.0
    %4306 = vmatprep.subr.mxu0 0.0
    %4307 = vmatpush2.msra.mxu0 0.0
    %4308 = vmatprep.subr.mxu0 0.0
    %4309 = vmatpush2.msra.mxu0 0.0
    %4310 = vmatprep.subr.mxu0 0.0
    %4311 = vmatpush2.msra.mxu0 0.0
    %4312 = vmatprep.subr.mxu0 0.0
    %4313 = vmatpush2.msra.mxu0 0.0
    %4314 = vmatprep.subr.mxu0 0.0
    %4315 = vmatpush2.msra.mxu0 0.0
    %4316 = vmatprep.subr.mxu0 0.0
    %4317 = vmatpush2.msra.mxu0 0.0
    %4318 = vmatprep.subr.mxu0 0.0
    %4319 = vmatpush2.msra.mxu0 0.0
    %4320 = vmatprep.subr.mxu0 0.0
    %4321 = vmatpush2.msra.mxu0 0.0
    %4322 = vmatprep.subr.mxu0 0.0
    %4323 = vmatpush2.msra.mxu0 0.0
    %4324 = vmatprep.subr.mxu0 0.0
    %4325 = vmatpush2.msra.mxu0 0.0
    %4326 = vmatprep.subr.mxu0 0.0
    %4327 = vmatpush2.msra.mxu0 0.0
    %4328 = vmatprep.subr.mxu0 0.0
    %4329 = vmatpush2.msra.mxu0 0.0
    %4330 = vmatprep.subr.mxu0 0.0
    %4331 = vmatpush2.msra.mxu0 0.0
    %4332 = vmatprep.subr.mxu0 0.0
    %4333 = vmatpush2.msra.mxu0 0.0
    %4334 = vmatprep.mubr.f32.mxu0 0.0
    %4335 = vmatmul.mubr.f32.gmra.mxu0 %v4268
    %v4336 = vpop.f32.mrf.mxu0
    %v4337 = vadd.f32 0.0, %v4336
    %v4338 = vpop.f32.mrf.mxu0
    %4339 = vdwg.mxu0
    %4340 = vrot.lane.b32.xlu0 %v3757, 16
    %v4341 = vpop.permute.xlu0 %4340
    %4343 = vrot.lane.b32.xlu0 %v2917, 48
    %v4344 = vpop.permute.xlu0 %4343
    %v4346 = vsel %vm482, %v4341, %v4344
    %v4347 = vmul.f32 %v2917, %v1074
    %v4348 = vmul.f32 %v4346, %v111
    %4350 = vrot.lane.b32.xlu0 %v4348, 96
    %v4351 = vpop.permute.xlu0 %4350
    %v4353 = vadd.f32 %v4347, %v4351
    %4354 = vrot.lane.b32.xlu0 %v3770, 16
    %v4355 = vpop.permute.xlu0 %4354
    %4357 = vrot.lane.b32.xlu0 %v2919, 48
    %v4358 = vpop.permute.xlu0 %4357
    %v4360 = vsel %vm482, %v4355, %v4358
    %v4361 = vmul.f32 %v2919, %v1074
    %v4362 = vmul.f32 %v4360, %v111
    %4364 = vrot.lane.b32.xlu0 %v4362, 96
    %v4365 = vpop.permute.xlu0 %4364
    %v4367 = vadd.f32 %v4361, %v4365
    %4369 = vrot.lane.b32.xlu0 %v4353, 32
    %v4370 = vpop.permute.xlu0 %4369
    %4372 = vrot.lane.b32.xlu0 %v4367, 32
    %v4373 = vpop.permute.xlu0 %4372
    %v4374 = vsel %vm500, %v4370, 0
    %v4376 = vsel %vm500, %v4373, 0
    %4378 = vmatprep.subr.mxu0 0.0
    %4379 = vmatpush1.xpose.msra.mxu0 0.0
    %4380 = vmatprep.subr.mxu0 0.0
    %4381 = vmatpush1.xpose.msra.mxu0 0.0
    %4382 = vmatprep.subr.mxu0 0.0
    %4383 = vmatpush1.xpose.msra.mxu0 0.0
    %4384 = vmatprep.subr.mxu0 0.0
    %4385 = vmatpush1.xpose.msra.mxu0 0.0
    %4386 = vmatprep.subr.mxu0 0.0
    %4387 = vmatpush1.xpose.msra.mxu0 0.0
    %4388 = vmatprep.subr.mxu0 0.0
    %4389 = vmatpush1.xpose.msra.mxu0 0.0
    %4390 = vmatprep.subr.mxu0 0.0
    %4391 = vmatpush1.xpose.msra.mxu0 0.0
    %4392 = vmatprep.subr.mxu0 0.0
    %4393 = vmatpush1.xpose.msra.mxu0 0.0
    %4394 = vmatprep.subr.mxu0 0.0
    %4395 = vmatpush1.xpose.msra.mxu0 0.0
    %4396 = vmatprep.subr.mxu0 0.0
    %4397 = vmatpush1.xpose.msra.mxu0 0.0
    %4398 = vmatprep.subr.mxu0 0.0
    %4399 = vmatpush1.xpose.msra.mxu0 0.0
    %4400 = vmatprep.subr.mxu0 0.0
    %4401 = vmatpush1.xpose.msra.mxu0 0.0
    %4402 = vmatprep.subr.mxu0 0.0
    %4403 = vmatpush1.xpose.msra.mxu0 0.0
    %4404 = vmatprep.subr.mxu0 0.0
    %4405 = vmatpush1.xpose.msra.mxu0 0.0
    %4406 = vmatprep.subr.mxu0 0.0
    %4407 = vmatpush1.xpose.msra.mxu0 0.0
    %4408 = vmatprep.subr.mxu0 0.0
    %4409 = vmatpush1.xpose.msra.mxu0 %v4376
    %4410 = vmatprep.subr.mxu0 0.0
    %4411 = vmatpush2.xpose.msra.mxu0 0.0
    %4412 = vmatprep.subr.mxu0 0.0
    %4413 = vmatpush2.xpose.msra.mxu0 0.0
    %4414 = vmatprep.subr.mxu0 0.0
    %4415 = vmatpush2.xpose.msra.mxu0 0.0
    %4416 = vmatprep.subr.mxu0 0.0
    %4417 = vmatpush2.xpose.msra.mxu0 0.0
    %4418 = vmatprep.subr.mxu0 0.0
    %4419 = vmatpush2.xpose.msra.mxu0 0.0
    %4420 = vmatprep.subr.mxu0 0.0
    %4421 = vmatpush2.xpose.msra.mxu0 0.0
    %4422 = vmatprep.subr.mxu0 0.0
    %4423 = vmatpush2.xpose.msra.mxu0 0.0
    %4424 = vmatprep.subr.mxu0 0.0
    %4425 = vmatpush2.xpose.msra.mxu0 0.0
    %4426 = vmatprep.subr.mxu0 0.0
    %4427 = vmatpush2.xpose.msra.mxu0 0.0
    %4428 = vmatprep.subr.mxu0 0.0
    %4429 = vmatpush2.xpose.msra.mxu0 0.0
    %4430 = vmatprep.subr.mxu0 0.0
    %4431 = vmatpush2.xpose.msra.mxu0 0.0
    %4432 = vmatprep.subr.mxu0 0.0
    %4433 = vmatpush2.xpose.msra.mxu0 0.0
    %4434 = vmatprep.subr.mxu0 0.0
    %4435 = vmatpush2.xpose.msra.mxu0 0.0
    %4436 = vmatprep.subr.mxu0 0.0
    %4437 = vmatpush2.xpose.msra.mxu0 0.0
    %4438 = vmatprep.subr.mxu0 0.0
    %4439 = vmatpush2.xpose.msra.mxu0 0.0
    %4440 = vmatprep.subr.mxu0 0.0
    %4441 = vmatpush2.xpose.msra.mxu0 0.0
    %4442 = vmatprep.mubr.f32.mxu0 0.0
    %4443 = vmatmul.mubr.f32.gmra.mxu0 %v4374
    %v4444 = vpop.f32.mrf.mxu0
    %v4445 = vadd.f32 0.0, %v4444
    %v4446 = vpop.f32.mrf.mxu0
    %4447 = vdwg.mxu0
    %v4448 = vmul.f32 %v4445, 0.17677669
    %v4449 = vsel %vm116, %v4448, -1e+30
    %v4450 = vsel %vm579, %v4449, -inf
    %4451 = vmax.xlane.f32.xlu0 %v4450
    %v4452 = vpop.xlane.xlu0 %4451
    %v4453 = vsub.f32 %v4449, %v4452
    %v4454 = vmul.f32 %v4453, 1.442695
    %v4455 = vpow.pop %v4454
    %v4456 = vsel %vm579, %v4455, 0.0
    %4457 = vadd.xlane.f32.xlu0 %v4456
    %v4458 = vpop.xlane.xlu0 %4457
    %v4459 = vrcp.pop %v4458
    %v4460 = vmul.f32 %v4455, %v4459
    %4461 = vrot.lane.b32.xlu0 %v2959, 32
    %v4462 = vpop.permute.xlu0 %4461
    %v4465 = vsel %vm579, %v4460, 0
    %4467 = vmatprep.subr.mxu0 0.0
    %4468 = vmatpush1.msra.mxu0 0.0
    %4469 = vmatprep.subr.mxu0 0.0
    %4470 = vmatpush1.msra.mxu0 0.0
    %4471 = vmatprep.subr.mxu0 0.0
    %4472 = vmatpush1.msra.mxu0 0.0
    %4473 = vmatprep.subr.mxu0 0.0
    %4474 = vmatpush1.msra.mxu0 0.0
    %4475 = vmatprep.subr.mxu0 0.0
    %4476 = vmatpush1.msra.mxu0 0.0
    %4477 = vmatprep.subr.mxu0 0.0
    %4478 = vmatpush1.msra.mxu0 0.0
    %4479 = vmatprep.subr.mxu0 0.0
    %4480 = vmatpush1.msra.mxu0 0.0
    %4481 = vmatprep.subr.mxu0 0.0
    %4482 = vmatpush1.msra.mxu0 0.0
    %4483 = vmatprep.subr.mxu0 0.0
    %4484 = vmatpush1.msra.mxu0 0.0
    %4485 = vmatprep.subr.mxu0 0.0
    %4486 = vmatpush1.msra.mxu0 0.0
    %4487 = vmatprep.subr.mxu0 0.0
    %4488 = vmatpush1.msra.mxu0 0.0
    %4489 = vmatprep.subr.mxu0 0.0
    %4490 = vmatpush1.msra.mxu0 0.0
    %4491 = vmatprep.subr.mxu0 0.0
    %4492 = vmatpush1.msra.mxu0 0.0
    %4493 = vmatprep.subr.mxu0 0.0
    %4494 = vmatpush1.msra.mxu0 0.0
    %4495 = vmatprep.subr.mxu0 0.0
    %4496 = vmatpush1.msra.mxu0 0.0
    %4497 = vmatprep.subr.mxu0 0.0
    %4498 = vmatpush1.msra.mxu0 %v4462
    %4499 = vmatprep.subr.mxu0 0.0
    %4500 = vmatpush2.msra.mxu0 0.0
    %4501 = vmatprep.subr.mxu0 0.0
    %4502 = vmatpush2.msra.mxu0 0.0
    %4503 = vmatprep.subr.mxu0 0.0
    %4504 = vmatpush2.msra.mxu0 0.0
    %4505 = vmatprep.subr.mxu0 0.0
    %4506 = vmatpush2.msra.mxu0 0.0
    %4507 = vmatprep.subr.mxu0 0.0
    %4508 = vmatpush2.msra.mxu0 0.0
    %4509 = vmatprep.subr.mxu0 0.0
    %4510 = vmatpush2.msra.mxu0 0.0
    %4511 = vmatprep.subr.mxu0 0.0
    %4512 = vmatpush2.msra.mxu0 0.0
    %4513 = vmatprep.subr.mxu0 0.0
    %4514 = vmatpush2.msra.mxu0 0.0
    %4515 = vmatprep.subr.mxu0 0.0
    %4516 = vmatpush2.msra.mxu0 0.0
    %4517 = vmatprep.subr.mxu0 0.0
    %4518 = vmatpush2.msra.mxu0 0.0
    %4519 = vmatprep.subr.mxu0 0.0
    %4520 = vmatpush2.msra.mxu0 0.0
    %4521 = vmatprep.subr.mxu0 0.0
    %4522 = vmatpush2.msra.mxu0 0.0
    %4523 = vmatprep.subr.mxu0 0.0
    %4524 = vmatpush2.msra.mxu0 0.0
    %4525 = vmatprep.subr.mxu0 0.0
    %4526 = vmatpush2.msra.mxu0 0.0
    %4527 = vmatprep.subr.mxu0 0.0
    %4528 = vmatpush2.msra.mxu0 0.0
    %4529 = vmatprep.subr.mxu0 0.0
    %4530 = vmatpush2.msra.mxu0 0.0
    %4531 = vmatprep.mubr.f32.mxu0 0.0
    %4532 = vmatmul.mubr.f32.gmra.mxu0 %v4465
    %v4533 = vpop.f32.mrf.mxu0
    %v4534 = vadd.f32 0.0, %v4533
    %v4535 = vpop.f32.mrf.mxu0
    %4536 = vdwg.mxu0
    %4538 = vrot.lane.b32.xlu0 %v4140, 32
    %v4539 = vpop.permute.xlu0 %4538
    %4542 = vrot.lane.b32.xlu0 %v4337, 64
    %v4543 = vpop.permute.xlu0 %4542
    %4546 = vrot.lane.b32.xlu0 %v4534, 96
    %v4547 = vpop.permute.xlu0 %4546
    %v4549 = vsel %vm500, %v3942, %v4539
    %v4550 = vsel %vm159, %v4549, %v4543
    %v4551 = vsel %vm1280, %v4550, %v4547
    %v4552 = vpack.c.bf16 %v4551, %v3756
    %s4553 = scalar_lea.vmem %s7, 64
    %v4554 = vld [vmem:[%s4553] sm:$0xf]
    %v4555 = vld [vmem:[%s4553 + $0x4] sm:$0xf]
    %v4556 = vld [vmem:[%s4553 + $0x8] sm:$0xf]
    %v4557 = vld [vmem:[%s4553 + $0xc] sm:$0xf]
    %v4558 = vld [vmem:[%s4553 + $0x10] sm:$0xf]
    %v4559 = vld [vmem:[%s4553 + $0x14] sm:$0xf]
    %v4560 = vld [vmem:[%s4553 + $0x18] sm:$0xf]
    %v4561 = vld [vmem:[%s4553 + $0x1c] sm:$0xf]
    %v4562 = vld [vmem:[%s4553 + $0x20] sm:$0xf]
    %v4563 = vld [vmem:[%s4553 + $0x24] sm:$0xf]
    %v4564 = vld [vmem:[%s4553 + $0x28] sm:$0xf]
    %v4565 = vld [vmem:[%s4553 + $0x2c] sm:$0xf]
    %v4566 = vld [vmem:[%s4553 + $0x30] sm:$0xf]
    %v4567 = vld [vmem:[%s4553 + $0x34] sm:$0xf]
    %v4568 = vld [vmem:[%s4553 + $0x38] sm:$0xf]
    %v4569 = vld [vmem:[%s4553 + $0x3c] sm:$0xf]
    %v4586 = vunpack.c.l.b16 %v4554
    %v4587 = vunpack.c.l.b16 %v4555
    %v4588 = vunpack.c.l.b16 %v4556
    %v4589 = vunpack.c.l.b16 %v4557
    %v4590 = vunpack.c.l.b16 %v4558
    %v4591 = vunpack.c.l.b16 %v4559
    %v4592 = vunpack.c.l.b16 %v4560
    %v4593 = vunpack.c.l.b16 %v4561
    %v4594 = vunpack.c.l.b16 %v4562
    %v4595 = vunpack.c.l.b16 %v4563
    %v4596 = vunpack.c.l.b16 %v4564
    %v4597 = vunpack.c.l.b16 %v4565
    %v4598 = vunpack.c.l.b16 %v4566
    %v4599 = vunpack.c.l.b16 %v4567
    %v4600 = vunpack.c.l.b16 %v4568
    %v4601 = vunpack.c.l.b16 %v4569
    %v4602 = vpack.c.b16 %v4587, %v4586
    %v4603 = vpack.c.b16 %v4589, %v4588
    %v4604 = vpack.c.b16 %v4591, %v4590
    %v4605 = vpack.c.b16 %v4593, %v4592
    %v4606 = vpack.c.b16 %v4595, %v4594
    %v4607 = vpack.c.b16 %v4597, %v4596
    %v4608 = vpack.c.b16 %v4599, %v4598
    %v4609 = vpack.c.b16 %v4601, %v4600
    %4618 = vmatprep.subr.bf16.mxu0 0
    %4619 = vmatpush1.bf16.msra.mxu0 %v4609
    %4620 = vmatprep.subr.bf16.mxu0 0
    %4621 = vmatpush1.bf16.msra.mxu0 %v4608
    %4622 = vmatprep.subr.bf16.mxu0 0
    %4623 = vmatpush1.bf16.msra.mxu0 %v4607
    %4624 = vmatprep.subr.bf16.mxu0 0
    %4625 = vmatpush1.bf16.msra.mxu0 %v4606
    %4626 = vmatprep.subr.bf16.mxu0 0
    %4627 = vmatpush1.bf16.msra.mxu0 %v4605
    %4628 = vmatprep.subr.bf16.mxu0 0
    %4629 = vmatpush1.bf16.msra.mxu0 %v4604
    %4630 = vmatprep.subr.bf16.mxu0 0
    %4631 = vmatpush1.bf16.msra.mxu0 %v4603
    %4632 = vmatprep.subr.bf16.mxu0 0
    %4633 = vmatpush1.bf16.msra.mxu0 %v4602
    %4634 = vmatprep.subr.bf16.mxu0 0
    %4635 = vmatpush2.bf16.msra.mxu0 0
    %4636 = vmatprep.subr.bf16.mxu0 0
    %4637 = vmatpush2.bf16.msra.mxu0 0
    %4638 = vmatprep.subr.bf16.mxu0 0
    %4639 = vmatpush2.bf16.msra.mxu0 0
    %4640 = vmatprep.subr.bf16.mxu0 0
    %4641 = vmatpush2.bf16.msra.mxu0 0
    %4642 = vmatprep.subr.bf16.mxu0 0
    %4643 = vmatpush2.bf16.msra.mxu0 0
    %4644 = vmatprep.subr.bf16.mxu0 0
    %4645 = vmatpush2.bf16.msra.mxu0 0
    %4646 = vmatprep.subr.bf16.mxu0 0
    %4647 = vmatpush2.bf16.msra.mxu0 0
    %4648 = vmatprep.subr.bf16.mxu0 0
    %4649 = vmatpush2.bf16.msra.mxu0 0
    %4650 = vmatprep.mubr.bf16.mxu0 0
    %4651 = vmatmul.mubr.bf16.gmra.mxu0 %v4552
    %v4652 = vpop.f32.mrf.mxu0
    %v4653 = vadd.f32 0.0, %v4652
    %v4654 = vpop.f32.mrf.mxu0
    %v4655 = vpop.f32.mrf.mxu0
    %v4656 = vadd.f32 0.0, %v4655
    %v4657 = vpop.f32.mrf.mxu0
    %4658 = vdwg.mxu0
    %v4659 = vadd.f32 %v2690, %v4653
    %v4660 = vadd.f32 %v2691, %v4656
    %s4661 = scalar_lea.vmem %s8, 1
    %v4662 = vld [vmem:[%s4661] sm:$0x1]
    %v4663 = vmul.f32 %v4659, %v4659
    %v4664 = vmul.f32 %v4660, %v4660
    %4665 = vadd.xlane.f32.xlu0 %v4663
    %v4666 = vpop.xlane.xlu0 %4665
    %4667 = vadd.xlane.f32.xlu0 %v4664
    %v4668 = vpop.xlane.xlu0 %4667
    %v4669 = vmul.f32 %v4666, %v211
    %v4670 = vmul.f32 %v4668, %v211
    %v4671 = vadd.f32 %v4669, 1e-05
    %v4672 = vadd.f32 %v4670, 1e-05
    %v4673 = vrsqrt.pop %v4671
    %v4674 = vrsqrt.pop %v4672
    %v4675 = vmul.f32 %v4659, %v4673
    %v4676 = vmul.f32 %v4660, %v4674
    %v4678 = vlaneseq
    %v4679 = vshrl.u32 %v4678, 7
    %v4680 = vsub.s32 0, %v4679
    %v4681 = vrot.slane %v4662, %v4680
    %v4683 = vmul.f32 %v4675, %v4681
    %v4684 = vmul.f32 %v4676, %v4681
    %v4685 = vpack.c.bf16 %v4684, %v4683
    %s4686 = scalar_lea.vmem [#allocation5], 128
    %v4687 = vld [vmem:[%s4686] sm:$0xff]
    %v4688 = vld [vmem:[%s4686 + $0x8] sm:$0xff]
    %v4689 = vld [vmem:[%s4686 + $0x10] sm:$0xff]
    %v4690 = vld [vmem:[%s4686 + $0x18] sm:$0xff]
    %v4691 = vld [vmem:[%s4686 + $0x20] sm:$0xff]
    %v4692 = vld [vmem:[%s4686 + $0x28] sm:$0xff]
    %v4693 = vld [vmem:[%s4686 + $0x30] sm:$0xff]
    %v4694 = vld [vmem:[%s4686 + $0x38] sm:$0xff]
    %v4695 = vld [vmem:[%s4686 + $0x40] sm:$0xff]
    %v4696 = vld [vmem:[%s4686 + $0x48] sm:$0xff]
    %v4697 = vld [vmem:[%s4686 + $0x50] sm:$0xff]
    %v4698 = vld [vmem:[%s4686 + $0x58] sm:$0xff]
    %v4699 = vld [vmem:[%s4686 + $0x60] sm:$0xff]
    %v4700 = vld [vmem:[%s4686 + $0x68] sm:$0xff]
    %v4701 = vld [vmem:[%s4686 + $0x70] sm:$0xff]
    %v4702 = vld [vmem:[%s4686 + $0x78] sm:$0xff]
    %v4719 = vunpack.c.l.b16 %v4687
    %v4720 = vunpack.c.h.b16 %v4687
    %v4721 = vunpack.c.l.b16 %v4688
    %v4722 = vunpack.c.h.b16 %v4688
    %v4723 = vunpack.c.l.b16 %v4689
    %v4724 = vunpack.c.h.b16 %v4689
    %v4725 = vunpack.c.l.b16 %v4690
    %v4726 = vunpack.c.h.b16 %v4690
    %v4727 = vunpack.c.l.b16 %v4691
    %v4728 = vunpack.c.h.b16 %v4691
    %v4729 = vunpack.c.l.b16 %v4692
    %v4730 = vunpack.c.h.b16 %v4692
    %v4731 = vunpack.c.l.b16 %v4693
    %v4732 = vunpack.c.h.b16 %v4693
    %v4733 = vunpack.c.l.b16 %v4694
    %v4734 = vunpack.c.h.b16 %v4694
    %v4735 = vunpack.c.l.b16 %v4695
    %v4736 = vunpack.c.h.b16 %v4695
    %v4737 = vunpack.c.l.b16 %v4696
    %v4738 = vunpack.c.h.b16 %v4696
    %v4739 = vunpack.c.l.b16 %v4697
    %v4740 = vunpack.c.h.b16 %v4697
    %v4741 = vunpack.c.l.b16 %v4698
    %v4742 = vunpack.c.h.b16 %v4698
    %v4743 = vunpack.c.l.b16 %v4699
    %v4744 = vunpack.c.h.b16 %v4699
    %v4745 = vunpack.c.l.b16 %v4700
    %v4746 = vunpack.c.h.b16 %v4700
    %v4747 = vunpack.c.l.b16 %v4701
    %v4748 = vunpack.c.h.b16 %v4701
    %v4749 = vunpack.c.l.b16 %v4702
    %v4750 = vunpack.c.h.b16 %v4702
    %v4751 = vpack.c.b16 %v4721, %v4719
    %v4752 = vpack.c.b16 %v4722, %v4720
    %v4753 = vpack.c.b16 %v4725, %v4723
    %v4754 = vpack.c.b16 %v4726, %v4724
    %v4755 = vpack.c.b16 %v4729, %v4727
    %v4756 = vpack.c.b16 %v4730, %v4728
    %v4757 = vpack.c.b16 %v4733, %v4731
    %v4758 = vpack.c.b16 %v4734, %v4732
    %v4759 = vpack.c.b16 %v4737, %v4735
    %v4760 = vpack.c.b16 %v4738, %v4736
    %v4761 = vpack.c.b16 %v4741, %v4739
    %v4762 = vpack.c.b16 %v4742, %v4740
    %v4763 = vpack.c.b16 %v4745, %v4743
    %v4764 = vpack.c.b16 %v4746, %v4744
    %v4765 = vpack.c.b16 %v4749, %v4747
    %v4766 = vpack.c.b16 %v4750, %v4748
    %4783 = vmatprep.subr.bf16.mxu0 %v4766
    %4784 = vmatpush1.bf16.msra.mxu0 %v4765
    %4785 = vmatprep.subr.bf16.mxu0 %v4764
    %4786 = vmatpush1.bf16.msra.mxu0 %v4763
    %4787 = vmatprep.subr.bf16.mxu0 %v4762
    %4788 = vmatpush1.bf16.msra.mxu0 %v4761
    %4789 = vmatprep.subr.bf16.mxu0 %v4760
    %4790 = vmatpush1.bf16.msra.mxu0 %v4759
    %4791 = vmatprep.subr.bf16.mxu0 %v4758
    %4792 = vmatpush1.bf16.msra.mxu0 %v4757
    %4793 = vmatprep.subr.bf16.mxu0 %v4756
    %4794 = vmatpush1.bf16.msra.mxu0 %v4755
    %4795 = vmatprep.subr.bf16.mxu0 %v4754
    %4796 = vmatpush1.bf16.msra.mxu0 %v4753
    %4797 = vmatprep.subr.bf16.mxu0 %v4752
    %4798 = vmatpush1.bf16.msra.mxu0 %v4751
    %4799 = vmatprep.subr.bf16.mxu0 0
    %4800 = vmatpush2.bf16.msra.mxu0 0
    %4801 = vmatprep.subr.bf16.mxu0 0
    %4802 = vmatpush2.bf16.msra.mxu0 0
    %4803 = vmatprep.subr.bf16.mxu0 0
    %4804 = vmatpush2.bf16.msra.mxu0 0
    %4805 = vmatprep.subr.bf16.mxu0 0
    %4806 = vmatpush2.bf16.msra.mxu0 0
    %4807 = vmatprep.subr.bf16.mxu0 0
    %4808 = vmatpush2.bf16.msra.mxu0 0
    %4809 = vmatprep.subr.bf16.mxu0 0
    %4810 = vmatpush2.bf16.msra.mxu0 0
    %4811 = vmatprep.subr.bf16.mxu0 0
    %4812 = vmatpush2.bf16.msra.mxu0 0
    %4813 = vmatprep.subr.bf16.mxu0 0
    %4814 = vmatpush2.bf16.msra.mxu0 0
    %4815 = vmatprep.mubr.bf16.mxu0 0
    %4816 = vmatmul.mubr.bf16.gmra.mxu0 %v4685
    %v4817 = vpop.f32.mrf.mxu0
    %v4818 = vadd.f32 0.0, %v4817
    %v4819 = vpop.f32.mrf.mxu0
    %v4820 = vadd.f32 0.0, %v4819
    %v4821 = vpop.f32.mrf.mxu0
    %v4822 = vadd.f32 0.0, %v4821
    %v4823 = vpop.f32.mrf.mxu0
    %v4824 = vadd.f32 0.0, %v4823
    %4825 = vdwg.mxu0
    %s4826 = scalar_lea.vmem [#allocation7], 128
    %v4827 = vld [vmem:[%s4826] sm:$0xff]
    %v4828 = vld [vmem:[%s4826 + $0x8] sm:$0xff]
    %v4829 = vld [vmem:[%s4826 + $0x10] sm:$0xff]
    %v4830 = vld [vmem:[%s4826 + $0x18] sm:$0xff]
    %v4831 = vld [vmem:[%s4826 + $0x20] sm:$0xff]
    %v4832 = vld [vmem:[%s4826 + $0x28] sm:$0xff]
    %v4833 = vld [vmem:[%s4826 + $0x30] sm:$0xff]
    %v4834 = vld [vmem:[%s4826 + $0x38] sm:$0xff]
    %v4835 = vld [vmem:[%s4826 + $0x40] sm:$0xff]
    %v4836 = vld [vmem:[%s4826 + $0x48] sm:$0xff]
    %v4837 = vld [vmem:[%s4826 + $0x50] sm:$0xff]
    %v4838 = vld [vmem:[%s4826 + $0x58] sm:$0xff]
    %v4839 = vld [vmem:[%s4826 + $0x60] sm:$0xff]
    %v4840 = vld [vmem:[%s4826 + $0x68] sm:$0xff]
    %v4841 = vld [vmem:[%s4826 + $0x70] sm:$0xff]
    %v4842 = vld [vmem:[%s4826 + $0x78] sm:$0xff]
    %v4859 = vunpack.c.l.b16 %v4827
    %v4860 = vunpack.c.h.b16 %v4827
    %v4861 = vunpack.c.l.b16 %v4828
    %v4862 = vunpack.c.h.b16 %v4828
    %v4863 = vunpack.c.l.b16 %v4829
    %v4864 = vunpack.c.h.b16 %v4829
    %v4865 = vunpack.c.l.b16 %v4830
    %v4866 = vunpack.c.h.b16 %v4830
    %v4867 = vunpack.c.l.b16 %v4831
    %v4868 = vunpack.c.h.b16 %v4831
    %v4869 = vunpack.c.l.b16 %v4832
    %v4870 = vunpack.c.h.b16 %v4832
    %v4871 = vunpack.c.l.b16 %v4833
    %v4872 = vunpack.c.h.b16 %v4833
    %v4873 = vunpack.c.l.b16 %v4834
    %v4874 = vunpack.c.h.b16 %v4834
    %v4875 = vunpack.c.l.b16 %v4835
    %v4876 = vunpack.c.h.b16 %v4835
    %v4877 = vunpack.c.l.b16 %v4836
    %v4878 = vunpack.c.h.b16 %v4836
    %v4879 = vunpack.c.l.b16 %v4837
    %v4880 = vunpack.c.h.b16 %v4837
    %v4881 = vunpack.c.l.b16 %v4838
    %v4882 = vunpack.c.h.b16 %v4838
    %v4883 = vunpack.c.l.b16 %v4839
    %v4884 = vunpack.c.h.b16 %v4839
    %v4885 = vunpack.c.l.b16 %v4840
    %v4886 = vunpack.c.h.b16 %v4840
    %v4887 = vunpack.c.l.b16 %v4841
    %v4888 = vunpack.c.h.b16 %v4841
    %v4889 = vunpack.c.l.b16 %v4842
    %v4890 = vunpack.c.h.b16 %v4842
    %v4891 = vpack.c.b16 %v4861, %v4859
    %v4892 = vpack.c.b16 %v4862, %v4860
    %v4893 = vpack.c.b16 %v4865, %v4863
    %v4894 = vpack.c.b16 %v4866, %v4864
    %v4895 = vpack.c.b16 %v4869, %v4867
    %v4896 = vpack.c.b16 %v4870, %v4868
    %v4897 = vpack.c.b16 %v4873, %v4871
    %v4898 = vpack.c.b16 %v4874, %v4872
    %v4899 = vpack.c.b16 %v4877, %v4875
    %v4900 = vpack.c.b16 %v4878, %v4876
    %v4901 = vpack.c.b16 %v4881, %v4879
    %v4902 = vpack.c.b16 %v4882, %v4880
    %v4903 = vpack.c.b16 %v4885, %v4883
    %v4904 = vpack.c.b16 %v4886, %v4884
    %v4905 = vpack.c.b16 %v4889, %v4887
    %v4906 = vpack.c.b16 %v4890, %v4888
    %4923 = vmatprep.subr.bf16.mxu0 %v4906
    %4924 = vmatpush1.bf16.msra.mxu0 %v4905
    %4925 = vmatprep.subr.bf16.mxu0 %v4904
    %4926 = vmatpush1.bf16.msra.mxu0 %v4903
    %4927 = vmatprep.subr.bf16.mxu0 %v4902
    %4928 = vmatpush1.bf16.msra.mxu0 %v4901
    %4929 = vmatprep.subr.bf16.mxu0 %v4900
    %4930 = vmatpush1.bf16.msra.mxu0 %v4899
    %4931 = vmatprep.subr.bf16.mxu0 %v4898
    %4932 = vmatpush1.bf16.msra.mxu0 %v4897
    %4933 = vmatprep.subr.bf16.mxu0 %v4896
    %4934 = vmatpush1.bf16.msra.mxu0 %v4895
    %4935 = vmatprep.subr.bf16.mxu0 %v4894
    %4936 = vmatpush1.bf16.msra.mxu0 %v4893
    %4937 = vmatprep.subr.bf16.mxu0 %v4892
    %4938 = vmatpush1.bf16.msra.mxu0 %v4891
    %4939 = vmatprep.subr.bf16.mxu0 0
    %4940 = vmatpush2.bf16.msra.mxu0 0
    %4941 = vmatprep.subr.bf16.mxu0 0
    %4942 = vmatpush2.bf16.msra.mxu0 0
    %4943 = vmatprep.subr.bf16.mxu0 0
    %4944 = vmatpush2.bf16.msra.mxu0 0
    %4945 = vmatprep.subr.bf16.mxu0 0
    %4946 = vmatpush2.bf16.msra.mxu0 0
    %4947 = vmatprep.subr.bf16.mxu0 0
    %4948 = vmatpush2.bf16.msra.mxu0 0
    %4949 = vmatprep.subr.bf16.mxu0 0
    %4950 = vmatpush2.bf16.msra.mxu0 0
    %4951 = vmatprep.subr.bf16.mxu0 0
    %4952 = vmatpush2.bf16.msra.mxu0 0
    %4953 = vmatprep.subr.bf16.mxu0 0
    %4954 = vmatpush2.bf16.msra.mxu0 0
    %4955 = vmatprep.mubr.bf16.mxu0 0
    %4956 = vmatmul.mubr.bf16.gmra.mxu0 %v4685
    %v4957 = vpop.f32.mrf.mxu0
    %v4958 = vadd.f32 0.0, %v4957
    %v4959 = vpop.f32.mrf.mxu0
    %v4960 = vadd.f32 0.0, %v4959
    %v4961 = vpop.f32.mrf.mxu0
    %v4962 = vadd.f32 0.0, %v4961
    %v4963 = vpop.f32.mrf.mxu0
    %v4964 = vadd.f32 0.0, %v4963
    %4965 = vdwg.mxu0
    %v4966 = vxor.u32 %v4818, 2147483648
    %v4967 = vxor.u32 %v4820, 2147483648
    %v4968 = vxor.u32 %v4822, 2147483648
    %v4969 = vxor.u32 %v4824, 2147483648
    %v4970 = vmul.f32 %v4966, 1.442695
    %v4971 = vpow.pop %v4970
    %v4972 = vmul.f32 %v4967, 1.442695
    %v4973 = vpow.pop %v4972
    %v4974 = vmul.f32 %v4968, 1.442695
    %v4975 = vpow.pop %v4974
    %v4976 = vmul.f32 %v4969, 1.442695
    %v4977 = vpow.pop %v4976
    %v4978 = vadd.f32 %v4971, 1.0
    %v4979 = vadd.f32 %v4973, 1.0
    %v4980 = vadd.f32 %v4975, 1.0
    %v4981 = vadd.f32 %v4977, 1.0
    %v4982 = vrcp.pop %v4978
    %v4983 = vmul.f32 1.0, %v4982
    %v4984 = vrcp.pop %v4979
    %v4985 = vmul.f32 1.0, %v4984
    %v4986 = vrcp.pop %v4980
    %v4987 = vmul.f32 1.0, %v4986
    %v4988 = vrcp.pop %v4981
    %v4989 = vmul.f32 1.0, %v4988
    %v4990 = vmul.f32 %v4818, %v4983
    %v4991 = vmul.f32 %v4820, %v4985
    %v4992 = vmul.f32 %v4822, %v4987
    %v4993 = vmul.f32 %v4824, %v4989
    %v4994 = vmul.f32 %v4990, %v4958
    %v4995 = vmul.f32 %v4991, %v4960
    %v4996 = vmul.f32 %v4992, %v4962
    %v4997 = vmul.f32 %v4993, %v4964
    %v4998 = vpack.c.bf16 %v4996, %v4994
    %v4999 = vpack.c.bf16 %v4997, %v4995
    %s5000 = scalar_lea.vmem [#allocation8], 128
    %v5001 = vld [vmem:[%s5000] sm:$0xf]
    %v5002 = vld [vmem:[%s5000 + $0x4] sm:$0xf]
    %v5003 = vld [vmem:[%s5000 + $0x8] sm:$0xf]
    %v5004 = vld [vmem:[%s5000 + $0xc] sm:$0xf]
    %v5005 = vld [vmem:[%s5000 + $0x10] sm:$0xf]
    %v5006 = vld [vmem:[%s5000 + $0x14] sm:$0xf]
    %v5007 = vld [vmem:[%s5000 + $0x18] sm:$0xf]
    %v5008 = vld [vmem:[%s5000 + $0x1c] sm:$0xf]
    %v5009 = vld [vmem:[%s5000 + $0x20] sm:$0xf]
    %v5010 = vld [vmem:[%s5000 + $0x24] sm:$0xf]
    %v5011 = vld [vmem:[%s5000 + $0x28] sm:$0xf]
    %v5012 = vld [vmem:[%s5000 + $0x2c] sm:$0xf]
    %v5013 = vld [vmem:[%s5000 + $0x30] sm:$0xf]
    %v5014 = vld [vmem:[%s5000 + $0x34] sm:$0xf]
    %v5015 = vld [vmem:[%s5000 + $0x38] sm:$0xf]
    %v5016 = vld [vmem:[%s5000 + $0x3c] sm:$0xf]
    %v5017 = vld [vmem:[%s5000 + $0x40] sm:$0xf]
    %v5018 = vld [vmem:[%s5000 + $0x44] sm:$0xf]
    %v5019 = vld [vmem:[%s5000 + $0x48] sm:$0xf]
    %v5020 = vld [vmem:[%s5000 + $0x4c] sm:$0xf]
    %v5021 = vld [vmem:[%s5000 + $0x50] sm:$0xf]
    %v5022 = vld [vmem:[%s5000 + $0x54] sm:$0xf]
    %v5023 = vld [vmem:[%s5000 + $0x58] sm:$0xf]
    %v5024 = vld [vmem:[%s5000 + $0x5c] sm:$0xf]
    %v5025 = vld [vmem:[%s5000 + $0x60] sm:$0xf]
    %v5026 = vld [vmem:[%s5000 + $0x64] sm:$0xf]
    %v5027 = vld [vmem:[%s5000 + $0x68] sm:$0xf]
    %v5028 = vld [vmem:[%s5000 + $0x6c] sm:$0xf]
    %v5029 = vld [vmem:[%s5000 + $0x70] sm:$0xf]
    %v5030 = vld [vmem:[%s5000 + $0x74] sm:$0xf]
    %v5031 = vld [vmem:[%s5000 + $0x78] sm:$0xf]
    %v5032 = vld [vmem:[%s5000 + $0x7c] sm:$0xf]
    %v5065 = vunpack.c.l.b16 %v5001
    %v5066 = vunpack.c.l.b16 %v5002
    %v5067 = vunpack.c.l.b16 %v5003
    %v5068 = vunpack.c.l.b16 %v5004
    %v5069 = vunpack.c.l.b16 %v5005
    %v5070 = vunpack.c.l.b16 %v5006
    %v5071 = vunpack.c.l.b16 %v5007
    %v5072 = vunpack.c.l.b16 %v5008
    %v5073 = vunpack.c.l.b16 %v5009
    %v5074 = vunpack.c.l.b16 %v5010
    %v5075 = vunpack.c.l.b16 %v5011
    %v5076 = vunpack.c.l.b16 %v5012
    %v5077 = vunpack.c.l.b16 %v5013
    %v5078 = vunpack.c.l.b16 %v5014
    %v5079 = vunpack.c.l.b16 %v5015
    %v5080 = vunpack.c.l.b16 %v5016
    %v5081 = vunpack.c.l.b16 %v5017
    %v5082 = vunpack.c.l.b16 %v5018
    %v5083 = vunpack.c.l.b16 %v5019
    %v5084 = vunpack.c.l.b16 %v5020
    %v5085 = vunpack.c.l.b16 %v5021
    %v5086 = vunpack.c.l.b16 %v5022
    %v5087 = vunpack.c.l.b16 %v5023
    %v5088 = vunpack.c.l.b16 %v5024
    %v5089 = vunpack.c.l.b16 %v5025
    %v5090 = vunpack.c.l.b16 %v5026
    %v5091 = vunpack.c.l.b16 %v5027
    %v5092 = vunpack.c.l.b16 %v5028
    %v5093 = vunpack.c.l.b16 %v5029
    %v5094 = vunpack.c.l.b16 %v5030
    %v5095 = vunpack.c.l.b16 %v5031
    %v5096 = vunpack.c.l.b16 %v5032
    %v5097 = vpack.c.b16 %v5066, %v5065
    %v5098 = vpack.c.b16 %v5068, %v5067
    %v5099 = vpack.c.b16 %v5070, %v5069
    %v5100 = vpack.c.b16 %v5072, %v5071
    %v5101 = vpack.c.b16 %v5074, %v5073
    %v5102 = vpack.c.b16 %v5076, %v5075
    %v5103 = vpack.c.b16 %v5078, %v5077
    %v5104 = vpack.c.b16 %v5080, %v5079
    %v5105 = vpack.c.b16 %v5082, %v5081
    %v5106 = vpack.c.b16 %v5084, %v5083
    %v5107 = vpack.c.b16 %v5086, %v5085
    %v5108 = vpack.c.b16 %v5088, %v5087
    %v5109 = vpack.c.b16 %v5090, %v5089
    %v5110 = vpack.c.b16 %v5092, %v5091
    %v5111 = vpack.c.b16 %v5094, %v5093
    %v5112 = vpack.c.b16 %v5096, %v5095
    %5129 = vmatprep.subr.bf16.mxu0 0
    %5130 = vmatpush1.bf16.msra.mxu0 %v5104
    %5131 = vmatprep.subr.bf16.mxu0 0
    %5132 = vmatpush1.bf16.msra.mxu0 %v5103
    %5133 = vmatprep.subr.bf16.mxu0 0
    %5134 = vmatpush1.bf16.msra.mxu0 %v5102
    %5135 = vmatprep.subr.bf16.mxu0 0
    %5136 = vmatpush1.bf16.msra.mxu0 %v5101
    %5137 = vmatprep.subr.bf16.mxu0 0
    %5138 = vmatpush1.bf16.msra.mxu0 %v5100
    %5139 = vmatprep.subr.bf16.mxu0 0
    %5140 = vmatpush1.bf16.msra.mxu0 %v5099
    %5141 = vmatprep.subr.bf16.mxu0 0
    %5142 = vmatpush1.bf16.msra.mxu0 %v5098
    %5143 = vmatprep.subr.bf16.mxu0 0
    %5144 = vmatpush1.bf16.msra.mxu0 %v5097
    %5145 = vmatprep.subr.bf16.mxu0 0
    %5146 = vmatpush2.bf16.msra.mxu0 %v5112
    %5147 = vmatprep.subr.bf16.mxu0 0
    %5148 = vmatpush2.bf16.msra.mxu0 %v5111
    %5149 = vmatprep.subr.bf16.mxu0 0
    %5150 = vmatpush2.bf16.msra.mxu0 %v5110
    %5151 = vmatprep.subr.bf16.mxu0 0
    %5152 = vmatpush2.bf16.msra.mxu0 %v5109
    %5153 = vmatprep.subr.bf16.mxu0 0
    %5154 = vmatpush2.bf16.msra.mxu0 %v5108
    %5155 = vmatprep.subr.bf16.mxu0 0
    %5156 = vmatpush2.bf16.msra.mxu0 %v5107
    %5157 = vmatprep.subr.bf16.mxu0 0
    %5158 = vmatpush2.bf16.msra.mxu0 %v5106
    %5159 = vmatprep.subr.bf16.mxu0 0
    %5160 = vmatpush2.bf16.msra.mxu0 %v5105
    %5161 = vmatprep.mubr.bf16.mxu0 %v4999
    %5162 = vmatmul.mubr.bf16.gmra.mxu0 %v4998
    %v5163 = vpop.f32.mrf.mxu0
    %v5164 = vadd.f32 0.0, %v5163
    %v5165 = vpop.f32.mrf.mxu0
    %v5166 = vpop.f32.mrf.mxu0
    %v5167 = vadd.f32 0.0, %v5166
    %v5168 = vpop.f32.mrf.mxu0
    %5169 = vdwg.mxu0
    %v5170 = vadd.f32 %v4659, %v5164
    %v5171 = vadd.f32 %v4660, %v5167
    %v5173 = vrot.slane %v5170, 6
    %v5176 = vrot.slane %v5171, 5
    %vm5178 = vcmask 1040384
    %v5179 = vsel %vm5178, %v5173, %v5176
    %v5180 = vld [vmem:[%s12] sm:$0x1]
    %v5181 = vmul.f32 %v5179, %v5179
    %vm5182 = vcmask 1041408
    %v5183 = vsel %vm5182, %v5181, 0.0
    %5184 = vadd.xlane.f32.xlu0 %v5183
    %v5185 = vpop.xlane.xlu0 %5184
    %v5186 = vmul.f32 %v5185, %v211
    %v5187 = vadd.f32 %v5186, 1e-05
    %v5188 = vrsqrt.pop %v5187
    %v5189 = vmul.f32 %v5179, %v5188
    %v5191 = vlaneseq
    %v5192 = vshrl.u32 %v5191, 7
    %v5193 = vsub.s32 0, %v5192
    %v5194 = vrot.slane %v5180, %v5193
    %v5196 = vmul.f32 %v5189, %v5194
    %v5197 = vpack.c.bf16 %v5196, %v5196
    %v5198 = vld [vmem:[%s13] sm:$0xf]
    %v5199 = vld [vmem:[%s13 + $0x4] sm:$0xf]
    %v5200 = vld [vmem:[%s13 + $0x8] sm:$0xf]
    %v5201 = vld [vmem:[%s13 + $0xc] sm:$0xf]
    %v5202 = vld [vmem:[%s13 + $0x10] sm:$0xf]
    %v5203 = vld [vmem:[%s13 + $0x14] sm:$0xf]
    %v5204 = vld [vmem:[%s13 + $0x18] sm:$0xf]
    %v5205 = vld [vmem:[%s13 + $0x1c] sm:$0xf]
    %v5206 = vld [vmem:[%s13 + $0x20] sm:$0xf]
    %v5207 = vld [vmem:[%s13 + $0x24] sm:$0xf]
    %v5208 = vld [vmem:[%s13 + $0x28] sm:$0xf]
    %v5209 = vld [vmem:[%s13 + $0x2c] sm:$0xf]
    %v5210 = vld [vmem:[%s13 + $0x30] sm:$0xf]
    %v5211 = vld [vmem:[%s13 + $0x34] sm:$0xf]
    %v5212 = vld [vmem:[%s13 + $0x38] sm:$0xf]
    %v5213 = vld [vmem:[%s13 + $0x3c] sm:$0xf]
    %v5230 = vunpack.c.l.b16 %v5198
    %v5231 = vunpack.c.l.b16 %v5199
    %v5232 = vunpack.c.l.b16 %v5200
    %v5233 = vunpack.c.l.b16 %v5201
    %v5234 = vunpack.c.l.b16 %v5202
    %v5235 = vunpack.c.l.b16 %v5203
    %v5236 = vunpack.c.l.b16 %v5204
    %v5237 = vunpack.c.l.b16 %v5205
    %v5238 = vunpack.c.l.b16 %v5206
    %v5239 = vunpack.c.l.b16 %v5207
    %v5240 = vunpack.c.l.b16 %v5208
    %v5241 = vunpack.c.l.b16 %v5209
    %v5242 = vunpack.c.l.b16 %v5210
    %v5243 = vunpack.c.l.b16 %v5211
    %v5244 = vunpack.c.l.b16 %v5212
    %v5245 = vunpack.c.l.b16 %v5213
    %v5246 = vpack.c.b16 %v5231, %v5230
    %v5247 = vpack.c.b16 %v5233, %v5232
    %v5248 = vpack.c.b16 %v5235, %v5234
    %v5249 = vpack.c.b16 %v5237, %v5236
    %v5250 = vpack.c.b16 %v5239, %v5238
    %v5251 = vpack.c.b16 %v5241, %v5240
    %v5252 = vpack.c.b16 %v5243, %v5242
    %v5253 = vpack.c.b16 %v5245, %v5244
    %5262 = vmatprep.subr.bf16.mxu0 0
    %5263 = vmatpush1.bf16.msra.mxu0 %v5253
    %5264 = vmatprep.subr.bf16.mxu0 0
    %5265 = vmatpush1.bf16.msra.mxu0 %v5252
    %5266 = vmatprep.subr.bf16.mxu0 0
    %5267 = vmatpush1.bf16.msra.mxu0 %v5251
    %5268 = vmatprep.subr.bf16.mxu0 0
    %5269 = vmatpush1.bf16.msra.mxu0 %v5250
    %5270 = vmatprep.subr.bf16.mxu0 0
    %5271 = vmatpush1.bf16.msra.mxu0 %v5249
    %5272 = vmatprep.subr.bf16.mxu0 0
    %5273 = vmatpush1.bf16.msra.mxu0 %v5248
    %5274 = vmatprep.subr.bf16.mxu0 0
    %5275 = vmatpush1.bf16.msra.mxu0 %v5247
    %5276 = vmatprep.subr.bf16.mxu0 0
    %5277 = vmatpush1.bf16.msra.mxu0 %v5246
    %5278 = vmatprep.subr.bf16.mxu0 0
    %5279 = vmatpush2.bf16.msra.mxu0 0
    %5280 = vmatprep.subr.bf16.mxu0 0
    %5281 = vmatpush2.bf16.msra.mxu0 0
    %5282 = vmatprep.subr.bf16.mxu0 0
    %5283 = vmatpush2.bf16.msra.mxu0 0
    %5284 = vmatprep.subr.bf16.mxu0 0
    %5285 = vmatpush2.bf16.msra.mxu0 0
    %5286 = vmatprep.subr.bf16.mxu0 0
    %5287 = vmatpush2.bf16.msra.mxu0 0
    %5288 = vmatprep.subr.bf16.mxu0 0
    %5289 = vmatpush2.bf16.msra.mxu0 0
    %5290 = vmatprep.subr.bf16.mxu0 0
    %5291 = vmatpush2.bf16.msra.mxu0 0
    %5292 = vmatprep.subr.bf16.mxu0 0
    %5293 = vmatpush2.bf16.msra.mxu0 0
    %5294 = vmatprep.mubr.bf16.mxu0 0
    %5295 = vmatmul.mubr.bf16.gmra.mxu0 %v5197
    %v5296 = vpop.f32.mrf.mxu0
    %v5297 = vadd.f32 0.0, %v5296
    %v5298 = vpop.f32.mrf.mxu0
    %v5299 = vpop.f32.mrf.mxu0
    %v5300 = vpop.f32.mrf.mxu0
    %5301 = vdwg.mxu0
    %v5302 = vld [vmem:[%s14] sm:$0xff]
    %v5303 = vld [vmem:[%s14 + $0x8] sm:$0xff]
    %v5304 = vld [vmem:[%s14 + $0x10] sm:$0xff]
    %v5305 = vld [vmem:[%s14 + $0x18] sm:$0xff]
    %v5306 = vld [vmem:[%s14 + $0x20] sm:$0xff]
    %v5307 = vld [vmem:[%s14 + $0x28] sm:$0xff]
    %v5308 = vld [vmem:[%s14 + $0x30] sm:$0xff]
    %v5309 = vld [vmem:[%s14 + $0x38] sm:$0xff]
    %v5310 = vld [vmem:[%s14 + $0x40] sm:$0xff]
    %v5311 = vld [vmem:[%s14 + $0x48] sm:$0xff]
    %v5312 = vld [vmem:[%s14 + $0x50] sm:$0xff]
    %v5313 = vld [vmem:[%s14 + $0x58] sm:$0xff]
    %v5314 = vld [vmem:[%s14 + $0x60] sm:$0xff]
    %v5315 = vld [vmem:[%s14 + $0x68] sm:$0xff]
    %v5316 = vld [vmem:[%s14 + $0x70] sm:$0xff]
    %v5317 = vld [vmem:[%s14 + $0x78] sm:$0xff]
    %v5318 = vld [vmem:[%s15] sm:$0x1]
    %v5320 = vlaneseq
    %v5321 = vshrl.u32 %v5320, 7
    %v5322 = vsub.s32 0, %v5321
    %v5323 = vrot.slane %v5318, %v5322
    %5325 = vmatprep.subr.mxu0 0.0
    %5326 = vmatpush1.msra.mxu0 %v5317
    %5327 = vmatprep.subr.mxu0 0.0
    %5328 = vmatpush1.msra.mxu0 %v5316
    %5329 = vmatprep.subr.mxu0 0.0
    %5330 = vmatpush1.msra.mxu0 %v5315
    %5331 = vmatprep.subr.mxu0 0.0
    %5332 = vmatpush1.msra.mxu0 %v5314
    %5333 = vmatprep.subr.mxu0 0.0
    %5334 = vmatpush1.msra.mxu0 %v5313
    %5335 = vmatprep.subr.mxu0 0.0
    %5336 = vmatpush1.msra.mxu0 %v5312
    %5337 = vmatprep.subr.mxu0 0.0
    %5338 = vmatpush1.msra.mxu0 %v5311
    %5339 = vmatprep.subr.mxu0 0.0
    %5340 = vmatpush1.msra.mxu0 %v5310
    %5341 = vmatprep.subr.mxu0 0.0
    %5342 = vmatpush1.msra.mxu0 %v5309
    %5343 = vmatprep.subr.mxu0 0.0
    %5344 = vmatpush1.msra.mxu0 %v5308
    %5345 = vmatprep.subr.mxu0 0.0
    %5346 = vmatpush1.msra.mxu0 %v5307
    %5347 = vmatprep.subr.mxu0 0.0
    %5348 = vmatpush1.msra.mxu0 %v5306
    %5349 = vmatprep.subr.mxu0 0.0
    %5350 = vmatpush1.msra.mxu0 %v5305
    %5351 = vmatprep.subr.mxu0 0.0
    %5352 = vmatpush1.msra.mxu0 %v5304
    %5353 = vmatprep.subr.mxu0 0.0
    %5354 = vmatpush1.msra.mxu0 %v5303
    %5355 = vmatprep.subr.mxu0 0.0
    %5356 = vmatpush1.msra.mxu0 %v5302
    %5357 = vmatprep.subr.mxu0 0.0
    %5358 = vmatpush2.msra.mxu0 0.0
    %5359 = vmatprep.subr.mxu0 0.0
    %5360 = vmatpush2.msra.mxu0 0.0
    %5361 = vmatprep.subr.mxu0 0.0
    %5362 = vmatpush2.msra.mxu0 0.0
    %5363 = vmatprep.subr.mxu0 0.0
    %5364 = vmatpush2.msra.mxu0 0.0
    %5365 = vmatprep.subr.mxu0 0.0
    %5366 = vmatpush2.msra.mxu0 0.0
    %5367 = vmatprep.subr.mxu0 0.0
    %5368 = vmatpush2.msra.mxu0 0.0
    %5369 = vmatprep.subr.mxu0 0.0
    %5370 = vmatpush2.msra.mxu0 0.0
    %5371 = vmatprep.subr.mxu0 0.0
    %5372 = vmatpush2.msra.mxu0 0.0
    %5373 = vmatprep.subr.mxu0 0.0
    %5374 = vmatpush2.msra.mxu0 0.0
    %5375 = vmatprep.subr.mxu0 0.0
    %5376 = vmatpush2.msra.mxu0 0.0
    %5377 = vmatprep.subr.mxu0 0.0
    %5378 = vmatpush2.msra.mxu0 0.0
    %5379 = vmatprep.subr.mxu0 0.0
    %5380 = vmatpush2.msra.mxu0 0.0
    %5381 = vmatprep.subr.mxu0 0.0
    %5382 = vmatpush2.msra.mxu0 0.0
    %5383 = vmatprep.subr.mxu0 0.0
    %5384 = vmatpush2.msra.mxu0 0.0
    %5385 = vmatprep.subr.mxu0 0.0
    %5386 = vmatpush2.msra.mxu0 0.0
    %5387 = vmatprep.subr.mxu0 0.0
    %5388 = vmatpush2.msra.mxu0 0.0
    %5389 = vmatprep.mubr.f32.mxu0 0.0
    %5390 = vmatmul.mubr.f32.gmra.mxu0 %v5297
    %v5391 = vpop.f32.mrf.mxu0
    %v5392 = vadd.f32 %v5323, %v5391
    %v5393 = vpop.f32.mrf.mxu0
    %5394 = vdwg.mxu0
    %vm5395 = vcmask 17408
    %5396 = vst.msk [vmem:[#allocation10] sm:$0x3] %vm5395, %v5392
    // Predicated region
    $region82: #{llama_regressor_forward.1} parent=1 // pred_check
      _
    $region83: #{llama_regressor_forward.1} parent=1 // pred_check_branch
      %5398 = sbr.rel (0) target = $region85
    $region84: #{llama_regressor_forward.1} parent=1 // pred_region
      %s5400 = ssub.s32 32, 32
      %5401 = vsyncadd [#allocation4], %s5400
      %s5403 = sshll.u32 [#allocation10], 4
      %s5404 = int_to_ptr.vmem [resolvable:$true] %s5403
      %5406 = dma.vmem_to_hbm [thread:$0]  %s5404, 32, %s16, [#allocation4]
    $region85: #{llama_regressor_forward.1} parent=1 // pred_fallthru
      _
    // Predicated region
    $region86: #{llama_regressor_forward.1} parent=1 // pred_check
      _
    $region87: #{llama_regressor_forward.1} parent=1 // pred_check_branch
      %5408 = sbr.rel (0) target = $region89
    $region88: #{llama_regressor_forward.1} parent=1 // pred_region
      %5409 = dma.done [#allocation4], 32
    $region89: #{llama_regressor_forward.1} parent=1 // pred_fallthru
      _
    %5410 = vsyncpa [#allocation3], 1
    %5411 = vsyncpa [#allocation6], 1
    %5412 = vsyncpa [#allocation9], 1
    %5413 = vsyncpa [#allocation4], 1

</llo_original>
